<compile_context>
chip_gen: v6e
topology: v6e:2x2x1
jax: 0.10.0
libtpu: 0.0.40
codegen_flags: <defaults>
</compile_context>

<pallas_src>
import jax
import jax.numpy as jnp
from jax.experimental import pallas as pl
from jax.experimental.pallas import tpu as pltpu

HIDDEN = 128          # d_model of every TimeSeriesEncoder
NUM_HEADS = 8
HEAD_DIM = HIDDEN // NUM_HEADS
FFN_DIM = 512
NUM_LAYERS = 2
OUTPUT_DIM = 256
MAX_LEN = 1000
LN_EPS = 1e-5
D_PAD = 16            # padded input-feature dim (multiple of 8, >= max(input_dims))


# ---------------------------------------------------------------------------
# in-kernel math helpers
# ---------------------------------------------------------------------------
def _mm(a, b):
    return jnp.dot(a, b, preferred_element_type=jnp.float32)


def _mm_cast(a, w):
    # cast activation to the weight dtype (bf16), accumulate in f32 on the MXU
    return jnp.dot(a.astype(w.dtype), w, preferred_element_type=jnp.float32)


def _mm_nt(a, b):
    # a @ b.T without materializing the transpose
    return jax.lax.dot_general(
        a, b, (((1,), (1,)), ((), ())), preferred_element_type=jnp.float32)


def _layer_norm(v, g, b):
    mu = jnp.mean(v, axis=-1, keepdims=True)
    var = jnp.mean((v - mu) ** 2, axis=-1, keepdims=True)
    return (v - mu) * jax.lax.rsqrt(var + LN_EPS) * g + b


def _head_masks():
    # (1, HIDDEN) f32 masks selecting each head's 16 lanes; hoisted out of loops
    col = jax.lax.broadcasted_iota(jnp.int32, (1, HIDDEN), 1)
    return [((col >= h * HEAD_DIM) & (col < (h + 1) * HEAD_DIM)).astype(jnp.float32)
            for h in range(NUM_HEADS)]


def _masked_mha(q, k, v, masks, batch, seq):
    """Multi-head self-attention on b-major flattened tokens.

    q/k/v: (batch*seq, HIDDEN) f32 (post-projection, pre-head-split).
    Returns the concatenated per-head outputs, (batch*seq, HIDDEN) f32,
    BEFORE the output projection.  Head split/concat is expressed with lane
    masks so every matmul is full lane width.
    """
    scale = 1.0 / float(HEAD_DIM) ** 0.5
    per_batch = []
    for b in range(batch):
        qb = q[b * seq:(b + 1) * seq]
        kb = k[b * seq:(b + 1) * seq]
        vb = v[b * seq:(b + 1) * seq]
        ob = jnp.zeros((seq, HIDDEN), jnp.float32)
        for hh in range(NUM_HEADS):
            m = masks[hh]
            s = _mm_nt(qb * m, kb) * scale                    # (seq, seq)
            s = s - jnp.max(s, axis=-1, keepdims=True)
            p = jnp.exp(s)
            p = p * pl.reciprocal(jnp.sum(p, axis=-1, keepdims=True), approx=True)
            ob = ob + _mm(p, vb * m)                          # lands in head hh cols
        per_batch.append(ob)
    return jnp.concatenate(per_batch, axis=0)                 # (batch*seq, HIDDEN)


# ---------------------------------------------------------------------------
# Kernel 1: all TimeSeriesEncoders, grid=(num_timeframes,)
# ---------------------------------------------------------------------------
def encoder_kernel(x_ref, pos_ref, w_in_ref, b_in_ref,
                   wqkv_ref, bqkv_ref, wo_ref, bo_ref,
                   ln1_g_ref, ln1_b_ref, w1_ref, b1_ref, w2_ref, b2_ref,
                   ln2_g_ref, ln2_b_ref, out_ref):
    B, S, D = x_ref.shape
    BS = B * S
    masks = _head_masks()

    # input projection + positional encoding for all B*S tokens at once
    x2 = x_ref[...].reshape(BS, D)
    h = _mm_cast(x2, w_in_ref[...]) + b_in_ref[...]           # (BS, H)
    pos = pos_ref[...]                                        # (S, H)
    h = h + jnp.concatenate([pos] * B, axis=0)

    for l in range(NUM_LAYERS):
        # fused QKV projection: one (BS,128)@(128,384) matmul
        qkv = _mm_cast(h, wqkv_ref[l]) + bqkv_ref[l]          # (BS, 3H)
        q = qkv[:, 0:HIDDEN]
        k = qkv[:, HIDDEN:2 * HIDDEN]
        v = qkv[:, 2 * HIDDEN:3 * HIDDEN]

        attn = _masked_mha(q, k, v, masks, B, S)              # (BS, H)
        attn = _mm_cast(attn, wo_ref[l]) + bo_ref[l]          # fused W_O
        h = _layer_norm(h + attn, ln1_g_ref[l], ln1_b_ref[l])

        ff = jnp.maximum(_mm_cast(h, w1_ref[l]) + b1_ref[l], 0.0)
        ff = _mm_cast(ff, w2_ref[l]) + b2_ref[l]
        h = _layer_norm(h + ff, ln2_g_ref[l], ln2_b_ref[l])

    # last-token pooling -> (B, H)
    last = jnp.concatenate([h[b * S + S - 1: b * S + S, :] for b in range(B)],
                           axis=0)
    out_ref[...] = last


# ---------------------------------------------------------------------------
# Kernel 2: cross-timeframe attention + output projection
# ---------------------------------------------------------------------------
def fusion_kernel(f_ref, wqkv_ref, bqkv_ref, wo_ref, bo_ref,
                  w_out_ref, b_out_ref, out_ref):
    B, T, H = f_ref.shape
    masks = _head_masks()

    f2 = f_ref[...].reshape(B * T, H)
    qkv = _mm_cast(f2, wqkv_ref[...]) + bqkv_ref[...]         # (B*T, 3H)
    q = qkv[:, 0:HIDDEN]
    k = qkv[:, HIDDEN:2 * HIDDEN]
    v = qkv[:, 2 * HIDDEN:3 * HIDDEN]

    attn = _masked_mha(q, k, v, masks, B, T)                  # (B*T, H)
    attn = _mm_cast(attn, wo_ref[...]) + bo_ref[...]          # fused W_O

    # flatten(T*H) @ W_out  ==  sum_t attn[:, t-th token] @ W_out[t]
    acc = jnp.zeros((B, OUTPUT_DIM), jnp.float32) + b_out_ref[...]
    for t in range(T):
        rows_t = jnp.concatenate(
            [attn[b * T + t: b * T + t + 1, :] for b in range(B)], axis=0)  # (B, H)
        acc = acc + _mm_cast(rows_t, w_out_ref[t])            # (B, OUT), full-width
    out_ref[...] = acc


# ---------------------------------------------------------------------------
# pallas_call wrappers
# ---------------------------------------------------------------------------
def _tf_spec(shape):
    """BlockSpec that selects one timeframe (leading axis) per grid step."""
    zeros = (0,) * (len(shape) - 1)
    return pl.BlockSpec((None,) + tuple(shape[1:]),
                        lambda t, _z=zeros: (t,) + _z)


def run_encoders(x_stack, ep):
    T, B, S, _ = x_stack.shape
    pos = ep["pos"][:, :S, :]                                 # (T, S, H) host-side slice
    args = (x_stack, pos, ep["w_in"], ep["b_in"],
            ep["wqkv"], ep["bqkv"], ep["wo"], ep["bo"],
            ep["ln1_g"], ep["ln1_b"], ep["w1"], ep["b1"], ep["w2"], ep["b2"],
            ep["ln2_g"], ep["ln2_b"])
    return pl.pallas_call(
        encoder_kernel,
        grid=(T,),
        out_shape=jax.ShapeDtypeStruct((T, B, HIDDEN), jnp.float32),
        in_specs=[_tf_spec(a.shape) for a in args],
        out_specs=pl.BlockSpec((None, B, HIDDEN), lambda t: (t, 0, 0)),
        compiler_params=pltpu.CompilerParams(
            dimension_semantics=("parallel",)),
    )(*args)


def run_fusion(features, cross, w_out, b_out):
    B = features.shape[0]
    args = (features, cross["wqkv"], cross["bqkv"], cross["wo"], cross["bo"],
            w_out, b_out)
    vmem = pltpu.MemorySpace.VMEM
    return pl.pallas_call(
        fusion_kernel,
        out_shape=jax.ShapeDtypeStruct((B, OUTPUT_DIM), jnp.float32),
        in_specs=[pl.BlockSpec(memory_space=vmem) for _ in args],
        out_specs=pl.BlockSpec(memory_space=vmem),
    )(*args)


def multi_timeframe_transformer(x, params):
    # host-side glue: zero-pad feature dims to D_PAD and stack timeframes
    xs = []
    for tf in params["timeframes"]:
        d = x[tf]
        pad = D_PAD - d.shape[-1]
        xs.append(jnp.pad(d, ((0, 0), (0, 0), (0, pad))))
    x_stack = jnp.stack(xs, axis=0)                            # (T, B, S, D_PAD)
    feats_tbh = run_encoders(x_stack, params["enc"])           # (T, B, H)
    features = jnp.transpose(feats_tbh, (1, 0, 2))             # (B, T, H)
    return run_fusion(features, params["cross"], params["w_out"], params["b_out"])


# ---------------------------------------------------------------------------
# deterministic synthetic parameters (weights stored bf16, biases/LN/pos f32)
# ---------------------------------------------------------------------------
def init_params(key, input_dims, output_dim=OUTPUT_DIM):
    tfs = list(input_dims.keys())
    T = len(tfs)
    L, H, FF = NUM_LAYERS, HIDDEN, FFN_DIM
    std = 0.05
    f32, bf16 = jnp.float32, jnp.bfloat16
    keys = jax.random.split(key, 10)

    enc = dict(
        w_in=(jax.random.normal(keys[0], (T, D_PAD, H)) * std).astype(bf16),
        b_in=jnp.zeros((T, 1, H), f32),
        pos=(jax.random.normal(keys[1], (T, MAX_LEN, H)) * 0.02).astype(f32),
        wqkv=(jax.random.normal(keys[2], (T, L, H, 3 * H)) * std).astype(bf16),
        bqkv=jnp.zeros((T, L, 1, 3 * H), f32),
        wo=(jax.random.normal(keys[3], (T, L, H, H)) * std).astype(bf16),
        bo=jnp.zeros((T, L, 1, H), f32),
        ln1_g=jnp.ones((T, L, 1, H), f32),
        ln1_b=jnp.zeros((T, L, 1, H), f32),
        w1=(jax.random.normal(keys[4], (T, L, H, FF)) * std).astype(bf16),
        b1=jnp.zeros((T, L, 1, FF), f32),
        w2=(jax.random.normal(keys[5], (T, L, FF, H)) * std).astype(bf16),
        b2=jnp.zeros((T, L, 1, H), f32),
        ln2_g=jnp.ones((T, L, 1, H), f32),
        ln2_b=jnp.zeros((T, L, 1, H), f32),
    )
    cross = dict(
        wqkv=(jax.random.normal(keys[6], (H, 3 * H)) * std).astype(bf16),
        bqkv=jnp.zeros((1, 3 * H), f32),
        wo=(jax.random.normal(keys[7], (H, H)) * std).astype(bf16),
        bo=jnp.zeros((1, H), f32),
    )
    w_out = (jax.random.normal(keys[8], (T, H, output_dim)) * std).astype(bf16)
    b_out = jnp.zeros((1, output_dim), f32)
    return dict(timeframes=tfs, enc=enc, cross=cross, w_out=w_out, b_out=b_out)


# ---------------------------------------------------------------------------
if __name__ == "__main__":
    input_dims = {"S5": 10, "M1": 8, "H1": 6}
    B, S = 2, 8

    key = jax.random.PRNGKey(0)
    k_params, k_data = jax.random.split(key)
    params = init_params(k_params, input_dims)

    data_keys = jax.random.split(k_data, len(input_dims))
    x = {tf: jax.random.normal(dk, (B, S, d), dtype=jnp.float32)
         for (tf, d), dk in zip(input_dims.items(), data_keys)}

    out = multi_timeframe_transformer(x, params)
    out = jax.block_until_ready(out)

    assert out.shape == (B, OUTPUT_DIM), out.shape
    assert bool(jnp.all(jnp.isfinite(out)))
    print("KERNEL_OK")
</pallas_src>

<mosaic_0001>
module attributes {stable_mosaic.version = 11 : i64} {
  func.func @encoder_kernel(%arg0: i32, %arg1: memref<1x2x8x16xf32, #tpu.memory_space<vmem>>, %arg2: memref<1x8x128xf32, #tpu.memory_space<vmem>>, %arg3: memref<1x16x128xbf16, #tpu.memory_space<vmem>>, %arg4: memref<1x1x128xf32, #tpu.memory_space<vmem>>, %arg5: memref<1x2x128x384xbf16, #tpu.memory_space<vmem>>, %arg6: memref<1x2x1x384xf32, #tpu.memory_space<vmem>>, %arg7: memref<1x2x128x128xbf16, #tpu.memory_space<vmem>>, %arg8: memref<1x2x1x128xf32, #tpu.memory_space<vmem>>, %arg9: memref<1x2x1x128xf32, #tpu.memory_space<vmem>>, %arg10: memref<1x2x1x128xf32, #tpu.memory_space<vmem>>, %arg11: memref<1x2x128x512xbf16, #tpu.memory_space<vmem>>, %arg12: memref<1x2x1x512xf32, #tpu.memory_space<vmem>>, %arg13: memref<1x2x512x128xbf16, #tpu.memory_space<vmem>>, %arg14: memref<1x2x1x128xf32, #tpu.memory_space<vmem>>, %arg15: memref<1x2x1x128xf32, #tpu.memory_space<vmem>>, %arg16: memref<1x2x1x128xf32, #tpu.memory_space<vmem>>, %arg17: memref<1x2x128xf32, #tpu.memory_space<vmem>>) attributes {dimension_semantics = [#tpu.dimension_semantics<parallel>], iteration_bounds = array<i64: 3>, scalar_prefetch = 0 : i64, scratch_operands = 0 : i64, tpu.core_type = #tpu.core_type<tc>, window_params = [{transform_indices = @transform_0, window_bounds = array<i64: 1, 2, 8, 16>}, {transform_indices = @transform_1, window_bounds = array<i64: 1, 8, 128>}, {transform_indices = @transform_2, window_bounds = array<i64: 1, 16, 128>}, {transform_indices = @transform_3, window_bounds = array<i64: 1, 1, 128>}, {transform_indices = @transform_4, window_bounds = array<i64: 1, 2, 128, 384>}, {transform_indices = @transform_5, window_bounds = array<i64: 1, 2, 1, 384>}, {transform_indices = @transform_6, window_bounds = array<i64: 1, 2, 128, 128>}, {transform_indices = @transform_7, window_bounds = array<i64: 1, 2, 1, 128>}, {transform_indices = @transform_8, window_bounds = array<i64: 1, 2, 1, 128>}, {transform_indices = @transform_9, window_bounds = array<i64: 1, 2, 1, 128>}, {transform_indices = @transform_10, window_bounds = array<i64: 1, 2, 128, 512>}, {transform_indices = @transform_11, window_bounds = array<i64: 1, 2, 1, 512>}, {transform_indices = @transform_12, window_bounds = array<i64: 1, 2, 512, 128>}, {transform_indices = @transform_13, window_bounds = array<i64: 1, 2, 1, 128>}, {transform_indices = @transform_14, window_bounds = array<i64: 1, 2, 1, 128>}, {transform_indices = @transform_15, window_bounds = array<i64: 1, 2, 1, 128>}, {transform_indices = @transform_16, window_bounds = array<i64: 1, 2, 128>}]} {
    %0 = tpu.iota {dimensions = array<i32: 1>} : vector<1x128xi32>
    %c0_i32 = arith.constant 0 : i32
    %1 = vector.broadcast %c0_i32 : i32 to vector<1x128xi32>
    %2 = arith.cmpi sge, %0, %1 : vector<1x128xi32>
    %c16_i32 = arith.constant 16 : i32
    %3 = vector.broadcast %c16_i32 : i32 to vector<1x128xi32>
    %4 = arith.cmpi slt, %0, %3 : vector<1x128xi32>
    %5 = arith.andi %2, %4 : vector<1x128xi1>
    %6 = arith.extui %5 : vector<1x128xi1> to vector<1x128xi32>
    %7 = arith.sitofp %6 : vector<1x128xi32> to vector<1x128xf32>
    %c16_i32_0 = arith.constant 16 : i32
    %8 = vector.broadcast %c16_i32_0 : i32 to vector<1x128xi32>
    %9 = arith.cmpi sge, %0, %8 : vector<1x128xi32>
    %c32_i32 = arith.constant 32 : i32
    %10 = vector.broadcast %c32_i32 : i32 to vector<1x128xi32>
    %11 = arith.cmpi slt, %0, %10 : vector<1x128xi32>
    %12 = arith.andi %9, %11 : vector<1x128xi1>
    %13 = arith.extui %12 : vector<1x128xi1> to vector<1x128xi32>
    %14 = arith.sitofp %13 : vector<1x128xi32> to vector<1x128xf32>
    %c32_i32_1 = arith.constant 32 : i32
    %15 = vector.broadcast %c32_i32_1 : i32 to vector<1x128xi32>
    %16 = arith.cmpi sge, %0, %15 : vector<1x128xi32>
    %c48_i32 = arith.constant 48 : i32
    %17 = vector.broadcast %c48_i32 : i32 to vector<1x128xi32>
    %18 = arith.cmpi slt, %0, %17 : vector<1x128xi32>
    %19 = arith.andi %16, %18 : vector<1x128xi1>
    %20 = arith.extui %19 : vector<1x128xi1> to vector<1x128xi32>
    %21 = arith.sitofp %20 : vector<1x128xi32> to vector<1x128xf32>
    %c48_i32_2 = arith.constant 48 : i32
    %22 = vector.broadcast %c48_i32_2 : i32 to vector<1x128xi32>
    %23 = arith.cmpi sge, %0, %22 : vector<1x128xi32>
    %c64_i32 = arith.constant 64 : i32
    %24 = vector.broadcast %c64_i32 : i32 to vector<1x128xi32>
    %25 = arith.cmpi slt, %0, %24 : vector<1x128xi32>
    %26 = arith.andi %23, %25 : vector<1x128xi1>
    %27 = arith.extui %26 : vector<1x128xi1> to vector<1x128xi32>
    %28 = arith.sitofp %27 : vector<1x128xi32> to vector<1x128xf32>
    %c64_i32_3 = arith.constant 64 : i32
    %29 = vector.broadcast %c64_i32_3 : i32 to vector<1x128xi32>
    %30 = arith.cmpi sge, %0, %29 : vector<1x128xi32>
    %c80_i32 = arith.constant 80 : i32
    %31 = vector.broadcast %c80_i32 : i32 to vector<1x128xi32>
    %32 = arith.cmpi slt, %0, %31 : vector<1x128xi32>
    %33 = arith.andi %30, %32 : vector<1x128xi1>
    %34 = arith.extui %33 : vector<1x128xi1> to vector<1x128xi32>
    %35 = arith.sitofp %34 : vector<1x128xi32> to vector<1x128xf32>
    %c80_i32_4 = arith.constant 80 : i32
    %36 = vector.broadcast %c80_i32_4 : i32 to vector<1x128xi32>
    %37 = arith.cmpi sge, %0, %36 : vector<1x128xi32>
    %c96_i32 = arith.constant 96 : i32
    %38 = vector.broadcast %c96_i32 : i32 to vector<1x128xi32>
    %39 = arith.cmpi slt, %0, %38 : vector<1x128xi32>
    %40 = arith.andi %37, %39 : vector<1x128xi1>
    %41 = arith.extui %40 : vector<1x128xi1> to vector<1x128xi32>
    %42 = arith.sitofp %41 : vector<1x128xi32> to vector<1x128xf32>
    %c96_i32_5 = arith.constant 96 : i32
    %43 = vector.broadcast %c96_i32_5 : i32 to vector<1x128xi32>
    %44 = arith.cmpi sge, %0, %43 : vector<1x128xi32>
    %c112_i32 = arith.constant 112 : i32
    %45 = vector.broadcast %c112_i32 : i32 to vector<1x128xi32>
    %46 = arith.cmpi slt, %0, %45 : vector<1x128xi32>
    %47 = arith.andi %44, %46 : vector<1x128xi1>
    %48 = arith.extui %47 : vector<1x128xi1> to vector<1x128xi32>
    %49 = arith.sitofp %48 : vector<1x128xi32> to vector<1x128xf32>
    %c112_i32_6 = arith.constant 112 : i32
    %50 = vector.broadcast %c112_i32_6 : i32 to vector<1x128xi32>
    %51 = arith.cmpi sge, %0, %50 : vector<1x128xi32>
    %c128_i32 = arith.constant 128 : i32
    %52 = vector.broadcast %c128_i32 : i32 to vector<1x128xi32>
    %53 = arith.cmpi slt, %0, %52 : vector<1x128xi32>
    %54 = arith.andi %51, %53 : vector<1x128xi1>
    %55 = arith.extui %54 : vector<1x128xi1> to vector<1x128xi32>
    %56 = arith.sitofp %55 : vector<1x128xi32> to vector<1x128xf32>
    %c0 = arith.constant 0 : index
    %c0_7 = arith.constant 0 : index
    %c0_8 = arith.constant 0 : index
    %c0_9 = arith.constant 0 : index
    %57 = vector.load %arg1[%c0, %c0_7, %c0_8, %c0_9] : memref<1x2x8x16xf32, #tpu.memory_space<vmem>>, vector<1x2x8x16xf32>
    %58 = vector.shape_cast %57 : vector<1x2x8x16xf32> to vector<2x8x16xf32>
    %59 = vector.shape_cast %58 : vector<2x8x16xf32> to vector<16x16xf32>
    %c0_10 = arith.constant 0 : index
    %c0_11 = arith.constant 0 : index
    %c0_12 = arith.constant 0 : index
    %60 = vector.load %arg3[%c0_10, %c0_11, %c0_12] : memref<1x16x128xbf16, #tpu.memory_space<vmem>>, vector<1x16x128xbf16>
    %61 = vector.shape_cast %60 : vector<1x16x128xbf16> to vector<16x128xbf16>
    %62 = arith.truncf %59 : vector<16x16xf32> to vector<16x16xbf16>
    %cst = arith.constant dense<0.000000e+00> : vector<16x128xf32>
    %63 = tpu.matmul %62, %61, %cst {dimension_numbers = #tpu.dot_dimension_numbers<[1], [0], [0], [1], [0, 0, 1, 1], [], []>} : vector<16x16xbf16>, vector<16x128xbf16>, vector<16x128xf32> -> vector<16x128xf32>
    %c0_13 = arith.constant 0 : index
    %c0_14 = arith.constant 0 : index
    %c0_15 = arith.constant 0 : index
    %64 = vector.load %arg4[%c0_13, %c0_14, %c0_15] : memref<1x1x128xf32, #tpu.memory_space<vmem>>, vector<1x1x128xf32>
    %65 = vector.shape_cast %64 : vector<1x1x128xf32> to vector<1x128xf32>
    %66 = vector.broadcast %65 : vector<1x128xf32> to vector<16x128xf32>
    %67 = arith.addf %63, %66 : vector<16x128xf32>
    %c0_16 = arith.constant 0 : index
    %c0_17 = arith.constant 0 : index
    %c0_18 = arith.constant 0 : index
    %68 = vector.load %arg2[%c0_16, %c0_17, %c0_18] : memref<1x8x128xf32, #tpu.memory_space<vmem>>, vector<1x8x128xf32>
    %69 = vector.shape_cast %68 : vector<1x8x128xf32> to vector<8x128xf32>
    %70 = tpu.concatenate %69, %69 in 0 : vector<8x128xf32>, vector<8x128xf32> -> vector<16x128xf32>
    %71 = arith.addf %67, %70 : vector<16x128xf32>
    %c0_19 = arith.constant 0 : index
    %c0_20 = arith.constant 0 : index
    %c0_21 = arith.constant 0 : index
    %c0_22 = arith.constant 0 : index
    %72 = vector.load %arg5[%c0_19, %c0_20, %c0_21, %c0_22] : memref<1x2x128x384xbf16, #tpu.memory_space<vmem>>, vector<1x1x128x384xbf16>
    %73 = vector.shape_cast %72 : vector<1x1x128x384xbf16> to vector<128x384xbf16>
    %74 = arith.truncf %71 : vector<16x128xf32> to vector<16x128xbf16>
    %cst_23 = arith.constant dense<0.000000e+00> : vector<16x384xf32>
    %75 = tpu.matmul %74, %73, %cst_23 {dimension_numbers = #tpu.dot_dimension_numbers<[1], [0], [0], [1], [0, 0, 1, 1], [], []>} : vector<16x128xbf16>, vector<128x384xbf16>, vector<16x384xf32> -> vector<16x384xf32>
    %c0_24 = arith.constant 0 : index
    %c0_25 = arith.constant 0 : index
    %c0_26 = arith.constant 0 : index
    %c0_27 = arith.constant 0 : index
    %76 = vector.load %arg6[%c0_24, %c0_25, %c0_26, %c0_27] : memref<1x2x1x384xf32, #tpu.memory_space<vmem>>, vector<1x1x1x384xf32>
    %77 = vector.shape_cast %76 : vector<1x1x1x384xf32> to vector<1x384xf32>
    %78 = vector.broadcast %77 : vector<1x384xf32> to vector<16x384xf32>
    %79 = arith.addf %75, %78 : vector<16x384xf32>
    %80 = vector.extract_strided_slice %79 {offsets = [0, 0], sizes = [16, 128], strides = [1, 1]} : vector<16x384xf32> to vector<16x128xf32>
    %81 = vector.extract_strided_slice %79 {offsets = [0, 128], sizes = [16, 128], strides = [1, 1]} : vector<16x384xf32> to vector<16x128xf32>
    %82 = vector.extract_strided_slice %79 {offsets = [0, 256], sizes = [16, 128], strides = [1, 1]} : vector<16x384xf32> to vector<16x128xf32>
    %83 = vector.extract_strided_slice %80 {offsets = [0, 0], sizes = [8, 128], strides = [1, 1]} : vector<16x128xf32> to vector<8x128xf32>
    %84 = vector.extract_strided_slice %81 {offsets = [0, 0], sizes = [8, 128], strides = [1, 1]} : vector<16x128xf32> to vector<8x128xf32>
    %85 = vector.extract_strided_slice %82 {offsets = [0, 0], sizes = [8, 128], strides = [1, 1]} : vector<16x128xf32> to vector<8x128xf32>
    %cst_28 = arith.constant 0.000000e+00 : f32
    %86 = vector.broadcast %cst_28 : f32 to vector<8x128xf32>
    %87 = vector.broadcast %7 : vector<1x128xf32> to vector<8x128xf32>
    %88 = arith.mulf %83, %87 : vector<8x128xf32>
    %cst_29 = arith.constant dense<0.000000e+00> : vector<8x8xf32>
    %89 = tpu.matmul %88, %84, %cst_29 {dimension_numbers = #tpu.dot_dimension_numbers<[1], [1], [0], [0], [0, 0, 1, 0], [], []>} : vector<8x128xf32>, vector<8x128xf32>, vector<8x8xf32> -> vector<8x8xf32>
    %cst_30 = arith.constant 2.500000e-01 : f32
    %90 = vector.broadcast %cst_30 : f32 to vector<8x8xf32>
    %91 = arith.mulf %89, %90 : vector<8x8xf32>
    %cst_31 = arith.constant dense<0xFF800000> : vector<8xf32>
    %92 = vector.multi_reduction <maximumf>, %91, %cst_31 [1] : vector<8x8xf32> to vector<8xf32>
    %93 = vector.shape_cast %92 : vector<8xf32> to vector<8x1xf32>
    %94 = vector.broadcast %93 : vector<8x1xf32> to vector<8x8xf32>
    %95 = arith.subf %91, %94 : vector<8x8xf32>
    %96 = math.exp %95 : vector<8x8xf32>
    %cst_32 = arith.constant dense<0.000000e+00> : vector<8xf32>
    %97 = vector.multi_reduction <add>, %96, %cst_32 [1] : vector<8x8xf32> to vector<8xf32>
    %98 = vector.shape_cast %97 : vector<8xf32> to vector<8x1xf32>
    %99 = tpu.reciprocal %98 {approx = true} : vector<8x1xf32> -> vector<8x1xf32>
    %100 = vector.broadcast %99 : vector<8x1xf32> to vector<8x8xf32>
    %101 = arith.mulf %96, %100 : vector<8x8xf32>
    %102 = vector.broadcast %7 : vector<1x128xf32> to vector<8x128xf32>
    %103 = arith.mulf %85, %102 : vector<8x128xf32>
    %cst_33 = arith.constant dense<0.000000e+00> : vector<8x128xf32>
    %104 = tpu.matmul %101, %103, %cst_33 {dimension_numbers = #tpu.dot_dimension_numbers<[1], [0], [0], [1], [0, 0, 1, 1], [], []>} : vector<8x8xf32>, vector<8x128xf32>, vector<8x128xf32> -> vector<8x128xf32>
    %105 = arith.addf %86, %104 : vector<8x128xf32>
    %106 = vector.broadcast %14 : vector<1x128xf32> to vector<8x128xf32>
    %107 = arith.mulf %83, %106 : vector<8x128xf32>
    %cst_34 = arith.constant dense<0.000000e+00> : vector<8x8xf32>
    %108 = tpu.matmul %107, %84, %cst_34 {dimension_numbers = #tpu.dot_dimension_numbers<[1], [1], [0], [0], [0, 0, 1, 0], [], []>} : vector<8x128xf32>, vector<8x128xf32>, vector<8x8xf32> -> vector<8x8xf32>
    %cst_35 = arith.constant 2.500000e-01 : f32
    %109 = vector.broadcast %cst_35 : f32 to vector<8x8xf32>
    %110 = arith.mulf %108, %109 : vector<8x8xf32>
    %cst_36 = arith.constant dense<0xFF800000> : vector<8xf32>
    %111 = vector.multi_reduction <maximumf>, %110, %cst_36 [1] : vector<8x8xf32> to vector<8xf32>
    %112 = vector.shape_cast %111 : vector<8xf32> to vector<8x1xf32>
    %113 = vector.broadcast %112 : vector<8x1xf32> to vector<8x8xf32>
    %114 = arith.subf %110, %113 : vector<8x8xf32>
    %115 = math.exp %114 : vector<8x8xf32>
    %cst_37 = arith.constant dense<0.000000e+00> : vector<8xf32>
    %116 = vector.multi_reduction <add>, %115, %cst_37 [1] : vector<8x8xf32> to vector<8xf32>
    %117 = vector.shape_cast %116 : vector<8xf32> to vector<8x1xf32>
    %118 = tpu.reciprocal %117 {approx = true} : vector<8x1xf32> -> vector<8x1xf32>
    %119 = vector.broadcast %118 : vector<8x1xf32> to vector<8x8xf32>
    %120 = arith.mulf %115, %119 : vector<8x8xf32>
    %121 = vector.broadcast %14 : vector<1x128xf32> to vector<8x128xf32>
    %122 = arith.mulf %85, %121 : vector<8x128xf32>
    %cst_38 = arith.constant dense<0.000000e+00> : vector<8x128xf32>
    %123 = tpu.matmul %120, %122, %cst_38 {dimension_numbers = #tpu.dot_dimension_numbers<[1], [0], [0], [1], [0, 0, 1, 1], [], []>} : vector<8x8xf32>, vector<8x128xf32>, vector<8x128xf32> -> vector<8x128xf32>
    %124 = arith.addf %105, %123 : vector<8x128xf32>
    %125 = vector.broadcast %21 : vector<1x128xf32> to vector<8x128xf32>
    %126 = arith.mulf %83, %125 : vector<8x128xf32>
    %cst_39 = arith.constant dense<0.000000e+00> : vector<8x8xf32>
    %127 = tpu.matmul %126, %84, %cst_39 {dimension_numbers = #tpu.dot_dimension_numbers<[1], [1], [0], [0], [0, 0, 1, 0], [], []>} : vector<8x128xf32>, vector<8x128xf32>, vector<8x8xf32> -> vector<8x8xf32>
    %cst_40 = arith.constant 2.500000e-01 : f32
    %128 = vector.broadcast %cst_40 : f32 to vector<8x8xf32>
    %129 = arith.mulf %127, %128 : vector<8x8xf32>
    %cst_41 = arith.constant dense<0xFF800000> : vector<8xf32>
    %130 = vector.multi_reduction <maximumf>, %129, %cst_41 [1] : vector<8x8xf32> to vector<8xf32>
    %131 = vector.shape_cast %130 : vector<8xf32> to vector<8x1xf32>
    %132 = vector.broadcast %131 : vector<8x1xf32> to vector<8x8xf32>
    %133 = arith.subf %129, %132 : vector<8x8xf32>
    %134 = math.exp %133 : vector<8x8xf32>
    %cst_42 = arith.constant dense<0.000000e+00> : vector<8xf32>
    %135 = vector.multi_reduction <add>, %134, %cst_42 [1] : vector<8x8xf32> to vector<8xf32>
    %136 = vector.shape_cast %135 : vector<8xf32> to vector<8x1xf32>
    %137 = tpu.reciprocal %136 {approx = true} : vector<8x1xf32> -> vector<8x1xf32>
    %138 = vector.broadcast %137 : vector<8x1xf32> to vector<8x8xf32>
    %139 = arith.mulf %134, %138 : vector<8x8xf32>
    %140 = vector.broadcast %21 : vector<1x128xf32> to vector<8x128xf32>
    %141 = arith.mulf %85, %140 : vector<8x128xf32>
    %cst_43 = arith.constant dense<0.000000e+00> : vector<8x128xf32>
    %142 = tpu.matmul %139, %141, %cst_43 {dimension_numbers = #tpu.dot_dimension_numbers<[1], [0], [0], [1], [0, 0, 1, 1], [], []>} : vector<8x8xf32>, vector<8x128xf32>, vector<8x128xf32> -> vector<8x128xf32>
    %143 = arith.addf %124, %142 : vector<8x128xf32>
    %144 = vector.broadcast %28 : vector<1x128xf32> to vector<8x128xf32>
    %145 = arith.mulf %83, %144 : vector<8x128xf32>
    %cst_44 = arith.constant dense<0.000000e+00> : vector<8x8xf32>
    %146 = tpu.matmul %145, %84, %cst_44 {dimension_numbers = #tpu.dot_dimension_numbers<[1], [1], [0], [0], [0, 0, 1, 0], [], []>} : vector<8x128xf32>, vector<8x128xf32>, vector<8x8xf32> -> vector<8x8xf32>
    %cst_45 = arith.constant 2.500000e-01 : f32
    %147 = vector.broadcast %cst_45 : f32 to vector<8x8xf32>
    %148 = arith.mulf %146, %147 : vector<8x8xf32>
    %cst_46 = arith.constant dense<0xFF800000> : vector<8xf32>
    %149 = vector.multi_reduction <maximumf>, %148, %cst_46 [1] : vector<8x8xf32> to vector<8xf32>
    %150 = vector.shape_cast %149 : vector<8xf32> to vector<8x1xf32>
    %151 = vector.broadcast %150 : vector<8x1xf32> to vector<8x8xf32>
    %152 = arith.subf %148, %151 : vector<8x8xf32>
    %153 = math.exp %152 : vector<8x8xf32>
    %cst_47 = arith.constant dense<0.000000e+00> : vector<8xf32>
    %154 = vector.multi_reduction <add>, %153, %cst_47 [1] : vector<8x8xf32> to vector<8xf32>
    %155 = vector.shape_cast %154 : vector<8xf32> to vector<8x1xf32>
    %156 = tpu.reciprocal %155 {approx = true} : vector<8x1xf32> -> vector<8x1xf32>
    %157 = vector.broadcast %156 : vector<8x1xf32> to vector<8x8xf32>
    %158 = arith.mulf %153, %157 : vector<8x8xf32>
    %159 = vector.broadcast %28 : vector<1x128xf32> to vector<8x128xf32>
    %160 = arith.mulf %85, %159 : vector<8x128xf32>
    %cst_48 = arith.constant dense<0.000000e+00> : vector<8x128xf32>
    %161 = tpu.matmul %158, %160, %cst_48 {dimension_numbers = #tpu.dot_dimension_numbers<[1], [0], [0], [1], [0, 0, 1, 1], [], []>} : vector<8x8xf32>, vector<8x128xf32>, vector<8x128xf32> -> vector<8x128xf32>
    %162 = arith.addf %143, %161 : vector<8x128xf32>
    %163 = vector.broadcast %35 : vector<1x128xf32> to vector<8x128xf32>
    %164 = arith.mulf %83, %163 : vector<8x128xf32>
    %cst_49 = arith.constant dense<0.000000e+00> : vector<8x8xf32>
    %165 = tpu.matmul %164, %84, %cst_49 {dimension_numbers = #tpu.dot_dimension_numbers<[1], [1], [0], [0], [0, 0, 1, 0], [], []>} : vector<8x128xf32>, vector<8x128xf32>, vector<8x8xf32> -> vector<8x8xf32>
    %cst_50 = arith.constant 2.500000e-01 : f32
    %166 = vector.broadcast %cst_50 : f32 to vector<8x8xf32>
    %167 = arith.mulf %165, %166 : vector<8x8xf32>
    %cst_51 = arith.constant dense<0xFF800000> : vector<8xf32>
    %168 = vector.multi_reduction <maximumf>, %167, %cst_51 [1] : vector<8x8xf32> to vector<8xf32>
    %169 = vector.shape_cast %168 : vector<8xf32> to vector<8x1xf32>
    %170 = vector.broadcast %169 : vector<8x1xf32> to vector<8x8xf32>
    %171 = arith.subf %167, %170 : vector<8x8xf32>
    %172 = math.exp %171 : vector<8x8xf32>
    %cst_52 = arith.constant dense<0.000000e+00> : vector<8xf32>
    %173 = vector.multi_reduction <add>, %172, %cst_52 [1] : vector<8x8xf32> to vector<8xf32>
    %174 = vector.shape_cast %173 : vector<8xf32> to vector<8x1xf32>
    %175 = tpu.reciprocal %174 {approx = true} : vector<8x1xf32> -> vector<8x1xf32>
    %176 = vector.broadcast %175 : vector<8x1xf32> to vector<8x8xf32>
    %177 = arith.mulf %172, %176 : vector<8x8xf32>
    %178 = vector.broadcast %35 : vector<1x128xf32> to vector<8x128xf32>
    %179 = arith.mulf %85, %178 : vector<8x128xf32>
    %cst_53 = arith.constant dense<0.000000e+00> : vector<8x128xf32>
    %180 = tpu.matmul %177, %179, %cst_53 {dimension_numbers = #tpu.dot_dimension_numbers<[1], [0], [0], [1], [0, 0, 1, 1], [], []>} : vector<8x8xf32>, vector<8x128xf32>, vector<8x128xf32> -> vector<8x128xf32>
    %181 = arith.addf %162, %180 : vector<8x128xf32>
    %182 = vector.broadcast %42 : vector<1x128xf32> to vector<8x128xf32>
    %183 = arith.mulf %83, %182 : vector<8x128xf32>
    %cst_54 = arith.constant dense<0.000000e+00> : vector<8x8xf32>
    %184 = tpu.matmul %183, %84, %cst_54 {dimension_numbers = #tpu.dot_dimension_numbers<[1], [1], [0], [0], [0, 0, 1, 0], [], []>} : vector<8x128xf32>, vector<8x128xf32>, vector<8x8xf32> -> vector<8x8xf32>
    %cst_55 = arith.constant 2.500000e-01 : f32
    %185 = vector.broadcast %cst_55 : f32 to vector<8x8xf32>
    %186 = arith.mulf %184, %185 : vector<8x8xf32>
    %cst_56 = arith.constant dense<0xFF800000> : vector<8xf32>
    %187 = vector.multi_reduction <maximumf>, %186, %cst_56 [1] : vector<8x8xf32> to vector<8xf32>
    %188 = vector.shape_cast %187 : vector<8xf32> to vector<8x1xf32>
    %189 = vector.broadcast %188 : vector<8x1xf32> to vector<8x8xf32>
    %190 = arith.subf %186, %189 : vector<8x8xf32>
    %191 = math.exp %190 : vector<8x8xf32>
    %cst_57 = arith.constant dense<0.000000e+00> : vector<8xf32>
    %192 = vector.multi_reduction <add>, %191, %cst_57 [1] : vector<8x8xf32> to vector<8xf32>
    %193 = vector.shape_cast %192 : vector<8xf32> to vector<8x1xf32>
    %194 = tpu.reciprocal %193 {approx = true} : vector<8x1xf32> -> vector<8x1xf32>
    %195 = vector.broadcast %194 : vector<8x1xf32> to vector<8x8xf32>
    %196 = arith.mulf %191, %195 : vector<8x8xf32>
    %197 = vector.broadcast %42 : vector<1x128xf32> to vector<8x128xf32>
    %198 = arith.mulf %85, %197 : vector<8x128xf32>
    %cst_58 = arith.constant dense<0.000000e+00> : vector<8x128xf32>
    %199 = tpu.matmul %196, %198, %cst_58 {dimension_numbers = #tpu.dot_dimension_numbers<[1], [0], [0], [1], [0, 0, 1, 1], [], []>} : vector<8x8xf32>, vector<8x128xf32>, vector<8x128xf32> -> vector<8x128xf32>
    %200 = arith.addf %181, %199 : vector<8x128xf32>
    %201 = vector.broadcast %49 : vector<1x128xf32> to vector<8x128xf32>
    %202 = arith.mulf %83, %201 : vector<8x128xf32>
    %cst_59 = arith.constant dense<0.000000e+00> : vector<8x8xf32>
    %203 = tpu.matmul %202, %84, %cst_59 {dimension_numbers = #tpu.dot_dimension_numbers<[1], [1], [0], [0], [0, 0, 1, 0], [], []>} : vector<8x128xf32>, vector<8x128xf32>, vector<8x8xf32> -> vector<8x8xf32>
    %cst_60 = arith.constant 2.500000e-01 : f32
    %204 = vector.broadcast %cst_60 : f32 to vector<8x8xf32>
    %205 = arith.mulf %203, %204 : vector<8x8xf32>
    %cst_61 = arith.constant dense<0xFF800000> : vector<8xf32>
    %206 = vector.multi_reduction <maximumf>, %205, %cst_61 [1] : vector<8x8xf32> to vector<8xf32>
    %207 = vector.shape_cast %206 : vector<8xf32> to vector<8x1xf32>
    %208 = vector.broadcast %207 : vector<8x1xf32> to vector<8x8xf32>
    %209 = arith.subf %205, %208 : vector<8x8xf32>
    %210 = math.exp %209 : vector<8x8xf32>
    %cst_62 = arith.constant dense<0.000000e+00> : vector<8xf32>
    %211 = vector.multi_reduction <add>, %210, %cst_62 [1] : vector<8x8xf32> to vector<8xf32>
    %212 = vector.shape_cast %211 : vector<8xf32> to vector<8x1xf32>
    %213 = tpu.reciprocal %212 {approx = true} : vector<8x1xf32> -> vector<8x1xf32>
    %214 = vector.broadcast %213 : vector<8x1xf32> to vector<8x8xf32>
    %215 = arith.mulf %210, %214 : vector<8x8xf32>
    %216 = vector.broadcast %49 : vector<1x128xf32> to vector<8x128xf32>
    %217 = arith.mulf %85, %216 : vector<8x128xf32>
    %cst_63 = arith.constant dense<0.000000e+00> : vector<8x128xf32>
    %218 = tpu.matmul %215, %217, %cst_63 {dimension_numbers = #tpu.dot_dimension_numbers<[1], [0], [0], [1], [0, 0, 1, 1], [], []>} : vector<8x8xf32>, vector<8x128xf32>, vector<8x128xf32> -> vector<8x128xf32>
    %219 = arith.addf %200, %218 : vector<8x128xf32>
    %220 = vector.broadcast %56 : vector<1x128xf32> to vector<8x128xf32>
    %221 = arith.mulf %83, %220 : vector<8x128xf32>
    %cst_64 = arith.constant dense<0.000000e+00> : vector<8x8xf32>
    %222 = tpu.matmul %221, %84, %cst_64 {dimension_numbers = #tpu.dot_dimension_numbers<[1], [1], [0], [0], [0, 0, 1, 0], [], []>} : vector<8x128xf32>, vector<8x128xf32>, vector<8x8xf32> -> vector<8x8xf32>
    %cst_65 = arith.constant 2.500000e-01 : f32
    %223 = vector.broadcast %cst_65 : f32 to vector<8x8xf32>
    %224 = arith.mulf %222, %223 : vector<8x8xf32>
    %cst_66 = arith.constant dense<0xFF800000> : vector<8xf32>
    %225 = vector.multi_reduction <maximumf>, %224, %cst_66 [1] : vector<8x8xf32> to vector<8xf32>
    %226 = vector.shape_cast %225 : vector<8xf32> to vector<8x1xf32>
    %227 = vector.broadcast %226 : vector<8x1xf32> to vector<8x8xf32>
    %228 = arith.subf %224, %227 : vector<8x8xf32>
    %229 = math.exp %228 : vector<8x8xf32>
    %cst_67 = arith.constant dense<0.000000e+00> : vector<8xf32>
    %230 = vector.multi_reduction <add>, %229, %cst_67 [1] : vector<8x8xf32> to vector<8xf32>
    %231 = vector.shape_cast %230 : vector<8xf32> to vector<8x1xf32>
    %232 = tpu.reciprocal %231 {approx = true} : vector<8x1xf32> -> vector<8x1xf32>
    %233 = vector.broadcast %232 : vector<8x1xf32> to vector<8x8xf32>
    %234 = arith.mulf %229, %233 : vector<8x8xf32>
    %235 = vector.broadcast %56 : vector<1x128xf32> to vector<8x128xf32>
    %236 = arith.mulf %85, %235 : vector<8x128xf32>
    %cst_68 = arith.constant dense<0.000000e+00> : vector<8x128xf32>
    %237 = tpu.matmul %234, %236, %cst_68 {dimension_numbers = #tpu.dot_dimension_numbers<[1], [0], [0], [1], [0, 0, 1, 1], [], []>} : vector<8x8xf32>, vector<8x128xf32>, vector<8x128xf32> -> vector<8x128xf32>
    %238 = arith.addf %219, %237 : vector<8x128xf32>
    %239 = vector.extract_strided_slice %80 {offsets = [8, 0], sizes = [8, 128], strides = [1, 1]} : vector<16x128xf32> to vector<8x128xf32>
    %240 = vector.extract_strided_slice %81 {offsets = [8, 0], sizes = [8, 128], strides = [1, 1]} : vector<16x128xf32> to vector<8x128xf32>
    %241 = vector.extract_strided_slice %82 {offsets = [8, 0], sizes = [8, 128], strides = [1, 1]} : vector<16x128xf32> to vector<8x128xf32>
    %cst_69 = arith.constant 0.000000e+00 : f32
    %242 = vector.broadcast %cst_69 : f32 to vector<8x128xf32>
    %243 = vector.broadcast %7 : vector<1x128xf32> to vector<8x128xf32>
    %244 = arith.mulf %239, %243 : vector<8x128xf32>
    %cst_70 = arith.constant dense<0.000000e+00> : vector<8x8xf32>
    %245 = tpu.matmul %244, %240, %cst_70 {dimension_numbers = #tpu.dot_dimension_numbers<[1], [1], [0], [0], [0, 0, 1, 0], [], []>} : vector<8x128xf32>, vector<8x128xf32>, vector<8x8xf32> -> vector<8x8xf32>
    %cst_71 = arith.constant 2.500000e-01 : f32
    %246 = vector.broadcast %cst_71 : f32 to vector<8x8xf32>
    %247 = arith.mulf %245, %246 : vector<8x8xf32>
    %cst_72 = arith.constant dense<0xFF800000> : vector<8xf32>
    %248 = vector.multi_reduction <maximumf>, %247, %cst_72 [1] : vector<8x8xf32> to vector<8xf32>
    %249 = vector.shape_cast %248 : vector<8xf32> to vector<8x1xf32>
    %250 = vector.broadcast %249 : vector<8x1xf32> to vector<8x8xf32>
    %251 = arith.subf %247, %250 : vector<8x8xf32>
    %252 = math.exp %251 : vector<8x8xf32>
    %cst_73 = arith.constant dense<0.000000e+00> : vector<8xf32>
    %253 = vector.multi_reduction <add>, %252, %cst_73 [1] : vector<8x8xf32> to vector<8xf32>
    %254 = vector.shape_cast %253 : vector<8xf32> to vector<8x1xf32>
    %255 = tpu.reciprocal %254 {approx = true} : vector<8x1xf32> -> vector<8x1xf32>
    %256 = vector.broadcast %255 : vector<8x1xf32> to vector<8x8xf32>
    %257 = arith.mulf %252, %256 : vector<8x8xf32>
    %258 = vector.broadcast %7 : vector<1x128xf32> to vector<8x128xf32>
    %259 = arith.mulf %241, %258 : vector<8x128xf32>
    %cst_74 = arith.constant dense<0.000000e+00> : vector<8x128xf32>
    %260 = tpu.matmul %257, %259, %cst_74 {dimension_numbers = #tpu.dot_dimension_numbers<[1], [0], [0], [1], [0, 0, 1, 1], [], []>} : vector<8x8xf32>, vector<8x128xf32>, vector<8x128xf32> -> vector<8x128xf32>
    %261 = arith.addf %242, %260 : vector<8x128xf32>
    %262 = vector.broadcast %14 : vector<1x128xf32> to vector<8x128xf32>
    %263 = arith.mulf %239, %262 : vector<8x128xf32>
    %cst_75 = arith.constant dense<0.000000e+00> : vector<8x8xf32>
    %264 = tpu.matmul %263, %240, %cst_75 {dimension_numbers = #tpu.dot_dimension_numbers<[1], [1], [0], [0], [0, 0, 1, 0], [], []>} : vector<8x128xf32>, vector<8x128xf32>, vector<8x8xf32> -> vector<8x8xf32>
    %cst_76 = arith.constant 2.500000e-01 : f32
    %265 = vector.broadcast %cst_76 : f32 to vector<8x8xf32>
    %266 = arith.mulf %264, %265 : vector<8x8xf32>
    %cst_77 = arith.constant dense<0xFF800000> : vector<8xf32>
    %267 = vector.multi_reduction <maximumf>, %266, %cst_77 [1] : vector<8x8xf32> to vector<8xf32>
    %268 = vector.shape_cast %267 : vector<8xf32> to vector<8x1xf32>
    %269 = vector.broadcast %268 : vector<8x1xf32> to vector<8x8xf32>
    %270 = arith.subf %266, %269 : vector<8x8xf32>
    %271 = math.exp %270 : vector<8x8xf32>
    %cst_78 = arith.constant dense<0.000000e+00> : vector<8xf32>
    %272 = vector.multi_reduction <add>, %271, %cst_78 [1] : vector<8x8xf32> to vector<8xf32>
    %273 = vector.shape_cast %272 : vector<8xf32> to vector<8x1xf32>
    %274 = tpu.reciprocal %273 {approx = true} : vector<8x1xf32> -> vector<8x1xf32>
    %275 = vector.broadcast %274 : vector<8x1xf32> to vector<8x8xf32>
    %276 = arith.mulf %271, %275 : vector<8x8xf32>
    %277 = vector.broadcast %14 : vector<1x128xf32> to vector<8x128xf32>
    %278 = arith.mulf %241, %277 : vector<8x128xf32>
    %cst_79 = arith.constant dense<0.000000e+00> : vector<8x128xf32>
    %279 = tpu.matmul %276, %278, %cst_79 {dimension_numbers = #tpu.dot_dimension_numbers<[1], [0], [0], [1], [0, 0, 1, 1], [], []>} : vector<8x8xf32>, vector<8x128xf32>, vector<8x128xf32> -> vector<8x128xf32>
    %280 = arith.addf %261, %279 : vector<8x128xf32>
    %281 = vector.broadcast %21 : vector<1x128xf32> to vector<8x128xf32>
    %282 = arith.mulf %239, %281 : vector<8x128xf32>
    %cst_80 = arith.constant dense<0.000000e+00> : vector<8x8xf32>
    %283 = tpu.matmul %282, %240, %cst_80 {dimension_numbers = #tpu.dot_dimension_numbers<[1], [1], [0], [0], [0, 0, 1, 0], [], []>} : vector<8x128xf32>, vector<8x128xf32>, vector<8x8xf32> -> vector<8x8xf32>
    %cst_81 = arith.constant 2.500000e-01 : f32
    %284 = vector.broadcast %cst_81 : f32 to vector<8x8xf32>
    %285 = arith.mulf %283, %284 : vector<8x8xf32>
    %cst_82 = arith.constant dense<0xFF800000> : vector<8xf32>
    %286 = vector.multi_reduction <maximumf>, %285, %cst_82 [1] : vector<8x8xf32> to vector<8xf32>
    %287 = vector.shape_cast %286 : vector<8xf32> to vector<8x1xf32>
    %288 = vector.broadcast %287 : vector<8x1xf32> to vector<8x8xf32>
    %289 = arith.subf %285, %288 : vector<8x8xf32>
    %290 = math.exp %289 : vector<8x8xf32>
    %cst_83 = arith.constant dense<0.000000e+00> : vector<8xf32>
    %291 = vector.multi_reduction <add>, %290, %cst_83 [1] : vector<8x8xf32> to vector<8xf32>
    %292 = vector.shape_cast %291 : vector<8xf32> to vector<8x1xf32>
    %293 = tpu.reciprocal %292 {approx = true} : vector<8x1xf32> -> vector<8x1xf32>
    %294 = vector.broadcast %293 : vector<8x1xf32> to vector<8x8xf32>
    %295 = arith.mulf %290, %294 : vector<8x8xf32>
    %296 = vector.broadcast %21 : vector<1x128xf32> to vector<8x128xf32>
    %297 = arith.mulf %241, %296 : vector<8x128xf32>
    %cst_84 = arith.constant dense<0.000000e+00> : vector<8x128xf32>
    %298 = tpu.matmul %295, %297, %cst_84 {dimension_numbers = #tpu.dot_dimension_numbers<[1], [0], [0], [1], [0, 0, 1, 1], [], []>} : vector<8x8xf32>, vector<8x128xf32>, vector<8x128xf32> -> vector<8x128xf32>
    %299 = arith.addf %280, %298 : vector<8x128xf32>
    %300 = vector.broadcast %28 : vector<1x128xf32> to vector<8x128xf32>
    %301 = arith.mulf %239, %300 : vector<8x128xf32>
    %cst_85 = arith.constant dense<0.000000e+00> : vector<8x8xf32>
    %302 = tpu.matmul %301, %240, %cst_85 {dimension_numbers = #tpu.dot_dimension_numbers<[1], [1], [0], [0], [0, 0, 1, 0], [], []>} : vector<8x128xf32>, vector<8x128xf32>, vector<8x8xf32> -> vector<8x8xf32>
    %cst_86 = arith.constant 2.500000e-01 : f32
    %303 = vector.broadcast %cst_86 : f32 to vector<8x8xf32>
    %304 = arith.mulf %302, %303 : vector<8x8xf32>
    %cst_87 = arith.constant dense<0xFF800000> : vector<8xf32>
    %305 = vector.multi_reduction <maximumf>, %304, %cst_87 [1] : vector<8x8xf32> to vector<8xf32>
    %306 = vector.shape_cast %305 : vector<8xf32> to vector<8x1xf32>
    %307 = vector.broadcast %306 : vector<8x1xf32> to vector<8x8xf32>
    %308 = arith.subf %304, %307 : vector<8x8xf32>
    %309 = math.exp %308 : vector<8x8xf32>
    %cst_88 = arith.constant dense<0.000000e+00> : vector<8xf32>
    %310 = vector.multi_reduction <add>, %309, %cst_88 [1] : vector<8x8xf32> to vector<8xf32>
    %311 = vector.shape_cast %310 : vector<8xf32> to vector<8x1xf32>
    %312 = tpu.reciprocal %311 {approx = true} : vector<8x1xf32> -> vector<8x1xf32>
    %313 = vector.broadcast %312 : vector<8x1xf32> to vector<8x8xf32>
    %314 = arith.mulf %309, %313 : vector<8x8xf32>
    %315 = vector.broadcast %28 : vector<1x128xf32> to vector<8x128xf32>
    %316 = arith.mulf %241, %315 : vector<8x128xf32>
    %cst_89 = arith.constant dense<0.000000e+00> : vector<8x128xf32>
    %317 = tpu.matmul %314, %316, %cst_89 {dimension_numbers = #tpu.dot_dimension_numbers<[1], [0], [0], [1], [0, 0, 1, 1], [], []>} : vector<8x8xf32>, vector<8x128xf32>, vector<8x128xf32> -> vector<8x128xf32>
    %318 = arith.addf %299, %317 : vector<8x128xf32>
    %319 = vector.broadcast %35 : vector<1x128xf32> to vector<8x128xf32>
    %320 = arith.mulf %239, %319 : vector<8x128xf32>
    %cst_90 = arith.constant dense<0.000000e+00> : vector<8x8xf32>
    %321 = tpu.matmul %320, %240, %cst_90 {dimension_numbers = #tpu.dot_dimension_numbers<[1], [1], [0], [0], [0, 0, 1, 0], [], []>} : vector<8x128xf32>, vector<8x128xf32>, vector<8x8xf32> -> vector<8x8xf32>
    %cst_91 = arith.constant 2.500000e-01 : f32
    %322 = vector.broadcast %cst_91 : f32 to vector<8x8xf32>
    %323 = arith.mulf %321, %322 : vector<8x8xf32>
    %cst_92 = arith.constant dense<0xFF800000> : vector<8xf32>
    %324 = vector.multi_reduction <maximumf>, %323, %cst_92 [1] : vector<8x8xf32> to vector<8xf32>
    %325 = vector.shape_cast %324 : vector<8xf32> to vector<8x1xf32>
    %326 = vector.broadcast %325 : vector<8x1xf32> to vector<8x8xf32>
    %327 = arith.subf %323, %326 : vector<8x8xf32>
    %328 = math.exp %327 : vector<8x8xf32>
    %cst_93 = arith.constant dense<0.000000e+00> : vector<8xf32>
    %329 = vector.multi_reduction <add>, %328, %cst_93 [1] : vector<8x8xf32> to vector<8xf32>
    %330 = vector.shape_cast %329 : vector<8xf32> to vector<8x1xf32>
    %331 = tpu.reciprocal %330 {approx = true} : vector<8x1xf32> -> vector<8x1xf32>
    %332 = vector.broadcast %331 : vector<8x1xf32> to vector<8x8xf32>
    %333 = arith.mulf %328, %332 : vector<8x8xf32>
    %334 = vector.broadcast %35 : vector<1x128xf32> to vector<8x128xf32>
    %335 = arith.mulf %241, %334 : vector<8x128xf32>
    %cst_94 = arith.constant dense<0.000000e+00> : vector<8x128xf32>
    %336 = tpu.matmul %333, %335, %cst_94 {dimension_numbers = #tpu.dot_dimension_numbers<[1], [0], [0], [1], [0, 0, 1, 1], [], []>} : vector<8x8xf32>, vector<8x128xf32>, vector<8x128xf32> -> vector<8x128xf32>
    %337 = arith.addf %318, %336 : vector<8x128xf32>
    %338 = vector.broadcast %42 : vector<1x128xf32> to vector<8x128xf32>
    %339 = arith.mulf %239, %338 : vector<8x128xf32>
    %cst_95 = arith.constant dense<0.000000e+00> : vector<8x8xf32>
    %340 = tpu.matmul %339, %240, %cst_95 {dimension_numbers = #tpu.dot_dimension_numbers<[1], [1], [0], [0], [0, 0, 1, 0], [], []>} : vector<8x128xf32>, vector<8x128xf32>, vector<8x8xf32> -> vector<8x8xf32>
    %cst_96 = arith.constant 2.500000e-01 : f32
    %341 = vector.broadcast %cst_96 : f32 to vector<8x8xf32>
    %342 = arith.mulf %340, %341 : vector<8x8xf32>
    %cst_97 = arith.constant dense<0xFF800000> : vector<8xf32>
    %343 = vector.multi_reduction <maximumf>, %342, %cst_97 [1] : vector<8x8xf32> to vector<8xf32>
    %344 = vector.shape_cast %343 : vector<8xf32> to vector<8x1xf32>
    %345 = vector.broadcast %344 : vector<8x1xf32> to vector<8x8xf32>
    %346 = arith.subf %342, %345 : vector<8x8xf32>
    %347 = math.exp %346 : vector<8x8xf32>
    %cst_98 = arith.constant dense<0.000000e+00> : vector<8xf32>
    %348 = vector.multi_reduction <add>, %347, %cst_98 [1] : vector<8x8xf32> to vector<8xf32>
    %349 = vector.shape_cast %348 : vector<8xf32> to vector<8x1xf32>
    %350 = tpu.reciprocal %349 {approx = true} : vector<8x1xf32> -> vector<8x1xf32>
    %351 = vector.broadcast %350 : vector<8x1xf32> to vector<8x8xf32>
    %352 = arith.mulf %347, %351 : vector<8x8xf32>
    %353 = vector.broadcast %42 : vector<1x128xf32> to vector<8x128xf32>
    %354 = arith.mulf %241, %353 : vector<8x128xf32>
    %cst_99 = arith.constant dense<0.000000e+00> : vector<8x128xf32>
    %355 = tpu.matmul %352, %354, %cst_99 {dimension_numbers = #tpu.dot_dimension_numbers<[1], [0], [0], [1], [0, 0, 1, 1], [], []>} : vector<8x8xf32>, vector<8x128xf32>, vector<8x128xf32> -> vector<8x128xf32>
    %356 = arith.addf %337, %355 : vector<8x128xf32>
    %357 = vector.broadcast %49 : vector<1x128xf32> to vector<8x128xf32>
    %358 = arith.mulf %239, %357 : vector<8x128xf32>
    %cst_100 = arith.constant dense<0.000000e+00> : vector<8x8xf32>
    %359 = tpu.matmul %358, %240, %cst_100 {dimension_numbers = #tpu.dot_dimension_numbers<[1], [1], [0], [0], [0, 0, 1, 0], [], []>} : vector<8x128xf32>, vector<8x128xf32>, vector<8x8xf32> -> vector<8x8xf32>
    %cst_101 = arith.constant 2.500000e-01 : f32
    %360 = vector.broadcast %cst_101 : f32 to vector<8x8xf32>
    %361 = arith.mulf %359, %360 : vector<8x8xf32>
    %cst_102 = arith.constant dense<0xFF800000> : vector<8xf32>
    %362 = vector.multi_reduction <maximumf>, %361, %cst_102 [1] : vector<8x8xf32> to vector<8xf32>
    %363 = vector.shape_cast %362 : vector<8xf32> to vector<8x1xf32>
    %364 = vector.broadcast %363 : vector<8x1xf32> to vector<8x8xf32>
    %365 = arith.subf %361, %364 : vector<8x8xf32>
    %366 = math.exp %365 : vector<8x8xf32>
    %cst_103 = arith.constant dense<0.000000e+00> : vector<8xf32>
    %367 = vector.multi_reduction <add>, %366, %cst_103 [1] : vector<8x8xf32> to vector<8xf32>
    %368 = vector.shape_cast %367 : vector<8xf32> to vector<8x1xf32>
    %369 = tpu.reciprocal %368 {approx = true} : vector<8x1xf32> -> vector<8x1xf32>
    %370 = vector.broadcast %369 : vector<8x1xf32> to vector<8x8xf32>
    %371 = arith.mulf %366, %370 : vector<8x8xf32>
    %372 = vector.broadcast %49 : vector<1x128xf32> to vector<8x128xf32>
    %373 = arith.mulf %241, %372 : vector<8x128xf32>
    %cst_104 = arith.constant dense<0.000000e+00> : vector<8x128xf32>
    %374 = tpu.matmul %371, %373, %cst_104 {dimension_numbers = #tpu.dot_dimension_numbers<[1], [0], [0], [1], [0, 0, 1, 1], [], []>} : vector<8x8xf32>, vector<8x128xf32>, vector<8x128xf32> -> vector<8x128xf32>
    %375 = arith.addf %356, %374 : vector<8x128xf32>
    %376 = vector.broadcast %56 : vector<1x128xf32> to vector<8x128xf32>
    %377 = arith.mulf %239, %376 : vector<8x128xf32>
    %cst_105 = arith.constant dense<0.000000e+00> : vector<8x8xf32>
    %378 = tpu.matmul %377, %240, %cst_105 {dimension_numbers = #tpu.dot_dimension_numbers<[1], [1], [0], [0], [0, 0, 1, 0], [], []>} : vector<8x128xf32>, vector<8x128xf32>, vector<8x8xf32> -> vector<8x8xf32>
    %cst_106 = arith.constant 2.500000e-01 : f32
    %379 = vector.broadcast %cst_106 : f32 to vector<8x8xf32>
    %380 = arith.mulf %378, %379 : vector<8x8xf32>
    %cst_107 = arith.constant dense<0xFF800000> : vector<8xf32>
    %381 = vector.multi_reduction <maximumf>, %380, %cst_107 [1] : vector<8x8xf32> to vector<8xf32>
    %382 = vector.shape_cast %381 : vector<8xf32> to vector<8x1xf32>
    %383 = vector.broadcast %382 : vector<8x1xf32> to vector<8x8xf32>
    %384 = arith.subf %380, %383 : vector<8x8xf32>
    %385 = math.exp %384 : vector<8x8xf32>
    %cst_108 = arith.constant dense<0.000000e+00> : vector<8xf32>
    %386 = vector.multi_reduction <add>, %385, %cst_108 [1] : vector<8x8xf32> to vector<8xf32>
    %387 = vector.shape_cast %386 : vector<8xf32> to vector<8x1xf32>
    %388 = tpu.reciprocal %387 {approx = true} : vector<8x1xf32> -> vector<8x1xf32>
    %389 = vector.broadcast %388 : vector<8x1xf32> to vector<8x8xf32>
    %390 = arith.mulf %385, %389 : vector<8x8xf32>
    %391 = vector.broadcast %56 : vector<1x128xf32> to vector<8x128xf32>
    %392 = arith.mulf %241, %391 : vector<8x128xf32>
    %cst_109 = arith.constant dense<0.000000e+00> : vector<8x128xf32>
    %393 = tpu.matmul %390, %392, %cst_109 {dimension_numbers = #tpu.dot_dimension_numbers<[1], [0], [0], [1], [0, 0, 1, 1], [], []>} : vector<8x8xf32>, vector<8x128xf32>, vector<8x128xf32> -> vector<8x128xf32>
    %394 = arith.addf %375, %393 : vector<8x128xf32>
    %395 = tpu.concatenate %238, %394 in 0 : vector<8x128xf32>, vector<8x128xf32> -> vector<16x128xf32>
    %c0_110 = arith.constant 0 : index
    %c0_111 = arith.constant 0 : index
    %c0_112 = arith.constant 0 : index
    %c0_113 = arith.constant 0 : index
    %396 = vector.load %arg7[%c0_110, %c0_111, %c0_112, %c0_113] : memref<1x2x128x128xbf16, #tpu.memory_space<vmem>>, vector<1x1x128x128xbf16>
    %397 = vector.shape_cast %396 : vector<1x1x128x128xbf16> to vector<128x128xbf16>
    %398 = arith.truncf %395 : vector<16x128xf32> to vector<16x128xbf16>
    %cst_114 = arith.constant dense<0.000000e+00> : vector<16x128xf32>
    %399 = tpu.matmul %398, %397, %cst_114 {dimension_numbers = #tpu.dot_dimension_numbers<[1], [0], [0], [1], [0, 0, 1, 1], [], []>} : vector<16x128xbf16>, vector<128x128xbf16>, vector<16x128xf32> -> vector<16x128xf32>
    %c0_115 = arith.constant 0 : index
    %c0_116 = arith.constant 0 : index
    %c0_117 = arith.constant 0 : index
    %c0_118 = arith.constant 0 : index
    %400 = vector.load %arg8[%c0_115, %c0_116, %c0_117, %c0_118] : memref<1x2x1x128xf32, #tpu.memory_space<vmem>>, vector<1x1x1x128xf32>
    %401 = vector.shape_cast %400 : vector<1x1x1x128xf32> to vector<1x128xf32>
    %402 = vector.broadcast %401 : vector<1x128xf32> to vector<16x128xf32>
    %403 = arith.addf %399, %402 : vector<16x128xf32>
    %404 = arith.addf %71, %403 : vector<16x128xf32>
    %c0_119 = arith.constant 0 : index
    %c0_120 = arith.constant 0 : index
    %c0_121 = arith.constant 0 : index
    %c0_122 = arith.constant 0 : index
    %405 = vector.load %arg9[%c0_119, %c0_120, %c0_121, %c0_122] : memref<1x2x1x128xf32, #tpu.memory_space<vmem>>, vector<1x1x1x128xf32>
    %406 = vector.shape_cast %405 : vector<1x1x1x128xf32> to vector<1x128xf32>
    %c0_123 = arith.constant 0 : index
    %c0_124 = arith.constant 0 : index
    %c0_125 = arith.constant 0 : index
    %c0_126 = arith.constant 0 : index
    %407 = vector.load %arg10[%c0_123, %c0_124, %c0_125, %c0_126] : memref<1x2x1x128xf32, #tpu.memory_space<vmem>>, vector<1x1x1x128xf32>
    %408 = vector.shape_cast %407 : vector<1x1x1x128xf32> to vector<1x128xf32>
    %cst_127 = arith.constant dense<0.000000e+00> : vector<16xf32>
    %409 = vector.multi_reduction <add>, %404, %cst_127 [1] : vector<16x128xf32> to vector<16xf32>
    %410 = vector.shape_cast %409 : vector<16xf32> to vector<16x1xf32>
    %cst_128 = arith.constant 1.280000e+02 : f32
    %411 = vector.broadcast %cst_128 : f32 to vector<16x1xf32>
    %412 = arith.divf %410, %411 : vector<16x1xf32>
    %413 = vector.broadcast %412 : vector<16x1xf32> to vector<16x128xf32>
    %414 = arith.subf %404, %413 : vector<16x128xf32>
    %415 = arith.mulf %414, %414 : vector<16x128xf32>
    %cst_129 = arith.constant dense<0.000000e+00> : vector<16xf32>
    %416 = vector.multi_reduction <add>, %415, %cst_129 [1] : vector<16x128xf32> to vector<16xf32>
    %417 = vector.shape_cast %416 : vector<16xf32> to vector<16x1xf32>
    %cst_130 = arith.constant 1.280000e+02 : f32
    %418 = vector.broadcast %cst_130 : f32 to vector<16x1xf32>
    %419 = arith.divf %417, %418 : vector<16x1xf32>
    %420 = vector.broadcast %412 : vector<16x1xf32> to vector<16x128xf32>
    %421 = arith.subf %404, %420 : vector<16x128xf32>
    %cst_131 = arith.constant 9.99999974E-6 : f32
    %422 = vector.broadcast %cst_131 : f32 to vector<16x1xf32>
    %423 = arith.addf %419, %422 : vector<16x1xf32>
    %424 = math.rsqrt %423 : vector<16x1xf32>
    %425 = vector.broadcast %424 : vector<16x1xf32> to vector<16x128xf32>
    %426 = arith.mulf %421, %425 : vector<16x128xf32>
    %427 = vector.broadcast %406 : vector<1x128xf32> to vector<16x128xf32>
    %428 = arith.mulf %426, %427 : vector<16x128xf32>
    %429 = vector.broadcast %408 : vector<1x128xf32> to vector<16x128xf32>
    %430 = arith.addf %428, %429 : vector<16x128xf32>
    %c0_132 = arith.constant 0 : index
    %c0_133 = arith.constant 0 : index
    %c0_134 = arith.constant 0 : index
    %c0_135 = arith.constant 0 : index
    %431 = vector.load %arg11[%c0_132, %c0_133, %c0_134, %c0_135] : memref<1x2x128x512xbf16, #tpu.memory_space<vmem>>, vector<1x1x128x512xbf16>
    %432 = vector.shape_cast %431 : vector<1x1x128x512xbf16> to vector<128x512xbf16>
    %433 = arith.truncf %430 : vector<16x128xf32> to vector<16x128xbf16>
    %cst_136 = arith.constant dense<0.000000e+00> : vector<16x512xf32>
    %434 = tpu.matmul %433, %432, %cst_136 {dimension_numbers = #tpu.dot_dimension_numbers<[1], [0], [0], [1], [0, 0, 1, 1], [], []>} : vector<16x128xbf16>, vector<128x512xbf16>, vector<16x512xf32> -> vector<16x512xf32>
    %c0_137 = arith.constant 0 : index
    %c0_138 = arith.constant 0 : index
    %c0_139 = arith.constant 0 : index
    %c0_140 = arith.constant 0 : index
    %435 = vector.load %arg12[%c0_137, %c0_138, %c0_139, %c0_140] : memref<1x2x1x512xf32, #tpu.memory_space<vmem>>, vector<1x1x1x512xf32>
    %436 = vector.shape_cast %435 : vector<1x1x1x512xf32> to vector<1x512xf32>
    %437 = vector.broadcast %436 : vector<1x512xf32> to vector<16x512xf32>
    %438 = arith.addf %434, %437 : vector<16x512xf32>
    %cst_141 = arith.constant 0.000000e+00 : f32
    %439 = vector.broadcast %cst_141 : f32 to vector<16x512xf32>
    %440 = arith.maximumf %438, %439 : vector<16x512xf32>
    %c0_142 = arith.constant 0 : index
    %c0_143 = arith.constant 0 : index
    %c0_144 = arith.constant 0 : index
    %c0_145 = arith.constant 0 : index
    %441 = vector.load %arg13[%c0_142, %c0_143, %c0_144, %c0_145] : memref<1x2x512x128xbf16, #tpu.memory_space<vmem>>, vector<1x1x512x128xbf16>
    %442 = vector.shape_cast %441 : vector<1x1x512x128xbf16> to vector<512x128xbf16>
    %443 = arith.truncf %440 : vector<16x512xf32> to vector<16x512xbf16>
    %cst_146 = arith.constant dense<0.000000e+00> : vector<16x128xf32>
    %444 = tpu.matmul %443, %442, %cst_146 {dimension_numbers = #tpu.dot_dimension_numbers<[1], [0], [0], [1], [0, 0, 1, 1], [], []>} : vector<16x512xbf16>, vector<512x128xbf16>, vector<16x128xf32> -> vector<16x128xf32>
    %c0_147 = arith.constant 0 : index
    %c0_148 = arith.constant 0 : index
    %c0_149 = arith.constant 0 : index
    %c0_150 = arith.constant 0 : index
    %445 = vector.load %arg14[%c0_147, %c0_148, %c0_149, %c0_150] : memref<1x2x1x128xf32, #tpu.memory_space<vmem>>, vector<1x1x1x128xf32>
    %446 = vector.shape_cast %445 : vector<1x1x1x128xf32> to vector<1x128xf32>
    %447 = vector.broadcast %446 : vector<1x128xf32> to vector<16x128xf32>
    %448 = arith.addf %444, %447 : vector<16x128xf32>
    %449 = arith.addf %430, %448 : vector<16x128xf32>
    %c0_151 = arith.constant 0 : index
    %c0_152 = arith.constant 0 : index
    %c0_153 = arith.constant 0 : index
    %c0_154 = arith.constant 0 : index
    %450 = vector.load %arg15[%c0_151, %c0_152, %c0_153, %c0_154] : memref<1x2x1x128xf32, #tpu.memory_space<vmem>>, vector<1x1x1x128xf32>
    %451 = vector.shape_cast %450 : vector<1x1x1x128xf32> to vector<1x128xf32>
    %c0_155 = arith.constant 0 : index
    %c0_156 = arith.constant 0 : index
    %c0_157 = arith.constant 0 : index
    %c0_158 = arith.constant 0 : index
    %452 = vector.load %arg16[%c0_155, %c0_156, %c0_157, %c0_158] : memref<1x2x1x128xf32, #tpu.memory_space<vmem>>, vector<1x1x1x128xf32>
    %453 = vector.shape_cast %452 : vector<1x1x1x128xf32> to vector<1x128xf32>
    %cst_159 = arith.constant dense<0.000000e+00> : vector<16xf32>
    %454 = vector.multi_reduction <add>, %449, %cst_159 [1] : vector<16x128xf32> to vector<16xf32>
    %455 = vector.shape_cast %454 : vector<16xf32> to vector<16x1xf32>
    %cst_160 = arith.constant 1.280000e+02 : f32
    %456 = vector.broadcast %cst_160 : f32 to vector<16x1xf32>
    %457 = arith.divf %455, %456 : vector<16x1xf32>
    %458 = vector.broadcast %457 : vector<16x1xf32> to vector<16x128xf32>
    %459 = arith.subf %449, %458 : vector<16x128xf32>
    %460 = arith.mulf %459, %459 : vector<16x128xf32>
    %cst_161 = arith.constant dense<0.000000e+00> : vector<16xf32>
    %461 = vector.multi_reduction <add>, %460, %cst_161 [1] : vector<16x128xf32> to vector<16xf32>
    %462 = vector.shape_cast %461 : vector<16xf32> to vector<16x1xf32>
    %cst_162 = arith.constant 1.280000e+02 : f32
    %463 = vector.broadcast %cst_162 : f32 to vector<16x1xf32>
    %464 = arith.divf %462, %463 : vector<16x1xf32>
    %465 = vector.broadcast %457 : vector<16x1xf32> to vector<16x128xf32>
    %466 = arith.subf %449, %465 : vector<16x128xf32>
    %cst_163 = arith.constant 9.99999974E-6 : f32
    %467 = vector.broadcast %cst_163 : f32 to vector<16x1xf32>
    %468 = arith.addf %464, %467 : vector<16x1xf32>
    %469 = math.rsqrt %468 : vector<16x1xf32>
    %470 = vector.broadcast %469 : vector<16x1xf32> to vector<16x128xf32>
    %471 = arith.mulf %466, %470 : vector<16x128xf32>
    %472 = vector.broadcast %451 : vector<1x128xf32> to vector<16x128xf32>
    %473 = arith.mulf %471, %472 : vector<16x128xf32>
    %474 = vector.broadcast %453 : vector<1x128xf32> to vector<16x128xf32>
    %475 = arith.addf %473, %474 : vector<16x128xf32>
    %c0_164 = arith.constant 0 : index
    %c1 = arith.constant 1 : index
    %c0_165 = arith.constant 0 : index
    %c0_166 = arith.constant 0 : index
    %476 = vector.load %arg5[%c0_164, %c1, %c0_165, %c0_166] : memref<1x2x128x384xbf16, #tpu.memory_space<vmem>>, vector<1x1x128x384xbf16>
    %477 = vector.shape_cast %476 : vector<1x1x128x384xbf16> to vector<128x384xbf16>
    %478 = arith.truncf %475 : vector<16x128xf32> to vector<16x128xbf16>
    %cst_167 = arith.constant dense<0.000000e+00> : vector<16x384xf32>
    %479 = tpu.matmul %478, %477, %cst_167 {dimension_numbers = #tpu.dot_dimension_numbers<[1], [0], [0], [1], [0, 0, 1, 1], [], []>} : vector<16x128xbf16>, vector<128x384xbf16>, vector<16x384xf32> -> vector<16x384xf32>
    %c0_168 = arith.constant 0 : index
    %c1_169 = arith.constant 1 : index
    %c0_170 = arith.constant 0 : index
    %c0_171 = arith.constant 0 : index
    %480 = vector.load %arg6[%c0_168, %c1_169, %c0_170, %c0_171] : memref<1x2x1x384xf32, #tpu.memory_space<vmem>>, vector<1x1x1x384xf32>
    %481 = vector.shape_cast %480 : vector<1x1x1x384xf32> to vector<1x384xf32>
    %482 = vector.broadcast %481 : vector<1x384xf32> to vector<16x384xf32>
    %483 = arith.addf %479, %482 : vector<16x384xf32>
    %484 = vector.extract_strided_slice %483 {offsets = [0, 0], sizes = [16, 128], strides = [1, 1]} : vector<16x384xf32> to vector<16x128xf32>
    %485 = vector.extract_strided_slice %483 {offsets = [0, 128], sizes = [16, 128], strides = [1, 1]} : vector<16x384xf32> to vector<16x128xf32>
    %486 = vector.extract_strided_slice %483 {offsets = [0, 256], sizes = [16, 128], strides = [1, 1]} : vector<16x384xf32> to vector<16x128xf32>
    %487 = vector.extract_strided_slice %484 {offsets = [0, 0], sizes = [8, 128], strides = [1, 1]} : vector<16x128xf32> to vector<8x128xf32>
    %488 = vector.extract_strided_slice %485 {offsets = [0, 0], sizes = [8, 128], strides = [1, 1]} : vector<16x128xf32> to vector<8x128xf32>
    %489 = vector.extract_strided_slice %486 {offsets = [0, 0], sizes = [8, 128], strides = [1, 1]} : vector<16x128xf32> to vector<8x128xf32>
    %cst_172 = arith.constant 0.000000e+00 : f32
    %490 = vector.broadcast %cst_172 : f32 to vector<8x128xf32>
    %491 = vector.broadcast %7 : vector<1x128xf32> to vector<8x128xf32>
    %492 = arith.mulf %487, %491 : vector<8x128xf32>
    %cst_173 = arith.constant dense<0.000000e+00> : vector<8x8xf32>
    %493 = tpu.matmul %492, %488, %cst_173 {dimension_numbers = #tpu.dot_dimension_numbers<[1], [1], [0], [0], [0, 0, 1, 0], [], []>} : vector<8x128xf32>, vector<8x128xf32>, vector<8x8xf32> -> vector<8x8xf32>
    %cst_174 = arith.constant 2.500000e-01 : f32
    %494 = vector.broadcast %cst_174 : f32 to vector<8x8xf32>
    %495 = arith.mulf %493, %494 : vector<8x8xf32>
    %cst_175 = arith.constant dense<0xFF800000> : vector<8xf32>
    %496 = vector.multi_reduction <maximumf>, %495, %cst_175 [1] : vector<8x8xf32> to vector<8xf32>
    %497 = vector.shape_cast %496 : vector<8xf32> to vector<8x1xf32>
    %498 = vector.broadcast %497 : vector<8x1xf32> to vector<8x8xf32>
    %499 = arith.subf %495, %498 : vector<8x8xf32>
    %500 = math.exp %499 : vector<8x8xf32>
    %cst_176 = arith.constant dense<0.000000e+00> : vector<8xf32>
    %501 = vector.multi_reduction <add>, %500, %cst_176 [1] : vector<8x8xf32> to vector<8xf32>
    %502 = vector.shape_cast %501 : vector<8xf32> to vector<8x1xf32>
    %503 = tpu.reciprocal %502 {approx = true} : vector<8x1xf32> -> vector<8x1xf32>
    %504 = vector.broadcast %503 : vector<8x1xf32> to vector<8x8xf32>
    %505 = arith.mulf %500, %504 : vector<8x8xf32>
    %506 = vector.broadcast %7 : vector<1x128xf32> to vector<8x128xf32>
    %507 = arith.mulf %489, %506 : vector<8x128xf32>
    %cst_177 = arith.constant dense<0.000000e+00> : vector<8x128xf32>
    %508 = tpu.matmul %505, %507, %cst_177 {dimension_numbers = #tpu.dot_dimension_numbers<[1], [0], [0], [1], [0, 0, 1, 1], [], []>} : vector<8x8xf32>, vector<8x128xf32>, vector<8x128xf32> -> vector<8x128xf32>
    %509 = arith.addf %490, %508 : vector<8x128xf32>
    %510 = vector.broadcast %14 : vector<1x128xf32> to vector<8x128xf32>
    %511 = arith.mulf %487, %510 : vector<8x128xf32>
    %cst_178 = arith.constant dense<0.000000e+00> : vector<8x8xf32>
    %512 = tpu.matmul %511, %488, %cst_178 {dimension_numbers = #tpu.dot_dimension_numbers<[1], [1], [0], [0], [0, 0, 1, 0], [], []>} : vector<8x128xf32>, vector<8x128xf32>, vector<8x8xf32> -> vector<8x8xf32>
    %cst_179 = arith.constant 2.500000e-01 : f32
    %513 = vector.broadcast %cst_179 : f32 to vector<8x8xf32>
    %514 = arith.mulf %512, %513 : vector<8x8xf32>
    %cst_180 = arith.constant dense<0xFF800000> : vector<8xf32>
    %515 = vector.multi_reduction <maximumf>, %514, %cst_180 [1] : vector<8x8xf32> to vector<8xf32>
    %516 = vector.shape_cast %515 : vector<8xf32> to vector<8x1xf32>
    %517 = vector.broadcast %516 : vector<8x1xf32> to vector<8x8xf32>
    %518 = arith.subf %514, %517 : vector<8x8xf32>
    %519 = math.exp %518 : vector<8x8xf32>
    %cst_181 = arith.constant dense<0.000000e+00> : vector<8xf32>
    %520 = vector.multi_reduction <add>, %519, %cst_181 [1] : vector<8x8xf32> to vector<8xf32>
    %521 = vector.shape_cast %520 : vector<8xf32> to vector<8x1xf32>
    %522 = tpu.reciprocal %521 {approx = true} : vector<8x1xf32> -> vector<8x1xf32>
    %523 = vector.broadcast %522 : vector<8x1xf32> to vector<8x8xf32>
    %524 = arith.mulf %519, %523 : vector<8x8xf32>
    %525 = vector.broadcast %14 : vector<1x128xf32> to vector<8x128xf32>
    %526 = arith.mulf %489, %525 : vector<8x128xf32>
    %cst_182 = arith.constant dense<0.000000e+00> : vector<8x128xf32>
    %527 = tpu.matmul %524, %526, %cst_182 {dimension_numbers = #tpu.dot_dimension_numbers<[1], [0], [0], [1], [0, 0, 1, 1], [], []>} : vector<8x8xf32>, vector<8x128xf32>, vector<8x128xf32> -> vector<8x128xf32>
    %528 = arith.addf %509, %527 : vector<8x128xf32>
    %529 = vector.broadcast %21 : vector<1x128xf32> to vector<8x128xf32>
    %530 = arith.mulf %487, %529 : vector<8x128xf32>
    %cst_183 = arith.constant dense<0.000000e+00> : vector<8x8xf32>
    %531 = tpu.matmul %530, %488, %cst_183 {dimension_numbers = #tpu.dot_dimension_numbers<[1], [1], [0], [0], [0, 0, 1, 0], [], []>} : vector<8x128xf32>, vector<8x128xf32>, vector<8x8xf32> -> vector<8x8xf32>
    %cst_184 = arith.constant 2.500000e-01 : f32
    %532 = vector.broadcast %cst_184 : f32 to vector<8x8xf32>
    %533 = arith.mulf %531, %532 : vector<8x8xf32>
    %cst_185 = arith.constant dense<0xFF800000> : vector<8xf32>
    %534 = vector.multi_reduction <maximumf>, %533, %cst_185 [1] : vector<8x8xf32> to vector<8xf32>
    %535 = vector.shape_cast %534 : vector<8xf32> to vector<8x1xf32>
    %536 = vector.broadcast %535 : vector<8x1xf32> to vector<8x8xf32>
    %537 = arith.subf %533, %536 : vector<8x8xf32>
    %538 = math.exp %537 : vector<8x8xf32>
    %cst_186 = arith.constant dense<0.000000e+00> : vector<8xf32>
    %539 = vector.multi_reduction <add>, %538, %cst_186 [1] : vector<8x8xf32> to vector<8xf32>
    %540 = vector.shape_cast %539 : vector<8xf32> to vector<8x1xf32>
    %541 = tpu.reciprocal %540 {approx = true} : vector<8x1xf32> -> vector<8x1xf32>
    %542 = vector.broadcast %541 : vector<8x1xf32> to vector<8x8xf32>
    %543 = arith.mulf %538, %542 : vector<8x8xf32>
    %544 = vector.broadcast %21 : vector<1x128xf32> to vector<8x128xf32>
    %545 = arith.mulf %489, %544 : vector<8x128xf32>
    %cst_187 = arith.constant dense<0.000000e+00> : vector<8x128xf32>
    %546 = tpu.matmul %543, %545, %cst_187 {dimension_numbers = #tpu.dot_dimension_numbers<[1], [0], [0], [1], [0, 0, 1, 1], [], []>} : vector<8x8xf32>, vector<8x128xf32>, vector<8x128xf32> -> vector<8x128xf32>
    %547 = arith.addf %528, %546 : vector<8x128xf32>
    %548 = vector.broadcast %28 : vector<1x128xf32> to vector<8x128xf32>
    %549 = arith.mulf %487, %548 : vector<8x128xf32>
    %cst_188 = arith.constant dense<0.000000e+00> : vector<8x8xf32>
    %550 = tpu.matmul %549, %488, %cst_188 {dimension_numbers = #tpu.dot_dimension_numbers<[1], [1], [0], [0], [0, 0, 1, 0], [], []>} : vector<8x128xf32>, vector<8x128xf32>, vector<8x8xf32> -> vector<8x8xf32>
    %cst_189 = arith.constant 2.500000e-01 : f32
    %551 = vector.broadcast %cst_189 : f32 to vector<8x8xf32>
    %552 = arith.mulf %550, %551 : vector<8x8xf32>
    %cst_190 = arith.constant dense<0xFF800000> : vector<8xf32>
    %553 = vector.multi_reduction <maximumf>, %552, %cst_190 [1] : vector<8x8xf32> to vector<8xf32>
    %554 = vector.shape_cast %553 : vector<8xf32> to vector<8x1xf32>
    %555 = vector.broadcast %554 : vector<8x1xf32> to vector<8x8xf32>
    %556 = arith.subf %552, %555 : vector<8x8xf32>
    %557 = math.exp %556 : vector<8x8xf32>
    %cst_191 = arith.constant dense<0.000000e+00> : vector<8xf32>
    %558 = vector.multi_reduction <add>, %557, %cst_191 [1] : vector<8x8xf32> to vector<8xf32>
    %559 = vector.shape_cast %558 : vector<8xf32> to vector<8x1xf32>
    %560 = tpu.reciprocal %559 {approx = true} : vector<8x1xf32> -> vector<8x1xf32>
    %561 = vector.broadcast %560 : vector<8x1xf32> to vector<8x8xf32>
    %562 = arith.mulf %557, %561 : vector<8x8xf32>
    %563 = vector.broadcast %28 : vector<1x128xf32> to vector<8x128xf32>
    %564 = arith.mulf %489, %563 : vector<8x128xf32>
    %cst_192 = arith.constant dense<0.000000e+00> : vector<8x128xf32>
    %565 = tpu.matmul %562, %564, %cst_192 {dimension_numbers = #tpu.dot_dimension_numbers<[1], [0], [0], [1], [0, 0, 1, 1], [], []>} : vector<8x8xf32>, vector<8x128xf32>, vector<8x128xf32> -> vector<8x128xf32>
    %566 = arith.addf %547, %565 : vector<8x128xf32>
    %567 = vector.broadcast %35 : vector<1x128xf32> to vector<8x128xf32>
    %568 = arith.mulf %487, %567 : vector<8x128xf32>
    %cst_193 = arith.constant dense<0.000000e+00> : vector<8x8xf32>
    %569 = tpu.matmul %568, %488, %cst_193 {dimension_numbers = #tpu.dot_dimension_numbers<[1], [1], [0], [0], [0, 0, 1, 0], [], []>} : vector<8x128xf32>, vector<8x128xf32>, vector<8x8xf32> -> vector<8x8xf32>
    %cst_194 = arith.constant 2.500000e-01 : f32
    %570 = vector.broadcast %cst_194 : f32 to vector<8x8xf32>
    %571 = arith.mulf %569, %570 : vector<8x8xf32>
    %cst_195 = arith.constant dense<0xFF800000> : vector<8xf32>
    %572 = vector.multi_reduction <maximumf>, %571, %cst_195 [1] : vector<8x8xf32> to vector<8xf32>
    %573 = vector.shape_cast %572 : vector<8xf32> to vector<8x1xf32>
    %574 = vector.broadcast %573 : vector<8x1xf32> to vector<8x8xf32>
    %575 = arith.subf %571, %574 : vector<8x8xf32>
    %576 = math.exp %575 : vector<8x8xf32>
    %cst_196 = arith.constant dense<0.000000e+00> : vector<8xf32>
    %577 = vector.multi_reduction <add>, %576, %cst_196 [1] : vector<8x8xf32> to vector<8xf32>
    %578 = vector.shape_cast %577 : vector<8xf32> to vector<8x1xf32>
    %579 = tpu.reciprocal %578 {approx = true} : vector<8x1xf32> -> vector<8x1xf32>
    %580 = vector.broadcast %579 : vector<8x1xf32> to vector<8x8xf32>
    %581 = arith.mulf %576, %580 : vector<8x8xf32>
    %582 = vector.broadcast %35 : vector<1x128xf32> to vector<8x128xf32>
    %583 = arith.mulf %489, %582 : vector<8x128xf32>
    %cst_197 = arith.constant dense<0.000000e+00> : vector<8x128xf32>
    %584 = tpu.matmul %581, %583, %cst_197 {dimension_numbers = #tpu.dot_dimension_numbers<[1], [0], [0], [1], [0, 0, 1, 1], [], []>} : vector<8x8xf32>, vector<8x128xf32>, vector<8x128xf32> -> vector<8x128xf32>
    %585 = arith.addf %566, %584 : vector<8x128xf32>
    %586 = vector.broadcast %42 : vector<1x128xf32> to vector<8x128xf32>
    %587 = arith.mulf %487, %586 : vector<8x128xf32>
    %cst_198 = arith.constant dense<0.000000e+00> : vector<8x8xf32>
    %588 = tpu.matmul %587, %488, %cst_198 {dimension_numbers = #tpu.dot_dimension_numbers<[1], [1], [0], [0], [0, 0, 1, 0], [], []>} : vector<8x128xf32>, vector<8x128xf32>, vector<8x8xf32> -> vector<8x8xf32>
    %cst_199 = arith.constant 2.500000e-01 : f32
    %589 = vector.broadcast %cst_199 : f32 to vector<8x8xf32>
    %590 = arith.mulf %588, %589 : vector<8x8xf32>
    %cst_200 = arith.constant dense<0xFF800000> : vector<8xf32>
    %591 = vector.multi_reduction <maximumf>, %590, %cst_200 [1] : vector<8x8xf32> to vector<8xf32>
    %592 = vector.shape_cast %591 : vector<8xf32> to vector<8x1xf32>
    %593 = vector.broadcast %592 : vector<8x1xf32> to vector<8x8xf32>
    %594 = arith.subf %590, %593 : vector<8x8xf32>
    %595 = math.exp %594 : vector<8x8xf32>
    %cst_201 = arith.constant dense<0.000000e+00> : vector<8xf32>
    %596 = vector.multi_reduction <add>, %595, %cst_201 [1] : vector<8x8xf32> to vector<8xf32>
    %597 = vector.shape_cast %596 : vector<8xf32> to vector<8x1xf32>
    %598 = tpu.reciprocal %597 {approx = true} : vector<8x1xf32> -> vector<8x1xf32>
    %599 = vector.broadcast %598 : vector<8x1xf32> to vector<8x8xf32>
    %600 = arith.mulf %595, %599 : vector<8x8xf32>
    %601 = vector.broadcast %42 : vector<1x128xf32> to vector<8x128xf32>
    %602 = arith.mulf %489, %601 : vector<8x128xf32>
    %cst_202 = arith.constant dense<0.000000e+00> : vector<8x128xf32>
    %603 = tpu.matmul %600, %602, %cst_202 {dimension_numbers = #tpu.dot_dimension_numbers<[1], [0], [0], [1], [0, 0, 1, 1], [], []>} : vector<8x8xf32>, vector<8x128xf32>, vector<8x128xf32> -> vector<8x128xf32>
    %604 = arith.addf %585, %603 : vector<8x128xf32>
    %605 = vector.broadcast %49 : vector<1x128xf32> to vector<8x128xf32>
    %606 = arith.mulf %487, %605 : vector<8x128xf32>
    %cst_203 = arith.constant dense<0.000000e+00> : vector<8x8xf32>
    %607 = tpu.matmul %606, %488, %cst_203 {dimension_numbers = #tpu.dot_dimension_numbers<[1], [1], [0], [0], [0, 0, 1, 0], [], []>} : vector<8x128xf32>, vector<8x128xf32>, vector<8x8xf32> -> vector<8x8xf32>
    %cst_204 = arith.constant 2.500000e-01 : f32
    %608 = vector.broadcast %cst_204 : f32 to vector<8x8xf32>
    %609 = arith.mulf %607, %608 : vector<8x8xf32>
    %cst_205 = arith.constant dense<0xFF800000> : vector<8xf32>
    %610 = vector.multi_reduction <maximumf>, %609, %cst_205 [1] : vector<8x8xf32> to vector<8xf32>
    %611 = vector.shape_cast %610 : vector<8xf32> to vector<8x1xf32>
    %612 = vector.broadcast %611 : vector<8x1xf32> to vector<8x8xf32>
    %613 = arith.subf %609, %612 : vector<8x8xf32>
    %614 = math.exp %613 : vector<8x8xf32>
    %cst_206 = arith.constant dense<0.000000e+00> : vector<8xf32>
    %615 = vector.multi_reduction <add>, %614, %cst_206 [1] : vector<8x8xf32> to vector<8xf32>
    %616 = vector.shape_cast %615 : vector<8xf32> to vector<8x1xf32>
    %617 = tpu.reciprocal %616 {approx = true} : vector<8x1xf32> -> vector<8x1xf32>
    %618 = vector.broadcast %617 : vector<8x1xf32> to vector<8x8xf32>
    %619 = arith.mulf %614, %618 : vector<8x8xf32>
    %620 = vector.broadcast %49 : vector<1x128xf32> to vector<8x128xf32>
    %621 = arith.mulf %489, %620 : vector<8x128xf32>
    %cst_207 = arith.constant dense<0.000000e+00> : vector<8x128xf32>
    %622 = tpu.matmul %619, %621, %cst_207 {dimension_numbers = #tpu.dot_dimension_numbers<[1], [0], [0], [1], [0, 0, 1, 1], [], []>} : vector<8x8xf32>, vector<8x128xf32>, vector<8x128xf32> -> vector<8x128xf32>
    %623 = arith.addf %604, %622 : vector<8x128xf32>
    %624 = vector.broadcast %56 : vector<1x128xf32> to vector<8x128xf32>
    %625 = arith.mulf %487, %624 : vector<8x128xf32>
    %cst_208 = arith.constant dense<0.000000e+00> : vector<8x8xf32>
    %626 = tpu.matmul %625, %488, %cst_208 {dimension_numbers = #tpu.dot_dimension_numbers<[1], [1], [0], [0], [0, 0, 1, 0], [], []>} : vector<8x128xf32>, vector<8x128xf32>, vector<8x8xf32> -> vector<8x8xf32>
    %cst_209 = arith.constant 2.500000e-01 : f32
    %627 = vector.broadcast %cst_209 : f32 to vector<8x8xf32>
    %628 = arith.mulf %626, %627 : vector<8x8xf32>
    %cst_210 = arith.constant dense<0xFF800000> : vector<8xf32>
    %629 = vector.multi_reduction <maximumf>, %628, %cst_210 [1] : vector<8x8xf32> to vector<8xf32>
    %630 = vector.shape_cast %629 : vector<8xf32> to vector<8x1xf32>
    %631 = vector.broadcast %630 : vector<8x1xf32> to vector<8x8xf32>
    %632 = arith.subf %628, %631 : vector<8x8xf32>
    %633 = math.exp %632 : vector<8x8xf32>
    %cst_211 = arith.constant dense<0.000000e+00> : vector<8xf32>
    %634 = vector.multi_reduction <add>, %633, %cst_211 [1] : vector<8x8xf32> to vector<8xf32>
    %635 = vector.shape_cast %634 : vector<8xf32> to vector<8x1xf32>
    %636 = tpu.reciprocal %635 {approx = true} : vector<8x1xf32> -> vector<8x1xf32>
    %637 = vector.broadcast %636 : vector<8x1xf32> to vector<8x8xf32>
    %638 = arith.mulf %633, %637 : vector<8x8xf32>
    %639 = vector.broadcast %56 : vector<1x128xf32> to vector<8x128xf32>
    %640 = arith.mulf %489, %639 : vector<8x128xf32>
    %cst_212 = arith.constant dense<0.000000e+00> : vector<8x128xf32>
    %641 = tpu.matmul %638, %640, %cst_212 {dimension_numbers = #tpu.dot_dimension_numbers<[1], [0], [0], [1], [0, 0, 1, 1], [], []>} : vector<8x8xf32>, vector<8x128xf32>, vector<8x128xf32> -> vector<8x128xf32>
    %642 = arith.addf %623, %641 : vector<8x128xf32>
    %643 = vector.extract_strided_slice %484 {offsets = [8, 0], sizes = [8, 128], strides = [1, 1]} : vector<16x128xf32> to vector<8x128xf32>
    %644 = vector.extract_strided_slice %485 {offsets = [8, 0], sizes = [8, 128], strides = [1, 1]} : vector<16x128xf32> to vector<8x128xf32>
    %645 = vector.extract_strided_slice %486 {offsets = [8, 0], sizes = [8, 128], strides = [1, 1]} : vector<16x128xf32> to vector<8x128xf32>
    %cst_213 = arith.constant 0.000000e+00 : f32
    %646 = vector.broadcast %cst_213 : f32 to vector<8x128xf32>
    %647 = vector.broadcast %7 : vector<1x128xf32> to vector<8x128xf32>
    %648 = arith.mulf %643, %647 : vector<8x128xf32>
    %cst_214 = arith.constant dense<0.000000e+00> : vector<8x8xf32>
    %649 = tpu.matmul %648, %644, %cst_214 {dimension_numbers = #tpu.dot_dimension_numbers<[1], [1], [0], [0], [0, 0, 1, 0], [], []>} : vector<8x128xf32>, vector<8x128xf32>, vector<8x8xf32> -> vector<8x8xf32>
    %cst_215 = arith.constant 2.500000e-01 : f32
    %650 = vector.broadcast %cst_215 : f32 to vector<8x8xf32>
    %651 = arith.mulf %649, %650 : vector<8x8xf32>
    %cst_216 = arith.constant dense<0xFF800000> : vector<8xf32>
    %652 = vector.multi_reduction <maximumf>, %651, %cst_216 [1] : vector<8x8xf32> to vector<8xf32>
    %653 = vector.shape_cast %652 : vector<8xf32> to vector<8x1xf32>
    %654 = vector.broadcast %653 : vector<8x1xf32> to vector<8x8xf32>
    %655 = arith.subf %651, %654 : vector<8x8xf32>
    %656 = math.exp %655 : vector<8x8xf32>
    %cst_217 = arith.constant dense<0.000000e+00> : vector<8xf32>
    %657 = vector.multi_reduction <add>, %656, %cst_217 [1] : vector<8x8xf32> to vector<8xf32>
    %658 = vector.shape_cast %657 : vector<8xf32> to vector<8x1xf32>
    %659 = tpu.reciprocal %658 {approx = true} : vector<8x1xf32> -> vector<8x1xf32>
    %660 = vector.broadcast %659 : vector<8x1xf32> to vector<8x8xf32>
    %661 = arith.mulf %656, %660 : vector<8x8xf32>
    %662 = vector.broadcast %7 : vector<1x128xf32> to vector<8x128xf32>
    %663 = arith.mulf %645, %662 : vector<8x128xf32>
    %cst_218 = arith.constant dense<0.000000e+00> : vector<8x128xf32>
    %664 = tpu.matmul %661, %663, %cst_218 {dimension_numbers = #tpu.dot_dimension_numbers<[1], [0], [0], [1], [0, 0, 1, 1], [], []>} : vector<8x8xf32>, vector<8x128xf32>, vector<8x128xf32> -> vector<8x128xf32>
    %665 = arith.addf %646, %664 : vector<8x128xf32>
    %666 = vector.broadcast %14 : vector<1x128xf32> to vector<8x128xf32>
    %667 = arith.mulf %643, %666 : vector<8x128xf32>
    %cst_219 = arith.constant dense<0.000000e+00> : vector<8x8xf32>
    %668 = tpu.matmul %667, %644, %cst_219 {dimension_numbers = #tpu.dot_dimension_numbers<[1], [1], [0], [0], [0, 0, 1, 0], [], []>} : vector<8x128xf32>, vector<8x128xf32>, vector<8x8xf32> -> vector<8x8xf32>
    %cst_220 = arith.constant 2.500000e-01 : f32
    %669 = vector.broadcast %cst_220 : f32 to vector<8x8xf32>
    %670 = arith.mulf %668, %669 : vector<8x8xf32>
    %cst_221 = arith.constant dense<0xFF800000> : vector<8xf32>
    %671 = vector.multi_reduction <maximumf>, %670, %cst_221 [1] : vector<8x8xf32> to vector<8xf32>
    %672 = vector.shape_cast %671 : vector<8xf32> to vector<8x1xf32>
    %673 = vector.broadcast %672 : vector<8x1xf32> to vector<8x8xf32>
    %674 = arith.subf %670, %673 : vector<8x8xf32>
    %675 = math.exp %674 : vector<8x8xf32>
    %cst_222 = arith.constant dense<0.000000e+00> : vector<8xf32>
    %676 = vector.multi_reduction <add>, %675, %cst_222 [1] : vector<8x8xf32> to vector<8xf32>
    %677 = vector.shape_cast %676 : vector<8xf32> to vector<8x1xf32>
    %678 = tpu.reciprocal %677 {approx = true} : vector<8x1xf32> -> vector<8x1xf32>
    %679 = vector.broadcast %678 : vector<8x1xf32> to vector<8x8xf32>
    %680 = arith.mulf %675, %679 : vector<8x8xf32>
    %681 = vector.broadcast %14 : vector<1x128xf32> to vector<8x128xf32>
    %682 = arith.mulf %645, %681 : vector<8x128xf32>
    %cst_223 = arith.constant dense<0.000000e+00> : vector<8x128xf32>
    %683 = tpu.matmul %680, %682, %cst_223 {dimension_numbers = #tpu.dot_dimension_numbers<[1], [0], [0], [1], [0, 0, 1, 1], [], []>} : vector<8x8xf32>, vector<8x128xf32>, vector<8x128xf32> -> vector<8x128xf32>
    %684 = arith.addf %665, %683 : vector<8x128xf32>
    %685 = vector.broadcast %21 : vector<1x128xf32> to vector<8x128xf32>
    %686 = arith.mulf %643, %685 : vector<8x128xf32>
    %cst_224 = arith.constant dense<0.000000e+00> : vector<8x8xf32>
    %687 = tpu.matmul %686, %644, %cst_224 {dimension_numbers = #tpu.dot_dimension_numbers<[1], [1], [0], [0], [0, 0, 1, 0], [], []>} : vector<8x128xf32>, vector<8x128xf32>, vector<8x8xf32> -> vector<8x8xf32>
    %cst_225 = arith.constant 2.500000e-01 : f32
    %688 = vector.broadcast %cst_225 : f32 to vector<8x8xf32>
    %689 = arith.mulf %687, %688 : vector<8x8xf32>
    %cst_226 = arith.constant dense<0xFF800000> : vector<8xf32>
    %690 = vector.multi_reduction <maximumf>, %689, %cst_226 [1] : vector<8x8xf32> to vector<8xf32>
    %691 = vector.shape_cast %690 : vector<8xf32> to vector<8x1xf32>
    %692 = vector.broadcast %691 : vector<8x1xf32> to vector<8x8xf32>
    %693 = arith.subf %689, %692 : vector<8x8xf32>
    %694 = math.exp %693 : vector<8x8xf32>
    %cst_227 = arith.constant dense<0.000000e+00> : vector<8xf32>
    %695 = vector.multi_reduction <add>, %694, %cst_227 [1] : vector<8x8xf32> to vector<8xf32>
    %696 = vector.shape_cast %695 : vector<8xf32> to vector<8x1xf32>
    %697 = tpu.reciprocal %696 {approx = true} : vector<8x1xf32> -> vector<8x1xf32>
    %698 = vector.broadcast %697 : vector<8x1xf32> to vector<8x8xf32>
    %699 = arith.mulf %694, %698 : vector<8x8xf32>
    %700 = vector.broadcast %21 : vector<1x128xf32> to vector<8x128xf32>
    %701 = arith.mulf %645, %700 : vector<8x128xf32>
    %cst_228 = arith.constant dense<0.000000e+00> : vector<8x128xf32>
    %702 = tpu.matmul %699, %701, %cst_228 {dimension_numbers = #tpu.dot_dimension_numbers<[1], [0], [0], [1], [0, 0, 1, 1], [], []>} : vector<8x8xf32>, vector<8x128xf32>, vector<8x128xf32> -> vector<8x128xf32>
    %703 = arith.addf %684, %702 : vector<8x128xf32>
    %704 = vector.broadcast %28 : vector<1x128xf32> to vector<8x128xf32>
    %705 = arith.mulf %643, %704 : vector<8x128xf32>
    %cst_229 = arith.constant dense<0.000000e+00> : vector<8x8xf32>
    %706 = tpu.matmul %705, %644, %cst_229 {dimension_numbers = #tpu.dot_dimension_numbers<[1], [1], [0], [0], [0, 0, 1, 0], [], []>} : vector<8x128xf32>, vector<8x128xf32>, vector<8x8xf32> -> vector<8x8xf32>
    %cst_230 = arith.constant 2.500000e-01 : f32
    %707 = vector.broadcast %cst_230 : f32 to vector<8x8xf32>
    %708 = arith.mulf %706, %707 : vector<8x8xf32>
    %cst_231 = arith.constant dense<0xFF800000> : vector<8xf32>
    %709 = vector.multi_reduction <maximumf>, %708, %cst_231 [1] : vector<8x8xf32> to vector<8xf32>
    %710 = vector.shape_cast %709 : vector<8xf32> to vector<8x1xf32>
    %711 = vector.broadcast %710 : vector<8x1xf32> to vector<8x8xf32>
    %712 = arith.subf %708, %711 : vector<8x8xf32>
    %713 = math.exp %712 : vector<8x8xf32>
    %cst_232 = arith.constant dense<0.000000e+00> : vector<8xf32>
    %714 = vector.multi_reduction <add>, %713, %cst_232 [1] : vector<8x8xf32> to vector<8xf32>
    %715 = vector.shape_cast %714 : vector<8xf32> to vector<8x1xf32>
    %716 = tpu.reciprocal %715 {approx = true} : vector<8x1xf32> -> vector<8x1xf32>
    %717 = vector.broadcast %716 : vector<8x1xf32> to vector<8x8xf32>
    %718 = arith.mulf %713, %717 : vector<8x8xf32>
    %719 = vector.broadcast %28 : vector<1x128xf32> to vector<8x128xf32>
    %720 = arith.mulf %645, %719 : vector<8x128xf32>
    %cst_233 = arith.constant dense<0.000000e+00> : vector<8x128xf32>
    %721 = tpu.matmul %718, %720, %cst_233 {dimension_numbers = #tpu.dot_dimension_numbers<[1], [0], [0], [1], [0, 0, 1, 1], [], []>} : vector<8x8xf32>, vector<8x128xf32>, vector<8x128xf32> -> vector<8x128xf32>
    %722 = arith.addf %703, %721 : vector<8x128xf32>
    %723 = vector.broadcast %35 : vector<1x128xf32> to vector<8x128xf32>
    %724 = arith.mulf %643, %723 : vector<8x128xf32>
    %cst_234 = arith.constant dense<0.000000e+00> : vector<8x8xf32>
    %725 = tpu.matmul %724, %644, %cst_234 {dimension_numbers = #tpu.dot_dimension_numbers<[1], [1], [0], [0], [0, 0, 1, 0], [], []>} : vector<8x128xf32>, vector<8x128xf32>, vector<8x8xf32> -> vector<8x8xf32>
    %cst_235 = arith.constant 2.500000e-01 : f32
    %726 = vector.broadcast %cst_235 : f32 to vector<8x8xf32>
    %727 = arith.mulf %725, %726 : vector<8x8xf32>
    %cst_236 = arith.constant dense<0xFF800000> : vector<8xf32>
    %728 = vector.multi_reduction <maximumf>, %727, %cst_236 [1] : vector<8x8xf32> to vector<8xf32>
    %729 = vector.shape_cast %728 : vector<8xf32> to vector<8x1xf32>
    %730 = vector.broadcast %729 : vector<8x1xf32> to vector<8x8xf32>
    %731 = arith.subf %727, %730 : vector<8x8xf32>
    %732 = math.exp %731 : vector<8x8xf32>
    %cst_237 = arith.constant dense<0.000000e+00> : vector<8xf32>
    %733 = vector.multi_reduction <add>, %732, %cst_237 [1] : vector<8x8xf32> to vector<8xf32>
    %734 = vector.shape_cast %733 : vector<8xf32> to vector<8x1xf32>
    %735 = tpu.reciprocal %734 {approx = true} : vector<8x1xf32> -> vector<8x1xf32>
    %736 = vector.broadcast %735 : vector<8x1xf32> to vector<8x8xf32>
    %737 = arith.mulf %732, %736 : vector<8x8xf32>
    %738 = vector.broadcast %35 : vector<1x128xf32> to vector<8x128xf32>
    %739 = arith.mulf %645, %738 : vector<8x128xf32>
    %cst_238 = arith.constant dense<0.000000e+00> : vector<8x128xf32>
    %740 = tpu.matmul %737, %739, %cst_238 {dimension_numbers = #tpu.dot_dimension_numbers<[1], [0], [0], [1], [0, 0, 1, 1], [], []>} : vector<8x8xf32>, vector<8x128xf32>, vector<8x128xf32> -> vector<8x128xf32>
    %741 = arith.addf %722, %740 : vector<8x128xf32>
    %742 = vector.broadcast %42 : vector<1x128xf32> to vector<8x128xf32>
    %743 = arith.mulf %643, %742 : vector<8x128xf32>
    %cst_239 = arith.constant dense<0.000000e+00> : vector<8x8xf32>
    %744 = tpu.matmul %743, %644, %cst_239 {dimension_numbers = #tpu.dot_dimension_numbers<[1], [1], [0], [0], [0, 0, 1, 0], [], []>} : vector<8x128xf32>, vector<8x128xf32>, vector<8x8xf32> -> vector<8x8xf32>
    %cst_240 = arith.constant 2.500000e-01 : f32
    %745 = vector.broadcast %cst_240 : f32 to vector<8x8xf32>
    %746 = arith.mulf %744, %745 : vector<8x8xf32>
    %cst_241 = arith.constant dense<0xFF800000> : vector<8xf32>
    %747 = vector.multi_reduction <maximumf>, %746, %cst_241 [1] : vector<8x8xf32> to vector<8xf32>
    %748 = vector.shape_cast %747 : vector<8xf32> to vector<8x1xf32>
    %749 = vector.broadcast %748 : vector<8x1xf32> to vector<8x8xf32>
    %750 = arith.subf %746, %749 : vector<8x8xf32>
    %751 = math.exp %750 : vector<8x8xf32>
    %cst_242 = arith.constant dense<0.000000e+00> : vector<8xf32>
    %752 = vector.multi_reduction <add>, %751, %cst_242 [1] : vector<8x8xf32> to vector<8xf32>
    %753 = vector.shape_cast %752 : vector<8xf32> to vector<8x1xf32>
    %754 = tpu.reciprocal %753 {approx = true} : vector<8x1xf32> -> vector<8x1xf32>
    %755 = vector.broadcast %754 : vector<8x1xf32> to vector<8x8xf32>
    %756 = arith.mulf %751, %755 : vector<8x8xf32>
    %757 = vector.broadcast %42 : vector<1x128xf32> to vector<8x128xf32>
    %758 = arith.mulf %645, %757 : vector<8x128xf32>
    %cst_243 = arith.constant dense<0.000000e+00> : vector<8x128xf32>
    %759 = tpu.matmul %756, %758, %cst_243 {dimension_numbers = #tpu.dot_dimension_numbers<[1], [0], [0], [1], [0, 0, 1, 1], [], []>} : vector<8x8xf32>, vector<8x128xf32>, vector<8x128xf32> -> vector<8x128xf32>
    %760 = arith.addf %741, %759 : vector<8x128xf32>
    %761 = vector.broadcast %49 : vector<1x128xf32> to vector<8x128xf32>
    %762 = arith.mulf %643, %761 : vector<8x128xf32>
    %cst_244 = arith.constant dense<0.000000e+00> : vector<8x8xf32>
    %763 = tpu.matmul %762, %644, %cst_244 {dimension_numbers = #tpu.dot_dimension_numbers<[1], [1], [0], [0], [0, 0, 1, 0], [], []>} : vector<8x128xf32>, vector<8x128xf32>, vector<8x8xf32> -> vector<8x8xf32>
    %cst_245 = arith.constant 2.500000e-01 : f32
    %764 = vector.broadcast %cst_245 : f32 to vector<8x8xf32>
    %765 = arith.mulf %763, %764 : vector<8x8xf32>
    %cst_246 = arith.constant dense<0xFF800000> : vector<8xf32>
    %766 = vector.multi_reduction <maximumf>, %765, %cst_246 [1] : vector<8x8xf32> to vector<8xf32>
    %767 = vector.shape_cast %766 : vector<8xf32> to vector<8x1xf32>
    %768 = vector.broadcast %767 : vector<8x1xf32> to vector<8x8xf32>
    %769 = arith.subf %765, %768 : vector<8x8xf32>
    %770 = math.exp %769 : vector<8x8xf32>
    %cst_247 = arith.constant dense<0.000000e+00> : vector<8xf32>
    %771 = vector.multi_reduction <add>, %770, %cst_247 [1] : vector<8x8xf32> to vector<8xf32>
    %772 = vector.shape_cast %771 : vector<8xf32> to vector<8x1xf32>
    %773 = tpu.reciprocal %772 {approx = true} : vector<8x1xf32> -> vector<8x1xf32>
    %774 = vector.broadcast %773 : vector<8x1xf32> to vector<8x8xf32>
    %775 = arith.mulf %770, %774 : vector<8x8xf32>
    %776 = vector.broadcast %49 : vector<1x128xf32> to vector<8x128xf32>
    %777 = arith.mulf %645, %776 : vector<8x128xf32>
    %cst_248 = arith.constant dense<0.000000e+00> : vector<8x128xf32>
    %778 = tpu.matmul %775, %777, %cst_248 {dimension_numbers = #tpu.dot_dimension_numbers<[1], [0], [0], [1], [0, 0, 1, 1], [], []>} : vector<8x8xf32>, vector<8x128xf32>, vector<8x128xf32> -> vector<8x128xf32>
    %779 = arith.addf %760, %778 : vector<8x128xf32>
    %780 = vector.broadcast %56 : vector<1x128xf32> to vector<8x128xf32>
    %781 = arith.mulf %643, %780 : vector<8x128xf32>
    %cst_249 = arith.constant dense<0.000000e+00> : vector<8x8xf32>
    %782 = tpu.matmul %781, %644, %cst_249 {dimension_numbers = #tpu.dot_dimension_numbers<[1], [1], [0], [0], [0, 0, 1, 0], [], []>} : vector<8x128xf32>, vector<8x128xf32>, vector<8x8xf32> -> vector<8x8xf32>
    %cst_250 = arith.constant 2.500000e-01 : f32
    %783 = vector.broadcast %cst_250 : f32 to vector<8x8xf32>
    %784 = arith.mulf %782, %783 : vector<8x8xf32>
    %cst_251 = arith.constant dense<0xFF800000> : vector<8xf32>
    %785 = vector.multi_reduction <maximumf>, %784, %cst_251 [1] : vector<8x8xf32> to vector<8xf32>
    %786 = vector.shape_cast %785 : vector<8xf32> to vector<8x1xf32>
    %787 = vector.broadcast %786 : vector<8x1xf32> to vector<8x8xf32>
    %788 = arith.subf %784, %787 : vector<8x8xf32>
    %789 = math.exp %788 : vector<8x8xf32>
    %cst_252 = arith.constant dense<0.000000e+00> : vector<8xf32>
    %790 = vector.multi_reduction <add>, %789, %cst_252 [1] : vector<8x8xf32> to vector<8xf32>
    %791 = vector.shape_cast %790 : vector<8xf32> to vector<8x1xf32>
    %792 = tpu.reciprocal %791 {approx = true} : vector<8x1xf32> -> vector<8x1xf32>
    %793 = vector.broadcast %792 : vector<8x1xf32> to vector<8x8xf32>
    %794 = arith.mulf %789, %793 : vector<8x8xf32>
    %795 = vector.broadcast %56 : vector<1x128xf32> to vector<8x128xf32>
    %796 = arith.mulf %645, %795 : vector<8x128xf32>
    %cst_253 = arith.constant dense<0.000000e+00> : vector<8x128xf32>
    %797 = tpu.matmul %794, %796, %cst_253 {dimension_numbers = #tpu.dot_dimension_numbers<[1], [0], [0], [1], [0, 0, 1, 1], [], []>} : vector<8x8xf32>, vector<8x128xf32>, vector<8x128xf32> -> vector<8x128xf32>
    %798 = arith.addf %779, %797 : vector<8x128xf32>
    %799 = tpu.concatenate %642, %798 in 0 : vector<8x128xf32>, vector<8x128xf32> -> vector<16x128xf32>
    %c0_254 = arith.constant 0 : index
    %c1_255 = arith.constant 1 : index
    %c0_256 = arith.constant 0 : index
    %c0_257 = arith.constant 0 : index
    %800 = vector.load %arg7[%c0_254, %c1_255, %c0_256, %c0_257] : memref<1x2x128x128xbf16, #tpu.memory_space<vmem>>, vector<1x1x128x128xbf16>
    %801 = vector.shape_cast %800 : vector<1x1x128x128xbf16> to vector<128x128xbf16>
    %802 = arith.truncf %799 : vector<16x128xf32> to vector<16x128xbf16>
    %cst_258 = arith.constant dense<0.000000e+00> : vector<16x128xf32>
    %803 = tpu.matmul %802, %801, %cst_258 {dimension_numbers = #tpu.dot_dimension_numbers<[1], [0], [0], [1], [0, 0, 1, 1], [], []>} : vector<16x128xbf16>, vector<128x128xbf16>, vector<16x128xf32> -> vector<16x128xf32>
    %c0_259 = arith.constant 0 : index
    %c1_260 = arith.constant 1 : index
    %c0_261 = arith.constant 0 : index
    %c0_262 = arith.constant 0 : index
    %804 = vector.load %arg8[%c0_259, %c1_260, %c0_261, %c0_262] : memref<1x2x1x128xf32, #tpu.memory_space<vmem>>, vector<1x1x1x128xf32>
    %805 = vector.shape_cast %804 : vector<1x1x1x128xf32> to vector<1x128xf32>
    %806 = vector.broadcast %805 : vector<1x128xf32> to vector<16x128xf32>
    %807 = arith.addf %803, %806 : vector<16x128xf32>
    %808 = arith.addf %475, %807 : vector<16x128xf32>
    %c0_263 = arith.constant 0 : index
    %c1_264 = arith.constant 1 : index
    %c0_265 = arith.constant 0 : index
    %c0_266 = arith.constant 0 : index
    %809 = vector.load %arg9[%c0_263, %c1_264, %c0_265, %c0_266] : memref<1x2x1x128xf32, #tpu.memory_space<vmem>>, vector<1x1x1x128xf32>
    %810 = vector.shape_cast %809 : vector<1x1x1x128xf32> to vector<1x128xf32>
    %c0_267 = arith.constant 0 : index
    %c1_268 = arith.constant 1 : index
    %c0_269 = arith.constant 0 : index
    %c0_270 = arith.constant 0 : index
    %811 = vector.load %arg10[%c0_267, %c1_268, %c0_269, %c0_270] : memref<1x2x1x128xf32, #tpu.memory_space<vmem>>, vector<1x1x1x128xf32>
    %812 = vector.shape_cast %811 : vector<1x1x1x128xf32> to vector<1x128xf32>
    %cst_271 = arith.constant dense<0.000000e+00> : vector<16xf32>
    %813 = vector.multi_reduction <add>, %808, %cst_271 [1] : vector<16x128xf32> to vector<16xf32>
    %814 = vector.shape_cast %813 : vector<16xf32> to vector<16x1xf32>
    %cst_272 = arith.constant 1.280000e+02 : f32
    %815 = vector.broadcast %cst_272 : f32 to vector<16x1xf32>
    %816 = arith.divf %814, %815 : vector<16x1xf32>
    %817 = vector.broadcast %816 : vector<16x1xf32> to vector<16x128xf32>
    %818 = arith.subf %808, %817 : vector<16x128xf32>
    %819 = arith.mulf %818, %818 : vector<16x128xf32>
    %cst_273 = arith.constant dense<0.000000e+00> : vector<16xf32>
    %820 = vector.multi_reduction <add>, %819, %cst_273 [1] : vector<16x128xf32> to vector<16xf32>
    %821 = vector.shape_cast %820 : vector<16xf32> to vector<16x1xf32>
    %cst_274 = arith.constant 1.280000e+02 : f32
    %822 = vector.broadcast %cst_274 : f32 to vector<16x1xf32>
    %823 = arith.divf %821, %822 : vector<16x1xf32>
    %824 = vector.broadcast %816 : vector<16x1xf32> to vector<16x128xf32>
    %825 = arith.subf %808, %824 : vector<16x128xf32>
    %cst_275 = arith.constant 9.99999974E-6 : f32
    %826 = vector.broadcast %cst_275 : f32 to vector<16x1xf32>
    %827 = arith.addf %823, %826 : vector<16x1xf32>
    %828 = math.rsqrt %827 : vector<16x1xf32>
    %829 = vector.broadcast %828 : vector<16x1xf32> to vector<16x128xf32>
    %830 = arith.mulf %825, %829 : vector<16x128xf32>
    %831 = vector.broadcast %810 : vector<1x128xf32> to vector<16x128xf32>
    %832 = arith.mulf %830, %831 : vector<16x128xf32>
    %833 = vector.broadcast %812 : vector<1x128xf32> to vector<16x128xf32>
    %834 = arith.addf %832, %833 : vector<16x128xf32>
    %c0_276 = arith.constant 0 : index
    %c1_277 = arith.constant 1 : index
    %c0_278 = arith.constant 0 : index
    %c0_279 = arith.constant 0 : index
    %835 = vector.load %arg11[%c0_276, %c1_277, %c0_278, %c0_279] : memref<1x2x128x512xbf16, #tpu.memory_space<vmem>>, vector<1x1x128x512xbf16>
    %836 = vector.shape_cast %835 : vector<1x1x128x512xbf16> to vector<128x512xbf16>
    %837 = arith.truncf %834 : vector<16x128xf32> to vector<16x128xbf16>
    %cst_280 = arith.constant dense<0.000000e+00> : vector<16x512xf32>
    %838 = tpu.matmul %837, %836, %cst_280 {dimension_numbers = #tpu.dot_dimension_numbers<[1], [0], [0], [1], [0, 0, 1, 1], [], []>} : vector<16x128xbf16>, vector<128x512xbf16>, vector<16x512xf32> -> vector<16x512xf32>
    %c0_281 = arith.constant 0 : index
    %c1_282 = arith.constant 1 : index
    %c0_283 = arith.constant 0 : index
    %c0_284 = arith.constant 0 : index
    %839 = vector.load %arg12[%c0_281, %c1_282, %c0_283, %c0_284] : memref<1x2x1x512xf32, #tpu.memory_space<vmem>>, vector<1x1x1x512xf32>
    %840 = vector.shape_cast %839 : vector<1x1x1x512xf32> to vector<1x512xf32>
    %841 = vector.broadcast %840 : vector<1x512xf32> to vector<16x512xf32>
    %842 = arith.addf %838, %841 : vector<16x512xf32>
    %cst_285 = arith.constant 0.000000e+00 : f32
    %843 = vector.broadcast %cst_285 : f32 to vector<16x512xf32>
    %844 = arith.maximumf %842, %843 : vector<16x512xf32>
    %c0_286 = arith.constant 0 : index
    %c1_287 = arith.constant 1 : index
    %c0_288 = arith.constant 0 : index
    %c0_289 = arith.constant 0 : index
    %845 = vector.load %arg13[%c0_286, %c1_287, %c0_288, %c0_289] : memref<1x2x512x128xbf16, #tpu.memory_space<vmem>>, vector<1x1x512x128xbf16>
    %846 = vector.shape_cast %845 : vector<1x1x512x128xbf16> to vector<512x128xbf16>
    %847 = arith.truncf %844 : vector<16x512xf32> to vector<16x512xbf16>
    %cst_290 = arith.constant dense<0.000000e+00> : vector<16x128xf32>
    %848 = tpu.matmul %847, %846, %cst_290 {dimension_numbers = #tpu.dot_dimension_numbers<[1], [0], [0], [1], [0, 0, 1, 1], [], []>} : vector<16x512xbf16>, vector<512x128xbf16>, vector<16x128xf32> -> vector<16x128xf32>
    %c0_291 = arith.constant 0 : index
    %c1_292 = arith.constant 1 : index
    %c0_293 = arith.constant 0 : index
    %c0_294 = arith.constant 0 : index
    %849 = vector.load %arg14[%c0_291, %c1_292, %c0_293, %c0_294] : memref<1x2x1x128xf32, #tpu.memory_space<vmem>>, vector<1x1x1x128xf32>
    %850 = vector.shape_cast %849 : vector<1x1x1x128xf32> to vector<1x128xf32>
    %851 = vector.broadcast %850 : vector<1x128xf32> to vector<16x128xf32>
    %852 = arith.addf %848, %851 : vector<16x128xf32>
    %853 = arith.addf %834, %852 : vector<16x128xf32>
    %c0_295 = arith.constant 0 : index
    %c1_296 = arith.constant 1 : index
    %c0_297 = arith.constant 0 : index
    %c0_298 = arith.constant 0 : index
    %854 = vector.load %arg15[%c0_295, %c1_296, %c0_297, %c0_298] : memref<1x2x1x128xf32, #tpu.memory_space<vmem>>, vector<1x1x1x128xf32>
    %855 = vector.shape_cast %854 : vector<1x1x1x128xf32> to vector<1x128xf32>
    %c0_299 = arith.constant 0 : index
    %c1_300 = arith.constant 1 : index
    %c0_301 = arith.constant 0 : index
    %c0_302 = arith.constant 0 : index
    %856 = vector.load %arg16[%c0_299, %c1_300, %c0_301, %c0_302] : memref<1x2x1x128xf32, #tpu.memory_space<vmem>>, vector<1x1x1x128xf32>
    %857 = vector.shape_cast %856 : vector<1x1x1x128xf32> to vector<1x128xf32>
    %cst_303 = arith.constant dense<0.000000e+00> : vector<16xf32>
    %858 = vector.multi_reduction <add>, %853, %cst_303 [1] : vector<16x128xf32> to vector<16xf32>
    %859 = vector.shape_cast %858 : vector<16xf32> to vector<16x1xf32>
    %cst_304 = arith.constant 1.280000e+02 : f32
    %860 = vector.broadcast %cst_304 : f32 to vector<16x1xf32>
    %861 = arith.divf %859, %860 : vector<16x1xf32>
    %862 = vector.broadcast %861 : vector<16x1xf32> to vector<16x128xf32>
    %863 = arith.subf %853, %862 : vector<16x128xf32>
    %864 = arith.mulf %863, %863 : vector<16x128xf32>
    %cst_305 = arith.constant dense<0.000000e+00> : vector<16xf32>
    %865 = vector.multi_reduction <add>, %864, %cst_305 [1] : vector<16x128xf32> to vector<16xf32>
    %866 = vector.shape_cast %865 : vector<16xf32> to vector<16x1xf32>
    %cst_306 = arith.constant 1.280000e+02 : f32
    %867 = vector.broadcast %cst_306 : f32 to vector<16x1xf32>
    %868 = arith.divf %866, %867 : vector<16x1xf32>
    %869 = vector.broadcast %861 : vector<16x1xf32> to vector<16x128xf32>
    %870 = arith.subf %853, %869 : vector<16x128xf32>
    %cst_307 = arith.constant 9.99999974E-6 : f32
    %871 = vector.broadcast %cst_307 : f32 to vector<16x1xf32>
    %872 = arith.addf %868, %871 : vector<16x1xf32>
    %873 = math.rsqrt %872 : vector<16x1xf32>
    %874 = vector.broadcast %873 : vector<16x1xf32> to vector<16x128xf32>
    %875 = arith.mulf %870, %874 : vector<16x128xf32>
    %876 = vector.broadcast %855 : vector<1x128xf32> to vector<16x128xf32>
    %877 = arith.mulf %875, %876 : vector<16x128xf32>
    %878 = vector.broadcast %857 : vector<1x128xf32> to vector<16x128xf32>
    %879 = arith.addf %877, %878 : vector<16x128xf32>
    %880 = vector.extract_strided_slice %879 {offsets = [7, 0], sizes = [1, 128], strides = [1, 1]} : vector<16x128xf32> to vector<1x128xf32>
    %881 = vector.extract_strided_slice %879 {offsets = [15, 0], sizes = [1, 128], strides = [1, 1]} : vector<16x128xf32> to vector<1x128xf32>
    %882 = tpu.concatenate %880, %881 in 0 : vector<1x128xf32>, vector<1x128xf32> -> vector<2x128xf32>
    %c0_308 = arith.constant 0 : index
    %c0_309 = arith.constant 0 : index
    %c0_310 = arith.constant 0 : index
    %883 = vector.load %arg17[%c0_308, %c0_309, %c0_310] : memref<1x2x128xf32, #tpu.memory_space<vmem>>, vector<1x2x128xf32>
    %884 = vector.shape_cast %883 : vector<1x2x128xf32> to vector<2x128xf32>
    %885 = vector.shape_cast %882 : vector<2x128xf32> to vector<1x2x128xf32>
    tpu.vector_store %arg17[%c0_308, %c0_309, %c0_310], %885 {strides = array<i32>} : memref<1x2x128xf32, #tpu.memory_space<vmem>>, vector<1x2x128xf32>,
    return
  }
  func.func @transform_0(%arg0: i32) -> (i32, i32, i32, i32) {
    %c0_i32 = arith.constant 0 : i32
    %c0_i32_0 = arith.constant 0 : i32
    %c0_i32_1 = arith.constant 0 : i32
    %c0_i32_2 = arith.constant 0 : i32
    return %arg0, %c0_i32, %c0_i32_0, %c0_i32_1 : i32, i32, i32, i32
  }
  func.func @transform_1(%arg0: i32) -> (i32, i32, i32) {
    %c0_i32 = arith.constant 0 : i32
    %c0_i32_0 = arith.constant 0 : i32
    %c0_i32_1 = arith.constant 0 : i32
    return %arg0, %c0_i32, %c0_i32_0 : i32, i32, i32
  }
  func.func @transform_2(%arg0: i32) -> (i32, i32, i32) {
    %c0_i32 = arith.constant 0 : i32
    %c0_i32_0 = arith.constant 0 : i32
    %c0_i32_1 = arith.constant 0 : i32
    return %arg0, %c0_i32, %c0_i32_0 : i32, i32, i32
  }
  func.func @transform_3(%arg0: i32) -> (i32, i32, i32) {
    %c0_i32 = arith.constant 0 : i32
    %c0_i32_0 = arith.constant 0 : i32
    %c0_i32_1 = arith.constant 0 : i32
    return %arg0, %c0_i32, %c0_i32_0 : i32, i32, i32
  }
  func.func @transform_4(%arg0: i32) -> (i32, i32, i32, i32) {
    %c0_i32 = arith.constant 0 : i32
    %c0_i32_0 = arith.constant 0 : i32
    %c0_i32_1 = arith.constant 0 : i32
    %c0_i32_2 = arith.constant 0 : i32
    return %arg0, %c0_i32, %c0_i32_0, %c0_i32_1 : i32, i32, i32, i32
  }
  func.func @transform_5(%arg0: i32) -> (i32, i32, i32, i32) {
    %c0_i32 = arith.constant 0 : i32
    %c0_i32_0 = arith.constant 0 : i32
    %c0_i32_1 = arith.constant 0 : i32
    %c0_i32_2 = arith.constant 0 : i32
    return %arg0, %c0_i32, %c0_i32_0, %c0_i32_1 : i32, i32, i32, i32
  }
  func.func @transform_6(%arg0: i32) -> (i32, i32, i32, i32) {
    %c0_i32 = arith.constant 0 : i32
    %c0_i32_0 = arith.constant 0 : i32
    %c0_i32_1 = arith.constant 0 : i32
    %c0_i32_2 = arith.constant 0 : i32
    return %arg0, %c0_i32, %c0_i32_0, %c0_i32_1 : i32, i32, i32, i32
  }
  func.func @transform_7(%arg0: i32) -> (i32, i32, i32, i32) {
    %c0_i32 = arith.constant 0 : i32
    %c0_i32_0 = arith.constant 0 : i32
    %c0_i32_1 = arith.constant 0 : i32
    %c0_i32_2 = arith.constant 0 : i32
    return %arg0, %c0_i32, %c0_i32_0, %c0_i32_1 : i32, i32, i32, i32
  }
  func.func @transform_8(%arg0: i32) -> (i32, i32, i32, i32) {
    %c0_i32 = arith.constant 0 : i32
    %c0_i32_0 = arith.constant 0 : i32
    %c0_i32_1 = arith.constant 0 : i32
    %c0_i32_2 = arith.constant 0 : i32
    return %arg0, %c0_i32, %c0_i32_0, %c0_i32_1 : i32, i32, i32, i32
  }
  func.func @transform_9(%arg0: i32) -> (i32, i32, i32, i32) {
    %c0_i32 = arith.constant 0 : i32
    %c0_i32_0 = arith.constant 0 : i32
    %c0_i32_1 = arith.constant 0 : i32
    %c0_i32_2 = arith.constant 0 : i32
    return %arg0, %c0_i32, %c0_i32_0, %c0_i32_1 : i32, i32, i32, i32
  }
  func.func @transform_10(%arg0: i32) -> (i32, i32, i32, i32) {
    %c0_i32 = arith.constant 0 : i32
    %c0_i32_0 = arith.constant 0 : i32
    %c0_i32_1 = arith.constant 0 : i32
    %c0_i32_2 = arith.constant 0 : i32
    return %arg0, %c0_i32, %c0_i32_0, %c0_i32_1 : i32, i32, i32, i32
  }
  func.func @transform_11(%arg0: i32) -> (i32, i32, i32, i32) {
    %c0_i32 = arith.constant 0 : i32
    %c0_i32_0 = arith.constant 0 : i32
    %c0_i32_1 = arith.constant 0 : i32
    %c0_i32_2 = arith.constant 0 : i32
    return %arg0, %c0_i32, %c0_i32_0, %c0_i32_1 : i32, i32, i32, i32
  }
  func.func @transform_12(%arg0: i32) -> (i32, i32, i32, i32) {
    %c0_i32 = arith.constant 0 : i32
    %c0_i32_0 = arith.constant 0 : i32
    %c0_i32_1 = arith.constant 0 : i32
    %c0_i32_2 = arith.constant 0 : i32
    return %arg0, %c0_i32, %c0_i32_0, %c0_i32_1 : i32, i32, i32, i32
  }
  func.func @transform_13(%arg0: i32) -> (i32, i32, i32, i32) {
    %c0_i32 = arith.constant 0 : i32
    %c0_i32_0 = arith.constant 0 : i32
    %c0_i32_1 = arith.constant 0 : i32
    %c0_i32_2 = arith.constant 0 : i32
    return %arg0, %c0_i32, %c0_i32_0, %c0_i32_1 : i32, i32, i32, i32
  }
  func.func @transform_14(%arg0: i32) -> (i32, i32, i32, i32) {
    %c0_i32 = arith.constant 0 : i32
    %c0_i32_0 = arith.constant 0 : i32
    %c0_i32_1 = arith.constant 0 : i32
    %c0_i32_2 = arith.constant 0 : i32
    return %arg0, %c0_i32, %c0_i32_0, %c0_i32_1 : i32, i32, i32, i32
  }
  func.func @transform_15(%arg0: i32) -> (i32, i32, i32, i32) {
    %c0_i32 = arith.constant 0 : i32
    %c0_i32_0 = arith.constant 0 : i32
    %c0_i32_1 = arith.constant 0 : i32
    %c0_i32_2 = arith.constant 0 : i32
    return %arg0, %c0_i32, %c0_i32_0, %c0_i32_1 : i32, i32, i32, i32
  }
  func.func @transform_16(%arg0: i32) -> (i32, i32, i32) {
    %c0_i32 = arith.constant 0 : i32
    %c0_i32_0 = arith.constant 0 : i32
    %c0_i32_1 = arith.constant 0 : i32
    return %arg0, %c0_i32, %c0_i32_0 : i32, i32, i32
  }
}

</mosaic_0001>

<llo_original>
// kernel: tpu_custom_call.1
$region0: #{tpu_custom_call.1}
  #allocation0 [shape = 'u32[]', space=smem, size = 0x4, offset = 0x4, fixed_abs, tag = 'smem constant byte address 0x4 - core index']
  #allocation1 [shape = 'u32[144,128]{1,0:T(1,128)}', space=vmem, size = 0x12000, scoped, tag = 'internal scratch']
  %s0 = inlined_call_operand.hbm [shape: f32[3,2,8,16], index: 0, kind: input, shape index: {}]
  %s1 = inlined_call_operand.hbm [shape: f32[3,8,128], index: 1, kind: input, shape index: {}]
  %s2 = inlined_call_operand.hbm [shape: bf16[3,16,128], index: 2, kind: input, shape index: {}]
  %s3 = inlined_call_operand.hbm [shape: f32[3,1,128], index: 3, kind: input, shape index: {}]
  %s4 = inlined_call_operand.hbm [shape: bf16[3,2,128,384], index: 4, kind: input, shape index: {}]
  %s5 = inlined_call_operand.hbm [shape: f32[3,2,1,384], index: 5, kind: input, shape index: {}]
  %s6 = inlined_call_operand.hbm [shape: bf16[3,2,128,128], index: 6, kind: input, shape index: {}]
  %s7 = inlined_call_operand.vmem [shape: f32[3,2,1,128], index: 7, kind: input, shape index: {}]
  %s8 = inlined_call_operand.vmem [shape: f32[3,2,1,128], index: 8, kind: input, shape index: {}]
  %s9 = inlined_call_operand.hbm [shape: f32[3,2,1,128], index: 9, kind: input, shape index: {}]
  %s10 = inlined_call_operand.hbm [shape: bf16[3,2,128,512], index: 10, kind: input, shape index: {}]
  %s11 = inlined_call_operand.hbm [shape: f32[3,2,1,512], index: 11, kind: input, shape index: {}]
  %s12 = inlined_call_operand.hbm [shape: bf16[3,2,512,128], index: 12, kind: input, shape index: {}]
  %s13 = inlined_call_operand.vmem [shape: f32[3,2,1,128], index: 13, kind: input, shape index: {}]
  %s14 = inlined_call_operand.vmem [shape: f32[3,2,1,128], index: 14, kind: input, shape index: {}]
  %s15 = inlined_call_operand.hbm [shape: f32[3,2,1,128], index: 15, kind: input, shape index: {}]
  %s16 = inlined_call_operand.hbm [shape: f32[3,2,128], index: 16, kind: output, shape index: {}]
  %s17 = sld [smem:[#allocation0]]
  $region145: #{tpu_custom_call.1} parent=0
    _
  %s19 = ssub.s32 1, %s17
  %s20 = scalar_select 0, %s19, %s17
  $region1: #{tpu_custom_call.1} parent=0
    #allocation2 [shape = 'u8[16384]{0}', space=vmem, size = 0x4000, scoped, tag = 'input window, operand 0']
    #allocation3 [shape = 's32[2]{0}', space=sflag, size = 0x8, scoped, tag = 'scoped memory for tpu_custom_call.1']
    #allocation4 [shape = 's32[2]{0}', space=sflag, size = 0x8, scoped, tag = 'scoped memory for tpu_custom_call.1']
    #allocation5 [shape = 'u8[8192]{0}', space=vmem, size = 0x2000, scoped, tag = 'input window, operand 1']
    #allocation6 [shape = 's32[2]{0}', space=sflag, size = 0x8, scoped, tag = 'scoped memory for tpu_custom_call.1']
    #allocation7 [shape = 'u8[8192]{0}', space=vmem, size = 0x2000, scoped, tag = 'input window, operand 2']
    #allocation8 [shape = 'u8[1024]{0}', space=vmem, size = 0x400, scoped, tag = 'input window, operand 3']
    #allocation9 [shape = 's32[2]{0}', space=sflag, size = 0x8, scoped, tag = 'scoped memory for tpu_custom_call.1']
    #allocation10 [shape = 'u8[393216]{0}', space=vmem, size = 0x60000, scoped, tag = 'input window, operand 4']
    #allocation11 [shape = 'u8[6144]{0}', space=vmem, size = 0x1800, scoped, tag = 'input window, operand 5']
    #allocation12 [shape = 's32[2]{0}', space=sflag, size = 0x8, scoped, tag = 'scoped memory for tpu_custom_call.1']
    #allocation13 [shape = 'u8[131072]{0}', space=vmem, size = 0x20000, scoped, tag = 'input window, operand 6']
    #allocation14 [shape = 'u8[2048]{0}', space=vmem, size = 0x800, scoped, tag = 'input window, operand 9']
    #allocation15 [shape = 's32[2]{0}', space=sflag, size = 0x8, scoped, tag = 'scoped memory for tpu_custom_call.1']
    #allocation16 [shape = 'u8[524288]{0}', space=vmem, size = 0x80000, scoped, tag = 'input window, operand 10']
    #allocation17 [shape = 'u8[8192]{0}', space=vmem, size = 0x2000, scoped, tag = 'input window, operand 11']
    #allocation18 [shape = 's32[2]{0}', space=sflag, size = 0x8, scoped, tag = 'scoped memory for tpu_custom_call.1']
    #allocation19 [shape = 'u8[524288]{0}', space=vmem, size = 0x80000, scoped, tag = 'input window, operand 12']
    #allocation20 [shape = 'u8[2048]{0}', space=vmem, size = 0x800, scoped, tag = 'input window, operand 15']
    #allocation21 [shape = 's32[2]{0}', space=sflag, size = 0x8, scoped, tag = 'scoped memory for tpu_custom_call.1']
    #allocation22 [shape = 'u8[2048]{0}', space=vmem, size = 0x800, scoped, tag = 'output window, operand 0']
    %21 = vsyncpa [#allocation3], 0
    %s22 = scalar_lea.sflag [#allocation3], 1
    %23 = vsyncpa %s22, 0
    %24 = vsyncpa [#allocation6], 0
    %s25 = scalar_lea.sflag [#allocation6], 1
    %26 = vsyncpa %s25, 0
    %27 = vsyncpa [#allocation9], 0
    %s28 = scalar_lea.sflag [#allocation9], 1
    %29 = vsyncpa %s28, 0
    %30 = vsyncpa [#allocation12], 0
    %s31 = scalar_lea.sflag [#allocation12], 1
    %32 = vsyncpa %s31, 0
    %33 = vsyncpa [#allocation15], 0
    %s34 = scalar_lea.sflag [#allocation15], 1
    %35 = vsyncpa %s34, 0
    %36 = vsyncpa [#allocation18], 0
    %s37 = scalar_lea.sflag [#allocation18], 1
    %38 = vsyncpa %s37, 0
    %39 = vsyncpa [#allocation21], 0
    %s40 = scalar_lea.sflag [#allocation21], 1
    %41 = vsyncpa %s40, 0
    %42 = vsyncpa [#allocation4], 0
    %s43 = scalar_lea.sflag [#allocation4], 1
    %44 = vsyncpa %s43, 0
    loop: start=0, step=1, limit=5
    $region2: #{tpu_custom_call.1} parent=1 // loop_pre_header
      _
    $region3: #{tpu_custom_call.1} parent=1 // loop_header
      %s46 = sphi 0, %s50
      %p47 = scmp.ge.s32.totalorder %s46, 5
      %s56 = sphi 0, %s58
      %s59 = sphi 0, %s56
      %s60 = sphi 0, %s59
      %s76 = sphi 0, %s60
      %s82 = sphi 0, %s84
      %s85 = sphi 0, %s82
      %s86 = sphi 0, %s85
      %s102 = sphi 0, %s86
      %s108 = sphi 0, %s110
      %s111 = sphi 0, %s108
      %s112 = sphi 0, %s111
      %s128 = sphi 0, %s112
      %s134 = sphi 0, %s136
      %s137 = sphi 0, %s134
      %s138 = sphi 0, %s137
      %s154 = sphi 0, %s138
      %s160 = sphi 0, %s162
      %s163 = sphi 0, %s160
      %s164 = sphi 0, %s163
      %s180 = sphi 0, %s164
      %s186 = sphi 0, %s188
      %s189 = sphi 0, %s186
      %s190 = sphi 0, %s189
      %s206 = sphi 0, %s190
      %s212 = sphi 0, %s214
      %s215 = sphi 0, %s212
      %s216 = sphi 0, %s215
      %s232 = sphi 0, %s216
      %s238 = sphi 0, %s240
      %s241 = sphi 0, %s238
      %s242 = sphi 0, %s241
      %s258 = sphi 0, %s242
      %s264 = sphi 0, %s266
      %s267 = sphi 0, %s264
      %s268 = sphi 0, %s267
      %s284 = sphi 0, %s268
      %s290 = sphi 0, %s292
      %s293 = sphi 0, %s290
      %s294 = sphi 0, %s293
      %s310 = sphi 0, %s294
      %s316 = sphi 0, %s318
      %s319 = sphi 0, %s316
      %s320 = sphi 0, %s319
      %s336 = sphi 0, %s320
      %s342 = sphi 0, %s344
      %s345 = sphi 0, %s342
      %s346 = sphi 0, %s345
      %s362 = sphi 0, %s346
      %s368 = sphi 0, %s370
      %s371 = sphi 0, %s368
      %s372 = sphi 0, %s371
      %s388 = sphi 0, %s372
      %s394 = sphi 0, %s396
      %s397 = sphi 0, %s394
      %s398 = sphi 0, %s397
      %s414 = sphi 0, %s398
      %s420 = sphi 0, %s422
      %s423 = sphi 0, %s420
      %s424 = sphi 0, %s423
      %s440 = sphi 0, %s424
      %s446 = sphi 0, %s448
      %s449 = sphi 0, %s446
      %s450 = sphi 0, %s449
      %s466 = sphi 0, %s450
      %s472 = sphi 0, %s474
      %s475 = sphi 0, %s472
      %s476 = sphi 0, %s475
      %s492 = sphi 0, %s476
    $region4: #{tpu_custom_call.1} parent=1 // loop_header_branch
      %49 = sbr.rel (%p47) target = $region8
    $region5: #{tpu_custom_call.1} parent=1 // loop_body
      %s51 = ssub.s32 %s46, 1
      %s52 = ssub.s32 %s46, 2
      %s53 = sadd.s32 %s46, 1
      %s54 = ssub.s32 %s46, %s53
      %p55 = scmp.eq.s32.totalorder %s54, 0
      %s57 = sadd.s32 %s56, 1
      %s58 = scalar_select %p55, %s56, %s57
      %p61 = pneg %p55
      %p62 = scmp.eq.s32.totalorder %s46, 2
      %p63 = por %p61, %p62
      %p64 = scmp.ne.s32.totalorder %s56, %s59
      %p65 = scmp.eq.s32.totalorder %s46, 0
      %p66 = por %p64, %p65
      %p67 = scmp.ne.s32.totalorder %s56, %s59
      %p68 = scmp.eq.s32.totalorder %s51, 2
      %p69 = por %p67, %p68
      %p70 = scmp.ne.s32.totalorder %s59, %s60
      %p71 = scmp.eq.s32.totalorder %s51, 0
      %p72 = por %p70, %p71
      %p73 = scmp.ne.s32.totalorder %s59, %s60
      %p74 = scmp.eq.s32.totalorder %s52, 2
      %p75 = por %p73, %p74
      %p77 = scmp.ne.s32.totalorder %s60, %s76
      %p78 = scmp.eq.s32.totalorder %s52, 0
      %p79 = por %p77, %p78
      %s80 = ssub.s32 %s46, %s53
      %p81 = scmp.eq.s32.totalorder %s80, 0
      %s83 = sadd.s32 %s82, 1
      %s84 = scalar_select %p81, %s82, %s83
      %p87 = pneg %p81
      %p88 = scmp.eq.s32.totalorder %s46, 2
      %p89 = por %p87, %p88
      %p90 = scmp.ne.s32.totalorder %s82, %s85
      %p91 = scmp.eq.s32.totalorder %s46, 0
      %p92 = por %p90, %p91
      %p93 = scmp.ne.s32.totalorder %s82, %s85
      %p94 = scmp.eq.s32.totalorder %s51, 2
      %p95 = por %p93, %p94
      %p96 = scmp.ne.s32.totalorder %s85, %s86
      %p97 = scmp.eq.s32.totalorder %s51, 0
      %p98 = por %p96, %p97
      %p99 = scmp.ne.s32.totalorder %s85, %s86
      %p100 = scmp.eq.s32.totalorder %s52, 2
      %p101 = por %p99, %p100
      %p103 = scmp.ne.s32.totalorder %s86, %s102
      %p104 = scmp.eq.s32.totalorder %s52, 0
      %p105 = por %p103, %p104
      %s106 = ssub.s32 %s46, %s53
      %p107 = scmp.eq.s32.totalorder %s106, 0
      %s109 = sadd.s32 %s108, 1
      %s110 = scalar_select %p107, %s108, %s109
      %p113 = pneg %p107
      %p114 = scmp.eq.s32.totalorder %s46, 2
      %p115 = por %p113, %p114
      %p116 = scmp.ne.s32.totalorder %s108, %s111
      %p117 = scmp.eq.s32.totalorder %s46, 0
      %p118 = por %p116, %p117
      %p119 = scmp.ne.s32.totalorder %s108, %s111
      %p120 = scmp.eq.s32.totalorder %s51, 2
      %p121 = por %p119, %p120
      %p122 = scmp.ne.s32.totalorder %s111, %s112
      %p123 = scmp.eq.s32.totalorder %s51, 0
      %p124 = por %p122, %p123
      %p125 = scmp.ne.s32.totalorder %s111, %s112
      %p126 = scmp.eq.s32.totalorder %s52, 2
      %p127 = por %p125, %p126
      %p129 = scmp.ne.s32.totalorder %s112, %s128
      %p130 = scmp.eq.s32.totalorder %s52, 0
      %p131 = por %p129, %p130
      %s132 = ssub.s32 %s46, %s53
      %p133 = scmp.eq.s32.totalorder %s132, 0
      %s135 = sadd.s32 %s134, 1
      %s136 = scalar_select %p133, %s134, %s135
      %p139 = pneg %p133
      %p140 = scmp.eq.s32.totalorder %s46, 2
      %p141 = por %p139, %p140
      %p142 = scmp.ne.s32.totalorder %s134, %s137
      %p143 = scmp.eq.s32.totalorder %s46, 0
      %p144 = por %p142, %p143
      %p145 = scmp.ne.s32.totalorder %s134, %s137
      %p146 = scmp.eq.s32.totalorder %s51, 2
      %p147 = por %p145, %p146
      %p148 = scmp.ne.s32.totalorder %s137, %s138
      %p149 = scmp.eq.s32.totalorder %s51, 0
      %p150 = por %p148, %p149
      %p151 = scmp.ne.s32.totalorder %s137, %s138
      %p152 = scmp.eq.s32.totalorder %s52, 2
      %p153 = por %p151, %p152
      %p155 = scmp.ne.s32.totalorder %s138, %s154
      %p156 = scmp.eq.s32.totalorder %s52, 0
      %p157 = por %p155, %p156
      %s158 = ssub.s32 %s46, %s53
      %p159 = scmp.eq.s32.totalorder %s158, 0
      %s161 = sadd.s32 %s160, 1
      %s162 = scalar_select %p159, %s160, %s161
      %p165 = pneg %p159
      %p166 = scmp.eq.s32.totalorder %s46, 2
      %p167 = por %p165, %p166
      %p168 = scmp.ne.s32.totalorder %s160, %s163
      %p169 = scmp.eq.s32.totalorder %s46, 0
      %p170 = por %p168, %p169
      %p171 = scmp.ne.s32.totalorder %s160, %s163
      %p172 = scmp.eq.s32.totalorder %s51, 2
      %p173 = por %p171, %p172
      %p174 = scmp.ne.s32.totalorder %s163, %s164
      %p175 = scmp.eq.s32.totalorder %s51, 0
      %p176 = por %p174, %p175
      %p177 = scmp.ne.s32.totalorder %s163, %s164
      %p178 = scmp.eq.s32.totalorder %s52, 2
      %p179 = por %p177, %p178
      %p181 = scmp.ne.s32.totalorder %s164, %s180
      %p182 = scmp.eq.s32.totalorder %s52, 0
      %p183 = por %p181, %p182
      %s184 = ssub.s32 %s46, %s53
      %p185 = scmp.eq.s32.totalorder %s184, 0
      %s187 = sadd.s32 %s186, 1
      %s188 = scalar_select %p185, %s186, %s187
      %p191 = pneg %p185
      %p192 = scmp.eq.s32.totalorder %s46, 2
      %p193 = por %p191, %p192
      %p194 = scmp.ne.s32.totalorder %s186, %s189
      %p195 = scmp.eq.s32.totalorder %s46, 0
      %p196 = por %p194, %p195
      %p197 = scmp.ne.s32.totalorder %s186, %s189
      %p198 = scmp.eq.s32.totalorder %s51, 2
      %p199 = por %p197, %p198
      %p200 = scmp.ne.s32.totalorder %s189, %s190
      %p201 = scmp.eq.s32.totalorder %s51, 0
      %p202 = por %p200, %p201
      %p203 = scmp.ne.s32.totalorder %s189, %s190
      %p204 = scmp.eq.s32.totalorder %s52, 2
      %p205 = por %p203, %p204
      %p207 = scmp.ne.s32.totalorder %s190, %s206
      %p208 = scmp.eq.s32.totalorder %s52, 0
      %p209 = por %p207, %p208
      %s210 = ssub.s32 %s46, %s53
      %p211 = scmp.eq.s32.totalorder %s210, 0
      %s213 = sadd.s32 %s212, 1
      %s214 = scalar_select %p211, %s212, %s213
      %p217 = pneg %p211
      %p218 = scmp.eq.s32.totalorder %s46, 2
      %p219 = por %p217, %p218
      %p220 = scmp.ne.s32.totalorder %s212, %s215
      %p221 = scmp.eq.s32.totalorder %s46, 0
      %p222 = por %p220, %p221
      %p223 = scmp.ne.s32.totalorder %s212, %s215
      %p224 = scmp.eq.s32.totalorder %s51, 2
      %p225 = por %p223, %p224
      %p226 = scmp.ne.s32.totalorder %s215, %s216
      %p227 = scmp.eq.s32.totalorder %s51, 0
      %p228 = por %p226, %p227
      %p229 = scmp.ne.s32.totalorder %s215, %s216
      %p230 = scmp.eq.s32.totalorder %s52, 2
      %p231 = por %p229, %p230
      %p233 = scmp.ne.s32.totalorder %s216, %s232
      %p234 = scmp.eq.s32.totalorder %s52, 0
      %p235 = por %p233, %p234
      %s236 = ssub.s32 %s46, %s53
      %p237 = scmp.eq.s32.totalorder %s236, 0
      %s239 = sadd.s32 %s238, 1
      %s240 = scalar_select %p237, %s238, %s239
      %p243 = pneg %p237
      %p244 = scmp.eq.s32.totalorder %s46, 2
      %p245 = por %p243, %p244
      %p246 = scmp.ne.s32.totalorder %s238, %s241
      %p247 = scmp.eq.s32.totalorder %s46, 0
      %p248 = por %p246, %p247
      %p249 = scmp.ne.s32.totalorder %s238, %s241
      %p250 = scmp.eq.s32.totalorder %s51, 2
      %p251 = por %p249, %p250
      %p252 = scmp.ne.s32.totalorder %s241, %s242
      %p253 = scmp.eq.s32.totalorder %s51, 0
      %p254 = por %p252, %p253
      %p255 = scmp.ne.s32.totalorder %s241, %s242
      %p256 = scmp.eq.s32.totalorder %s52, 2
      %p257 = por %p255, %p256
      %p259 = scmp.ne.s32.totalorder %s242, %s258
      %p260 = scmp.eq.s32.totalorder %s52, 0
      %p261 = por %p259, %p260
      %s262 = ssub.s32 %s46, %s53
      %p263 = scmp.eq.s32.totalorder %s262, 0
      %s265 = sadd.s32 %s264, 1
      %s266 = scalar_select %p263, %s264, %s265
      %p269 = pneg %p263
      %p270 = scmp.eq.s32.totalorder %s46, 2
      %p271 = por %p269, %p270
      %p272 = scmp.ne.s32.totalorder %s264, %s267
      %p273 = scmp.eq.s32.totalorder %s46, 0
      %p274 = por %p272, %p273
      %p275 = scmp.ne.s32.totalorder %s264, %s267
      %p276 = scmp.eq.s32.totalorder %s51, 2
      %p277 = por %p275, %p276
      %p278 = scmp.ne.s32.totalorder %s267, %s268
      %p279 = scmp.eq.s32.totalorder %s51, 0
      %p280 = por %p278, %p279
      %p281 = scmp.ne.s32.totalorder %s267, %s268
      %p282 = scmp.eq.s32.totalorder %s52, 2
      %p283 = por %p281, %p282
      %p285 = scmp.ne.s32.totalorder %s268, %s284
      %p286 = scmp.eq.s32.totalorder %s52, 0
      %p287 = por %p285, %p286
      %s288 = ssub.s32 %s46, %s53
      %p289 = scmp.eq.s32.totalorder %s288, 0
      %s291 = sadd.s32 %s290, 1
      %s292 = scalar_select %p289, %s290, %s291
      %p295 = pneg %p289
      %p296 = scmp.eq.s32.totalorder %s46, 2
      %p297 = por %p295, %p296
      %p298 = scmp.ne.s32.totalorder %s290, %s293
      %p299 = scmp.eq.s32.totalorder %s46, 0
      %p300 = por %p298, %p299
      %p301 = scmp.ne.s32.totalorder %s290, %s293
      %p302 = scmp.eq.s32.totalorder %s51, 2
      %p303 = por %p301, %p302
      %p304 = scmp.ne.s32.totalorder %s293, %s294
      %p305 = scmp.eq.s32.totalorder %s51, 0
      %p306 = por %p304, %p305
      %p307 = scmp.ne.s32.totalorder %s293, %s294
      %p308 = scmp.eq.s32.totalorder %s52, 2
      %p309 = por %p307, %p308
      %p311 = scmp.ne.s32.totalorder %s294, %s310
      %p312 = scmp.eq.s32.totalorder %s52, 0
      %p313 = por %p311, %p312
      %s314 = ssub.s32 %s46, %s53
      %p315 = scmp.eq.s32.totalorder %s314, 0
      %s317 = sadd.s32 %s316, 1
      %s318 = scalar_select %p315, %s316, %s317
      %p321 = pneg %p315
      %p322 = scmp.eq.s32.totalorder %s46, 2
      %p323 = por %p321, %p322
      %p324 = scmp.ne.s32.totalorder %s316, %s319
      %p325 = scmp.eq.s32.totalorder %s46, 0
      %p326 = por %p324, %p325
      %p327 = scmp.ne.s32.totalorder %s316, %s319
      %p328 = scmp.eq.s32.totalorder %s51, 2
      %p329 = por %p327, %p328
      %p330 = scmp.ne.s32.totalorder %s319, %s320
      %p331 = scmp.eq.s32.totalorder %s51, 0
      %p332 = por %p330, %p331
      %p333 = scmp.ne.s32.totalorder %s319, %s320
      %p334 = scmp.eq.s32.totalorder %s52, 2
      %p335 = por %p333, %p334
      %p337 = scmp.ne.s32.totalorder %s320, %s336
      %p338 = scmp.eq.s32.totalorder %s52, 0
      %p339 = por %p337, %p338
      %s340 = ssub.s32 %s46, %s53
      %p341 = scmp.eq.s32.totalorder %s340, 0
      %s343 = sadd.s32 %s342, 1
      %s344 = scalar_select %p341, %s342, %s343
      %p347 = pneg %p341
      %p348 = scmp.eq.s32.totalorder %s46, 2
      %p349 = por %p347, %p348
      %p350 = scmp.ne.s32.totalorder %s342, %s345
      %p351 = scmp.eq.s32.totalorder %s46, 0
      %p352 = por %p350, %p351
      %p353 = scmp.ne.s32.totalorder %s342, %s345
      %p354 = scmp.eq.s32.totalorder %s51, 2
      %p355 = por %p353, %p354
      %p356 = scmp.ne.s32.totalorder %s345, %s346
      %p357 = scmp.eq.s32.totalorder %s51, 0
      %p358 = por %p356, %p357
      %p359 = scmp.ne.s32.totalorder %s345, %s346
      %p360 = scmp.eq.s32.totalorder %s52, 2
      %p361 = por %p359, %p360
      %p363 = scmp.ne.s32.totalorder %s346, %s362
      %p364 = scmp.eq.s32.totalorder %s52, 0
      %p365 = por %p363, %p364
      %s366 = ssub.s32 %s46, %s53
      %p367 = scmp.eq.s32.totalorder %s366, 0
      %s369 = sadd.s32 %s368, 1
      %s370 = scalar_select %p367, %s368, %s369
      %p373 = pneg %p367
      %p374 = scmp.eq.s32.totalorder %s46, 2
      %p375 = por %p373, %p374
      %p376 = scmp.ne.s32.totalorder %s368, %s371
      %p377 = scmp.eq.s32.totalorder %s46, 0
      %p378 = por %p376, %p377
      %p379 = scmp.ne.s32.totalorder %s368, %s371
      %p380 = scmp.eq.s32.totalorder %s51, 2
      %p381 = por %p379, %p380
      %p382 = scmp.ne.s32.totalorder %s371, %s372
      %p383 = scmp.eq.s32.totalorder %s51, 0
      %p384 = por %p382, %p383
      %p385 = scmp.ne.s32.totalorder %s371, %s372
      %p386 = scmp.eq.s32.totalorder %s52, 2
      %p387 = por %p385, %p386
      %p389 = scmp.ne.s32.totalorder %s372, %s388
      %p390 = scmp.eq.s32.totalorder %s52, 0
      %p391 = por %p389, %p390
      %s392 = ssub.s32 %s46, %s53
      %p393 = scmp.eq.s32.totalorder %s392, 0
      %s395 = sadd.s32 %s394, 1
      %s396 = scalar_select %p393, %s394, %s395
      %p399 = pneg %p393
      %p400 = scmp.eq.s32.totalorder %s46, 2
      %p401 = por %p399, %p400
      %p402 = scmp.ne.s32.totalorder %s394, %s397
      %p403 = scmp.eq.s32.totalorder %s46, 0
      %p404 = por %p402, %p403
      %p405 = scmp.ne.s32.totalorder %s394, %s397
      %p406 = scmp.eq.s32.totalorder %s51, 2
      %p407 = por %p405, %p406
      %p408 = scmp.ne.s32.totalorder %s397, %s398
      %p409 = scmp.eq.s32.totalorder %s51, 0
      %p410 = por %p408, %p409
      %p411 = scmp.ne.s32.totalorder %s397, %s398
      %p412 = scmp.eq.s32.totalorder %s52, 2
      %p413 = por %p411, %p412
      %p415 = scmp.ne.s32.totalorder %s398, %s414
      %p416 = scmp.eq.s32.totalorder %s52, 0
      %p417 = por %p415, %p416
      %s418 = ssub.s32 %s46, %s53
      %p419 = scmp.eq.s32.totalorder %s418, 0
      %s421 = sadd.s32 %s420, 1
      %s422 = scalar_select %p419, %s420, %s421
      %p425 = pneg %p419
      %p426 = scmp.eq.s32.totalorder %s46, 2
      %p427 = por %p425, %p426
      %p428 = scmp.ne.s32.totalorder %s420, %s423
      %p429 = scmp.eq.s32.totalorder %s46, 0
      %p430 = por %p428, %p429
      %p431 = scmp.ne.s32.totalorder %s420, %s423
      %p432 = scmp.eq.s32.totalorder %s51, 2
      %p433 = por %p431, %p432
      %p434 = scmp.ne.s32.totalorder %s423, %s424
      %p435 = scmp.eq.s32.totalorder %s51, 0
      %p436 = por %p434, %p435
      %p437 = scmp.ne.s32.totalorder %s423, %s424
      %p438 = scmp.eq.s32.totalorder %s52, 2
      %p439 = por %p437, %p438
      %p441 = scmp.ne.s32.totalorder %s424, %s440
      %p442 = scmp.eq.s32.totalorder %s52, 0
      %p443 = por %p441, %p442
      %s444 = ssub.s32 %s46, %s53
      %p445 = scmp.eq.s32.totalorder %s444, 0
      %s447 = sadd.s32 %s446, 1
      %s448 = scalar_select %p445, %s446, %s447
      %p451 = pneg %p445
      %p452 = scmp.eq.s32.totalorder %s46, 2
      %p453 = por %p451, %p452
      %p454 = scmp.ne.s32.totalorder %s446, %s449
      %p455 = scmp.eq.s32.totalorder %s46, 0
      %p456 = por %p454, %p455
      %p457 = scmp.ne.s32.totalorder %s446, %s449
      %p458 = scmp.eq.s32.totalorder %s51, 2
      %p459 = por %p457, %p458
      %p460 = scmp.ne.s32.totalorder %s449, %s450
      %p461 = scmp.eq.s32.totalorder %s51, 0
      %p462 = por %p460, %p461
      %p463 = scmp.ne.s32.totalorder %s449, %s450
      %p464 = scmp.eq.s32.totalorder %s52, 2
      %p465 = por %p463, %p464
      %p467 = scmp.ne.s32.totalorder %s450, %s466
      %p468 = scmp.eq.s32.totalorder %s52, 0
      %p469 = por %p467, %p468
      %s470 = ssub.s32 %s46, %s53
      %p471 = scmp.eq.s32.totalorder %s470, 0
      %s473 = sadd.s32 %s472, 1
      %s474 = scalar_select %p471, %s472, %s473
      %p477 = pneg %p471
      %p478 = scmp.eq.s32.totalorder %s46, 2
      %p479 = por %p477, %p478
      %p480 = scmp.ne.s32.totalorder %s472, %s475
      %p481 = scmp.eq.s32.totalorder %s46, 0
      %p482 = por %p480, %p481
      %p483 = scmp.ne.s32.totalorder %s472, %s475
      %p484 = scmp.eq.s32.totalorder %s51, 2
      %p485 = por %p483, %p484
      %p486 = scmp.ne.s32.totalorder %s475, %s476
      %p487 = scmp.eq.s32.totalorder %s51, 0
      %p488 = por %p486, %p487
      %p489 = scmp.ne.s32.totalorder %s475, %s476
      %p490 = scmp.eq.s32.totalorder %s52, 2
      %p491 = por %p489, %p490
      %p493 = scmp.ne.s32.totalorder %s476, %s492
      %p494 = scmp.eq.s32.totalorder %s52, 0
      %p495 = por %p493, %p494
      %p496 = scmp.le.s32.totalorder 1, %s46
      %p497 = scmp.lt.s32.totalorder %s46, 4
      %p498 = pnand %p496, %p497
      %p499 = pneg %p498
      // Predicated region
      $region9: #{tpu_custom_call.1} parent=5 // pred_check
        _
      $region10: #{tpu_custom_call.1} parent=5 // pred_check_branch
        %501 = sbr.rel (%p498) target = $region12
      $region11: #{tpu_custom_call.1} parent=5 // pred_region
        %s502 = ssub.s32 %s46, 1
      $region12: #{tpu_custom_call.1} parent=5 // pred_fallthru
        _
      %p503 = scmp.lt.s32.totalorder %s46, 3
      // Predicated region
      $region13: #{tpu_custom_call.1} parent=5 // pred_check
        %p504 = pneg %p503
      $region14: #{tpu_custom_call.1} parent=5 // pred_check_branch
        %506 = sbr.rel (%p504) target = $region16
      $region15: #{tpu_custom_call.1} parent=5 // pred_region
        // Predicated region
        $region17: #{tpu_custom_call.1} parent=15 // pred_check
          %p507 = pneg %p66
        $region18: #{tpu_custom_call.1} parent=15 // pred_check_branch
          %509 = sbr.rel (%p507) target = $region20
        $region19: #{tpu_custom_call.1} parent=15 // pred_region
          %s510 = sand.u32 %s56, 1
          %s511 = scalar_lea.sflag [#allocation3], %s510
          %s512 = sand.u32 %s56, 1
          %s513 = smul.addr %s512, 16
          %s514 = scalar_lea.vmem [#allocation2], %s513
          %s516 = ssub.s32 256, 256
          %517 = vsyncadd %s511, %s516
          %s518 = smul.addr %s46, 2
          %s519 = smul.addr %s518, 128
          %s520 = scalar_lea.hbm %s0, %s519
          %s521 = sshll.u32 %s514, 4
          %s522 = int_to_ptr.vmem [resolvable:$true] %s521
          %527 = dma.hbm_to_vmem [thread:$0]  %s520, 256, %s522, %s511, 128, 128, 8
        $region20: #{tpu_custom_call.1} parent=15 // pred_fallthru
          _
        // Predicated region
        $region21: #{tpu_custom_call.1} parent=15 // pred_check
          %p528 = pneg %p92
        $region22: #{tpu_custom_call.1} parent=15 // pred_check_branch
          %530 = sbr.rel (%p528) target = $region24
        $region23: #{tpu_custom_call.1} parent=15 // pred_region
          %s531 = sand.u32 %s46, 1
          %s532 = scalar_lea.sflag [#allocation6], %s531
          %s533 = sand.u32 %s82, 1
          %s534 = smul.addr %s533, 8
          %s535 = scalar_lea.vmem [#allocation5], %s534
          %s537 = ssub.s32 128, 128
          %538 = vsyncadd %s532, %s537
          %s539 = smul.addr %s46, 128
          %s540 = scalar_lea.hbm %s1, %s539
          %s542 = sshll.u32 %s535, 4
          %s543 = int_to_ptr.vmem [resolvable:$true] %s542
          %545 = dma.hbm_to_vmem [thread:$0]  %s540, 128, %s543, %s532
        $region24: #{tpu_custom_call.1} parent=15 // pred_fallthru
          _
        // Predicated region
        $region25: #{tpu_custom_call.1} parent=15 // pred_check
          %p546 = pneg %p118
        $region26: #{tpu_custom_call.1} parent=15 // pred_check_branch
          %548 = sbr.rel (%p546) target = $region28
        $region27: #{tpu_custom_call.1} parent=15 // pred_region
          %s549 = sand.u32 %s46, 1
          %s550 = scalar_lea.sflag [#allocation6], %s549
          %s551 = sand.u32 %s108, 1
          %s552 = smul.addr %s551, 8
          %s553 = scalar_lea.vmem [#allocation7], %s552
          %s555 = ssub.s32 128, 128
          %556 = vsyncadd %s550, %s555
          %s557 = smul.addr %s46, 2
          %s558 = smul.addr %s557, 64
          %s559 = scalar_lea.hbm %s2, %s558
          %s560 = sshll.u32 %s553, 4
          %s561 = int_to_ptr.vmem [resolvable:$true] %s560
          %566 = dma.hbm_to_vmem [thread:$0]  %s559, 128, %s561, %s550, 64, 64, 4
        $region28: #{tpu_custom_call.1} parent=15 // pred_fallthru
          _
        // Predicated region
        $region29: #{tpu_custom_call.1} parent=15 // pred_check
          %p567 = pneg %p144
        $region30: #{tpu_custom_call.1} parent=15 // pred_check_branch
          %569 = sbr.rel (%p567) target = $region32
        $region31: #{tpu_custom_call.1} parent=15 // pred_region
          %s570 = sand.u32 %s46, 1
          %s571 = scalar_lea.sflag [#allocation9], %s570
          %s572 = sand.u32 %s134, 1
          %s573 = scalar_lea.vmem [#allocation8], %s572
          %s575 = ssub.s32 16, 16
          %576 = vsyncadd %s571, %s575
          %s577 = smul.addr %s46, 16
          %s578 = scalar_lea.hbm %s3, %s577
          %s580 = sshll.u32 %s573, 4
          %s581 = int_to_ptr.vmem [resolvable:$true] %s580
          %583 = dma.hbm_to_vmem [thread:$0]  %s578, 16, %s581, %s571
        $region32: #{tpu_custom_call.1} parent=15 // pred_fallthru
          _
        // Predicated region
        $region33: #{tpu_custom_call.1} parent=15 // pred_check
          %p584 = pneg %p170
        $region34: #{tpu_custom_call.1} parent=15 // pred_check_branch
          %586 = sbr.rel (%p584) target = $region36
        $region35: #{tpu_custom_call.1} parent=15 // pred_region
          %s587 = sand.u32 %s46, 1
          %s588 = scalar_lea.sflag [#allocation9], %s587
          %s589 = sand.u32 %s160, 1
          %s590 = smul.addr %s589, 384
          %s591 = scalar_lea.vmem [#allocation10], %s590
          %s593 = ssub.s32 6144, 6144
          %594 = vsyncadd %s588, %s593
          %s595 = smul.addr %s46, 96
          %s596 = smul.addr %s595, 64
          %s597 = scalar_lea.hbm %s4, %s596
          %s598 = sshll.u32 %s591, 4
          %s599 = int_to_ptr.vmem [resolvable:$true] %s598
          %604 = dma.hbm_to_vmem [thread:$0]  %s597, 6144, %s599, %s588, 192, 192, 12
        $region36: #{tpu_custom_call.1} parent=15 // pred_fallthru
          _
        // Predicated region
        $region37: #{tpu_custom_call.1} parent=15 // pred_check
          %p605 = pneg %p196
        $region38: #{tpu_custom_call.1} parent=15 // pred_check_branch
          %607 = sbr.rel (%p605) target = $region40
        $region39: #{tpu_custom_call.1} parent=15 // pred_region
          %s608 = sand.u32 %s46, 1
          %s609 = scalar_lea.sflag [#allocation12], %s608
          %s610 = sand.u32 %s186, 1
          %s611 = smul.addr %s610, 6
          %s612 = scalar_lea.vmem [#allocation11], %s611
          %s614 = ssub.s32 96, 96
          %615 = vsyncadd %s609, %s614
          %s616 = smul.addr %s46, 6
          %s617 = smul.addr %s616, 16
          %s618 = scalar_lea.hbm %s5, %s617
          %s619 = sshll.u32 %s612, 4
          %s620 = int_to_ptr.vmem [resolvable:$true] %s619
          %625 = dma.hbm_to_vmem [thread:$0]  %s618, 96, %s620, %s609, 48, 48, 3
        $region40: #{tpu_custom_call.1} parent=15 // pred_fallthru
          _
        // Predicated region
        $region41: #{tpu_custom_call.1} parent=15 // pred_check
          %p626 = pneg %p222
        $region42: #{tpu_custom_call.1} parent=15 // pred_check_branch
          %628 = sbr.rel (%p626) target = $region44
        $region43: #{tpu_custom_call.1} parent=15 // pred_region
          %s629 = sand.u32 %s46, 1
          %s630 = scalar_lea.sflag [#allocation12], %s629
          %s631 = sand.u32 %s212, 1
          %s632 = smul.addr %s631, 128
          %s633 = scalar_lea.vmem [#allocation13], %s632
          %s635 = ssub.s32 2048, 2048
          %636 = vsyncadd %s630, %s635
          %s637 = smul.addr %s46, 32
          %s638 = smul.addr %s637, 64
          %s639 = scalar_lea.hbm %s6, %s638
          %s640 = sshll.u32 %s633, 4
          %s641 = int_to_ptr.vmem [resolvable:$true] %s640
          %646 = dma.hbm_to_vmem [thread:$0]  %s639, 2048, %s641, %s630, 64, 64, 4
        $region44: #{tpu_custom_call.1} parent=15 // pred_fallthru
          _
        // Predicated region
        $region45: #{tpu_custom_call.1} parent=15 // pred_check
          %p647 = pneg %p248
        $region46: #{tpu_custom_call.1} parent=15 // pred_check_branch
          %649 = sbr.rel (%p647) target = $region48
        $region47: #{tpu_custom_call.1} parent=15 // pred_region
          %p650 = scmp.lt.s32.totalorder %s46, 2
          %s651 = scalar_select %p650, %s46, 2
          %s652 = smul.addr %s651, 2
          %s653 = scalar_lea.vmem %s7, %s652
        $region48: #{tpu_custom_call.1} parent=15 // pred_fallthru
          _
        // Predicated region
        $region49: #{tpu_custom_call.1} parent=15 // pred_check
          %p654 = pneg %p274
        $region50: #{tpu_custom_call.1} parent=15 // pred_check_branch
          %656 = sbr.rel (%p654) target = $region52
        $region51: #{tpu_custom_call.1} parent=15 // pred_region
          %p657 = scmp.lt.s32.totalorder %s46, 2
          %s658 = scalar_select %p657, %s46, 2
          %s659 = smul.addr %s658, 2
          %s660 = scalar_lea.vmem %s8, %s659
        $region52: #{tpu_custom_call.1} parent=15 // pred_fallthru
          _
        // Predicated region
        $region53: #{tpu_custom_call.1} parent=15 // pred_check
          %p661 = pneg %p300
        $region54: #{tpu_custom_call.1} parent=15 // pred_check_branch
          %663 = sbr.rel (%p661) target = $region56
        $region55: #{tpu_custom_call.1} parent=15 // pred_region
          %s664 = sand.u32 %s46, 1
          %s665 = scalar_lea.sflag [#allocation15], %s664
          %s666 = sand.u32 %s290, 1
          %s667 = smul.addr %s666, 2
          %s668 = scalar_lea.vmem [#allocation14], %s667
          %s670 = ssub.s32 32, 32
          %671 = vsyncadd %s665, %s670
          %s672 = smul.addr %s46, 2
          %s673 = smul.addr %s672, 16
          %s674 = scalar_lea.hbm %s9, %s673
          %s675 = sshll.u32 %s668, 4
          %s676 = int_to_ptr.vmem [resolvable:$true] %s675
          %681 = dma.hbm_to_vmem [thread:$0]  %s674, 32, %s676, %s665, 16, 16, 1
        $region56: #{tpu_custom_call.1} parent=15 // pred_fallthru
          _
        // Predicated region
        $region57: #{tpu_custom_call.1} parent=15 // pred_check
          %p682 = pneg %p326
        $region58: #{tpu_custom_call.1} parent=15 // pred_check_branch
          %684 = sbr.rel (%p682) target = $region60
        $region59: #{tpu_custom_call.1} parent=15 // pred_region
          %s685 = sand.u32 %s46, 1
          %s686 = scalar_lea.sflag [#allocation15], %s685
          %s687 = sand.u32 %s316, 1
          %s688 = smul.addr %s687, 512
          %s689 = scalar_lea.vmem [#allocation16], %s688
          %s691 = ssub.s32 8192, 8192
          %692 = vsyncadd %s686, %s691
          %s693 = smul.addr %s46, 128
          %s694 = smul.addr %s693, 64
          %s695 = scalar_lea.hbm %s10, %s694
          %s696 = sshll.u32 %s689, 4
          %s697 = int_to_ptr.vmem [resolvable:$true] %s696
          %702 = dma.hbm_to_vmem [thread:$0]  %s695, 8192, %s697, %s686, 256, 256, 16
        $region60: #{tpu_custom_call.1} parent=15 // pred_fallthru
          _
        // Predicated region
        $region61: #{tpu_custom_call.1} parent=15 // pred_check
          %p703 = pneg %p352
        $region62: #{tpu_custom_call.1} parent=15 // pred_check_branch
          %705 = sbr.rel (%p703) target = $region64
        $region63: #{tpu_custom_call.1} parent=15 // pred_region
          %s706 = sand.u32 %s46, 1
          %s707 = scalar_lea.sflag [#allocation18], %s706
          %s708 = sand.u32 %s342, 1
          %s709 = smul.addr %s708, 8
          %s710 = scalar_lea.vmem [#allocation17], %s709
          %s712 = ssub.s32 128, 128
          %713 = vsyncadd %s707, %s712
          %s714 = smul.addr %s46, 8
          %s715 = smul.addr %s714, 16
          %s716 = scalar_lea.hbm %s11, %s715
          %s717 = sshll.u32 %s710, 4
          %s718 = int_to_ptr.vmem [resolvable:$true] %s717
          %723 = dma.hbm_to_vmem [thread:$0]  %s716, 128, %s718, %s707, 64, 64, 4
        $region64: #{tpu_custom_call.1} parent=15 // pred_fallthru
          _
        // Predicated region
        $region65: #{tpu_custom_call.1} parent=15 // pred_check
          %p724 = pneg %p378
        $region66: #{tpu_custom_call.1} parent=15 // pred_check_branch
          %726 = sbr.rel (%p724) target = $region68
        $region67: #{tpu_custom_call.1} parent=15 // pred_region
          %s727 = sand.u32 %s46, 1
          %s728 = scalar_lea.sflag [#allocation18], %s727
          %s729 = sand.u32 %s368, 1
          %s730 = smul.addr %s729, 512
          %s731 = scalar_lea.vmem [#allocation19], %s730
          %s733 = ssub.s32 8192, 8192
          %734 = vsyncadd %s728, %s733
          %s735 = smul.addr %s46, 128
          %s736 = smul.addr %s735, 64
          %s737 = scalar_lea.hbm %s12, %s736
          %s738 = sshll.u32 %s731, 4
          %s739 = int_to_ptr.vmem [resolvable:$true] %s738
          %744 = dma.hbm_to_vmem [thread:$0]  %s737, 8192, %s739, %s728, 64, 64, 4
        $region68: #{tpu_custom_call.1} parent=15 // pred_fallthru
          _
        // Predicated region
        $region69: #{tpu_custom_call.1} parent=15 // pred_check
          %p745 = pneg %p404
        $region70: #{tpu_custom_call.1} parent=15 // pred_check_branch
          %747 = sbr.rel (%p745) target = $region72
        $region71: #{tpu_custom_call.1} parent=15 // pred_region
          %p748 = scmp.lt.s32.totalorder %s46, 2
          %s749 = scalar_select %p748, %s46, 2
          %s750 = smul.addr %s749, 2
          %s751 = scalar_lea.vmem %s13, %s750
        $region72: #{tpu_custom_call.1} parent=15 // pred_fallthru
          _
        // Predicated region
        $region73: #{tpu_custom_call.1} parent=15 // pred_check
          %p752 = pneg %p430
        $region74: #{tpu_custom_call.1} parent=15 // pred_check_branch
          %754 = sbr.rel (%p752) target = $region76
        $region75: #{tpu_custom_call.1} parent=15 // pred_region
          %p755 = scmp.lt.s32.totalorder %s46, 2
          %s756 = scalar_select %p755, %s46, 2
          %s757 = smul.addr %s756, 2
          %s758 = scalar_lea.vmem %s14, %s757
        $region76: #{tpu_custom_call.1} parent=15 // pred_fallthru
          _
        // Predicated region
        $region77: #{tpu_custom_call.1} parent=15 // pred_check
          %p759 = pneg %p456
        $region78: #{tpu_custom_call.1} parent=15 // pred_check_branch
          %761 = sbr.rel (%p759) target = $region80
        $region79: #{tpu_custom_call.1} parent=15 // pred_region
          %s762 = sand.u32 %s446, 1
          %s763 = scalar_lea.sflag [#allocation21], %s762
          %s764 = sand.u32 %s446, 1
          %s765 = smul.addr %s764, 2
          %s766 = scalar_lea.vmem [#allocation20], %s765
          %s768 = ssub.s32 32, 32
          %769 = vsyncadd %s763, %s768
          %s770 = smul.addr %s46, 2
          %s771 = smul.addr %s770, 16
          %s772 = scalar_lea.hbm %s15, %s771
          %s773 = sshll.u32 %s766, 4
          %s774 = int_to_ptr.vmem [resolvable:$true] %s773
          %779 = dma.hbm_to_vmem [thread:$0]  %s772, 32, %s774, %s763, 16, 16, 1
        $region80: #{tpu_custom_call.1} parent=15 // pred_fallthru
          _
      $region16: #{tpu_custom_call.1} parent=5 // pred_fallthru
        _
      %p780 = scmp.le.s32.totalorder 1, %s46
      %p781 = scmp.lt.s32.totalorder %s46, 4
      %p782 = pnand %p780, %p781
      %p783 = pneg %p782
      // Predicated region
      $region81: #{tpu_custom_call.1} parent=5 // pred_check
        _
      $region82: #{tpu_custom_call.1} parent=5 // pred_check_branch
        %785 = sbr.rel (%p782) target = $region84
      $region83: #{tpu_custom_call.1} parent=5 // pred_region
        %s786 = ssub.s32 %s46, 1
        %s787 = sand.u32 %s59, 1
        %s788 = scalar_lea.sflag [#allocation3], %s787
        %s789 = sand.u32 %s59, 1
        %s790 = smul.addr %s789, 16
        %s791 = scalar_lea.vmem [#allocation2], %s790
        // Predicated region
        $region85: #{tpu_custom_call.1} parent=83 // pred_check
          %p792 = pneg %p72
        $region86: #{tpu_custom_call.1} parent=83 // pred_check_branch
          %794 = sbr.rel (%p792) target = $region88
        $region87: #{tpu_custom_call.1} parent=83 // pred_region
          %795 = dma.done %s788, 256
        $region88: #{tpu_custom_call.1} parent=83 // pred_fallthru
          _
        %s796 = sand.u32 %s51, 1
        %s797 = scalar_lea.sflag [#allocation6], %s796
        %s798 = sand.u32 %s85, 1
        %s799 = smul.addr %s798, 8
        %s800 = scalar_lea.vmem [#allocation5], %s799
        // Predicated region
        $region89: #{tpu_custom_call.1} parent=83 // pred_check
          %p801 = pneg %p98
        $region90: #{tpu_custom_call.1} parent=83 // pred_check_branch
          %803 = sbr.rel (%p801) target = $region92
        $region91: #{tpu_custom_call.1} parent=83 // pred_region
          %804 = dma.done %s797, 128
        $region92: #{tpu_custom_call.1} parent=83 // pred_fallthru
          _
        %s805 = sand.u32 %s51, 1
        %s806 = scalar_lea.sflag [#allocation6], %s805
        %s807 = sand.u32 %s111, 1
        %s808 = smul.addr %s807, 8
        %s809 = scalar_lea.vmem [#allocation7], %s808
        // Predicated region
        $region93: #{tpu_custom_call.1} parent=83 // pred_check
          %p810 = pneg %p124
        $region94: #{tpu_custom_call.1} parent=83 // pred_check_branch
          %812 = sbr.rel (%p810) target = $region96
        $region95: #{tpu_custom_call.1} parent=83 // pred_region
          %813 = dma.done %s806, 128
        $region96: #{tpu_custom_call.1} parent=83 // pred_fallthru
          _
        %s814 = sand.u32 %s51, 1
        %s815 = scalar_lea.sflag [#allocation9], %s814
        %s816 = sand.u32 %s137, 1
        %s817 = scalar_lea.vmem [#allocation8], %s816
        // Predicated region
        $region97: #{tpu_custom_call.1} parent=83 // pred_check
          %p818 = pneg %p150
        $region98: #{tpu_custom_call.1} parent=83 // pred_check_branch
          %820 = sbr.rel (%p818) target = $region100
        $region99: #{tpu_custom_call.1} parent=83 // pred_region
          %821 = dma.done %s815, 16
        $region100: #{tpu_custom_call.1} parent=83 // pred_fallthru
          _
        %s822 = sand.u32 %s51, 1
        %s823 = scalar_lea.sflag [#allocation9], %s822
        %s824 = sand.u32 %s163, 1
        %s825 = smul.addr %s824, 384
        %s826 = scalar_lea.vmem [#allocation10], %s825
        // Predicated region
        $region101: #{tpu_custom_call.1} parent=83 // pred_check
          %p827 = pneg %p176
        $region102: #{tpu_custom_call.1} parent=83 // pred_check_branch
          %829 = sbr.rel (%p827) target = $region104
        $region103: #{tpu_custom_call.1} parent=83 // pred_region
          %830 = dma.done %s823, 6144
        $region104: #{tpu_custom_call.1} parent=83 // pred_fallthru
          _
        %s831 = sand.u32 %s51, 1
        %s832 = scalar_lea.sflag [#allocation12], %s831
        %s833 = sand.u32 %s189, 1
        %s834 = smul.addr %s833, 6
        %s835 = scalar_lea.vmem [#allocation11], %s834
        // Predicated region
        $region105: #{tpu_custom_call.1} parent=83 // pred_check
          %p836 = pneg %p202
        $region106: #{tpu_custom_call.1} parent=83 // pred_check_branch
          %838 = sbr.rel (%p836) target = $region108
        $region107: #{tpu_custom_call.1} parent=83 // pred_region
          %839 = dma.done %s832, 96
        $region108: #{tpu_custom_call.1} parent=83 // pred_fallthru
          _
        %s840 = sand.u32 %s51, 1
        %s841 = scalar_lea.sflag [#allocation12], %s840
        %s842 = sand.u32 %s215, 1
        %s843 = smul.addr %s842, 128
        %s844 = scalar_lea.vmem [#allocation13], %s843
        // Predicated region
        $region109: #{tpu_custom_call.1} parent=83 // pred_check
          %p845 = pneg %p228
        $region110: #{tpu_custom_call.1} parent=83 // pred_check_branch
          %847 = sbr.rel (%p845) target = $region112
        $region111: #{tpu_custom_call.1} parent=83 // pred_region
          %848 = dma.done %s841, 2048
        $region112: #{tpu_custom_call.1} parent=83 // pred_fallthru
          _
        %s849 = sand.u32 %s51, 1
        %s850 = scalar_lea.sflag [#allocation15], %s849
        %s851 = sand.u32 %s293, 1
        %s852 = smul.addr %s851, 2
        %s853 = scalar_lea.vmem [#allocation14], %s852
        // Predicated region
        $region113: #{tpu_custom_call.1} parent=83 // pred_check
          %p854 = pneg %p306
        $region114: #{tpu_custom_call.1} parent=83 // pred_check_branch
          %856 = sbr.rel (%p854) target = $region116
        $region115: #{tpu_custom_call.1} parent=83 // pred_region
          %857 = dma.done %s850, 32
        $region116: #{tpu_custom_call.1} parent=83 // pred_fallthru
          _
        %s858 = sand.u32 %s51, 1
        %s859 = scalar_lea.sflag [#allocation15], %s858
        %s860 = sand.u32 %s319, 1
        %s861 = smul.addr %s860, 512
        %s862 = scalar_lea.vmem [#allocation16], %s861
        // Predicated region
        $region117: #{tpu_custom_call.1} parent=83 // pred_check
          %p863 = pneg %p332
        $region118: #{tpu_custom_call.1} parent=83 // pred_check_branch
          %865 = sbr.rel (%p863) target = $region120
        $region119: #{tpu_custom_call.1} parent=83 // pred_region
          %866 = dma.done %s859, 8192
        $region120: #{tpu_custom_call.1} parent=83 // pred_fallthru
          _
        %s867 = sand.u32 %s51, 1
        %s868 = scalar_lea.sflag [#allocation18], %s867
        %s869 = sand.u32 %s345, 1
        %s870 = smul.addr %s869, 8
        %s871 = scalar_lea.vmem [#allocation17], %s870
        // Predicated region
        $region121: #{tpu_custom_call.1} parent=83 // pred_check
          %p872 = pneg %p358
        $region122: #{tpu_custom_call.1} parent=83 // pred_check_branch
          %874 = sbr.rel (%p872) target = $region124
        $region123: #{tpu_custom_call.1} parent=83 // pred_region
          %875 = dma.done %s868, 128
        $region124: #{tpu_custom_call.1} parent=83 // pred_fallthru
          _
        %s876 = sand.u32 %s51, 1
        %s877 = scalar_lea.sflag [#allocation18], %s876
        %s878 = sand.u32 %s371, 1
        %s879 = smul.addr %s878, 512
        %s880 = scalar_lea.vmem [#allocation19], %s879
        // Predicated region
        $region125: #{tpu_custom_call.1} parent=83 // pred_check
          %p881 = pneg %p384
        $region126: #{tpu_custom_call.1} parent=83 // pred_check_branch
          %883 = sbr.rel (%p881) target = $region128
        $region127: #{tpu_custom_call.1} parent=83 // pred_region
          %884 = dma.done %s877, 8192
        $region128: #{tpu_custom_call.1} parent=83 // pred_fallthru
          _
        %s885 = sand.u32 %s449, 1
        %s886 = scalar_lea.sflag [#allocation21], %s885
        %s887 = sand.u32 %s449, 1
        %s888 = smul.addr %s887, 2
        %s889 = scalar_lea.vmem [#allocation20], %s888
        // Predicated region
        $region129: #{tpu_custom_call.1} parent=83 // pred_check
          %p890 = pneg %p462
        $region130: #{tpu_custom_call.1} parent=83 // pred_check_branch
          %892 = sbr.rel (%p890) target = $region132
        $region131: #{tpu_custom_call.1} parent=83 // pred_region
          %893 = dma.done %s886, 32
        $region132: #{tpu_custom_call.1} parent=83 // pred_fallthru
          _
        %s894 = sand.u32 %s59, 1
        %s895 = scalar_lea.sflag [#allocation3], %s894
        %s896 = sand.u32 %s59, 1
        %s897 = smul.addr %s896, 16
        %s898 = scalar_lea.vmem [#allocation2], %s897
        %p899 = pneg %p72
        %p900 = pneg %p69
        %s901 = sand.u32 %s51, 1
        %s902 = scalar_lea.sflag [#allocation6], %s901
        %s903 = sand.u32 %s85, 1
        %s904 = smul.addr %s903, 8
        %s905 = scalar_lea.vmem [#allocation5], %s904
        %p906 = pneg %p98
        %p907 = pneg %p95
        %s908 = sand.u32 %s51, 1
        %s909 = scalar_lea.sflag [#allocation6], %s908
        %s910 = sand.u32 %s111, 1
        %s911 = smul.addr %s910, 8
        %s912 = scalar_lea.vmem [#allocation7], %s911
        %p913 = pneg %p124
        %p914 = pneg %p121
        %s915 = sand.u32 %s51, 1
        %s916 = scalar_lea.sflag [#allocation9], %s915
        %s917 = sand.u32 %s137, 1
        %s918 = scalar_lea.vmem [#allocation8], %s917
        %p919 = pneg %p150
        %p920 = pneg %p147
        %s921 = sand.u32 %s51, 1
        %s922 = scalar_lea.sflag [#allocation9], %s921
        %s923 = sand.u32 %s163, 1
        %s924 = smul.addr %s923, 384
        %s925 = scalar_lea.vmem [#allocation10], %s924
        %p926 = pneg %p176
        %p927 = pneg %p173
        %s928 = sand.u32 %s51, 1
        %s929 = scalar_lea.sflag [#allocation12], %s928
        %s930 = sand.u32 %s189, 1
        %s931 = smul.addr %s930, 6
        %s932 = scalar_lea.vmem [#allocation11], %s931
        %p933 = pneg %p202
        %p934 = pneg %p199
        %s935 = sand.u32 %s51, 1
        %s936 = scalar_lea.sflag [#allocation12], %s935
        %s937 = sand.u32 %s215, 1
        %s938 = smul.addr %s937, 128
        %s939 = scalar_lea.vmem [#allocation13], %s938
        %p940 = pneg %p228
        %p941 = pneg %p225
        %p942 = scmp.lt.s32.totalorder %s51, 2
        %s943 = scalar_select %p942, %s51, 2
        %s944 = smul.addr %s943, 2
        %s945 = scalar_lea.vmem %s7, %s944
        %p946 = pneg %p254
        %p947 = pneg %p251
        %p948 = scmp.lt.s32.totalorder %s51, 2
        %s949 = scalar_select %p948, %s51, 2
        %s950 = smul.addr %s949, 2
        %s951 = scalar_lea.vmem %s8, %s950
        %p952 = pneg %p280
        %p953 = pneg %p277
        %s954 = sand.u32 %s51, 1
        %s955 = scalar_lea.sflag [#allocation15], %s954
        %s956 = sand.u32 %s293, 1
        %s957 = smul.addr %s956, 2
        %s958 = scalar_lea.vmem [#allocation14], %s957
        %p959 = pneg %p306
        %p960 = pneg %p303
        %s961 = sand.u32 %s51, 1
        %s962 = scalar_lea.sflag [#allocation15], %s961
        %s963 = sand.u32 %s319, 1
        %s964 = smul.addr %s963, 512
        %s965 = scalar_lea.vmem [#allocation16], %s964
        %p966 = pneg %p332
        %p967 = pneg %p329
        %s968 = sand.u32 %s51, 1
        %s969 = scalar_lea.sflag [#allocation18], %s968
        %s970 = sand.u32 %s345, 1
        %s971 = smul.addr %s970, 8
        %s972 = scalar_lea.vmem [#allocation17], %s971
        %p973 = pneg %p358
        %p974 = pneg %p355
        %s975 = sand.u32 %s51, 1
        %s976 = scalar_lea.sflag [#allocation18], %s975
        %s977 = sand.u32 %s371, 1
        %s978 = smul.addr %s977, 512
        %s979 = scalar_lea.vmem [#allocation19], %s978
        %p980 = pneg %p384
        %p981 = pneg %p381
        %p982 = scmp.lt.s32.totalorder %s51, 2
        %s983 = scalar_select %p982, %s51, 2
        %s984 = smul.addr %s983, 2
        %s985 = scalar_lea.vmem %s13, %s984
        %p986 = pneg %p410
        %p987 = pneg %p407
        %p988 = scmp.lt.s32.totalorder %s51, 2
        %s989 = scalar_select %p988, %s51, 2
        %s990 = smul.addr %s989, 2
        %s991 = scalar_lea.vmem %s14, %s990
        %p992 = pneg %p436
        %p993 = pneg %p433
        %s994 = sand.u32 %s449, 1
        %s995 = scalar_lea.sflag [#allocation21], %s994
        %s996 = sand.u32 %s449, 1
        %s997 = smul.addr %s996, 2
        %s998 = scalar_lea.vmem [#allocation20], %s997
        %p999 = pneg %p462
        %p1000 = pneg %p459
        %p1001 = pneg %p488
        %p1002 = pneg %p485
        %s1003 = sand.u32 %s475, 1
        %s1004 = scalar_lea.sflag [#allocation4], %s1003
        %s1005 = sand.u32 %s475, 1
        %s1006 = smul.addr %s1005, 2
        %s1007 = scalar_lea.vmem [#allocation22], %s1006
        %p1008 = scmp.lt.s32.totalorder %s51, 2
        %s1009 = scalar_select %p1008, %s51, 2
        %s1010 = smul.addr %s1009, 2
        %s1011 = scalar_lea.vmem %s7, %s1010
        %p1012 = scmp.lt.s32.totalorder %s51, 2
        %s1013 = scalar_select %p1012, %s51, 2
        %s1014 = smul.addr %s1013, 2
        %s1015 = scalar_lea.vmem %s8, %s1014
        %p1016 = scmp.lt.s32.totalorder %s51, 2
        %s1017 = scalar_select %p1016, %s51, 2
        %s1018 = smul.addr %s1017, 2
        %s1019 = scalar_lea.vmem %s13, %s1018
        %p1020 = scmp.lt.s32.totalorder %s51, 2
        %s1021 = scalar_select %p1020, %s51, 2
        %s1022 = smul.addr %s1021, 2
        %s1023 = scalar_lea.vmem %s14, %s1022
        %v1025 = vlaneseq
        %v1026 = vand.u32 %v1025, 127
        %vm1027 = vcmp.ge.s32.totalorder %v1026, 0
        %vm1028 = vcmp.lt.s32.totalorder %v1026, 16
        %vm1029 = vmand %vm1027, %vm1028
        %v1030 = vsel %vm1029, 1, 0
        %v1031 = vcvt.s32.f32 %v1030
        %vm1032 = vcmp.ge.s32.totalorder %v1026, 16
        %vm1033 = vcmp.lt.s32.totalorder %v1026, 32
        %vm1034 = vmand %vm1032, %vm1033
        %v1035 = vsel %vm1034, 1, 0
        %v1036 = vcvt.s32.f32 %v1035
        %vm1037 = vcmp.ge.s32.totalorder %v1026, 32
        %vm1038 = vcmp.lt.s32.totalorder %v1026, 48
        %vm1039 = vmand %vm1037, %vm1038
        %v1040 = vsel %vm1039, 1, 0
        %v1041 = vcvt.s32.f32 %v1040
        %vm1042 = vcmp.ge.s32.totalorder %v1026, 48
        %vm1043 = vcmp.lt.s32.totalorder %v1026, 64
        %vm1044 = vmand %vm1042, %vm1043
        %v1045 = vsel %vm1044, 1, 0
        %v1046 = vcvt.s32.f32 %v1045
        %vm1047 = vcmp.ge.s32.totalorder %v1026, 64
        %vm1048 = vcmp.lt.s32.totalorder %v1026, 80
        %vm1049 = vmand %vm1047, %vm1048
        %v1050 = vsel %vm1049, 1, 0
        %v1051 = vcvt.s32.f32 %v1050
        %vm1052 = vcmp.ge.s32.totalorder %v1026, 80
        %vm1053 = vcmp.lt.s32.totalorder %v1026, 96
        %vm1054 = vmand %vm1052, %vm1053
        %v1055 = vsel %vm1054, 1, 0
        %v1056 = vcvt.s32.f32 %v1055
        %vm1057 = vcmp.ge.s32.totalorder %v1026, 96
        %vm1058 = vcmp.lt.s32.totalorder %v1026, 112
        %vm1059 = vmand %vm1057, %vm1058
        %v1060 = vsel %vm1059, 1, 0
        %v1061 = vcvt.s32.f32 %v1060
        %vm1062 = vcmp.ge.s32.totalorder %v1026, 112
        %vm1063 = vcmp.lt.s32.totalorder %v1026, 128
        %vm1064 = vmand %vm1062, %vm1063
        %v1065 = vsel %vm1064, 1, 0
        %v1066 = vcvt.s32.f32 %v1065
        %v1067 = vld [vmem:[%s791] sm:$0xff]
        %v1068 = vld [vmem:[%s791 + $0x8] sm:$0xff]
        %v1069 = vld [vmem:[%s809] sm:$0xf]
        %v1070 = vld [vmem:[%s809 + $0x4] sm:$0xf]
        %v1071 = vpack.c.bf16 %v1068, %v1067
        %v1072 = vld [vmem:[%s817] sm:$0x1]
        %v1074 = vlaneseq
        %v1075 = vshrl.u32 %v1074, 7
        %v1076 = vsub.s32 0, %v1075
        %v1077 = vrot.slane %v1072, %v1076
        %v1081 = vunpack.c.l.b16 %v1069
        %v1082 = vunpack.c.l.b16 %v1070
        %v1083 = vpack.c.b16 %v1082, %v1081
        %vm1085 = vcmask 130048
        %v1087 = vsel %vm1085, %v1071, 0
        %1089 = vmatprep.subr.bf16.mxu0 0
        %1090 = vmatpush1.bf16.msra.mxu0 0
        %1091 = vmatprep.subr.bf16.mxu0 0
        %1092 = vmatpush1.bf16.msra.mxu0 0
        %1093 = vmatprep.subr.bf16.mxu0 0
        %1094 = vmatpush1.bf16.msra.mxu0 0
        %1095 = vmatprep.subr.bf16.mxu0 0
        %1096 = vmatpush1.bf16.msra.mxu0 0
        %1097 = vmatprep.subr.bf16.mxu0 0
        %1098 = vmatpush1.bf16.msra.mxu0 0
        %1099 = vmatprep.subr.bf16.mxu0 0
        %1100 = vmatpush1.bf16.msra.mxu0 0
        %1101 = vmatprep.subr.bf16.mxu0 0
        %1102 = vmatpush1.bf16.msra.mxu0 0
        %1103 = vmatprep.subr.bf16.mxu0 0
        %1104 = vmatpush1.bf16.msra.mxu0 %v1083
        %1105 = vmatprep.subr.bf16.mxu0 0
        %1106 = vmatpush2.bf16.msra.mxu0 0
        %1107 = vmatprep.subr.bf16.mxu0 0
        %1108 = vmatpush2.bf16.msra.mxu0 0
        %1109 = vmatprep.subr.bf16.mxu0 0
        %1110 = vmatpush2.bf16.msra.mxu0 0
        %1111 = vmatprep.subr.bf16.mxu0 0
        %1112 = vmatpush2.bf16.msra.mxu0 0
        %1113 = vmatprep.subr.bf16.mxu0 0
        %1114 = vmatpush2.bf16.msra.mxu0 0
        %1115 = vmatprep.subr.bf16.mxu0 0
        %1116 = vmatpush2.bf16.msra.mxu0 0
        %1117 = vmatprep.subr.bf16.mxu0 0
        %1118 = vmatpush2.bf16.msra.mxu0 0
        %1119 = vmatprep.subr.bf16.mxu0 0
        %1120 = vmatpush2.bf16.msra.mxu0 0
        %1121 = vmatprep.mubr.bf16.mxu0 0
        %1122 = vmatmul.mubr.bf16.gmra.mxu0 %v1087
        %v1123 = vpop.f32.mrf.mxu0
        %v1124 = vadd.f32 %v1077, %v1123
        %v1125 = vpop.f32.mrf.mxu0
        %v1126 = vpop.f32.mrf.mxu0
        %v1127 = vadd.f32 %v1077, %v1126
        %v1128 = vpop.f32.mrf.mxu0
        %1129 = vdwg.mxu0
        %v1130 = vld [vmem:[%s800] sm:$0xff]
        %v1131 = vadd.f32 %v1124, %v1130
        %v1132 = vadd.f32 %v1127, %v1130
        %v1133 = vld [vmem:[%s826] sm:$0xff]
        %v1134 = vld [vmem:[%s826 + $0x8] sm:$0xf]
        %v1135 = vld [vmem:[%s826 + $0xc] sm:$0xff]
        %v1136 = vld [vmem:[%s826 + $0x14] sm:$0xf]
        %v1137 = vld [vmem:[%s826 + $0x18] sm:$0xff]
        %v1138 = vld [vmem:[%s826 + $0x20] sm:$0xf]
        %v1139 = vld [vmem:[%s826 + $0x24] sm:$0xff]
        %v1140 = vld [vmem:[%s826 + $0x2c] sm:$0xf]
        %v1141 = vld [vmem:[%s826 + $0x30] sm:$0xff]
        %v1142 = vld [vmem:[%s826 + $0x38] sm:$0xf]
        %v1143 = vld [vmem:[%s826 + $0x3c] sm:$0xff]
        %v1144 = vld [vmem:[%s826 + $0x44] sm:$0xf]
        %v1145 = vld [vmem:[%s826 + $0x48] sm:$0xff]
        %v1146 = vld [vmem:[%s826 + $0x50] sm:$0xf]
        %v1147 = vld [vmem:[%s826 + $0x54] sm:$0xff]
        %v1148 = vld [vmem:[%s826 + $0x5c] sm:$0xf]
        %v1149 = vld [vmem:[%s826 + $0x60] sm:$0xff]
        %v1150 = vld [vmem:[%s826 + $0x68] sm:$0xf]
        %v1151 = vld [vmem:[%s826 + $0x6c] sm:$0xff]
        %v1152 = vld [vmem:[%s826 + $0x74] sm:$0xf]
        %v1153 = vld [vmem:[%s826 + $0x78] sm:$0xff]
        %v1154 = vld [vmem:[%s826 + $0x80] sm:$0xf]
        %v1155 = vld [vmem:[%s826 + $0x84] sm:$0xff]
        %v1156 = vld [vmem:[%s826 + $0x8c] sm:$0xf]
        %v1157 = vld [vmem:[%s826 + $0x90] sm:$0xff]
        %v1158 = vld [vmem:[%s826 + $0x98] sm:$0xf]
        %v1159 = vld [vmem:[%s826 + $0x9c] sm:$0xff]
        %v1160 = vld [vmem:[%s826 + $0xa4] sm:$0xf]
        %v1161 = vld [vmem:[%s826 + $0xa8] sm:$0xff]
        %v1162 = vld [vmem:[%s826 + $0xb0] sm:$0xf]
        %v1163 = vld [vmem:[%s826 + $0xb4] sm:$0xff]
        %v1164 = vld [vmem:[%s826 + $0xbc] sm:$0xf]
        %v1165 = vpack.c.bf16 %v1132, %v1131
        %v1166 = vld [vmem:[%s835] sm:$0x7]
        %v1168 = vlaneseq
        %v1169 = vshrl.u32 %v1168, 7
        %v1170 = vsub.s32 0, %v1169
        %v1171 = vrot.slane %v1166, %v1170
        %v1172 = vlaneseq
        %v1173 = vshrl.u32 %v1172, 7
        %v1174 = vsub.s32 1, %v1173
        %v1175 = vrot.slane %v1166, %v1174
        %v1176 = vlaneseq
        %v1177 = vshrl.u32 %v1176, 7
        %v1178 = vsub.s32 2, %v1177
        %v1179 = vrot.slane %v1166, %v1178
        %v1215 = vunpack.c.l.b16 %v1133
        %v1216 = vunpack.c.h.b16 %v1133
        %v1217 = vunpack.c.l.b16 %v1134
        %v1218 = vunpack.c.l.b16 %v1135
        %v1219 = vunpack.c.h.b16 %v1135
        %v1220 = vunpack.c.l.b16 %v1136
        %v1221 = vunpack.c.l.b16 %v1137
        %v1222 = vunpack.c.h.b16 %v1137
        %v1223 = vunpack.c.l.b16 %v1138
        %v1224 = vunpack.c.l.b16 %v1139
        %v1225 = vunpack.c.h.b16 %v1139
        %v1226 = vunpack.c.l.b16 %v1140
        %v1227 = vunpack.c.l.b16 %v1141
        %v1228 = vunpack.c.h.b16 %v1141
        %v1229 = vunpack.c.l.b16 %v1142
        %v1230 = vunpack.c.l.b16 %v1143
        %v1231 = vunpack.c.h.b16 %v1143
        %v1232 = vunpack.c.l.b16 %v1144
        %v1233 = vunpack.c.l.b16 %v1145
        %v1234 = vunpack.c.h.b16 %v1145
        %v1235 = vunpack.c.l.b16 %v1146
        %v1236 = vunpack.c.l.b16 %v1147
        %v1237 = vunpack.c.h.b16 %v1147
        %v1238 = vunpack.c.l.b16 %v1148
        %v1239 = vunpack.c.l.b16 %v1149
        %v1240 = vunpack.c.h.b16 %v1149
        %v1241 = vunpack.c.l.b16 %v1150
        %v1242 = vunpack.c.l.b16 %v1151
        %v1243 = vunpack.c.h.b16 %v1151
        %v1244 = vunpack.c.l.b16 %v1152
        %v1245 = vunpack.c.l.b16 %v1153
        %v1246 = vunpack.c.h.b16 %v1153
        %v1247 = vunpack.c.l.b16 %v1154
        %v1248 = vunpack.c.l.b16 %v1155
        %v1249 = vunpack.c.h.b16 %v1155
        %v1250 = vunpack.c.l.b16 %v1156
        %v1251 = vunpack.c.l.b16 %v1157
        %v1252 = vunpack.c.h.b16 %v1157
        %v1253 = vunpack.c.l.b16 %v1158
        %v1254 = vunpack.c.l.b16 %v1159
        %v1255 = vunpack.c.h.b16 %v1159
        %v1256 = vunpack.c.l.b16 %v1160
        %v1257 = vunpack.c.l.b16 %v1161
        %v1258 = vunpack.c.h.b16 %v1161
        %v1259 = vunpack.c.l.b16 %v1162
        %v1260 = vunpack.c.l.b16 %v1163
        %v1261 = vunpack.c.h.b16 %v1163
        %v1262 = vunpack.c.l.b16 %v1164
        %v1263 = vpack.c.b16 %v1218, %v1215
        %v1264 = vpack.c.b16 %v1219, %v1216
        %v1265 = vpack.c.b16 %v1220, %v1217
        %v1266 = vpack.c.b16 %v1224, %v1221
        %v1267 = vpack.c.b16 %v1225, %v1222
        %v1268 = vpack.c.b16 %v1226, %v1223
        %v1269 = vpack.c.b16 %v1230, %v1227
        %v1270 = vpack.c.b16 %v1231, %v1228
        %v1271 = vpack.c.b16 %v1232, %v1229
        %v1272 = vpack.c.b16 %v1236, %v1233
        %v1273 = vpack.c.b16 %v1237, %v1234
        %v1274 = vpack.c.b16 %v1238, %v1235
        %v1275 = vpack.c.b16 %v1242, %v1239
        %v1276 = vpack.c.b16 %v1243, %v1240
        %v1277 = vpack.c.b16 %v1244, %v1241
        %v1278 = vpack.c.b16 %v1248, %v1245
        %v1279 = vpack.c.b16 %v1249, %v1246
        %v1280 = vpack.c.b16 %v1250, %v1247
        %v1281 = vpack.c.b16 %v1254, %v1251
        %v1282 = vpack.c.b16 %v1255, %v1252
        %v1283 = vpack.c.b16 %v1256, %v1253
        %v1284 = vpack.c.b16 %v1260, %v1257
        %v1285 = vpack.c.b16 %v1261, %v1258
        %v1286 = vpack.c.b16 %v1262, %v1259
        %1311 = vmatprep.subr.bf16.mxu0 %v1285
        %1312 = vmatpush1.bf16.msra.mxu0 %v1284
        %1313 = vmatprep.subr.bf16.mxu0 %v1282
        %1314 = vmatpush1.bf16.msra.mxu0 %v1281
        %1315 = vmatprep.subr.bf16.mxu0 %v1279
        %1316 = vmatpush1.bf16.msra.mxu0 %v1278
        %1317 = vmatprep.subr.bf16.mxu0 %v1276
        %1318 = vmatpush1.bf16.msra.mxu0 %v1275
        %1319 = vmatprep.subr.bf16.mxu0 %v1273
        %1320 = vmatpush1.bf16.msra.mxu0 %v1272
        %1321 = vmatprep.subr.bf16.mxu0 %v1270
        %1322 = vmatpush1.bf16.msra.mxu0 %v1269
        %1323 = vmatprep.subr.bf16.mxu0 %v1267
        %1324 = vmatpush1.bf16.msra.mxu0 %v1266
        %1325 = vmatprep.subr.bf16.mxu0 %v1264
        %1326 = vmatpush1.bf16.msra.mxu0 %v1263
        %1327 = vmatprep.subr.bf16.mxu0 0
        %1328 = vmatpush2.bf16.msra.mxu0 0
        %1329 = vmatprep.subr.bf16.mxu0 0
        %1330 = vmatpush2.bf16.msra.mxu0 0
        %1331 = vmatprep.subr.bf16.mxu0 0
        %1332 = vmatpush2.bf16.msra.mxu0 0
        %1333 = vmatprep.subr.bf16.mxu0 0
        %1334 = vmatpush2.bf16.msra.mxu0 0
        %1335 = vmatprep.subr.bf16.mxu0 0
        %1336 = vmatpush2.bf16.msra.mxu0 0
        %1337 = vmatprep.subr.bf16.mxu0 0
        %1338 = vmatpush2.bf16.msra.mxu0 0
        %1339 = vmatprep.subr.bf16.mxu0 0
        %1340 = vmatpush2.bf16.msra.mxu0 0
        %1341 = vmatprep.subr.bf16.mxu0 0
        %1342 = vmatpush2.bf16.msra.mxu0 0
        %1343 = vmatprep.mubr.bf16.mxu0 0
        %1344 = vmatmul.mubr.bf16.gmra.mxu0 %v1165
        %v1345 = vpop.f32.mrf.mxu0
        %v1346 = vadd.f32 %v1171, %v1345
        %v1347 = vpop.f32.mrf.mxu0
        %v1348 = vadd.f32 %v1175, %v1347
        %v1349 = vpop.f32.mrf.mxu0
        %v1350 = vadd.f32 %v1171, %v1349
        %v1351 = vpop.f32.mrf.mxu0
        %v1352 = vadd.f32 %v1175, %v1351
        %1353 = vdwg.mxu0
        %1354 = vmatprep.subr.bf16.mxu0 0
        %1355 = vmatpush1.bf16.msra.mxu0 %v1286
        %1356 = vmatprep.subr.bf16.mxu0 0
        %1357 = vmatpush1.bf16.msra.mxu0 %v1283
        %1358 = vmatprep.subr.bf16.mxu0 0
        %1359 = vmatpush1.bf16.msra.mxu0 %v1280
        %1360 = vmatprep.subr.bf16.mxu0 0
        %1361 = vmatpush1.bf16.msra.mxu0 %v1277
        %1362 = vmatprep.subr.bf16.mxu0 0
        %1363 = vmatpush1.bf16.msra.mxu0 %v1274
        %1364 = vmatprep.subr.bf16.mxu0 0
        %1365 = vmatpush1.bf16.msra.mxu0 %v1271
        %1366 = vmatprep.subr.bf16.mxu0 0
        %1367 = vmatpush1.bf16.msra.mxu0 %v1268
        %1368 = vmatprep.subr.bf16.mxu0 0
        %1369 = vmatpush1.bf16.msra.mxu0 %v1265
        %1370 = vmatprep.subr.bf16.mxu0 0
        %1371 = vmatpush2.bf16.msra.mxu0 0
        %1372 = vmatprep.subr.bf16.mxu0 0
        %1373 = vmatpush2.bf16.msra.mxu0 0
        %1374 = vmatprep.subr.bf16.mxu0 0
        %1375 = vmatpush2.bf16.msra.mxu0 0
        %1376 = vmatprep.subr.bf16.mxu0 0
        %1377 = vmatpush2.bf16.msra.mxu0 0
        %1378 = vmatprep.subr.bf16.mxu0 0
        %1379 = vmatpush2.bf16.msra.mxu0 0
        %1380 = vmatprep.subr.bf16.mxu0 0
        %1381 = vmatpush2.bf16.msra.mxu0 0
        %1382 = vmatprep.subr.bf16.mxu0 0
        %1383 = vmatpush2.bf16.msra.mxu0 0
        %1384 = vmatprep.subr.bf16.mxu0 0
        %1385 = vmatpush2.bf16.msra.mxu0 0
        %1386 = vmatprep.mubr.bf16.mxu0 0
        %1387 = vmatmul.mubr.bf16.gmra.mxu0 %v1165
        %v1388 = vpop.f32.mrf.mxu0
        %v1389 = vadd.f32 %v1179, %v1388
        %v1390 = vpop.f32.mrf.mxu0
        %v1391 = vpop.f32.mrf.mxu0
        %v1392 = vadd.f32 %v1179, %v1391
        %v1393 = vpop.f32.mrf.mxu0
        %1394 = vdwg.mxu0
        %v1395 = vmul.f32 %v1346, %v1031
        %1396 = vmatprep.subr.mxu0 0.0
        %1397 = vmatpush1.xpose.msra.mxu0 0.0
        %1398 = vmatprep.subr.mxu0 0.0
        %1399 = vmatpush1.xpose.msra.mxu0 0.0
        %1400 = vmatprep.subr.mxu0 0.0
        %1401 = vmatpush1.xpose.msra.mxu0 0.0
        %1402 = vmatprep.subr.mxu0 0.0
        %1403 = vmatpush1.xpose.msra.mxu0 0.0
        %1404 = vmatprep.subr.mxu0 0.0
        %1405 = vmatpush1.xpose.msra.mxu0 0.0
        %1406 = vmatprep.subr.mxu0 0.0
        %1407 = vmatpush1.xpose.msra.mxu0 0.0
        %1408 = vmatprep.subr.mxu0 0.0
        %1409 = vmatpush1.xpose.msra.mxu0 0.0
        %1410 = vmatprep.subr.mxu0 0.0
        %1411 = vmatpush1.xpose.msra.mxu0 0.0
        %1412 = vmatprep.subr.mxu0 0.0
        %1413 = vmatpush1.xpose.msra.mxu0 0.0
        %1414 = vmatprep.subr.mxu0 0.0
        %1415 = vmatpush1.xpose.msra.mxu0 0.0
        %1416 = vmatprep.subr.mxu0 0.0
        %1417 = vmatpush1.xpose.msra.mxu0 0.0
        %1418 = vmatprep.subr.mxu0 0.0
        %1419 = vmatpush1.xpose.msra.mxu0 0.0
        %1420 = vmatprep.subr.mxu0 0.0
        %1421 = vmatpush1.xpose.msra.mxu0 0.0
        %1422 = vmatprep.subr.mxu0 0.0
        %1423 = vmatpush1.xpose.msra.mxu0 0.0
        %1424 = vmatprep.subr.mxu0 0.0
        %1425 = vmatpush1.xpose.msra.mxu0 0.0
        %1426 = vmatprep.subr.mxu0 0.0
        %1427 = vmatpush1.xpose.msra.mxu0 %v1348
        %1428 = vmatprep.subr.mxu0 0.0
        %1429 = vmatpush2.xpose.msra.mxu0 0.0
        %1430 = vmatprep.subr.mxu0 0.0
        %1431 = vmatpush2.xpose.msra.mxu0 0.0
        %1432 = vmatprep.subr.mxu0 0.0
        %1433 = vmatpush2.xpose.msra.mxu0 0.0
        %1434 = vmatprep.subr.mxu0 0.0
        %1435 = vmatpush2.xpose.msra.mxu0 0.0
        %1436 = vmatprep.subr.mxu0 0.0
        %1437 = vmatpush2.xpose.msra.mxu0 0.0
        %1438 = vmatprep.subr.mxu0 0.0
        %1439 = vmatpush2.xpose.msra.mxu0 0.0
        %1440 = vmatprep.subr.mxu0 0.0
        %1441 = vmatpush2.xpose.msra.mxu0 0.0
        %1442 = vmatprep.subr.mxu0 0.0
        %1443 = vmatpush2.xpose.msra.mxu0 0.0
        %1444 = vmatprep.subr.mxu0 0.0
        %1445 = vmatpush2.xpose.msra.mxu0 0.0
        %1446 = vmatprep.subr.mxu0 0.0
        %1447 = vmatpush2.xpose.msra.mxu0 0.0
        %1448 = vmatprep.subr.mxu0 0.0
        %1449 = vmatpush2.xpose.msra.mxu0 0.0
        %1450 = vmatprep.subr.mxu0 0.0
        %1451 = vmatpush2.xpose.msra.mxu0 0.0
        %1452 = vmatprep.subr.mxu0 0.0
        %1453 = vmatpush2.xpose.msra.mxu0 0.0
        %1454 = vmatprep.subr.mxu0 0.0
        %1455 = vmatpush2.xpose.msra.mxu0 0.0
        %1456 = vmatprep.subr.mxu0 0.0
        %1457 = vmatpush2.xpose.msra.mxu0 0.0
        %1458 = vmatprep.subr.mxu0 0.0
        %1459 = vmatpush2.xpose.msra.mxu0 0.0
        %1460 = vmatprep.mubr.f32.mxu0 0.0
        %1461 = vmatmul.mubr.f32.gmra.mxu0 %v1395
        %v1462 = vpop.f32.mrf.mxu0
        %v1463 = vadd.f32 0.0, %v1462
        %v1464 = vpop.f32.mrf.mxu0
        %1465 = vdwg.mxu0
        %v1466 = vmul.f32 %v1463, 0.25
        %vm1467 = vcmask 64512
        %v1468 = vsel %vm1467, %v1466, -inf
        %1469 = vmax.xlane.f32.xlu0 %v1468
        %v1470 = vpop.xlane.xlu0 %1469
        %v1471 = vsub.f32 %v1466, %v1470
        %v1472 = vmul.f32 %v1471, 1.442695
        %v1473 = vpow.pop %v1472
        %v1474 = vsel %vm1467, %v1473, 0.0
        %1475 = vadd.xlane.f32.xlu0 %v1474
        %v1476 = vpop.xlane.xlu0 %1475
        %v1477 = vrcp.pop %v1476
        %v1478 = vmul.f32 %v1473, %v1477
        %v1479 = vmul.f32 %v1389, %v1031
        %v1480 = vmul.f32 %v1346, %v1036
        %1481 = vmatprep.subr.mxu0 0.0
        %1482 = vmatpush1.xpose.msra.mxu0 0.0
        %1483 = vmatprep.subr.mxu0 0.0
        %1484 = vmatpush1.xpose.msra.mxu0 0.0
        %1485 = vmatprep.subr.mxu0 0.0
        %1486 = vmatpush1.xpose.msra.mxu0 0.0
        %1487 = vmatprep.subr.mxu0 0.0
        %1488 = vmatpush1.xpose.msra.mxu0 0.0
        %1489 = vmatprep.subr.mxu0 0.0
        %1490 = vmatpush1.xpose.msra.mxu0 0.0
        %1491 = vmatprep.subr.mxu0 0.0
        %1492 = vmatpush1.xpose.msra.mxu0 0.0
        %1493 = vmatprep.subr.mxu0 0.0
        %1494 = vmatpush1.xpose.msra.mxu0 0.0
        %1495 = vmatprep.subr.mxu0 0.0
        %1496 = vmatpush1.xpose.msra.mxu0 0.0
        %1497 = vmatprep.subr.mxu0 0.0
        %1498 = vmatpush1.xpose.msra.mxu0 0.0
        %1499 = vmatprep.subr.mxu0 0.0
        %1500 = vmatpush1.xpose.msra.mxu0 0.0
        %1501 = vmatprep.subr.mxu0 0.0
        %1502 = vmatpush1.xpose.msra.mxu0 0.0
        %1503 = vmatprep.subr.mxu0 0.0
        %1504 = vmatpush1.xpose.msra.mxu0 0.0
        %1505 = vmatprep.subr.mxu0 0.0
        %1506 = vmatpush1.xpose.msra.mxu0 0.0
        %1507 = vmatprep.subr.mxu0 0.0
        %1508 = vmatpush1.xpose.msra.mxu0 0.0
        %1509 = vmatprep.subr.mxu0 0.0
        %1510 = vmatpush1.xpose.msra.mxu0 0.0
        %1511 = vmatprep.subr.mxu0 0.0
        %1512 = vmatpush1.xpose.msra.mxu0 %v1348
        %1513 = vmatprep.subr.mxu0 0.0
        %1514 = vmatpush2.xpose.msra.mxu0 0.0
        %1515 = vmatprep.subr.mxu0 0.0
        %1516 = vmatpush2.xpose.msra.mxu0 0.0
        %1517 = vmatprep.subr.mxu0 0.0
        %1518 = vmatpush2.xpose.msra.mxu0 0.0
        %1519 = vmatprep.subr.mxu0 0.0
        %1520 = vmatpush2.xpose.msra.mxu0 0.0
        %1521 = vmatprep.subr.mxu0 0.0
        %1522 = vmatpush2.xpose.msra.mxu0 0.0
        %1523 = vmatprep.subr.mxu0 0.0
        %1524 = vmatpush2.xpose.msra.mxu0 0.0
        %1525 = vmatprep.subr.mxu0 0.0
        %1526 = vmatpush2.xpose.msra.mxu0 0.0
        %1527 = vmatprep.subr.mxu0 0.0
        %1528 = vmatpush2.xpose.msra.mxu0 0.0
        %1529 = vmatprep.subr.mxu0 0.0
        %1530 = vmatpush2.xpose.msra.mxu0 0.0
        %1531 = vmatprep.subr.mxu0 0.0
        %1532 = vmatpush2.xpose.msra.mxu0 0.0
        %1533 = vmatprep.subr.mxu0 0.0
        %1534 = vmatpush2.xpose.msra.mxu0 0.0
        %1535 = vmatprep.subr.mxu0 0.0
        %1536 = vmatpush2.xpose.msra.mxu0 0.0
        %1537 = vmatprep.subr.mxu0 0.0
        %1538 = vmatpush2.xpose.msra.mxu0 0.0
        %1539 = vmatprep.subr.mxu0 0.0
        %1540 = vmatpush2.xpose.msra.mxu0 0.0
        %1541 = vmatprep.subr.mxu0 0.0
        %1542 = vmatpush2.xpose.msra.mxu0 0.0
        %1543 = vmatprep.subr.mxu0 0.0
        %1544 = vmatpush2.xpose.msra.mxu0 0.0
        %1545 = vmatprep.mubr.f32.mxu0 0.0
        %1546 = vmatmul.mubr.f32.gmra.mxu0 %v1480
        %v1547 = vpop.f32.mrf.mxu0
        %v1548 = vadd.f32 0.0, %v1547
        %v1549 = vpop.f32.mrf.mxu0
        %1550 = vdwg.mxu0
        %v1551 = vmul.f32 %v1548, 0.25
        %v1552 = vsel %vm1467, %v1551, -inf
        %1553 = vmax.xlane.f32.xlu0 %v1552
        %v1554 = vpop.xlane.xlu0 %1553
        %v1555 = vsub.f32 %v1551, %v1554
        %v1556 = vmul.f32 %v1555, 1.442695
        %v1557 = vpow.pop %v1556
        %v1558 = vsel %vm1467, %v1557, 0.0
        %1559 = vadd.xlane.f32.xlu0 %v1558
        %v1560 = vpop.xlane.xlu0 %1559
        %v1561 = vrcp.pop %v1560
        %v1562 = vmul.f32 %v1557, %v1561
        %v1563 = vmul.f32 %v1389, %v1036
        %v1565 = vsel %vm1467, %v1562, 0
        %1567 = vmatprep.subr.mxu0 0.0
        %1568 = vmatpush1.msra.mxu0 0.0
        %1569 = vmatprep.subr.mxu0 0.0
        %1570 = vmatpush1.msra.mxu0 0.0
        %1571 = vmatprep.subr.mxu0 0.0
        %1572 = vmatpush1.msra.mxu0 0.0
        %1573 = vmatprep.subr.mxu0 0.0
        %1574 = vmatpush1.msra.mxu0 0.0
        %1575 = vmatprep.subr.mxu0 0.0
        %1576 = vmatpush1.msra.mxu0 0.0
        %1577 = vmatprep.subr.mxu0 0.0
        %1578 = vmatpush1.msra.mxu0 0.0
        %1579 = vmatprep.subr.mxu0 0.0
        %1580 = vmatpush1.msra.mxu0 0.0
        %1581 = vmatprep.subr.mxu0 0.0
        %1582 = vmatpush1.msra.mxu0 0.0
        %1583 = vmatprep.subr.mxu0 0.0
        %1584 = vmatpush1.msra.mxu0 0.0
        %1585 = vmatprep.subr.mxu0 0.0
        %1586 = vmatpush1.msra.mxu0 0.0
        %1587 = vmatprep.subr.mxu0 0.0
        %1588 = vmatpush1.msra.mxu0 0.0
        %1589 = vmatprep.subr.mxu0 0.0
        %1590 = vmatpush1.msra.mxu0 0.0
        %1591 = vmatprep.subr.mxu0 0.0
        %1592 = vmatpush1.msra.mxu0 0.0
        %1593 = vmatprep.subr.mxu0 0.0
        %1594 = vmatpush1.msra.mxu0 0.0
        %1595 = vmatprep.subr.mxu0 0.0
        %1596 = vmatpush1.msra.mxu0 0.0
        %1597 = vmatprep.subr.mxu0 0.0
        %1598 = vmatpush1.msra.mxu0 %v1563
        %1599 = vmatprep.subr.mxu0 0.0
        %1600 = vmatpush2.msra.mxu0 0.0
        %1601 = vmatprep.subr.mxu0 0.0
        %1602 = vmatpush2.msra.mxu0 0.0
        %1603 = vmatprep.subr.mxu0 0.0
        %1604 = vmatpush2.msra.mxu0 0.0
        %1605 = vmatprep.subr.mxu0 0.0
        %1606 = vmatpush2.msra.mxu0 0.0
        %1607 = vmatprep.subr.mxu0 0.0
        %1608 = vmatpush2.msra.mxu0 0.0
        %1609 = vmatprep.subr.mxu0 0.0
        %1610 = vmatpush2.msra.mxu0 0.0
        %1611 = vmatprep.subr.mxu0 0.0
        %1612 = vmatpush2.msra.mxu0 0.0
        %1613 = vmatprep.subr.mxu0 0.0
        %1614 = vmatpush2.msra.mxu0 0.0
        %1615 = vmatprep.subr.mxu0 0.0
        %1616 = vmatpush2.msra.mxu0 0.0
        %1617 = vmatprep.subr.mxu0 0.0
        %1618 = vmatpush2.msra.mxu0 0.0
        %1619 = vmatprep.subr.mxu0 0.0
        %1620 = vmatpush2.msra.mxu0 0.0
        %1621 = vmatprep.subr.mxu0 0.0
        %1622 = vmatpush2.msra.mxu0 0.0
        %1623 = vmatprep.subr.mxu0 0.0
        %1624 = vmatpush2.msra.mxu0 0.0
        %1625 = vmatprep.subr.mxu0 0.0
        %1626 = vmatpush2.msra.mxu0 0.0
        %1627 = vmatprep.subr.mxu0 0.0
        %1628 = vmatpush2.msra.mxu0 0.0
        %1629 = vmatprep.subr.mxu0 0.0
        %1630 = vmatpush2.msra.mxu0 0.0
        %1631 = vmatprep.mubr.f32.mxu0 0.0
        %1632 = vmatmul.mubr.f32.gmra.mxu0 %v1565
        %v1633 = vpop.f32.mrf.mxu0
        %v1634 = vadd.f32 0.0, %v1633
        %v1635 = vpop.f32.mrf.mxu0
        %1636 = vdwg.mxu0
        %v1638 = vsel %vm1467, %v1478, 0
        %1640 = vmatprep.subr.mxu0 0.0
        %1641 = vmatpush1.msra.mxu0 0.0
        %1642 = vmatprep.subr.mxu0 0.0
        %1643 = vmatpush1.msra.mxu0 0.0
        %1644 = vmatprep.subr.mxu0 0.0
        %1645 = vmatpush1.msra.mxu0 0.0
        %1646 = vmatprep.subr.mxu0 0.0
        %1647 = vmatpush1.msra.mxu0 0.0
        %1648 = vmatprep.subr.mxu0 0.0
        %1649 = vmatpush1.msra.mxu0 0.0
        %1650 = vmatprep.subr.mxu0 0.0
        %1651 = vmatpush1.msra.mxu0 0.0
        %1652 = vmatprep.subr.mxu0 0.0
        %1653 = vmatpush1.msra.mxu0 0.0
        %1654 = vmatprep.subr.mxu0 0.0
        %1655 = vmatpush1.msra.mxu0 0.0
        %1656 = vmatprep.subr.mxu0 0.0
        %1657 = vmatpush1.msra.mxu0 0.0
        %1658 = vmatprep.subr.mxu0 0.0
        %1659 = vmatpush1.msra.mxu0 0.0
        %1660 = vmatprep.subr.mxu0 0.0
        %1661 = vmatpush1.msra.mxu0 0.0
        %1662 = vmatprep.subr.mxu0 0.0
        %1663 = vmatpush1.msra.mxu0 0.0
        %1664 = vmatprep.subr.mxu0 0.0
        %1665 = vmatpush1.msra.mxu0 0.0
        %1666 = vmatprep.subr.mxu0 0.0
        %1667 = vmatpush1.msra.mxu0 0.0
        %1668 = vmatprep.subr.mxu0 0.0
        %1669 = vmatpush1.msra.mxu0 0.0
        %1670 = vmatprep.subr.mxu0 0.0
        %1671 = vmatpush1.msra.mxu0 %v1479
        %1672 = vmatprep.subr.mxu0 0.0
        %1673 = vmatpush2.msra.mxu0 0.0
        %1674 = vmatprep.subr.mxu0 0.0
        %1675 = vmatpush2.msra.mxu0 0.0
        %1676 = vmatprep.subr.mxu0 0.0
        %1677 = vmatpush2.msra.mxu0 0.0
        %1678 = vmatprep.subr.mxu0 0.0
        %1679 = vmatpush2.msra.mxu0 0.0
        %1680 = vmatprep.subr.mxu0 0.0
        %1681 = vmatpush2.msra.mxu0 0.0
        %1682 = vmatprep.subr.mxu0 0.0
        %1683 = vmatpush2.msra.mxu0 0.0
        %1684 = vmatprep.subr.mxu0 0.0
        %1685 = vmatpush2.msra.mxu0 0.0
        %1686 = vmatprep.subr.mxu0 0.0
        %1687 = vmatpush2.msra.mxu0 0.0
        %1688 = vmatprep.subr.mxu0 0.0
        %1689 = vmatpush2.msra.mxu0 0.0
        %1690 = vmatprep.subr.mxu0 0.0
        %1691 = vmatpush2.msra.mxu0 0.0
        %1692 = vmatprep.subr.mxu0 0.0
        %1693 = vmatpush2.msra.mxu0 0.0
        %1694 = vmatprep.subr.mxu0 0.0
        %1695 = vmatpush2.msra.mxu0 0.0
        %1696 = vmatprep.subr.mxu0 0.0
        %1697 = vmatpush2.msra.mxu0 0.0
        %1698 = vmatprep.subr.mxu0 0.0
        %1699 = vmatpush2.msra.mxu0 0.0
        %1700 = vmatprep.subr.mxu0 0.0
        %1701 = vmatpush2.msra.mxu0 0.0
        %1702 = vmatprep.subr.mxu0 0.0
        %1703 = vmatpush2.msra.mxu0 0.0
        %1704 = vmatprep.mubr.f32.mxu0 0.0
        %1705 = vmatmul.mubr.f32.gmra.mxu0 %v1638
        %v1706 = vpop.f32.mrf.mxu0
        %v1707 = vadd.f32 %v1634, %v1706
        %v1708 = vpop.f32.mrf.mxu0
        %1709 = vdwg.mxu0
        %v1710 = vmul.f32 %v1346, %v1041
        %1711 = vmatprep.subr.mxu0 0.0
        %1712 = vmatpush1.xpose.msra.mxu0 0.0
        %1713 = vmatprep.subr.mxu0 0.0
        %1714 = vmatpush1.xpose.msra.mxu0 0.0
        %1715 = vmatprep.subr.mxu0 0.0
        %1716 = vmatpush1.xpose.msra.mxu0 0.0
        %1717 = vmatprep.subr.mxu0 0.0
        %1718 = vmatpush1.xpose.msra.mxu0 0.0
        %1719 = vmatprep.subr.mxu0 0.0
        %1720 = vmatpush1.xpose.msra.mxu0 0.0
        %1721 = vmatprep.subr.mxu0 0.0
        %1722 = vmatpush1.xpose.msra.mxu0 0.0
        %1723 = vmatprep.subr.mxu0 0.0
        %1724 = vmatpush1.xpose.msra.mxu0 0.0
        %1725 = vmatprep.subr.mxu0 0.0
        %1726 = vmatpush1.xpose.msra.mxu0 0.0
        %1727 = vmatprep.subr.mxu0 0.0
        %1728 = vmatpush1.xpose.msra.mxu0 0.0
        %1729 = vmatprep.subr.mxu0 0.0
        %1730 = vmatpush1.xpose.msra.mxu0 0.0
        %1731 = vmatprep.subr.mxu0 0.0
        %1732 = vmatpush1.xpose.msra.mxu0 0.0
        %1733 = vmatprep.subr.mxu0 0.0
        %1734 = vmatpush1.xpose.msra.mxu0 0.0
        %1735 = vmatprep.subr.mxu0 0.0
        %1736 = vmatpush1.xpose.msra.mxu0 0.0
        %1737 = vmatprep.subr.mxu0 0.0
        %1738 = vmatpush1.xpose.msra.mxu0 0.0
        %1739 = vmatprep.subr.mxu0 0.0
        %1740 = vmatpush1.xpose.msra.mxu0 0.0
        %1741 = vmatprep.subr.mxu0 0.0
        %1742 = vmatpush1.xpose.msra.mxu0 %v1348
        %1743 = vmatprep.subr.mxu0 0.0
        %1744 = vmatpush2.xpose.msra.mxu0 0.0
        %1745 = vmatprep.subr.mxu0 0.0
        %1746 = vmatpush2.xpose.msra.mxu0 0.0
        %1747 = vmatprep.subr.mxu0 0.0
        %1748 = vmatpush2.xpose.msra.mxu0 0.0
        %1749 = vmatprep.subr.mxu0 0.0
        %1750 = vmatpush2.xpose.msra.mxu0 0.0
        %1751 = vmatprep.subr.mxu0 0.0
        %1752 = vmatpush2.xpose.msra.mxu0 0.0
        %1753 = vmatprep.subr.mxu0 0.0
        %1754 = vmatpush2.xpose.msra.mxu0 0.0
        %1755 = vmatprep.subr.mxu0 0.0
        %1756 = vmatpush2.xpose.msra.mxu0 0.0
        %1757 = vmatprep.subr.mxu0 0.0
        %1758 = vmatpush2.xpose.msra.mxu0 0.0
        %1759 = vmatprep.subr.mxu0 0.0
        %1760 = vmatpush2.xpose.msra.mxu0 0.0
        %1761 = vmatprep.subr.mxu0 0.0
        %1762 = vmatpush2.xpose.msra.mxu0 0.0
        %1763 = vmatprep.subr.mxu0 0.0
        %1764 = vmatpush2.xpose.msra.mxu0 0.0
        %1765 = vmatprep.subr.mxu0 0.0
        %1766 = vmatpush2.xpose.msra.mxu0 0.0
        %1767 = vmatprep.subr.mxu0 0.0
        %1768 = vmatpush2.xpose.msra.mxu0 0.0
        %1769 = vmatprep.subr.mxu0 0.0
        %1770 = vmatpush2.xpose.msra.mxu0 0.0
        %1771 = vmatprep.subr.mxu0 0.0
        %1772 = vmatpush2.xpose.msra.mxu0 0.0
        %1773 = vmatprep.subr.mxu0 0.0
        %1774 = vmatpush2.xpose.msra.mxu0 0.0
        %1775 = vmatprep.mubr.f32.mxu0 0.0
        %1776 = vmatmul.mubr.f32.gmra.mxu0 %v1710
        %v1777 = vpop.f32.mrf.mxu0
        %v1778 = vadd.f32 0.0, %v1777
        %v1779 = vpop.f32.mrf.mxu0
        %1780 = vdwg.mxu0
        %v1781 = vmul.f32 %v1778, 0.25
        %v1782 = vsel %vm1467, %v1781, -inf
        %1783 = vmax.xlane.f32.xlu0 %v1782
        %v1784 = vpop.xlane.xlu0 %1783
        %v1785 = vsub.f32 %v1781, %v1784
        %v1786 = vmul.f32 %v1785, 1.442695
        %v1787 = vpow.pop %v1786
        %v1788 = vsel %vm1467, %v1787, 0.0
        %1789 = vadd.xlane.f32.xlu0 %v1788
        %v1790 = vpop.xlane.xlu0 %1789
        %v1791 = vrcp.pop %v1790
        %v1792 = vmul.f32 %v1787, %v1791
        %v1793 = vmul.f32 %v1389, %v1041
        %v1795 = vsel %vm1467, %v1792, 0
        %1797 = vmatprep.subr.mxu0 0.0
        %1798 = vmatpush1.msra.mxu0 0.0
        %1799 = vmatprep.subr.mxu0 0.0
        %1800 = vmatpush1.msra.mxu0 0.0
        %1801 = vmatprep.subr.mxu0 0.0
        %1802 = vmatpush1.msra.mxu0 0.0
        %1803 = vmatprep.subr.mxu0 0.0
        %1804 = vmatpush1.msra.mxu0 0.0
        %1805 = vmatprep.subr.mxu0 0.0
        %1806 = vmatpush1.msra.mxu0 0.0
        %1807 = vmatprep.subr.mxu0 0.0
        %1808 = vmatpush1.msra.mxu0 0.0
        %1809 = vmatprep.subr.mxu0 0.0
        %1810 = vmatpush1.msra.mxu0 0.0
        %1811 = vmatprep.subr.mxu0 0.0
        %1812 = vmatpush1.msra.mxu0 0.0
        %1813 = vmatprep.subr.mxu0 0.0
        %1814 = vmatpush1.msra.mxu0 0.0
        %1815 = vmatprep.subr.mxu0 0.0
        %1816 = vmatpush1.msra.mxu0 0.0
        %1817 = vmatprep.subr.mxu0 0.0
        %1818 = vmatpush1.msra.mxu0 0.0
        %1819 = vmatprep.subr.mxu0 0.0
        %1820 = vmatpush1.msra.mxu0 0.0
        %1821 = vmatprep.subr.mxu0 0.0
        %1822 = vmatpush1.msra.mxu0 0.0
        %1823 = vmatprep.subr.mxu0 0.0
        %1824 = vmatpush1.msra.mxu0 0.0
        %1825 = vmatprep.subr.mxu0 0.0
        %1826 = vmatpush1.msra.mxu0 0.0
        %1827 = vmatprep.subr.mxu0 0.0
        %1828 = vmatpush1.msra.mxu0 %v1793
        %1829 = vmatprep.subr.mxu0 0.0
        %1830 = vmatpush2.msra.mxu0 0.0
        %1831 = vmatprep.subr.mxu0 0.0
        %1832 = vmatpush2.msra.mxu0 0.0
        %1833 = vmatprep.subr.mxu0 0.0
        %1834 = vmatpush2.msra.mxu0 0.0
        %1835 = vmatprep.subr.mxu0 0.0
        %1836 = vmatpush2.msra.mxu0 0.0
        %1837 = vmatprep.subr.mxu0 0.0
        %1838 = vmatpush2.msra.mxu0 0.0
        %1839 = vmatprep.subr.mxu0 0.0
        %1840 = vmatpush2.msra.mxu0 0.0
        %1841 = vmatprep.subr.mxu0 0.0
        %1842 = vmatpush2.msra.mxu0 0.0
        %1843 = vmatprep.subr.mxu0 0.0
        %1844 = vmatpush2.msra.mxu0 0.0
        %1845 = vmatprep.subr.mxu0 0.0
        %1846 = vmatpush2.msra.mxu0 0.0
        %1847 = vmatprep.subr.mxu0 0.0
        %1848 = vmatpush2.msra.mxu0 0.0
        %1849 = vmatprep.subr.mxu0 0.0
        %1850 = vmatpush2.msra.mxu0 0.0
        %1851 = vmatprep.subr.mxu0 0.0
        %1852 = vmatpush2.msra.mxu0 0.0
        %1853 = vmatprep.subr.mxu0 0.0
        %1854 = vmatpush2.msra.mxu0 0.0
        %1855 = vmatprep.subr.mxu0 0.0
        %1856 = vmatpush2.msra.mxu0 0.0
        %1857 = vmatprep.subr.mxu0 0.0
        %1858 = vmatpush2.msra.mxu0 0.0
        %1859 = vmatprep.subr.mxu0 0.0
        %1860 = vmatpush2.msra.mxu0 0.0
        %1861 = vmatprep.mubr.f32.mxu0 0.0
        %1862 = vmatmul.mubr.f32.gmra.mxu0 %v1795
        %v1863 = vpop.f32.mrf.mxu0
        %v1864 = vadd.f32 0.0, %v1863
        %v1865 = vpop.f32.mrf.mxu0
        %1866 = vdwg.mxu0
        %v1867 = vadd.f32 %v1707, %v1864
        %v1868 = vmul.f32 %v1346, %v1046
        %1869 = vmatprep.subr.mxu0 0.0
        %1870 = vmatpush1.xpose.msra.mxu0 0.0
        %1871 = vmatprep.subr.mxu0 0.0
        %1872 = vmatpush1.xpose.msra.mxu0 0.0
        %1873 = vmatprep.subr.mxu0 0.0
        %1874 = vmatpush1.xpose.msra.mxu0 0.0
        %1875 = vmatprep.subr.mxu0 0.0
        %1876 = vmatpush1.xpose.msra.mxu0 0.0
        %1877 = vmatprep.subr.mxu0 0.0
        %1878 = vmatpush1.xpose.msra.mxu0 0.0
        %1879 = vmatprep.subr.mxu0 0.0
        %1880 = vmatpush1.xpose.msra.mxu0 0.0
        %1881 = vmatprep.subr.mxu0 0.0
        %1882 = vmatpush1.xpose.msra.mxu0 0.0
        %1883 = vmatprep.subr.mxu0 0.0
        %1884 = vmatpush1.xpose.msra.mxu0 0.0
        %1885 = vmatprep.subr.mxu0 0.0
        %1886 = vmatpush1.xpose.msra.mxu0 0.0
        %1887 = vmatprep.subr.mxu0 0.0
        %1888 = vmatpush1.xpose.msra.mxu0 0.0
        %1889 = vmatprep.subr.mxu0 0.0
        %1890 = vmatpush1.xpose.msra.mxu0 0.0
        %1891 = vmatprep.subr.mxu0 0.0
        %1892 = vmatpush1.xpose.msra.mxu0 0.0
        %1893 = vmatprep.subr.mxu0 0.0
        %1894 = vmatpush1.xpose.msra.mxu0 0.0
        %1895 = vmatprep.subr.mxu0 0.0
        %1896 = vmatpush1.xpose.msra.mxu0 0.0
        %1897 = vmatprep.subr.mxu0 0.0
        %1898 = vmatpush1.xpose.msra.mxu0 0.0
        %1899 = vmatprep.subr.mxu0 0.0
        %1900 = vmatpush1.xpose.msra.mxu0 %v1348
        %1901 = vmatprep.subr.mxu0 0.0
        %1902 = vmatpush2.xpose.msra.mxu0 0.0
        %1903 = vmatprep.subr.mxu0 0.0
        %1904 = vmatpush2.xpose.msra.mxu0 0.0
        %1905 = vmatprep.subr.mxu0 0.0
        %1906 = vmatpush2.xpose.msra.mxu0 0.0
        %1907 = vmatprep.subr.mxu0 0.0
        %1908 = vmatpush2.xpose.msra.mxu0 0.0
        %1909 = vmatprep.subr.mxu0 0.0
        %1910 = vmatpush2.xpose.msra.mxu0 0.0
        %1911 = vmatprep.subr.mxu0 0.0
        %1912 = vmatpush2.xpose.msra.mxu0 0.0
        %1913 = vmatprep.subr.mxu0 0.0
        %1914 = vmatpush2.xpose.msra.mxu0 0.0
        %1915 = vmatprep.subr.mxu0 0.0
        %1916 = vmatpush2.xpose.msra.mxu0 0.0
        %1917 = vmatprep.subr.mxu0 0.0
        %1918 = vmatpush2.xpose.msra.mxu0 0.0
        %1919 = vmatprep.subr.mxu0 0.0
        %1920 = vmatpush2.xpose.msra.mxu0 0.0
        %1921 = vmatprep.subr.mxu0 0.0
        %1922 = vmatpush2.xpose.msra.mxu0 0.0
        %1923 = vmatprep.subr.mxu0 0.0
        %1924 = vmatpush2.xpose.msra.mxu0 0.0
        %1925 = vmatprep.subr.mxu0 0.0
        %1926 = vmatpush2.xpose.msra.mxu0 0.0
        %1927 = vmatprep.subr.mxu0 0.0
        %1928 = vmatpush2.xpose.msra.mxu0 0.0
        %1929 = vmatprep.subr.mxu0 0.0
        %1930 = vmatpush2.xpose.msra.mxu0 0.0
        %1931 = vmatprep.subr.mxu0 0.0
        %1932 = vmatpush2.xpose.msra.mxu0 0.0
        %1933 = vmatprep.mubr.f32.mxu0 0.0
        %1934 = vmatmul.mubr.f32.gmra.mxu0 %v1868
        %v1935 = vpop.f32.mrf.mxu0
        %v1936 = vadd.f32 0.0, %v1935
        %v1937 = vpop.f32.mrf.mxu0
        %1938 = vdwg.mxu0
        %v1939 = vmul.f32 %v1936, 0.25
        %v1940 = vsel %vm1467, %v1939, -inf
        %1941 = vmax.xlane.f32.xlu0 %v1940
        %v1942 = vpop.xlane.xlu0 %1941
        %v1943 = vsub.f32 %v1939, %v1942
        %v1944 = vmul.f32 %v1943, 1.442695
        %v1945 = vpow.pop %v1944
        %v1946 = vsel %vm1467, %v1945, 0.0
        %1947 = vadd.xlane.f32.xlu0 %v1946
        %v1948 = vpop.xlane.xlu0 %1947
        %v1949 = vrcp.pop %v1948
        %v1950 = vmul.f32 %v1945, %v1949
        %v1951 = vmul.f32 %v1389, %v1046
        %v1953 = vsel %vm1467, %v1950, 0
        %1955 = vmatprep.subr.mxu0 0.0
        %1956 = vmatpush1.msra.mxu0 0.0
        %1957 = vmatprep.subr.mxu0 0.0
        %1958 = vmatpush1.msra.mxu0 0.0
        %1959 = vmatprep.subr.mxu0 0.0
        %1960 = vmatpush1.msra.mxu0 0.0
        %1961 = vmatprep.subr.mxu0 0.0
        %1962 = vmatpush1.msra.mxu0 0.0
        %1963 = vmatprep.subr.mxu0 0.0
        %1964 = vmatpush1.msra.mxu0 0.0
        %1965 = vmatprep.subr.mxu0 0.0
        %1966 = vmatpush1.msra.mxu0 0.0
        %1967 = vmatprep.subr.mxu0 0.0
        %1968 = vmatpush1.msra.mxu0 0.0
        %1969 = vmatprep.subr.mxu0 0.0
        %1970 = vmatpush1.msra.mxu0 0.0
        %1971 = vmatprep.subr.mxu0 0.0
        %1972 = vmatpush1.msra.mxu0 0.0
        %1973 = vmatprep.subr.mxu0 0.0
        %1974 = vmatpush1.msra.mxu0 0.0
        %1975 = vmatprep.subr.mxu0 0.0
        %1976 = vmatpush1.msra.mxu0 0.0
        %1977 = vmatprep.subr.mxu0 0.0
        %1978 = vmatpush1.msra.mxu0 0.0
        %1979 = vmatprep.subr.mxu0 0.0
        %1980 = vmatpush1.msra.mxu0 0.0
        %1981 = vmatprep.subr.mxu0 0.0
        %1982 = vmatpush1.msra.mxu0 0.0
        %1983 = vmatprep.subr.mxu0 0.0
        %1984 = vmatpush1.msra.mxu0 0.0
        %1985 = vmatprep.subr.mxu0 0.0
        %1986 = vmatpush1.msra.mxu0 %v1951
        %1987 = vmatprep.subr.mxu0 0.0
        %1988 = vmatpush2.msra.mxu0 0.0
        %1989 = vmatprep.subr.mxu0 0.0
        %1990 = vmatpush2.msra.mxu0 0.0
        %1991 = vmatprep.subr.mxu0 0.0
        %1992 = vmatpush2.msra.mxu0 0.0
        %1993 = vmatprep.subr.mxu0 0.0
        %1994 = vmatpush2.msra.mxu0 0.0
        %1995 = vmatprep.subr.mxu0 0.0
        %1996 = vmatpush2.msra.mxu0 0.0
        %1997 = vmatprep.subr.mxu0 0.0
        %1998 = vmatpush2.msra.mxu0 0.0
        %1999 = vmatprep.subr.mxu0 0.0
        %2000 = vmatpush2.msra.mxu0 0.0
        %2001 = vmatprep.subr.mxu0 0.0
        %2002 = vmatpush2.msra.mxu0 0.0
        %2003 = vmatprep.subr.mxu0 0.0
        %2004 = vmatpush2.msra.mxu0 0.0
        %2005 = vmatprep.subr.mxu0 0.0
        %2006 = vmatpush2.msra.mxu0 0.0
        %2007 = vmatprep.subr.mxu0 0.0
        %2008 = vmatpush2.msra.mxu0 0.0
        %2009 = vmatprep.subr.mxu0 0.0
        %2010 = vmatpush2.msra.mxu0 0.0
        %2011 = vmatprep.subr.mxu0 0.0
        %2012 = vmatpush2.msra.mxu0 0.0
        %2013 = vmatprep.subr.mxu0 0.0
        %2014 = vmatpush2.msra.mxu0 0.0
        %2015 = vmatprep.subr.mxu0 0.0
        %2016 = vmatpush2.msra.mxu0 0.0
        %2017 = vmatprep.subr.mxu0 0.0
        %2018 = vmatpush2.msra.mxu0 0.0
        %2019 = vmatprep.mubr.f32.mxu0 0.0
        %2020 = vmatmul.mubr.f32.gmra.mxu0 %v1953
        %v2021 = vpop.f32.mrf.mxu0
        %v2022 = vadd.f32 0.0, %v2021
        %v2023 = vpop.f32.mrf.mxu0
        %2024 = vdwg.mxu0
        %v2025 = vadd.f32 %v1867, %v2022
        %v2026 = vmul.f32 %v1346, %v1051
        %2027 = vmatprep.subr.mxu0 0.0
        %2028 = vmatpush1.xpose.msra.mxu0 0.0
        %2029 = vmatprep.subr.mxu0 0.0
        %2030 = vmatpush1.xpose.msra.mxu0 0.0
        %2031 = vmatprep.subr.mxu0 0.0
        %2032 = vmatpush1.xpose.msra.mxu0 0.0
        %2033 = vmatprep.subr.mxu0 0.0
        %2034 = vmatpush1.xpose.msra.mxu0 0.0
        %2035 = vmatprep.subr.mxu0 0.0
        %2036 = vmatpush1.xpose.msra.mxu0 0.0
        %2037 = vmatprep.subr.mxu0 0.0
        %2038 = vmatpush1.xpose.msra.mxu0 0.0
        %2039 = vmatprep.subr.mxu0 0.0
        %2040 = vmatpush1.xpose.msra.mxu0 0.0
        %2041 = vmatprep.subr.mxu0 0.0
        %2042 = vmatpush1.xpose.msra.mxu0 0.0
        %2043 = vmatprep.subr.mxu0 0.0
        %2044 = vmatpush1.xpose.msra.mxu0 0.0
        %2045 = vmatprep.subr.mxu0 0.0
        %2046 = vmatpush1.xpose.msra.mxu0 0.0
        %2047 = vmatprep.subr.mxu0 0.0
        %2048 = vmatpush1.xpose.msra.mxu0 0.0
        %2049 = vmatprep.subr.mxu0 0.0
        %2050 = vmatpush1.xpose.msra.mxu0 0.0
        %2051 = vmatprep.subr.mxu0 0.0
        %2052 = vmatpush1.xpose.msra.mxu0 0.0
        %2053 = vmatprep.subr.mxu0 0.0
        %2054 = vmatpush1.xpose.msra.mxu0 0.0
        %2055 = vmatprep.subr.mxu0 0.0
        %2056 = vmatpush1.xpose.msra.mxu0 0.0
        %2057 = vmatprep.subr.mxu0 0.0
        %2058 = vmatpush1.xpose.msra.mxu0 %v1348
        %2059 = vmatprep.subr.mxu0 0.0
        %2060 = vmatpush2.xpose.msra.mxu0 0.0
        %2061 = vmatprep.subr.mxu0 0.0
        %2062 = vmatpush2.xpose.msra.mxu0 0.0
        %2063 = vmatprep.subr.mxu0 0.0
        %2064 = vmatpush2.xpose.msra.mxu0 0.0
        %2065 = vmatprep.subr.mxu0 0.0
        %2066 = vmatpush2.xpose.msra.mxu0 0.0
        %2067 = vmatprep.subr.mxu0 0.0
        %2068 = vmatpush2.xpose.msra.mxu0 0.0
        %2069 = vmatprep.subr.mxu0 0.0
        %2070 = vmatpush2.xpose.msra.mxu0 0.0
        %2071 = vmatprep.subr.mxu0 0.0
        %2072 = vmatpush2.xpose.msra.mxu0 0.0
        %2073 = vmatprep.subr.mxu0 0.0
        %2074 = vmatpush2.xpose.msra.mxu0 0.0
        %2075 = vmatprep.subr.mxu0 0.0
        %2076 = vmatpush2.xpose.msra.mxu0 0.0
        %2077 = vmatprep.subr.mxu0 0.0
        %2078 = vmatpush2.xpose.msra.mxu0 0.0
        %2079 = vmatprep.subr.mxu0 0.0
        %2080 = vmatpush2.xpose.msra.mxu0 0.0
        %2081 = vmatprep.subr.mxu0 0.0
        %2082 = vmatpush2.xpose.msra.mxu0 0.0
        %2083 = vmatprep.subr.mxu0 0.0
        %2084 = vmatpush2.xpose.msra.mxu0 0.0
        %2085 = vmatprep.subr.mxu0 0.0
        %2086 = vmatpush2.xpose.msra.mxu0 0.0
        %2087 = vmatprep.subr.mxu0 0.0
        %2088 = vmatpush2.xpose.msra.mxu0 0.0
        %2089 = vmatprep.subr.mxu0 0.0
        %2090 = vmatpush2.xpose.msra.mxu0 0.0
        %2091 = vmatprep.mubr.f32.mxu0 0.0
        %2092 = vmatmul.mubr.f32.gmra.mxu0 %v2026
        %v2093 = vpop.f32.mrf.mxu0
        %v2094 = vadd.f32 0.0, %v2093
        %v2095 = vpop.f32.mrf.mxu0
        %2096 = vdwg.mxu0
        %v2097 = vmul.f32 %v2094, 0.25
        %v2098 = vsel %vm1467, %v2097, -inf
        %2099 = vmax.xlane.f32.xlu0 %v2098
        %v2100 = vpop.xlane.xlu0 %2099
        %v2101 = vsub.f32 %v2097, %v2100
        %v2102 = vmul.f32 %v2101, 1.442695
        %v2103 = vpow.pop %v2102
        %v2104 = vsel %vm1467, %v2103, 0.0
        %2105 = vadd.xlane.f32.xlu0 %v2104
        %v2106 = vpop.xlane.xlu0 %2105
        %v2107 = vrcp.pop %v2106
        %v2108 = vmul.f32 %v2103, %v2107
        %v2109 = vmul.f32 %v1389, %v1051
        %v2111 = vsel %vm1467, %v2108, 0
        %2113 = vmatprep.subr.mxu0 0.0
        %2114 = vmatpush1.msra.mxu0 0.0
        %2115 = vmatprep.subr.mxu0 0.0
        %2116 = vmatpush1.msra.mxu0 0.0
        %2117 = vmatprep.subr.mxu0 0.0
        %2118 = vmatpush1.msra.mxu0 0.0
        %2119 = vmatprep.subr.mxu0 0.0
        %2120 = vmatpush1.msra.mxu0 0.0
        %2121 = vmatprep.subr.mxu0 0.0
        %2122 = vmatpush1.msra.mxu0 0.0
        %2123 = vmatprep.subr.mxu0 0.0
        %2124 = vmatpush1.msra.mxu0 0.0
        %2125 = vmatprep.subr.mxu0 0.0
        %2126 = vmatpush1.msra.mxu0 0.0
        %2127 = vmatprep.subr.mxu0 0.0
        %2128 = vmatpush1.msra.mxu0 0.0
        %2129 = vmatprep.subr.mxu0 0.0
        %2130 = vmatpush1.msra.mxu0 0.0
        %2131 = vmatprep.subr.mxu0 0.0
        %2132 = vmatpush1.msra.mxu0 0.0
        %2133 = vmatprep.subr.mxu0 0.0
        %2134 = vmatpush1.msra.mxu0 0.0
        %2135 = vmatprep.subr.mxu0 0.0
        %2136 = vmatpush1.msra.mxu0 0.0
        %2137 = vmatprep.subr.mxu0 0.0
        %2138 = vmatpush1.msra.mxu0 0.0
        %2139 = vmatprep.subr.mxu0 0.0
        %2140 = vmatpush1.msra.mxu0 0.0
        %2141 = vmatprep.subr.mxu0 0.0
        %2142 = vmatpush1.msra.mxu0 0.0
        %2143 = vmatprep.subr.mxu0 0.0
        %2144 = vmatpush1.msra.mxu0 %v2109
        %2145 = vmatprep.subr.mxu0 0.0
        %2146 = vmatpush2.msra.mxu0 0.0
        %2147 = vmatprep.subr.mxu0 0.0
        %2148 = vmatpush2.msra.mxu0 0.0
        %2149 = vmatprep.subr.mxu0 0.0
        %2150 = vmatpush2.msra.mxu0 0.0
        %2151 = vmatprep.subr.mxu0 0.0
        %2152 = vmatpush2.msra.mxu0 0.0
        %2153 = vmatprep.subr.mxu0 0.0
        %2154 = vmatpush2.msra.mxu0 0.0
        %2155 = vmatprep.subr.mxu0 0.0
        %2156 = vmatpush2.msra.mxu0 0.0
        %2157 = vmatprep.subr.mxu0 0.0
        %2158 = vmatpush2.msra.mxu0 0.0
        %2159 = vmatprep.subr.mxu0 0.0
        %2160 = vmatpush2.msra.mxu0 0.0
        %2161 = vmatprep.subr.mxu0 0.0
        %2162 = vmatpush2.msra.mxu0 0.0
        %2163 = vmatprep.subr.mxu0 0.0
        %2164 = vmatpush2.msra.mxu0 0.0
        %2165 = vmatprep.subr.mxu0 0.0
        %2166 = vmatpush2.msra.mxu0 0.0
        %2167 = vmatprep.subr.mxu0 0.0
        %2168 = vmatpush2.msra.mxu0 0.0
        %2169 = vmatprep.subr.mxu0 0.0
        %2170 = vmatpush2.msra.mxu0 0.0
        %2171 = vmatprep.subr.mxu0 0.0
        %2172 = vmatpush2.msra.mxu0 0.0
        %2173 = vmatprep.subr.mxu0 0.0
        %2174 = vmatpush2.msra.mxu0 0.0
        %2175 = vmatprep.subr.mxu0 0.0
        %2176 = vmatpush2.msra.mxu0 0.0
        %2177 = vmatprep.mubr.f32.mxu0 0.0
        %2178 = vmatmul.mubr.f32.gmra.mxu0 %v2111
        %v2179 = vpop.f32.mrf.mxu0
        %v2180 = vadd.f32 0.0, %v2179
        %v2181 = vpop.f32.mrf.mxu0
        %2182 = vdwg.mxu0
        %v2183 = vadd.f32 %v2025, %v2180
        %v2184 = vmul.f32 %v1346, %v1056
        %2185 = vmatprep.subr.mxu0 0.0
        %2186 = vmatpush1.xpose.msra.mxu0 0.0
        %2187 = vmatprep.subr.mxu0 0.0
        %2188 = vmatpush1.xpose.msra.mxu0 0.0
        %2189 = vmatprep.subr.mxu0 0.0
        %2190 = vmatpush1.xpose.msra.mxu0 0.0
        %2191 = vmatprep.subr.mxu0 0.0
        %2192 = vmatpush1.xpose.msra.mxu0 0.0
        %2193 = vmatprep.subr.mxu0 0.0
        %2194 = vmatpush1.xpose.msra.mxu0 0.0
        %2195 = vmatprep.subr.mxu0 0.0
        %2196 = vmatpush1.xpose.msra.mxu0 0.0
        %2197 = vmatprep.subr.mxu0 0.0
        %2198 = vmatpush1.xpose.msra.mxu0 0.0
        %2199 = vmatprep.subr.mxu0 0.0
        %2200 = vmatpush1.xpose.msra.mxu0 0.0
        %2201 = vmatprep.subr.mxu0 0.0
        %2202 = vmatpush1.xpose.msra.mxu0 0.0
        %2203 = vmatprep.subr.mxu0 0.0
        %2204 = vmatpush1.xpose.msra.mxu0 0.0
        %2205 = vmatprep.subr.mxu0 0.0
        %2206 = vmatpush1.xpose.msra.mxu0 0.0
        %2207 = vmatprep.subr.mxu0 0.0
        %2208 = vmatpush1.xpose.msra.mxu0 0.0
        %2209 = vmatprep.subr.mxu0 0.0
        %2210 = vmatpush1.xpose.msra.mxu0 0.0
        %2211 = vmatprep.subr.mxu0 0.0
        %2212 = vmatpush1.xpose.msra.mxu0 0.0
        %2213 = vmatprep.subr.mxu0 0.0
        %2214 = vmatpush1.xpose.msra.mxu0 0.0
        %2215 = vmatprep.subr.mxu0 0.0
        %2216 = vmatpush1.xpose.msra.mxu0 %v1348
        %2217 = vmatprep.subr.mxu0 0.0
        %2218 = vmatpush2.xpose.msra.mxu0 0.0
        %2219 = vmatprep.subr.mxu0 0.0
        %2220 = vmatpush2.xpose.msra.mxu0 0.0
        %2221 = vmatprep.subr.mxu0 0.0
        %2222 = vmatpush2.xpose.msra.mxu0 0.0
        %2223 = vmatprep.subr.mxu0 0.0
        %2224 = vmatpush2.xpose.msra.mxu0 0.0
        %2225 = vmatprep.subr.mxu0 0.0
        %2226 = vmatpush2.xpose.msra.mxu0 0.0
        %2227 = vmatprep.subr.mxu0 0.0
        %2228 = vmatpush2.xpose.msra.mxu0 0.0
        %2229 = vmatprep.subr.mxu0 0.0
        %2230 = vmatpush2.xpose.msra.mxu0 0.0
        %2231 = vmatprep.subr.mxu0 0.0
        %2232 = vmatpush2.xpose.msra.mxu0 0.0
        %2233 = vmatprep.subr.mxu0 0.0
        %2234 = vmatpush2.xpose.msra.mxu0 0.0
        %2235 = vmatprep.subr.mxu0 0.0
        %2236 = vmatpush2.xpose.msra.mxu0 0.0
        %2237 = vmatprep.subr.mxu0 0.0
        %2238 = vmatpush2.xpose.msra.mxu0 0.0
        %2239 = vmatprep.subr.mxu0 0.0
        %2240 = vmatpush2.xpose.msra.mxu0 0.0
        %2241 = vmatprep.subr.mxu0 0.0
        %2242 = vmatpush2.xpose.msra.mxu0 0.0
        %2243 = vmatprep.subr.mxu0 0.0
        %2244 = vmatpush2.xpose.msra.mxu0 0.0
        %2245 = vmatprep.subr.mxu0 0.0
        %2246 = vmatpush2.xpose.msra.mxu0 0.0
        %2247 = vmatprep.subr.mxu0 0.0
        %2248 = vmatpush2.xpose.msra.mxu0 0.0
        %2249 = vmatprep.mubr.f32.mxu0 0.0
        %2250 = vmatmul.mubr.f32.gmra.mxu0 %v2184
        %v2251 = vpop.f32.mrf.mxu0
        %v2252 = vadd.f32 0.0, %v2251
        %v2253 = vpop.f32.mrf.mxu0
        %2254 = vdwg.mxu0
        %v2255 = vmul.f32 %v2252, 0.25
        %v2256 = vsel %vm1467, %v2255, -inf
        %2257 = vmax.xlane.f32.xlu0 %v2256
        %v2258 = vpop.xlane.xlu0 %2257
        %v2259 = vsub.f32 %v2255, %v2258
        %v2260 = vmul.f32 %v2259, 1.442695
        %v2261 = vpow.pop %v2260
        %v2262 = vsel %vm1467, %v2261, 0.0
        %2263 = vadd.xlane.f32.xlu0 %v2262
        %v2264 = vpop.xlane.xlu0 %2263
        %v2265 = vrcp.pop %v2264
        %v2266 = vmul.f32 %v2261, %v2265
        %v2267 = vmul.f32 %v1389, %v1056
        %v2269 = vsel %vm1467, %v2266, 0
        %2271 = vmatprep.subr.mxu0 0.0
        %2272 = vmatpush1.msra.mxu0 0.0
        %2273 = vmatprep.subr.mxu0 0.0
        %2274 = vmatpush1.msra.mxu0 0.0
        %2275 = vmatprep.subr.mxu0 0.0
        %2276 = vmatpush1.msra.mxu0 0.0
        %2277 = vmatprep.subr.mxu0 0.0
        %2278 = vmatpush1.msra.mxu0 0.0
        %2279 = vmatprep.subr.mxu0 0.0
        %2280 = vmatpush1.msra.mxu0 0.0
        %2281 = vmatprep.subr.mxu0 0.0
        %2282 = vmatpush1.msra.mxu0 0.0
        %2283 = vmatprep.subr.mxu0 0.0
        %2284 = vmatpush1.msra.mxu0 0.0
        %2285 = vmatprep.subr.mxu0 0.0
        %2286 = vmatpush1.msra.mxu0 0.0
        %2287 = vmatprep.subr.mxu0 0.0
        %2288 = vmatpush1.msra.mxu0 0.0
        %2289 = vmatprep.subr.mxu0 0.0
        %2290 = vmatpush1.msra.mxu0 0.0
        %2291 = vmatprep.subr.mxu0 0.0
        %2292 = vmatpush1.msra.mxu0 0.0
        %2293 = vmatprep.subr.mxu0 0.0
        %2294 = vmatpush1.msra.mxu0 0.0
        %2295 = vmatprep.subr.mxu0 0.0
        %2296 = vmatpush1.msra.mxu0 0.0
        %2297 = vmatprep.subr.mxu0 0.0
        %2298 = vmatpush1.msra.mxu0 0.0
        %2299 = vmatprep.subr.mxu0 0.0
        %2300 = vmatpush1.msra.mxu0 0.0
        %2301 = vmatprep.subr.mxu0 0.0
        %2302 = vmatpush1.msra.mxu0 %v2267
        %2303 = vmatprep.subr.mxu0 0.0
        %2304 = vmatpush2.msra.mxu0 0.0
        %2305 = vmatprep.subr.mxu0 0.0
        %2306 = vmatpush2.msra.mxu0 0.0
        %2307 = vmatprep.subr.mxu0 0.0
        %2308 = vmatpush2.msra.mxu0 0.0
        %2309 = vmatprep.subr.mxu0 0.0
        %2310 = vmatpush2.msra.mxu0 0.0
        %2311 = vmatprep.subr.mxu0 0.0
        %2312 = vmatpush2.msra.mxu0 0.0
        %2313 = vmatprep.subr.mxu0 0.0
        %2314 = vmatpush2.msra.mxu0 0.0
        %2315 = vmatprep.subr.mxu0 0.0
        %2316 = vmatpush2.msra.mxu0 0.0
        %2317 = vmatprep.subr.mxu0 0.0
        %2318 = vmatpush2.msra.mxu0 0.0
        %2319 = vmatprep.subr.mxu0 0.0
        %2320 = vmatpush2.msra.mxu0 0.0
        %2321 = vmatprep.subr.mxu0 0.0
        %2322 = vmatpush2.msra.mxu0 0.0
        %2323 = vmatprep.subr.mxu0 0.0
        %2324 = vmatpush2.msra.mxu0 0.0
        %2325 = vmatprep.subr.mxu0 0.0
        %2326 = vmatpush2.msra.mxu0 0.0
        %2327 = vmatprep.subr.mxu0 0.0
        %2328 = vmatpush2.msra.mxu0 0.0
        %2329 = vmatprep.subr.mxu0 0.0
        %2330 = vmatpush2.msra.mxu0 0.0
        %2331 = vmatprep.subr.mxu0 0.0
        %2332 = vmatpush2.msra.mxu0 0.0
        %2333 = vmatprep.subr.mxu0 0.0
        %2334 = vmatpush2.msra.mxu0 0.0
        %2335 = vmatprep.mubr.f32.mxu0 0.0
        %2336 = vmatmul.mubr.f32.gmra.mxu0 %v2269
        %v2337 = vpop.f32.mrf.mxu0
        %v2338 = vadd.f32 0.0, %v2337
        %v2339 = vpop.f32.mrf.mxu0
        %2340 = vdwg.mxu0
        %v2341 = vadd.f32 %v2183, %v2338
        %v2342 = vmul.f32 %v1346, %v1061
        %2343 = vmatprep.subr.mxu0 0.0
        %2344 = vmatpush1.xpose.msra.mxu0 0.0
        %2345 = vmatprep.subr.mxu0 0.0
        %2346 = vmatpush1.xpose.msra.mxu0 0.0
        %2347 = vmatprep.subr.mxu0 0.0
        %2348 = vmatpush1.xpose.msra.mxu0 0.0
        %2349 = vmatprep.subr.mxu0 0.0
        %2350 = vmatpush1.xpose.msra.mxu0 0.0
        %2351 = vmatprep.subr.mxu0 0.0
        %2352 = vmatpush1.xpose.msra.mxu0 0.0
        %2353 = vmatprep.subr.mxu0 0.0
        %2354 = vmatpush1.xpose.msra.mxu0 0.0
        %2355 = vmatprep.subr.mxu0 0.0
        %2356 = vmatpush1.xpose.msra.mxu0 0.0
        %2357 = vmatprep.subr.mxu0 0.0
        %2358 = vmatpush1.xpose.msra.mxu0 0.0
        %2359 = vmatprep.subr.mxu0 0.0
        %2360 = vmatpush1.xpose.msra.mxu0 0.0
        %2361 = vmatprep.subr.mxu0 0.0
        %2362 = vmatpush1.xpose.msra.mxu0 0.0
        %2363 = vmatprep.subr.mxu0 0.0
        %2364 = vmatpush1.xpose.msra.mxu0 0.0
        %2365 = vmatprep.subr.mxu0 0.0
        %2366 = vmatpush1.xpose.msra.mxu0 0.0
        %2367 = vmatprep.subr.mxu0 0.0
        %2368 = vmatpush1.xpose.msra.mxu0 0.0
        %2369 = vmatprep.subr.mxu0 0.0
        %2370 = vmatpush1.xpose.msra.mxu0 0.0
        %2371 = vmatprep.subr.mxu0 0.0
        %2372 = vmatpush1.xpose.msra.mxu0 0.0
        %2373 = vmatprep.subr.mxu0 0.0
        %2374 = vmatpush1.xpose.msra.mxu0 %v1348
        %2375 = vmatprep.subr.mxu0 0.0
        %2376 = vmatpush2.xpose.msra.mxu0 0.0
        %2377 = vmatprep.subr.mxu0 0.0
        %2378 = vmatpush2.xpose.msra.mxu0 0.0
        %2379 = vmatprep.subr.mxu0 0.0
        %2380 = vmatpush2.xpose.msra.mxu0 0.0
        %2381 = vmatprep.subr.mxu0 0.0
        %2382 = vmatpush2.xpose.msra.mxu0 0.0
        %2383 = vmatprep.subr.mxu0 0.0
        %2384 = vmatpush2.xpose.msra.mxu0 0.0
        %2385 = vmatprep.subr.mxu0 0.0
        %2386 = vmatpush2.xpose.msra.mxu0 0.0
        %2387 = vmatprep.subr.mxu0 0.0
        %2388 = vmatpush2.xpose.msra.mxu0 0.0
        %2389 = vmatprep.subr.mxu0 0.0
        %2390 = vmatpush2.xpose.msra.mxu0 0.0
        %2391 = vmatprep.subr.mxu0 0.0
        %2392 = vmatpush2.xpose.msra.mxu0 0.0
        %2393 = vmatprep.subr.mxu0 0.0
        %2394 = vmatpush2.xpose.msra.mxu0 0.0
        %2395 = vmatprep.subr.mxu0 0.0
        %2396 = vmatpush2.xpose.msra.mxu0 0.0
        %2397 = vmatprep.subr.mxu0 0.0
        %2398 = vmatpush2.xpose.msra.mxu0 0.0
        %2399 = vmatprep.subr.mxu0 0.0
        %2400 = vmatpush2.xpose.msra.mxu0 0.0
        %2401 = vmatprep.subr.mxu0 0.0
        %2402 = vmatpush2.xpose.msra.mxu0 0.0
        %2403 = vmatprep.subr.mxu0 0.0
        %2404 = vmatpush2.xpose.msra.mxu0 0.0
        %2405 = vmatprep.subr.mxu0 0.0
        %2406 = vmatpush2.xpose.msra.mxu0 0.0
        %2407 = vmatprep.mubr.f32.mxu0 0.0
        %2408 = vmatmul.mubr.f32.gmra.mxu0 %v2342
        %v2409 = vpop.f32.mrf.mxu0
        %v2410 = vadd.f32 0.0, %v2409
        %v2411 = vpop.f32.mrf.mxu0
        %2412 = vdwg.mxu0
        %v2413 = vmul.f32 %v2410, 0.25
        %v2414 = vsel %vm1467, %v2413, -inf
        %2415 = vmax.xlane.f32.xlu0 %v2414
        %v2416 = vpop.xlane.xlu0 %2415
        %v2417 = vsub.f32 %v2413, %v2416
        %v2418 = vmul.f32 %v2417, 1.442695
        %v2419 = vpow.pop %v2418
        %v2420 = vsel %vm1467, %v2419, 0.0
        %2421 = vadd.xlane.f32.xlu0 %v2420
        %v2422 = vpop.xlane.xlu0 %2421
        %v2423 = vrcp.pop %v2422
        %v2424 = vmul.f32 %v2419, %v2423
        %v2425 = vmul.f32 %v1389, %v1061
        %v2427 = vsel %vm1467, %v2424, 0
        %2429 = vmatprep.subr.mxu0 0.0
        %2430 = vmatpush1.msra.mxu0 0.0
        %2431 = vmatprep.subr.mxu0 0.0
        %2432 = vmatpush1.msra.mxu0 0.0
        %2433 = vmatprep.subr.mxu0 0.0
        %2434 = vmatpush1.msra.mxu0 0.0
        %2435 = vmatprep.subr.mxu0 0.0
        %2436 = vmatpush1.msra.mxu0 0.0
        %2437 = vmatprep.subr.mxu0 0.0
        %2438 = vmatpush1.msra.mxu0 0.0
        %2439 = vmatprep.subr.mxu0 0.0
        %2440 = vmatpush1.msra.mxu0 0.0
        %2441 = vmatprep.subr.mxu0 0.0
        %2442 = vmatpush1.msra.mxu0 0.0
        %2443 = vmatprep.subr.mxu0 0.0
        %2444 = vmatpush1.msra.mxu0 0.0
        %2445 = vmatprep.subr.mxu0 0.0
        %2446 = vmatpush1.msra.mxu0 0.0
        %2447 = vmatprep.subr.mxu0 0.0
        %2448 = vmatpush1.msra.mxu0 0.0
        %2449 = vmatprep.subr.mxu0 0.0
        %2450 = vmatpush1.msra.mxu0 0.0
        %2451 = vmatprep.subr.mxu0 0.0
        %2452 = vmatpush1.msra.mxu0 0.0
        %2453 = vmatprep.subr.mxu0 0.0
        %2454 = vmatpush1.msra.mxu0 0.0
        %2455 = vmatprep.subr.mxu0 0.0
        %2456 = vmatpush1.msra.mxu0 0.0
        %2457 = vmatprep.subr.mxu0 0.0
        %2458 = vmatpush1.msra.mxu0 0.0
        %2459 = vmatprep.subr.mxu0 0.0
        %2460 = vmatpush1.msra.mxu0 %v2425
        %2461 = vmatprep.subr.mxu0 0.0
        %2462 = vmatpush2.msra.mxu0 0.0
        %2463 = vmatprep.subr.mxu0 0.0
        %2464 = vmatpush2.msra.mxu0 0.0
        %2465 = vmatprep.subr.mxu0 0.0
        %2466 = vmatpush2.msra.mxu0 0.0
        %2467 = vmatprep.subr.mxu0 0.0
        %2468 = vmatpush2.msra.mxu0 0.0
        %2469 = vmatprep.subr.mxu0 0.0
        %2470 = vmatpush2.msra.mxu0 0.0
        %2471 = vmatprep.subr.mxu0 0.0
        %2472 = vmatpush2.msra.mxu0 0.0
        %2473 = vmatprep.subr.mxu0 0.0
        %2474 = vmatpush2.msra.mxu0 0.0
        %2475 = vmatprep.subr.mxu0 0.0
        %2476 = vmatpush2.msra.mxu0 0.0
        %2477 = vmatprep.subr.mxu0 0.0
        %2478 = vmatpush2.msra.mxu0 0.0
        %2479 = vmatprep.subr.mxu0 0.0
        %2480 = vmatpush2.msra.mxu0 0.0
        %2481 = vmatprep.subr.mxu0 0.0
        %2482 = vmatpush2.msra.mxu0 0.0
        %2483 = vmatprep.subr.mxu0 0.0
        %2484 = vmatpush2.msra.mxu0 0.0
        %2485 = vmatprep.subr.mxu0 0.0
        %2486 = vmatpush2.msra.mxu0 0.0
        %2487 = vmatprep.subr.mxu0 0.0
        %2488 = vmatpush2.msra.mxu0 0.0
        %2489 = vmatprep.subr.mxu0 0.0
        %2490 = vmatpush2.msra.mxu0 0.0
        %2491 = vmatprep.subr.mxu0 0.0
        %2492 = vmatpush2.msra.mxu0 0.0
        %2493 = vmatprep.mubr.f32.mxu0 0.0
        %2494 = vmatmul.mubr.f32.gmra.mxu0 %v2427
        %v2495 = vpop.f32.mrf.mxu0
        %v2496 = vadd.f32 0.0, %v2495
        %v2497 = vpop.f32.mrf.mxu0
        %2498 = vdwg.mxu0
        %v2499 = vadd.f32 %v2341, %v2496
        %v2500 = vmul.f32 %v1346, %v1066
        %2501 = vmatprep.subr.mxu0 0.0
        %2502 = vmatpush1.xpose.msra.mxu0 0.0
        %2503 = vmatprep.subr.mxu0 0.0
        %2504 = vmatpush1.xpose.msra.mxu0 0.0
        %2505 = vmatprep.subr.mxu0 0.0
        %2506 = vmatpush1.xpose.msra.mxu0 0.0
        %2507 = vmatprep.subr.mxu0 0.0
        %2508 = vmatpush1.xpose.msra.mxu0 0.0
        %2509 = vmatprep.subr.mxu0 0.0
        %2510 = vmatpush1.xpose.msra.mxu0 0.0
        %2511 = vmatprep.subr.mxu0 0.0
        %2512 = vmatpush1.xpose.msra.mxu0 0.0
        %2513 = vmatprep.subr.mxu0 0.0
        %2514 = vmatpush1.xpose.msra.mxu0 0.0
        %2515 = vmatprep.subr.mxu0 0.0
        %2516 = vmatpush1.xpose.msra.mxu0 0.0
        %2517 = vmatprep.subr.mxu0 0.0
        %2518 = vmatpush1.xpose.msra.mxu0 0.0
        %2519 = vmatprep.subr.mxu0 0.0
        %2520 = vmatpush1.xpose.msra.mxu0 0.0
        %2521 = vmatprep.subr.mxu0 0.0
        %2522 = vmatpush1.xpose.msra.mxu0 0.0
        %2523 = vmatprep.subr.mxu0 0.0
        %2524 = vmatpush1.xpose.msra.mxu0 0.0
        %2525 = vmatprep.subr.mxu0 0.0
        %2526 = vmatpush1.xpose.msra.mxu0 0.0
        %2527 = vmatprep.subr.mxu0 0.0
        %2528 = vmatpush1.xpose.msra.mxu0 0.0
        %2529 = vmatprep.subr.mxu0 0.0
        %2530 = vmatpush1.xpose.msra.mxu0 0.0
        %2531 = vmatprep.subr.mxu0 0.0
        %2532 = vmatpush1.xpose.msra.mxu0 %v1348
        %2533 = vmatprep.subr.mxu0 0.0
        %2534 = vmatpush2.xpose.msra.mxu0 0.0
        %2535 = vmatprep.subr.mxu0 0.0
        %2536 = vmatpush2.xpose.msra.mxu0 0.0
        %2537 = vmatprep.subr.mxu0 0.0
        %2538 = vmatpush2.xpose.msra.mxu0 0.0
        %2539 = vmatprep.subr.mxu0 0.0
        %2540 = vmatpush2.xpose.msra.mxu0 0.0
        %2541 = vmatprep.subr.mxu0 0.0
        %2542 = vmatpush2.xpose.msra.mxu0 0.0
        %2543 = vmatprep.subr.mxu0 0.0
        %2544 = vmatpush2.xpose.msra.mxu0 0.0
        %2545 = vmatprep.subr.mxu0 0.0
        %2546 = vmatpush2.xpose.msra.mxu0 0.0
        %2547 = vmatprep.subr.mxu0 0.0
        %2548 = vmatpush2.xpose.msra.mxu0 0.0
        %2549 = vmatprep.subr.mxu0 0.0
        %2550 = vmatpush2.xpose.msra.mxu0 0.0
        %2551 = vmatprep.subr.mxu0 0.0
        %2552 = vmatpush2.xpose.msra.mxu0 0.0
        %2553 = vmatprep.subr.mxu0 0.0
        %2554 = vmatpush2.xpose.msra.mxu0 0.0
        %2555 = vmatprep.subr.mxu0 0.0
        %2556 = vmatpush2.xpose.msra.mxu0 0.0
        %2557 = vmatprep.subr.mxu0 0.0
        %2558 = vmatpush2.xpose.msra.mxu0 0.0
        %2559 = vmatprep.subr.mxu0 0.0
        %2560 = vmatpush2.xpose.msra.mxu0 0.0
        %2561 = vmatprep.subr.mxu0 0.0
        %2562 = vmatpush2.xpose.msra.mxu0 0.0
        %2563 = vmatprep.subr.mxu0 0.0
        %2564 = vmatpush2.xpose.msra.mxu0 0.0
        %2565 = vmatprep.mubr.f32.mxu0 0.0
        %2566 = vmatmul.mubr.f32.gmra.mxu0 %v2500
        %v2567 = vpop.f32.mrf.mxu0
        %v2568 = vadd.f32 0.0, %v2567
        %v2569 = vpop.f32.mrf.mxu0
        %2570 = vdwg.mxu0
        %v2571 = vmul.f32 %v2568, 0.25
        %v2572 = vsel %vm1467, %v2571, -inf
        %2573 = vmax.xlane.f32.xlu0 %v2572
        %v2574 = vpop.xlane.xlu0 %2573
        %v2575 = vsub.f32 %v2571, %v2574
        %v2576 = vmul.f32 %v2575, 1.442695
        %v2577 = vpow.pop %v2576
        %v2578 = vsel %vm1467, %v2577, 0.0
        %2579 = vadd.xlane.f32.xlu0 %v2578
        %v2580 = vpop.xlane.xlu0 %2579
        %v2581 = vrcp.pop %v2580
        %v2582 = vmul.f32 %v2577, %v2581
        %v2583 = vmul.f32 %v1389, %v1066
        %v2585 = vsel %vm1467, %v2582, 0
        %2587 = vmatprep.subr.mxu0 0.0
        %2588 = vmatpush1.msra.mxu0 0.0
        %2589 = vmatprep.subr.mxu0 0.0
        %2590 = vmatpush1.msra.mxu0 0.0
        %2591 = vmatprep.subr.mxu0 0.0
        %2592 = vmatpush1.msra.mxu0 0.0
        %2593 = vmatprep.subr.mxu0 0.0
        %2594 = vmatpush1.msra.mxu0 0.0
        %2595 = vmatprep.subr.mxu0 0.0
        %2596 = vmatpush1.msra.mxu0 0.0
        %2597 = vmatprep.subr.mxu0 0.0
        %2598 = vmatpush1.msra.mxu0 0.0
        %2599 = vmatprep.subr.mxu0 0.0
        %2600 = vmatpush1.msra.mxu0 0.0
        %2601 = vmatprep.subr.mxu0 0.0
        %2602 = vmatpush1.msra.mxu0 0.0
        %2603 = vmatprep.subr.mxu0 0.0
        %2604 = vmatpush1.msra.mxu0 0.0
        %2605 = vmatprep.subr.mxu0 0.0
        %2606 = vmatpush1.msra.mxu0 0.0
        %2607 = vmatprep.subr.mxu0 0.0
        %2608 = vmatpush1.msra.mxu0 0.0
        %2609 = vmatprep.subr.mxu0 0.0
        %2610 = vmatpush1.msra.mxu0 0.0
        %2611 = vmatprep.subr.mxu0 0.0
        %2612 = vmatpush1.msra.mxu0 0.0
        %2613 = vmatprep.subr.mxu0 0.0
        %2614 = vmatpush1.msra.mxu0 0.0
        %2615 = vmatprep.subr.mxu0 0.0
        %2616 = vmatpush1.msra.mxu0 0.0
        %2617 = vmatprep.subr.mxu0 0.0
        %2618 = vmatpush1.msra.mxu0 %v2583
        %2619 = vmatprep.subr.mxu0 0.0
        %2620 = vmatpush2.msra.mxu0 0.0
        %2621 = vmatprep.subr.mxu0 0.0
        %2622 = vmatpush2.msra.mxu0 0.0
        %2623 = vmatprep.subr.mxu0 0.0
        %2624 = vmatpush2.msra.mxu0 0.0
        %2625 = vmatprep.subr.mxu0 0.0
        %2626 = vmatpush2.msra.mxu0 0.0
        %2627 = vmatprep.subr.mxu0 0.0
        %2628 = vmatpush2.msra.mxu0 0.0
        %2629 = vmatprep.subr.mxu0 0.0
        %2630 = vmatpush2.msra.mxu0 0.0
        %2631 = vmatprep.subr.mxu0 0.0
        %2632 = vmatpush2.msra.mxu0 0.0
        %2633 = vmatprep.subr.mxu0 0.0
        %2634 = vmatpush2.msra.mxu0 0.0
        %2635 = vmatprep.subr.mxu0 0.0
        %2636 = vmatpush2.msra.mxu0 0.0
        %2637 = vmatprep.subr.mxu0 0.0
        %2638 = vmatpush2.msra.mxu0 0.0
        %2639 = vmatprep.subr.mxu0 0.0
        %2640 = vmatpush2.msra.mxu0 0.0
        %2641 = vmatprep.subr.mxu0 0.0
        %2642 = vmatpush2.msra.mxu0 0.0
        %2643 = vmatprep.subr.mxu0 0.0
        %2644 = vmatpush2.msra.mxu0 0.0
        %2645 = vmatprep.subr.mxu0 0.0
        %2646 = vmatpush2.msra.mxu0 0.0
        %2647 = vmatprep.subr.mxu0 0.0
        %2648 = vmatpush2.msra.mxu0 0.0
        %2649 = vmatprep.subr.mxu0 0.0
        %2650 = vmatpush2.msra.mxu0 0.0
        %2651 = vmatprep.mubr.f32.mxu0 0.0
        %2652 = vmatmul.mubr.f32.gmra.mxu0 %v2585
        %v2653 = vpop.f32.mrf.mxu0
        %v2654 = vadd.f32 0.0, %v2653
        %v2655 = vpop.f32.mrf.mxu0
        %2656 = vdwg.mxu0
        %v2657 = vadd.f32 %v2499, %v2654
        %v2658 = vmul.f32 %v1350, %v1031
        %2659 = vmatprep.subr.mxu0 0.0
        %2660 = vmatpush1.xpose.msra.mxu0 0.0
        %2661 = vmatprep.subr.mxu0 0.0
        %2662 = vmatpush1.xpose.msra.mxu0 0.0
        %2663 = vmatprep.subr.mxu0 0.0
        %2664 = vmatpush1.xpose.msra.mxu0 0.0
        %2665 = vmatprep.subr.mxu0 0.0
        %2666 = vmatpush1.xpose.msra.mxu0 0.0
        %2667 = vmatprep.subr.mxu0 0.0
        %2668 = vmatpush1.xpose.msra.mxu0 0.0
        %2669 = vmatprep.subr.mxu0 0.0
        %2670 = vmatpush1.xpose.msra.mxu0 0.0
        %2671 = vmatprep.subr.mxu0 0.0
        %2672 = vmatpush1.xpose.msra.mxu0 0.0
        %2673 = vmatprep.subr.mxu0 0.0
        %2674 = vmatpush1.xpose.msra.mxu0 0.0
        %2675 = vmatprep.subr.mxu0 0.0
        %2676 = vmatpush1.xpose.msra.mxu0 0.0
        %2677 = vmatprep.subr.mxu0 0.0
        %2678 = vmatpush1.xpose.msra.mxu0 0.0
        %2679 = vmatprep.subr.mxu0 0.0
        %2680 = vmatpush1.xpose.msra.mxu0 0.0
        %2681 = vmatprep.subr.mxu0 0.0
        %2682 = vmatpush1.xpose.msra.mxu0 0.0
        %2683 = vmatprep.subr.mxu0 0.0
        %2684 = vmatpush1.xpose.msra.mxu0 0.0
        %2685 = vmatprep.subr.mxu0 0.0
        %2686 = vmatpush1.xpose.msra.mxu0 0.0
        %2687 = vmatprep.subr.mxu0 0.0
        %2688 = vmatpush1.xpose.msra.mxu0 0.0
        %2689 = vmatprep.subr.mxu0 0.0
        %2690 = vmatpush1.xpose.msra.mxu0 %v1352
        %2691 = vmatprep.subr.mxu0 0.0
        %2692 = vmatpush2.xpose.msra.mxu0 0.0
        %2693 = vmatprep.subr.mxu0 0.0
        %2694 = vmatpush2.xpose.msra.mxu0 0.0
        %2695 = vmatprep.subr.mxu0 0.0
        %2696 = vmatpush2.xpose.msra.mxu0 0.0
        %2697 = vmatprep.subr.mxu0 0.0
        %2698 = vmatpush2.xpose.msra.mxu0 0.0
        %2699 = vmatprep.subr.mxu0 0.0
        %2700 = vmatpush2.xpose.msra.mxu0 0.0
        %2701 = vmatprep.subr.mxu0 0.0
        %2702 = vmatpush2.xpose.msra.mxu0 0.0
        %2703 = vmatprep.subr.mxu0 0.0
        %2704 = vmatpush2.xpose.msra.mxu0 0.0
        %2705 = vmatprep.subr.mxu0 0.0
        %2706 = vmatpush2.xpose.msra.mxu0 0.0
        %2707 = vmatprep.subr.mxu0 0.0
        %2708 = vmatpush2.xpose.msra.mxu0 0.0
        %2709 = vmatprep.subr.mxu0 0.0
        %2710 = vmatpush2.xpose.msra.mxu0 0.0
        %2711 = vmatprep.subr.mxu0 0.0
        %2712 = vmatpush2.xpose.msra.mxu0 0.0
        %2713 = vmatprep.subr.mxu0 0.0
        %2714 = vmatpush2.xpose.msra.mxu0 0.0
        %2715 = vmatprep.subr.mxu0 0.0
        %2716 = vmatpush2.xpose.msra.mxu0 0.0
        %2717 = vmatprep.subr.mxu0 0.0
        %2718 = vmatpush2.xpose.msra.mxu0 0.0
        %2719 = vmatprep.subr.mxu0 0.0
        %2720 = vmatpush2.xpose.msra.mxu0 0.0
        %2721 = vmatprep.subr.mxu0 0.0
        %2722 = vmatpush2.xpose.msra.mxu0 0.0
        %2723 = vmatprep.mubr.f32.mxu0 0.0
        %2724 = vmatmul.mubr.f32.gmra.mxu0 %v2658
        %v2725 = vpop.f32.mrf.mxu0
        %v2726 = vadd.f32 0.0, %v2725
        %v2727 = vpop.f32.mrf.mxu0
        %2728 = vdwg.mxu0
        %v2729 = vmul.f32 %v2726, 0.25
        %v2730 = vsel %vm1467, %v2729, -inf
        %2731 = vmax.xlane.f32.xlu0 %v2730
        %v2732 = vpop.xlane.xlu0 %2731
        %v2733 = vsub.f32 %v2729, %v2732
        %v2734 = vmul.f32 %v2733, 1.442695
        %v2735 = vpow.pop %v2734
        %v2736 = vsel %vm1467, %v2735, 0.0
        %2737 = vadd.xlane.f32.xlu0 %v2736
        %v2738 = vpop.xlane.xlu0 %2737
        %v2739 = vrcp.pop %v2738
        %v2740 = vmul.f32 %v2735, %v2739
        %v2741 = vmul.f32 %v1392, %v1031
        %v2742 = vmul.f32 %v1350, %v1036
        %2743 = vmatprep.subr.mxu0 0.0
        %2744 = vmatpush1.xpose.msra.mxu0 0.0
        %2745 = vmatprep.subr.mxu0 0.0
        %2746 = vmatpush1.xpose.msra.mxu0 0.0
        %2747 = vmatprep.subr.mxu0 0.0
        %2748 = vmatpush1.xpose.msra.mxu0 0.0
        %2749 = vmatprep.subr.mxu0 0.0
        %2750 = vmatpush1.xpose.msra.mxu0 0.0
        %2751 = vmatprep.subr.mxu0 0.0
        %2752 = vmatpush1.xpose.msra.mxu0 0.0
        %2753 = vmatprep.subr.mxu0 0.0
        %2754 = vmatpush1.xpose.msra.mxu0 0.0
        %2755 = vmatprep.subr.mxu0 0.0
        %2756 = vmatpush1.xpose.msra.mxu0 0.0
        %2757 = vmatprep.subr.mxu0 0.0
        %2758 = vmatpush1.xpose.msra.mxu0 0.0
        %2759 = vmatprep.subr.mxu0 0.0
        %2760 = vmatpush1.xpose.msra.mxu0 0.0
        %2761 = vmatprep.subr.mxu0 0.0
        %2762 = vmatpush1.xpose.msra.mxu0 0.0
        %2763 = vmatprep.subr.mxu0 0.0
        %2764 = vmatpush1.xpose.msra.mxu0 0.0
        %2765 = vmatprep.subr.mxu0 0.0
        %2766 = vmatpush1.xpose.msra.mxu0 0.0
        %2767 = vmatprep.subr.mxu0 0.0
        %2768 = vmatpush1.xpose.msra.mxu0 0.0
        %2769 = vmatprep.subr.mxu0 0.0
        %2770 = vmatpush1.xpose.msra.mxu0 0.0
        %2771 = vmatprep.subr.mxu0 0.0
        %2772 = vmatpush1.xpose.msra.mxu0 0.0
        %2773 = vmatprep.subr.mxu0 0.0
        %2774 = vmatpush1.xpose.msra.mxu0 %v1352
        %2775 = vmatprep.subr.mxu0 0.0
        %2776 = vmatpush2.xpose.msra.mxu0 0.0
        %2777 = vmatprep.subr.mxu0 0.0
        %2778 = vmatpush2.xpose.msra.mxu0 0.0
        %2779 = vmatprep.subr.mxu0 0.0
        %2780 = vmatpush2.xpose.msra.mxu0 0.0
        %2781 = vmatprep.subr.mxu0 0.0
        %2782 = vmatpush2.xpose.msra.mxu0 0.0
        %2783 = vmatprep.subr.mxu0 0.0
        %2784 = vmatpush2.xpose.msra.mxu0 0.0
        %2785 = vmatprep.subr.mxu0 0.0
        %2786 = vmatpush2.xpose.msra.mxu0 0.0
        %2787 = vmatprep.subr.mxu0 0.0
        %2788 = vmatpush2.xpose.msra.mxu0 0.0
        %2789 = vmatprep.subr.mxu0 0.0
        %2790 = vmatpush2.xpose.msra.mxu0 0.0
        %2791 = vmatprep.subr.mxu0 0.0
        %2792 = vmatpush2.xpose.msra.mxu0 0.0
        %2793 = vmatprep.subr.mxu0 0.0
        %2794 = vmatpush2.xpose.msra.mxu0 0.0
        %2795 = vmatprep.subr.mxu0 0.0
        %2796 = vmatpush2.xpose.msra.mxu0 0.0
        %2797 = vmatprep.subr.mxu0 0.0
        %2798 = vmatpush2.xpose.msra.mxu0 0.0
        %2799 = vmatprep.subr.mxu0 0.0
        %2800 = vmatpush2.xpose.msra.mxu0 0.0
        %2801 = vmatprep.subr.mxu0 0.0
        %2802 = vmatpush2.xpose.msra.mxu0 0.0
        %2803 = vmatprep.subr.mxu0 0.0
        %2804 = vmatpush2.xpose.msra.mxu0 0.0
        %2805 = vmatprep.subr.mxu0 0.0
        %2806 = vmatpush2.xpose.msra.mxu0 0.0
        %2807 = vmatprep.mubr.f32.mxu0 0.0
        %2808 = vmatmul.mubr.f32.gmra.mxu0 %v2742
        %v2809 = vpop.f32.mrf.mxu0
        %v2810 = vadd.f32 0.0, %v2809
        %v2811 = vpop.f32.mrf.mxu0
        %2812 = vdwg.mxu0
        %v2813 = vmul.f32 %v2810, 0.25
        %v2814 = vsel %vm1467, %v2813, -inf
        %2815 = vmax.xlane.f32.xlu0 %v2814
        %v2816 = vpop.xlane.xlu0 %2815
        %v2817 = vsub.f32 %v2813, %v2816
        %v2818 = vmul.f32 %v2817, 1.442695
        %v2819 = vpow.pop %v2818
        %v2820 = vsel %vm1467, %v2819, 0.0
        %2821 = vadd.xlane.f32.xlu0 %v2820
        %v2822 = vpop.xlane.xlu0 %2821
        %v2823 = vrcp.pop %v2822
        %v2824 = vmul.f32 %v2819, %v2823
        %v2825 = vmul.f32 %v1392, %v1036
        %v2827 = vsel %vm1467, %v2824, 0
        %2829 = vmatprep.subr.mxu0 0.0
        %2830 = vmatpush1.msra.mxu0 0.0
        %2831 = vmatprep.subr.mxu0 0.0
        %2832 = vmatpush1.msra.mxu0 0.0
        %2833 = vmatprep.subr.mxu0 0.0
        %2834 = vmatpush1.msra.mxu0 0.0
        %2835 = vmatprep.subr.mxu0 0.0
        %2836 = vmatpush1.msra.mxu0 0.0
        %2837 = vmatprep.subr.mxu0 0.0
        %2838 = vmatpush1.msra.mxu0 0.0
        %2839 = vmatprep.subr.mxu0 0.0
        %2840 = vmatpush1.msra.mxu0 0.0
        %2841 = vmatprep.subr.mxu0 0.0
        %2842 = vmatpush1.msra.mxu0 0.0
        %2843 = vmatprep.subr.mxu0 0.0
        %2844 = vmatpush1.msra.mxu0 0.0
        %2845 = vmatprep.subr.mxu0 0.0
        %2846 = vmatpush1.msra.mxu0 0.0
        %2847 = vmatprep.subr.mxu0 0.0
        %2848 = vmatpush1.msra.mxu0 0.0
        %2849 = vmatprep.subr.mxu0 0.0
        %2850 = vmatpush1.msra.mxu0 0.0
        %2851 = vmatprep.subr.mxu0 0.0
        %2852 = vmatpush1.msra.mxu0 0.0
        %2853 = vmatprep.subr.mxu0 0.0
        %2854 = vmatpush1.msra.mxu0 0.0
        %2855 = vmatprep.subr.mxu0 0.0
        %2856 = vmatpush1.msra.mxu0 0.0
        %2857 = vmatprep.subr.mxu0 0.0
        %2858 = vmatpush1.msra.mxu0 0.0
        %2859 = vmatprep.subr.mxu0 0.0
        %2860 = vmatpush1.msra.mxu0 %v2825
        %2861 = vmatprep.subr.mxu0 0.0
        %2862 = vmatpush2.msra.mxu0 0.0
        %2863 = vmatprep.subr.mxu0 0.0
        %2864 = vmatpush2.msra.mxu0 0.0
        %2865 = vmatprep.subr.mxu0 0.0
        %2866 = vmatpush2.msra.mxu0 0.0
        %2867 = vmatprep.subr.mxu0 0.0
        %2868 = vmatpush2.msra.mxu0 0.0
        %2869 = vmatprep.subr.mxu0 0.0
        %2870 = vmatpush2.msra.mxu0 0.0
        %2871 = vmatprep.subr.mxu0 0.0
        %2872 = vmatpush2.msra.mxu0 0.0
        %2873 = vmatprep.subr.mxu0 0.0
        %2874 = vmatpush2.msra.mxu0 0.0
        %2875 = vmatprep.subr.mxu0 0.0
        %2876 = vmatpush2.msra.mxu0 0.0
        %2877 = vmatprep.subr.mxu0 0.0
        %2878 = vmatpush2.msra.mxu0 0.0
        %2879 = vmatprep.subr.mxu0 0.0
        %2880 = vmatpush2.msra.mxu0 0.0
        %2881 = vmatprep.subr.mxu0 0.0
        %2882 = vmatpush2.msra.mxu0 0.0
        %2883 = vmatprep.subr.mxu0 0.0
        %2884 = vmatpush2.msra.mxu0 0.0
        %2885 = vmatprep.subr.mxu0 0.0
        %2886 = vmatpush2.msra.mxu0 0.0
        %2887 = vmatprep.subr.mxu0 0.0
        %2888 = vmatpush2.msra.mxu0 0.0
        %2889 = vmatprep.subr.mxu0 0.0
        %2890 = vmatpush2.msra.mxu0 0.0
        %2891 = vmatprep.subr.mxu0 0.0
        %2892 = vmatpush2.msra.mxu0 0.0
        %2893 = vmatprep.mubr.f32.mxu0 0.0
        %2894 = vmatmul.mubr.f32.gmra.mxu0 %v2827
        %v2895 = vpop.f32.mrf.mxu0
        %v2896 = vadd.f32 0.0, %v2895
        %v2897 = vpop.f32.mrf.mxu0
        %2898 = vdwg.mxu0
        %v2900 = vsel %vm1467, %v2740, 0
        %2902 = vmatprep.subr.mxu0 0.0
        %2903 = vmatpush1.msra.mxu0 0.0
        %2904 = vmatprep.subr.mxu0 0.0
        %2905 = vmatpush1.msra.mxu0 0.0
        %2906 = vmatprep.subr.mxu0 0.0
        %2907 = vmatpush1.msra.mxu0 0.0
        %2908 = vmatprep.subr.mxu0 0.0
        %2909 = vmatpush1.msra.mxu0 0.0
        %2910 = vmatprep.subr.mxu0 0.0
        %2911 = vmatpush1.msra.mxu0 0.0
        %2912 = vmatprep.subr.mxu0 0.0
        %2913 = vmatpush1.msra.mxu0 0.0
        %2914 = vmatprep.subr.mxu0 0.0
        %2915 = vmatpush1.msra.mxu0 0.0
        %2916 = vmatprep.subr.mxu0 0.0
        %2917 = vmatpush1.msra.mxu0 0.0
        %2918 = vmatprep.subr.mxu0 0.0
        %2919 = vmatpush1.msra.mxu0 0.0
        %2920 = vmatprep.subr.mxu0 0.0
        %2921 = vmatpush1.msra.mxu0 0.0
        %2922 = vmatprep.subr.mxu0 0.0
        %2923 = vmatpush1.msra.mxu0 0.0
        %2924 = vmatprep.subr.mxu0 0.0
        %2925 = vmatpush1.msra.mxu0 0.0
        %2926 = vmatprep.subr.mxu0 0.0
        %2927 = vmatpush1.msra.mxu0 0.0
        %2928 = vmatprep.subr.mxu0 0.0
        %2929 = vmatpush1.msra.mxu0 0.0
        %2930 = vmatprep.subr.mxu0 0.0
        %2931 = vmatpush1.msra.mxu0 0.0
        %2932 = vmatprep.subr.mxu0 0.0
        %2933 = vmatpush1.msra.mxu0 %v2741
        %2934 = vmatprep.subr.mxu0 0.0
        %2935 = vmatpush2.msra.mxu0 0.0
        %2936 = vmatprep.subr.mxu0 0.0
        %2937 = vmatpush2.msra.mxu0 0.0
        %2938 = vmatprep.subr.mxu0 0.0
        %2939 = vmatpush2.msra.mxu0 0.0
        %2940 = vmatprep.subr.mxu0 0.0
        %2941 = vmatpush2.msra.mxu0 0.0
        %2942 = vmatprep.subr.mxu0 0.0
        %2943 = vmatpush2.msra.mxu0 0.0
        %2944 = vmatprep.subr.mxu0 0.0
        %2945 = vmatpush2.msra.mxu0 0.0
        %2946 = vmatprep.subr.mxu0 0.0
        %2947 = vmatpush2.msra.mxu0 0.0
        %2948 = vmatprep.subr.mxu0 0.0
        %2949 = vmatpush2.msra.mxu0 0.0
        %2950 = vmatprep.subr.mxu0 0.0
        %2951 = vmatpush2.msra.mxu0 0.0
        %2952 = vmatprep.subr.mxu0 0.0
        %2953 = vmatpush2.msra.mxu0 0.0
        %2954 = vmatprep.subr.mxu0 0.0
        %2955 = vmatpush2.msra.mxu0 0.0
        %2956 = vmatprep.subr.mxu0 0.0
        %2957 = vmatpush2.msra.mxu0 0.0
        %2958 = vmatprep.subr.mxu0 0.0
        %2959 = vmatpush2.msra.mxu0 0.0
        %2960 = vmatprep.subr.mxu0 0.0
        %2961 = vmatpush2.msra.mxu0 0.0
        %2962 = vmatprep.subr.mxu0 0.0
        %2963 = vmatpush2.msra.mxu0 0.0
        %2964 = vmatprep.subr.mxu0 0.0
        %2965 = vmatpush2.msra.mxu0 0.0
        %2966 = vmatprep.mubr.f32.mxu0 0.0
        %2967 = vmatmul.mubr.f32.gmra.mxu0 %v2900
        %v2968 = vpop.f32.mrf.mxu0
        %v2969 = vadd.f32 %v2896, %v2968
        %v2970 = vpop.f32.mrf.mxu0
        %2971 = vdwg.mxu0
        %v2972 = vmul.f32 %v1350, %v1041
        %2973 = vmatprep.subr.mxu0 0.0
        %2974 = vmatpush1.xpose.msra.mxu0 0.0
        %2975 = vmatprep.subr.mxu0 0.0
        %2976 = vmatpush1.xpose.msra.mxu0 0.0
        %2977 = vmatprep.subr.mxu0 0.0
        %2978 = vmatpush1.xpose.msra.mxu0 0.0
        %2979 = vmatprep.subr.mxu0 0.0
        %2980 = vmatpush1.xpose.msra.mxu0 0.0
        %2981 = vmatprep.subr.mxu0 0.0
        %2982 = vmatpush1.xpose.msra.mxu0 0.0
        %2983 = vmatprep.subr.mxu0 0.0
        %2984 = vmatpush1.xpose.msra.mxu0 0.0
        %2985 = vmatprep.subr.mxu0 0.0
        %2986 = vmatpush1.xpose.msra.mxu0 0.0
        %2987 = vmatprep.subr.mxu0 0.0
        %2988 = vmatpush1.xpose.msra.mxu0 0.0
        %2989 = vmatprep.subr.mxu0 0.0
        %2990 = vmatpush1.xpose.msra.mxu0 0.0
        %2991 = vmatprep.subr.mxu0 0.0
        %2992 = vmatpush1.xpose.msra.mxu0 0.0
        %2993 = vmatprep.subr.mxu0 0.0
        %2994 = vmatpush1.xpose.msra.mxu0 0.0
        %2995 = vmatprep.subr.mxu0 0.0
        %2996 = vmatpush1.xpose.msra.mxu0 0.0
        %2997 = vmatprep.subr.mxu0 0.0
        %2998 = vmatpush1.xpose.msra.mxu0 0.0
        %2999 = vmatprep.subr.mxu0 0.0
        %3000 = vmatpush1.xpose.msra.mxu0 0.0
        %3001 = vmatprep.subr.mxu0 0.0
        %3002 = vmatpush1.xpose.msra.mxu0 0.0
        %3003 = vmatprep.subr.mxu0 0.0
        %3004 = vmatpush1.xpose.msra.mxu0 %v1352
        %3005 = vmatprep.subr.mxu0 0.0
        %3006 = vmatpush2.xpose.msra.mxu0 0.0
        %3007 = vmatprep.subr.mxu0 0.0
        %3008 = vmatpush2.xpose.msra.mxu0 0.0
        %3009 = vmatprep.subr.mxu0 0.0
        %3010 = vmatpush2.xpose.msra.mxu0 0.0
        %3011 = vmatprep.subr.mxu0 0.0
        %3012 = vmatpush2.xpose.msra.mxu0 0.0
        %3013 = vmatprep.subr.mxu0 0.0
        %3014 = vmatpush2.xpose.msra.mxu0 0.0
        %3015 = vmatprep.subr.mxu0 0.0
        %3016 = vmatpush2.xpose.msra.mxu0 0.0
        %3017 = vmatprep.subr.mxu0 0.0
        %3018 = vmatpush2.xpose.msra.mxu0 0.0
        %3019 = vmatprep.subr.mxu0 0.0
        %3020 = vmatpush2.xpose.msra.mxu0 0.0
        %3021 = vmatprep.subr.mxu0 0.0
        %3022 = vmatpush2.xpose.msra.mxu0 0.0
        %3023 = vmatprep.subr.mxu0 0.0
        %3024 = vmatpush2.xpose.msra.mxu0 0.0
        %3025 = vmatprep.subr.mxu0 0.0
        %3026 = vmatpush2.xpose.msra.mxu0 0.0
        %3027 = vmatprep.subr.mxu0 0.0
        %3028 = vmatpush2.xpose.msra.mxu0 0.0
        %3029 = vmatprep.subr.mxu0 0.0
        %3030 = vmatpush2.xpose.msra.mxu0 0.0
        %3031 = vmatprep.subr.mxu0 0.0
        %3032 = vmatpush2.xpose.msra.mxu0 0.0
        %3033 = vmatprep.subr.mxu0 0.0
        %3034 = vmatpush2.xpose.msra.mxu0 0.0
        %3035 = vmatprep.subr.mxu0 0.0
        %3036 = vmatpush2.xpose.msra.mxu0 0.0
        %3037 = vmatprep.mubr.f32.mxu0 0.0
        %3038 = vmatmul.mubr.f32.gmra.mxu0 %v2972
        %v3039 = vpop.f32.mrf.mxu0
        %v3040 = vadd.f32 0.0, %v3039
        %v3041 = vpop.f32.mrf.mxu0
        %3042 = vdwg.mxu0
        %v3043 = vmul.f32 %v3040, 0.25
        %v3044 = vsel %vm1467, %v3043, -inf
        %3045 = vmax.xlane.f32.xlu0 %v3044
        %v3046 = vpop.xlane.xlu0 %3045
        %v3047 = vsub.f32 %v3043, %v3046
        %v3048 = vmul.f32 %v3047, 1.442695
        %v3049 = vpow.pop %v3048
        %v3050 = vsel %vm1467, %v3049, 0.0
        %3051 = vadd.xlane.f32.xlu0 %v3050
        %v3052 = vpop.xlane.xlu0 %3051
        %v3053 = vrcp.pop %v3052
        %v3054 = vmul.f32 %v3049, %v3053
        %v3055 = vmul.f32 %v1392, %v1041
        %v3057 = vsel %vm1467, %v3054, 0
        %3059 = vmatprep.subr.mxu0 0.0
        %3060 = vmatpush1.msra.mxu0 0.0
        %3061 = vmatprep.subr.mxu0 0.0
        %3062 = vmatpush1.msra.mxu0 0.0
        %3063 = vmatprep.subr.mxu0 0.0
        %3064 = vmatpush1.msra.mxu0 0.0
        %3065 = vmatprep.subr.mxu0 0.0
        %3066 = vmatpush1.msra.mxu0 0.0
        %3067 = vmatprep.subr.mxu0 0.0
        %3068 = vmatpush1.msra.mxu0 0.0
        %3069 = vmatprep.subr.mxu0 0.0
        %3070 = vmatpush1.msra.mxu0 0.0
        %3071 = vmatprep.subr.mxu0 0.0
        %3072 = vmatpush1.msra.mxu0 0.0
        %3073 = vmatprep.subr.mxu0 0.0
        %3074 = vmatpush1.msra.mxu0 0.0
        %3075 = vmatprep.subr.mxu0 0.0
        %3076 = vmatpush1.msra.mxu0 0.0
        %3077 = vmatprep.subr.mxu0 0.0
        %3078 = vmatpush1.msra.mxu0 0.0
        %3079 = vmatprep.subr.mxu0 0.0
        %3080 = vmatpush1.msra.mxu0 0.0
        %3081 = vmatprep.subr.mxu0 0.0
        %3082 = vmatpush1.msra.mxu0 0.0
        %3083 = vmatprep.subr.mxu0 0.0
        %3084 = vmatpush1.msra.mxu0 0.0
        %3085 = vmatprep.subr.mxu0 0.0
        %3086 = vmatpush1.msra.mxu0 0.0
        %3087 = vmatprep.subr.mxu0 0.0
        %3088 = vmatpush1.msra.mxu0 0.0
        %3089 = vmatprep.subr.mxu0 0.0
        %3090 = vmatpush1.msra.mxu0 %v3055
        %3091 = vmatprep.subr.mxu0 0.0
        %3092 = vmatpush2.msra.mxu0 0.0
        %3093 = vmatprep.subr.mxu0 0.0
        %3094 = vmatpush2.msra.mxu0 0.0
        %3095 = vmatprep.subr.mxu0 0.0
        %3096 = vmatpush2.msra.mxu0 0.0
        %3097 = vmatprep.subr.mxu0 0.0
        %3098 = vmatpush2.msra.mxu0 0.0
        %3099 = vmatprep.subr.mxu0 0.0
        %3100 = vmatpush2.msra.mxu0 0.0
        %3101 = vmatprep.subr.mxu0 0.0
        %3102 = vmatpush2.msra.mxu0 0.0
        %3103 = vmatprep.subr.mxu0 0.0
        %3104 = vmatpush2.msra.mxu0 0.0
        %3105 = vmatprep.subr.mxu0 0.0
        %3106 = vmatpush2.msra.mxu0 0.0
        %3107 = vmatprep.subr.mxu0 0.0
        %3108 = vmatpush2.msra.mxu0 0.0
        %3109 = vmatprep.subr.mxu0 0.0
        %3110 = vmatpush2.msra.mxu0 0.0
        %3111 = vmatprep.subr.mxu0 0.0
        %3112 = vmatpush2.msra.mxu0 0.0
        %3113 = vmatprep.subr.mxu0 0.0
        %3114 = vmatpush2.msra.mxu0 0.0
        %3115 = vmatprep.subr.mxu0 0.0
        %3116 = vmatpush2.msra.mxu0 0.0
        %3117 = vmatprep.subr.mxu0 0.0
        %3118 = vmatpush2.msra.mxu0 0.0
        %3119 = vmatprep.subr.mxu0 0.0
        %3120 = vmatpush2.msra.mxu0 0.0
        %3121 = vmatprep.subr.mxu0 0.0
        %3122 = vmatpush2.msra.mxu0 0.0
        %3123 = vmatprep.mubr.f32.mxu0 0.0
        %3124 = vmatmul.mubr.f32.gmra.mxu0 %v3057
        %v3125 = vpop.f32.mrf.mxu0
        %v3126 = vadd.f32 0.0, %v3125
        %v3127 = vpop.f32.mrf.mxu0
        %3128 = vdwg.mxu0
        %v3129 = vadd.f32 %v2969, %v3126
        %v3130 = vmul.f32 %v1350, %v1046
        %3131 = vmatprep.subr.mxu0 0.0
        %3132 = vmatpush1.xpose.msra.mxu0 0.0
        %3133 = vmatprep.subr.mxu0 0.0
        %3134 = vmatpush1.xpose.msra.mxu0 0.0
        %3135 = vmatprep.subr.mxu0 0.0
        %3136 = vmatpush1.xpose.msra.mxu0 0.0
        %3137 = vmatprep.subr.mxu0 0.0
        %3138 = vmatpush1.xpose.msra.mxu0 0.0
        %3139 = vmatprep.subr.mxu0 0.0
        %3140 = vmatpush1.xpose.msra.mxu0 0.0
        %3141 = vmatprep.subr.mxu0 0.0
        %3142 = vmatpush1.xpose.msra.mxu0 0.0
        %3143 = vmatprep.subr.mxu0 0.0
        %3144 = vmatpush1.xpose.msra.mxu0 0.0
        %3145 = vmatprep.subr.mxu0 0.0
        %3146 = vmatpush1.xpose.msra.mxu0 0.0
        %3147 = vmatprep.subr.mxu0 0.0
        %3148 = vmatpush1.xpose.msra.mxu0 0.0
        %3149 = vmatprep.subr.mxu0 0.0
        %3150 = vmatpush1.xpose.msra.mxu0 0.0
        %3151 = vmatprep.subr.mxu0 0.0
        %3152 = vmatpush1.xpose.msra.mxu0 0.0
        %3153 = vmatprep.subr.mxu0 0.0
        %3154 = vmatpush1.xpose.msra.mxu0 0.0
        %3155 = vmatprep.subr.mxu0 0.0
        %3156 = vmatpush1.xpose.msra.mxu0 0.0
        %3157 = vmatprep.subr.mxu0 0.0
        %3158 = vmatpush1.xpose.msra.mxu0 0.0
        %3159 = vmatprep.subr.mxu0 0.0
        %3160 = vmatpush1.xpose.msra.mxu0 0.0
        %3161 = vmatprep.subr.mxu0 0.0
        %3162 = vmatpush1.xpose.msra.mxu0 %v1352
        %3163 = vmatprep.subr.mxu0 0.0
        %3164 = vmatpush2.xpose.msra.mxu0 0.0
        %3165 = vmatprep.subr.mxu0 0.0
        %3166 = vmatpush2.xpose.msra.mxu0 0.0
        %3167 = vmatprep.subr.mxu0 0.0
        %3168 = vmatpush2.xpose.msra.mxu0 0.0
        %3169 = vmatprep.subr.mxu0 0.0
        %3170 = vmatpush2.xpose.msra.mxu0 0.0
        %3171 = vmatprep.subr.mxu0 0.0
        %3172 = vmatpush2.xpose.msra.mxu0 0.0
        %3173 = vmatprep.subr.mxu0 0.0
        %3174 = vmatpush2.xpose.msra.mxu0 0.0
        %3175 = vmatprep.subr.mxu0 0.0
        %3176 = vmatpush2.xpose.msra.mxu0 0.0
        %3177 = vmatprep.subr.mxu0 0.0
        %3178 = vmatpush2.xpose.msra.mxu0 0.0
        %3179 = vmatprep.subr.mxu0 0.0
        %3180 = vmatpush2.xpose.msra.mxu0 0.0
        %3181 = vmatprep.subr.mxu0 0.0
        %3182 = vmatpush2.xpose.msra.mxu0 0.0
        %3183 = vmatprep.subr.mxu0 0.0
        %3184 = vmatpush2.xpose.msra.mxu0 0.0
        %3185 = vmatprep.subr.mxu0 0.0
        %3186 = vmatpush2.xpose.msra.mxu0 0.0
        %3187 = vmatprep.subr.mxu0 0.0
        %3188 = vmatpush2.xpose.msra.mxu0 0.0
        %3189 = vmatprep.subr.mxu0 0.0
        %3190 = vmatpush2.xpose.msra.mxu0 0.0
        %3191 = vmatprep.subr.mxu0 0.0
        %3192 = vmatpush2.xpose.msra.mxu0 0.0
        %3193 = vmatprep.subr.mxu0 0.0
        %3194 = vmatpush2.xpose.msra.mxu0 0.0
        %3195 = vmatprep.mubr.f32.mxu0 0.0
        %3196 = vmatmul.mubr.f32.gmra.mxu0 %v3130
        %v3197 = vpop.f32.mrf.mxu0
        %v3198 = vadd.f32 0.0, %v3197
        %v3199 = vpop.f32.mrf.mxu0
        %3200 = vdwg.mxu0
        %v3201 = vmul.f32 %v3198, 0.25
        %v3202 = vsel %vm1467, %v3201, -inf
        %3203 = vmax.xlane.f32.xlu0 %v3202
        %v3204 = vpop.xlane.xlu0 %3203
        %v3205 = vsub.f32 %v3201, %v3204
        %v3206 = vmul.f32 %v3205, 1.442695
        %v3207 = vpow.pop %v3206
        %v3208 = vsel %vm1467, %v3207, 0.0
        %3209 = vadd.xlane.f32.xlu0 %v3208
        %v3210 = vpop.xlane.xlu0 %3209
        %v3211 = vrcp.pop %v3210
        %v3212 = vmul.f32 %v3207, %v3211
        %v3213 = vmul.f32 %v1392, %v1046
        %v3215 = vsel %vm1467, %v3212, 0
        %3217 = vmatprep.subr.mxu0 0.0
        %3218 = vmatpush1.msra.mxu0 0.0
        %3219 = vmatprep.subr.mxu0 0.0
        %3220 = vmatpush1.msra.mxu0 0.0
        %3221 = vmatprep.subr.mxu0 0.0
        %3222 = vmatpush1.msra.mxu0 0.0
        %3223 = vmatprep.subr.mxu0 0.0
        %3224 = vmatpush1.msra.mxu0 0.0
        %3225 = vmatprep.subr.mxu0 0.0
        %3226 = vmatpush1.msra.mxu0 0.0
        %3227 = vmatprep.subr.mxu0 0.0
        %3228 = vmatpush1.msra.mxu0 0.0
        %3229 = vmatprep.subr.mxu0 0.0
        %3230 = vmatpush1.msra.mxu0 0.0
        %3231 = vmatprep.subr.mxu0 0.0
        %3232 = vmatpush1.msra.mxu0 0.0
        %3233 = vmatprep.subr.mxu0 0.0
        %3234 = vmatpush1.msra.mxu0 0.0
        %3235 = vmatprep.subr.mxu0 0.0
        %3236 = vmatpush1.msra.mxu0 0.0
        %3237 = vmatprep.subr.mxu0 0.0
        %3238 = vmatpush1.msra.mxu0 0.0
        %3239 = vmatprep.subr.mxu0 0.0
        %3240 = vmatpush1.msra.mxu0 0.0
        %3241 = vmatprep.subr.mxu0 0.0
        %3242 = vmatpush1.msra.mxu0 0.0
        %3243 = vmatprep.subr.mxu0 0.0
        %3244 = vmatpush1.msra.mxu0 0.0
        %3245 = vmatprep.subr.mxu0 0.0
        %3246 = vmatpush1.msra.mxu0 0.0
        %3247 = vmatprep.subr.mxu0 0.0
        %3248 = vmatpush1.msra.mxu0 %v3213
        %3249 = vmatprep.subr.mxu0 0.0
        %3250 = vmatpush2.msra.mxu0 0.0
        %3251 = vmatprep.subr.mxu0 0.0
        %3252 = vmatpush2.msra.mxu0 0.0
        %3253 = vmatprep.subr.mxu0 0.0
        %3254 = vmatpush2.msra.mxu0 0.0
        %3255 = vmatprep.subr.mxu0 0.0
        %3256 = vmatpush2.msra.mxu0 0.0
        %3257 = vmatprep.subr.mxu0 0.0
        %3258 = vmatpush2.msra.mxu0 0.0
        %3259 = vmatprep.subr.mxu0 0.0
        %3260 = vmatpush2.msra.mxu0 0.0
        %3261 = vmatprep.subr.mxu0 0.0
        %3262 = vmatpush2.msra.mxu0 0.0
        %3263 = vmatprep.subr.mxu0 0.0
        %3264 = vmatpush2.msra.mxu0 0.0
        %3265 = vmatprep.subr.mxu0 0.0
        %3266 = vmatpush2.msra.mxu0 0.0
        %3267 = vmatprep.subr.mxu0 0.0
        %3268 = vmatpush2.msra.mxu0 0.0
        %3269 = vmatprep.subr.mxu0 0.0
        %3270 = vmatpush2.msra.mxu0 0.0
        %3271 = vmatprep.subr.mxu0 0.0
        %3272 = vmatpush2.msra.mxu0 0.0
        %3273 = vmatprep.subr.mxu0 0.0
        %3274 = vmatpush2.msra.mxu0 0.0
        %3275 = vmatprep.subr.mxu0 0.0
        %3276 = vmatpush2.msra.mxu0 0.0
        %3277 = vmatprep.subr.mxu0 0.0
        %3278 = vmatpush2.msra.mxu0 0.0
        %3279 = vmatprep.subr.mxu0 0.0
        %3280 = vmatpush2.msra.mxu0 0.0
        %3281 = vmatprep.mubr.f32.mxu0 0.0
        %3282 = vmatmul.mubr.f32.gmra.mxu0 %v3215
        %v3283 = vpop.f32.mrf.mxu0
        %v3284 = vadd.f32 0.0, %v3283
        %v3285 = vpop.f32.mrf.mxu0
        %3286 = vdwg.mxu0
        %v3287 = vadd.f32 %v3129, %v3284
        %v3288 = vmul.f32 %v1350, %v1051
        %3289 = vmatprep.subr.mxu0 0.0
        %3290 = vmatpush1.xpose.msra.mxu0 0.0
        %3291 = vmatprep.subr.mxu0 0.0
        %3292 = vmatpush1.xpose.msra.mxu0 0.0
        %3293 = vmatprep.subr.mxu0 0.0
        %3294 = vmatpush1.xpose.msra.mxu0 0.0
        %3295 = vmatprep.subr.mxu0 0.0
        %3296 = vmatpush1.xpose.msra.mxu0 0.0
        %3297 = vmatprep.subr.mxu0 0.0
        %3298 = vmatpush1.xpose.msra.mxu0 0.0
        %3299 = vmatprep.subr.mxu0 0.0
        %3300 = vmatpush1.xpose.msra.mxu0 0.0
        %3301 = vmatprep.subr.mxu0 0.0
        %3302 = vmatpush1.xpose.msra.mxu0 0.0
        %3303 = vmatprep.subr.mxu0 0.0
        %3304 = vmatpush1.xpose.msra.mxu0 0.0
        %3305 = vmatprep.subr.mxu0 0.0
        %3306 = vmatpush1.xpose.msra.mxu0 0.0
        %3307 = vmatprep.subr.mxu0 0.0
        %3308 = vmatpush1.xpose.msra.mxu0 0.0
        %3309 = vmatprep.subr.mxu0 0.0
        %3310 = vmatpush1.xpose.msra.mxu0 0.0
        %3311 = vmatprep.subr.mxu0 0.0
        %3312 = vmatpush1.xpose.msra.mxu0 0.0
        %3313 = vmatprep.subr.mxu0 0.0
        %3314 = vmatpush1.xpose.msra.mxu0 0.0
        %3315 = vmatprep.subr.mxu0 0.0
        %3316 = vmatpush1.xpose.msra.mxu0 0.0
        %3317 = vmatprep.subr.mxu0 0.0
        %3318 = vmatpush1.xpose.msra.mxu0 0.0
        %3319 = vmatprep.subr.mxu0 0.0
        %3320 = vmatpush1.xpose.msra.mxu0 %v1352
        %3321 = vmatprep.subr.mxu0 0.0
        %3322 = vmatpush2.xpose.msra.mxu0 0.0
        %3323 = vmatprep.subr.mxu0 0.0
        %3324 = vmatpush2.xpose.msra.mxu0 0.0
        %3325 = vmatprep.subr.mxu0 0.0
        %3326 = vmatpush2.xpose.msra.mxu0 0.0
        %3327 = vmatprep.subr.mxu0 0.0
        %3328 = vmatpush2.xpose.msra.mxu0 0.0
        %3329 = vmatprep.subr.mxu0 0.0
        %3330 = vmatpush2.xpose.msra.mxu0 0.0
        %3331 = vmatprep.subr.mxu0 0.0
        %3332 = vmatpush2.xpose.msra.mxu0 0.0
        %3333 = vmatprep.subr.mxu0 0.0
        %3334 = vmatpush2.xpose.msra.mxu0 0.0
        %3335 = vmatprep.subr.mxu0 0.0
        %3336 = vmatpush2.xpose.msra.mxu0 0.0
        %3337 = vmatprep.subr.mxu0 0.0
        %3338 = vmatpush2.xpose.msra.mxu0 0.0
        %3339 = vmatprep.subr.mxu0 0.0
        %3340 = vmatpush2.xpose.msra.mxu0 0.0
        %3341 = vmatprep.subr.mxu0 0.0
        %3342 = vmatpush2.xpose.msra.mxu0 0.0
        %3343 = vmatprep.subr.mxu0 0.0
        %3344 = vmatpush2.xpose.msra.mxu0 0.0
        %3345 = vmatprep.subr.mxu0 0.0
        %3346 = vmatpush2.xpose.msra.mxu0 0.0
        %3347 = vmatprep.subr.mxu0 0.0
        %3348 = vmatpush2.xpose.msra.mxu0 0.0
        %3349 = vmatprep.subr.mxu0 0.0
        %3350 = vmatpush2.xpose.msra.mxu0 0.0
        %3351 = vmatprep.subr.mxu0 0.0
        %3352 = vmatpush2.xpose.msra.mxu0 0.0
        %3353 = vmatprep.mubr.f32.mxu0 0.0
        %3354 = vmatmul.mubr.f32.gmra.mxu0 %v3288
        %v3355 = vpop.f32.mrf.mxu0
        %v3356 = vadd.f32 0.0, %v3355
        %v3357 = vpop.f32.mrf.mxu0
        %3358 = vdwg.mxu0
        %v3359 = vmul.f32 %v3356, 0.25
        %v3360 = vsel %vm1467, %v3359, -inf
        %3361 = vmax.xlane.f32.xlu0 %v3360
        %v3362 = vpop.xlane.xlu0 %3361
        %v3363 = vsub.f32 %v3359, %v3362
        %v3364 = vmul.f32 %v3363, 1.442695
        %v3365 = vpow.pop %v3364
        %v3366 = vsel %vm1467, %v3365, 0.0
        %3367 = vadd.xlane.f32.xlu0 %v3366
        %v3368 = vpop.xlane.xlu0 %3367
        %v3369 = vrcp.pop %v3368
        %v3370 = vmul.f32 %v3365, %v3369
        %v3371 = vmul.f32 %v1392, %v1051
        %v3373 = vsel %vm1467, %v3370, 0
        %3375 = vmatprep.subr.mxu0 0.0
        %3376 = vmatpush1.msra.mxu0 0.0
        %3377 = vmatprep.subr.mxu0 0.0
        %3378 = vmatpush1.msra.mxu0 0.0
        %3379 = vmatprep.subr.mxu0 0.0
        %3380 = vmatpush1.msra.mxu0 0.0
        %3381 = vmatprep.subr.mxu0 0.0
        %3382 = vmatpush1.msra.mxu0 0.0
        %3383 = vmatprep.subr.mxu0 0.0
        %3384 = vmatpush1.msra.mxu0 0.0
        %3385 = vmatprep.subr.mxu0 0.0
        %3386 = vmatpush1.msra.mxu0 0.0
        %3387 = vmatprep.subr.mxu0 0.0
        %3388 = vmatpush1.msra.mxu0 0.0
        %3389 = vmatprep.subr.mxu0 0.0
        %3390 = vmatpush1.msra.mxu0 0.0
        %3391 = vmatprep.subr.mxu0 0.0
        %3392 = vmatpush1.msra.mxu0 0.0
        %3393 = vmatprep.subr.mxu0 0.0
        %3394 = vmatpush1.msra.mxu0 0.0
        %3395 = vmatprep.subr.mxu0 0.0
        %3396 = vmatpush1.msra.mxu0 0.0
        %3397 = vmatprep.subr.mxu0 0.0
        %3398 = vmatpush1.msra.mxu0 0.0
        %3399 = vmatprep.subr.mxu0 0.0
        %3400 = vmatpush1.msra.mxu0 0.0
        %3401 = vmatprep.subr.mxu0 0.0
        %3402 = vmatpush1.msra.mxu0 0.0
        %3403 = vmatprep.subr.mxu0 0.0
        %3404 = vmatpush1.msra.mxu0 0.0
        %3405 = vmatprep.subr.mxu0 0.0
        %3406 = vmatpush1.msra.mxu0 %v3371
        %3407 = vmatprep.subr.mxu0 0.0
        %3408 = vmatpush2.msra.mxu0 0.0
        %3409 = vmatprep.subr.mxu0 0.0
        %3410 = vmatpush2.msra.mxu0 0.0
        %3411 = vmatprep.subr.mxu0 0.0
        %3412 = vmatpush2.msra.mxu0 0.0
        %3413 = vmatprep.subr.mxu0 0.0
        %3414 = vmatpush2.msra.mxu0 0.0
        %3415 = vmatprep.subr.mxu0 0.0
        %3416 = vmatpush2.msra.mxu0 0.0
        %3417 = vmatprep.subr.mxu0 0.0
        %3418 = vmatpush2.msra.mxu0 0.0
        %3419 = vmatprep.subr.mxu0 0.0
        %3420 = vmatpush2.msra.mxu0 0.0
        %3421 = vmatprep.subr.mxu0 0.0
        %3422 = vmatpush2.msra.mxu0 0.0
        %3423 = vmatprep.subr.mxu0 0.0
        %3424 = vmatpush2.msra.mxu0 0.0
        %3425 = vmatprep.subr.mxu0 0.0
        %3426 = vmatpush2.msra.mxu0 0.0
        %3427 = vmatprep.subr.mxu0 0.0
        %3428 = vmatpush2.msra.mxu0 0.0
        %3429 = vmatprep.subr.mxu0 0.0
        %3430 = vmatpush2.msra.mxu0 0.0
        %3431 = vmatprep.subr.mxu0 0.0
        %3432 = vmatpush2.msra.mxu0 0.0
        %3433 = vmatprep.subr.mxu0 0.0
        %3434 = vmatpush2.msra.mxu0 0.0
        %3435 = vmatprep.subr.mxu0 0.0
        %3436 = vmatpush2.msra.mxu0 0.0
        %3437 = vmatprep.subr.mxu0 0.0
        %3438 = vmatpush2.msra.mxu0 0.0
        %3439 = vmatprep.mubr.f32.mxu0 0.0
        %3440 = vmatmul.mubr.f32.gmra.mxu0 %v3373
        %v3441 = vpop.f32.mrf.mxu0
        %v3442 = vadd.f32 0.0, %v3441
        %v3443 = vpop.f32.mrf.mxu0
        %3444 = vdwg.mxu0
        %v3445 = vadd.f32 %v3287, %v3442
        %v3446 = vmul.f32 %v1350, %v1056
        %3447 = vmatprep.subr.mxu0 0.0
        %3448 = vmatpush1.xpose.msra.mxu0 0.0
        %3449 = vmatprep.subr.mxu0 0.0
        %3450 = vmatpush1.xpose.msra.mxu0 0.0
        %3451 = vmatprep.subr.mxu0 0.0
        %3452 = vmatpush1.xpose.msra.mxu0 0.0
        %3453 = vmatprep.subr.mxu0 0.0
        %3454 = vmatpush1.xpose.msra.mxu0 0.0
        %3455 = vmatprep.subr.mxu0 0.0
        %3456 = vmatpush1.xpose.msra.mxu0 0.0
        %3457 = vmatprep.subr.mxu0 0.0
        %3458 = vmatpush1.xpose.msra.mxu0 0.0
        %3459 = vmatprep.subr.mxu0 0.0
        %3460 = vmatpush1.xpose.msra.mxu0 0.0
        %3461 = vmatprep.subr.mxu0 0.0
        %3462 = vmatpush1.xpose.msra.mxu0 0.0
        %3463 = vmatprep.subr.mxu0 0.0
        %3464 = vmatpush1.xpose.msra.mxu0 0.0
        %3465 = vmatprep.subr.mxu0 0.0
        %3466 = vmatpush1.xpose.msra.mxu0 0.0
        %3467 = vmatprep.subr.mxu0 0.0
        %3468 = vmatpush1.xpose.msra.mxu0 0.0
        %3469 = vmatprep.subr.mxu0 0.0
        %3470 = vmatpush1.xpose.msra.mxu0 0.0
        %3471 = vmatprep.subr.mxu0 0.0
        %3472 = vmatpush1.xpose.msra.mxu0 0.0
        %3473 = vmatprep.subr.mxu0 0.0
        %3474 = vmatpush1.xpose.msra.mxu0 0.0
        %3475 = vmatprep.subr.mxu0 0.0
        %3476 = vmatpush1.xpose.msra.mxu0 0.0
        %3477 = vmatprep.subr.mxu0 0.0
        %3478 = vmatpush1.xpose.msra.mxu0 %v1352
        %3479 = vmatprep.subr.mxu0 0.0
        %3480 = vmatpush2.xpose.msra.mxu0 0.0
        %3481 = vmatprep.subr.mxu0 0.0
        %3482 = vmatpush2.xpose.msra.mxu0 0.0
        %3483 = vmatprep.subr.mxu0 0.0
        %3484 = vmatpush2.xpose.msra.mxu0 0.0
        %3485 = vmatprep.subr.mxu0 0.0
        %3486 = vmatpush2.xpose.msra.mxu0 0.0
        %3487 = vmatprep.subr.mxu0 0.0
        %3488 = vmatpush2.xpose.msra.mxu0 0.0
        %3489 = vmatprep.subr.mxu0 0.0
        %3490 = vmatpush2.xpose.msra.mxu0 0.0
        %3491 = vmatprep.subr.mxu0 0.0
        %3492 = vmatpush2.xpose.msra.mxu0 0.0
        %3493 = vmatprep.subr.mxu0 0.0
        %3494 = vmatpush2.xpose.msra.mxu0 0.0
        %3495 = vmatprep.subr.mxu0 0.0
        %3496 = vmatpush2.xpose.msra.mxu0 0.0
        %3497 = vmatprep.subr.mxu0 0.0
        %3498 = vmatpush2.xpose.msra.mxu0 0.0
        %3499 = vmatprep.subr.mxu0 0.0
        %3500 = vmatpush2.xpose.msra.mxu0 0.0
        %3501 = vmatprep.subr.mxu0 0.0
        %3502 = vmatpush2.xpose.msra.mxu0 0.0
        %3503 = vmatprep.subr.mxu0 0.0
        %3504 = vmatpush2.xpose.msra.mxu0 0.0
        %3505 = vmatprep.subr.mxu0 0.0
        %3506 = vmatpush2.xpose.msra.mxu0 0.0
        %3507 = vmatprep.subr.mxu0 0.0
        %3508 = vmatpush2.xpose.msra.mxu0 0.0
        %3509 = vmatprep.subr.mxu0 0.0
        %3510 = vmatpush2.xpose.msra.mxu0 0.0
        %3511 = vmatprep.mubr.f32.mxu0 0.0
        %3512 = vmatmul.mubr.f32.gmra.mxu0 %v3446
        %v3513 = vpop.f32.mrf.mxu0
        %v3514 = vadd.f32 0.0, %v3513
        %v3515 = vpop.f32.mrf.mxu0
        %3516 = vdwg.mxu0
        %v3517 = vmul.f32 %v3514, 0.25
        %v3518 = vsel %vm1467, %v3517, -inf
        %3519 = vmax.xlane.f32.xlu0 %v3518
        %v3520 = vpop.xlane.xlu0 %3519
        %v3521 = vsub.f32 %v3517, %v3520
        %v3522 = vmul.f32 %v3521, 1.442695
        %v3523 = vpow.pop %v3522
        %v3524 = vsel %vm1467, %v3523, 0.0
        %3525 = vadd.xlane.f32.xlu0 %v3524
        %v3526 = vpop.xlane.xlu0 %3525
        %v3527 = vrcp.pop %v3526
        %v3528 = vmul.f32 %v3523, %v3527
        %v3529 = vmul.f32 %v1392, %v1056
        %v3531 = vsel %vm1467, %v3528, 0
        %3533 = vmatprep.subr.mxu0 0.0
        %3534 = vmatpush1.msra.mxu0 0.0
        %3535 = vmatprep.subr.mxu0 0.0
        %3536 = vmatpush1.msra.mxu0 0.0
        %3537 = vmatprep.subr.mxu0 0.0
        %3538 = vmatpush1.msra.mxu0 0.0
        %3539 = vmatprep.subr.mxu0 0.0
        %3540 = vmatpush1.msra.mxu0 0.0
        %3541 = vmatprep.subr.mxu0 0.0
        %3542 = vmatpush1.msra.mxu0 0.0
        %3543 = vmatprep.subr.mxu0 0.0
        %3544 = vmatpush1.msra.mxu0 0.0
        %3545 = vmatprep.subr.mxu0 0.0
        %3546 = vmatpush1.msra.mxu0 0.0
        %3547 = vmatprep.subr.mxu0 0.0
        %3548 = vmatpush1.msra.mxu0 0.0
        %3549 = vmatprep.subr.mxu0 0.0
        %3550 = vmatpush1.msra.mxu0 0.0
        %3551 = vmatprep.subr.mxu0 0.0
        %3552 = vmatpush1.msra.mxu0 0.0
        %3553 = vmatprep.subr.mxu0 0.0
        %3554 = vmatpush1.msra.mxu0 0.0
        %3555 = vmatprep.subr.mxu0 0.0
        %3556 = vmatpush1.msra.mxu0 0.0
        %3557 = vmatprep.subr.mxu0 0.0
        %3558 = vmatpush1.msra.mxu0 0.0
        %3559 = vmatprep.subr.mxu0 0.0
        %3560 = vmatpush1.msra.mxu0 0.0
        %3561 = vmatprep.subr.mxu0 0.0
        %3562 = vmatpush1.msra.mxu0 0.0
        %3563 = vmatprep.subr.mxu0 0.0
        %3564 = vmatpush1.msra.mxu0 %v3529
        %3565 = vmatprep.subr.mxu0 0.0
        %3566 = vmatpush2.msra.mxu0 0.0
        %3567 = vmatprep.subr.mxu0 0.0
        %3568 = vmatpush2.msra.mxu0 0.0
        %3569 = vmatprep.subr.mxu0 0.0
        %3570 = vmatpush2.msra.mxu0 0.0
        %3571 = vmatprep.subr.mxu0 0.0
        %3572 = vmatpush2.msra.mxu0 0.0
        %3573 = vmatprep.subr.mxu0 0.0
        %3574 = vmatpush2.msra.mxu0 0.0
        %3575 = vmatprep.subr.mxu0 0.0
        %3576 = vmatpush2.msra.mxu0 0.0
        %3577 = vmatprep.subr.mxu0 0.0
        %3578 = vmatpush2.msra.mxu0 0.0
        %3579 = vmatprep.subr.mxu0 0.0
        %3580 = vmatpush2.msra.mxu0 0.0
        %3581 = vmatprep.subr.mxu0 0.0
        %3582 = vmatpush2.msra.mxu0 0.0
        %3583 = vmatprep.subr.mxu0 0.0
        %3584 = vmatpush2.msra.mxu0 0.0
        %3585 = vmatprep.subr.mxu0 0.0
        %3586 = vmatpush2.msra.mxu0 0.0
        %3587 = vmatprep.subr.mxu0 0.0
        %3588 = vmatpush2.msra.mxu0 0.0
        %3589 = vmatprep.subr.mxu0 0.0
        %3590 = vmatpush2.msra.mxu0 0.0
        %3591 = vmatprep.subr.mxu0 0.0
        %3592 = vmatpush2.msra.mxu0 0.0
        %3593 = vmatprep.subr.mxu0 0.0
        %3594 = vmatpush2.msra.mxu0 0.0
        %3595 = vmatprep.subr.mxu0 0.0
        %3596 = vmatpush2.msra.mxu0 0.0
        %3597 = vmatprep.mubr.f32.mxu0 0.0
        %3598 = vmatmul.mubr.f32.gmra.mxu0 %v3531
        %v3599 = vpop.f32.mrf.mxu0
        %v3600 = vadd.f32 0.0, %v3599
        %v3601 = vpop.f32.mrf.mxu0
        %3602 = vdwg.mxu0
        %v3603 = vadd.f32 %v3445, %v3600
        %v3604 = vmul.f32 %v1350, %v1061
        %3605 = vmatprep.subr.mxu0 0.0
        %3606 = vmatpush1.xpose.msra.mxu0 0.0
        %3607 = vmatprep.subr.mxu0 0.0
        %3608 = vmatpush1.xpose.msra.mxu0 0.0
        %3609 = vmatprep.subr.mxu0 0.0
        %3610 = vmatpush1.xpose.msra.mxu0 0.0
        %3611 = vmatprep.subr.mxu0 0.0
        %3612 = vmatpush1.xpose.msra.mxu0 0.0
        %3613 = vmatprep.subr.mxu0 0.0
        %3614 = vmatpush1.xpose.msra.mxu0 0.0
        %3615 = vmatprep.subr.mxu0 0.0
        %3616 = vmatpush1.xpose.msra.mxu0 0.0
        %3617 = vmatprep.subr.mxu0 0.0
        %3618 = vmatpush1.xpose.msra.mxu0 0.0
        %3619 = vmatprep.subr.mxu0 0.0
        %3620 = vmatpush1.xpose.msra.mxu0 0.0
        %3621 = vmatprep.subr.mxu0 0.0
        %3622 = vmatpush1.xpose.msra.mxu0 0.0
        %3623 = vmatprep.subr.mxu0 0.0
        %3624 = vmatpush1.xpose.msra.mxu0 0.0
        %3625 = vmatprep.subr.mxu0 0.0
        %3626 = vmatpush1.xpose.msra.mxu0 0.0
        %3627 = vmatprep.subr.mxu0 0.0
        %3628 = vmatpush1.xpose.msra.mxu0 0.0
        %3629 = vmatprep.subr.mxu0 0.0
        %3630 = vmatpush1.xpose.msra.mxu0 0.0
        %3631 = vmatprep.subr.mxu0 0.0
        %3632 = vmatpush1.xpose.msra.mxu0 0.0
        %3633 = vmatprep.subr.mxu0 0.0
        %3634 = vmatpush1.xpose.msra.mxu0 0.0
        %3635 = vmatprep.subr.mxu0 0.0
        %3636 = vmatpush1.xpose.msra.mxu0 %v1352
        %3637 = vmatprep.subr.mxu0 0.0
        %3638 = vmatpush2.xpose.msra.mxu0 0.0
        %3639 = vmatprep.subr.mxu0 0.0
        %3640 = vmatpush2.xpose.msra.mxu0 0.0
        %3641 = vmatprep.subr.mxu0 0.0
        %3642 = vmatpush2.xpose.msra.mxu0 0.0
        %3643 = vmatprep.subr.mxu0 0.0
        %3644 = vmatpush2.xpose.msra.mxu0 0.0
        %3645 = vmatprep.subr.mxu0 0.0
        %3646 = vmatpush2.xpose.msra.mxu0 0.0
        %3647 = vmatprep.subr.mxu0 0.0
        %3648 = vmatpush2.xpose.msra.mxu0 0.0
        %3649 = vmatprep.subr.mxu0 0.0
        %3650 = vmatpush2.xpose.msra.mxu0 0.0
        %3651 = vmatprep.subr.mxu0 0.0
        %3652 = vmatpush2.xpose.msra.mxu0 0.0
        %3653 = vmatprep.subr.mxu0 0.0
        %3654 = vmatpush2.xpose.msra.mxu0 0.0
        %3655 = vmatprep.subr.mxu0 0.0
        %3656 = vmatpush2.xpose.msra.mxu0 0.0
        %3657 = vmatprep.subr.mxu0 0.0
        %3658 = vmatpush2.xpose.msra.mxu0 0.0
        %3659 = vmatprep.subr.mxu0 0.0
        %3660 = vmatpush2.xpose.msra.mxu0 0.0
        %3661 = vmatprep.subr.mxu0 0.0
        %3662 = vmatpush2.xpose.msra.mxu0 0.0
        %3663 = vmatprep.subr.mxu0 0.0
        %3664 = vmatpush2.xpose.msra.mxu0 0.0
        %3665 = vmatprep.subr.mxu0 0.0
        %3666 = vmatpush2.xpose.msra.mxu0 0.0
        %3667 = vmatprep.subr.mxu0 0.0
        %3668 = vmatpush2.xpose.msra.mxu0 0.0
        %3669 = vmatprep.mubr.f32.mxu0 0.0
        %3670 = vmatmul.mubr.f32.gmra.mxu0 %v3604
        %v3671 = vpop.f32.mrf.mxu0
        %v3672 = vadd.f32 0.0, %v3671
        %v3673 = vpop.f32.mrf.mxu0
        %3674 = vdwg.mxu0
        %v3675 = vmul.f32 %v3672, 0.25
        %v3676 = vsel %vm1467, %v3675, -inf
        %3677 = vmax.xlane.f32.xlu0 %v3676
        %v3678 = vpop.xlane.xlu0 %3677
        %v3679 = vsub.f32 %v3675, %v3678
        %v3680 = vmul.f32 %v3679, 1.442695
        %v3681 = vpow.pop %v3680
        %v3682 = vsel %vm1467, %v3681, 0.0
        %3683 = vadd.xlane.f32.xlu0 %v3682
        %v3684 = vpop.xlane.xlu0 %3683
        %v3685 = vrcp.pop %v3684
        %v3686 = vmul.f32 %v3681, %v3685
        %v3687 = vmul.f32 %v1392, %v1061
        %v3689 = vsel %vm1467, %v3686, 0
        %3691 = vmatprep.subr.mxu0 0.0
        %3692 = vmatpush1.msra.mxu0 0.0
        %3693 = vmatprep.subr.mxu0 0.0
        %3694 = vmatpush1.msra.mxu0 0.0
        %3695 = vmatprep.subr.mxu0 0.0
        %3696 = vmatpush1.msra.mxu0 0.0
        %3697 = vmatprep.subr.mxu0 0.0
        %3698 = vmatpush1.msra.mxu0 0.0
        %3699 = vmatprep.subr.mxu0 0.0
        %3700 = vmatpush1.msra.mxu0 0.0
        %3701 = vmatprep.subr.mxu0 0.0
        %3702 = vmatpush1.msra.mxu0 0.0
        %3703 = vmatprep.subr.mxu0 0.0
        %3704 = vmatpush1.msra.mxu0 0.0
        %3705 = vmatprep.subr.mxu0 0.0
        %3706 = vmatpush1.msra.mxu0 0.0
        %3707 = vmatprep.subr.mxu0 0.0
        %3708 = vmatpush1.msra.mxu0 0.0
        %3709 = vmatprep.subr.mxu0 0.0
        %3710 = vmatpush1.msra.mxu0 0.0
        %3711 = vmatprep.subr.mxu0 0.0
        %3712 = vmatpush1.msra.mxu0 0.0
        %3713 = vmatprep.subr.mxu0 0.0
        %3714 = vmatpush1.msra.mxu0 0.0
        %3715 = vmatprep.subr.mxu0 0.0
        %3716 = vmatpush1.msra.mxu0 0.0
        %3717 = vmatprep.subr.mxu0 0.0
        %3718 = vmatpush1.msra.mxu0 0.0
        %3719 = vmatprep.subr.mxu0 0.0
        %3720 = vmatpush1.msra.mxu0 0.0
        %3721 = vmatprep.subr.mxu0 0.0
        %3722 = vmatpush1.msra.mxu0 %v3687
        %3723 = vmatprep.subr.mxu0 0.0
        %3724 = vmatpush2.msra.mxu0 0.0
        %3725 = vmatprep.subr.mxu0 0.0
        %3726 = vmatpush2.msra.mxu0 0.0
        %3727 = vmatprep.subr.mxu0 0.0
        %3728 = vmatpush2.msra.mxu0 0.0
        %3729 = vmatprep.subr.mxu0 0.0
        %3730 = vmatpush2.msra.mxu0 0.0
        %3731 = vmatprep.subr.mxu0 0.0
        %3732 = vmatpush2.msra.mxu0 0.0
        %3733 = vmatprep.subr.mxu0 0.0
        %3734 = vmatpush2.msra.mxu0 0.0
        %3735 = vmatprep.subr.mxu0 0.0
        %3736 = vmatpush2.msra.mxu0 0.0
        %3737 = vmatprep.subr.mxu0 0.0
        %3738 = vmatpush2.msra.mxu0 0.0
        %3739 = vmatprep.subr.mxu0 0.0
        %3740 = vmatpush2.msra.mxu0 0.0
        %3741 = vmatprep.subr.mxu0 0.0
        %3742 = vmatpush2.msra.mxu0 0.0
        %3743 = vmatprep.subr.mxu0 0.0
        %3744 = vmatpush2.msra.mxu0 0.0
        %3745 = vmatprep.subr.mxu0 0.0
        %3746 = vmatpush2.msra.mxu0 0.0
        %3747 = vmatprep.subr.mxu0 0.0
        %3748 = vmatpush2.msra.mxu0 0.0
        %3749 = vmatprep.subr.mxu0 0.0
        %3750 = vmatpush2.msra.mxu0 0.0
        %3751 = vmatprep.subr.mxu0 0.0
        %3752 = vmatpush2.msra.mxu0 0.0
        %3753 = vmatprep.subr.mxu0 0.0
        %3754 = vmatpush2.msra.mxu0 0.0
        %3755 = vmatprep.mubr.f32.mxu0 0.0
        %3756 = vmatmul.mubr.f32.gmra.mxu0 %v3689
        %v3757 = vpop.f32.mrf.mxu0
        %v3758 = vadd.f32 0.0, %v3757
        %v3759 = vpop.f32.mrf.mxu0
        %3760 = vdwg.mxu0
        %v3761 = vadd.f32 %v3603, %v3758
        %v3762 = vmul.f32 %v1350, %v1066
        %3763 = vmatprep.subr.mxu0 0.0
        %3764 = vmatpush1.xpose.msra.mxu0 0.0
        %3765 = vmatprep.subr.mxu0 0.0
        %3766 = vmatpush1.xpose.msra.mxu0 0.0
        %3767 = vmatprep.subr.mxu0 0.0
        %3768 = vmatpush1.xpose.msra.mxu0 0.0
        %3769 = vmatprep.subr.mxu0 0.0
        %3770 = vmatpush1.xpose.msra.mxu0 0.0
        %3771 = vmatprep.subr.mxu0 0.0
        %3772 = vmatpush1.xpose.msra.mxu0 0.0
        %3773 = vmatprep.subr.mxu0 0.0
        %3774 = vmatpush1.xpose.msra.mxu0 0.0
        %3775 = vmatprep.subr.mxu0 0.0
        %3776 = vmatpush1.xpose.msra.mxu0 0.0
        %3777 = vmatprep.subr.mxu0 0.0
        %3778 = vmatpush1.xpose.msra.mxu0 0.0
        %3779 = vmatprep.subr.mxu0 0.0
        %3780 = vmatpush1.xpose.msra.mxu0 0.0
        %3781 = vmatprep.subr.mxu0 0.0
        %3782 = vmatpush1.xpose.msra.mxu0 0.0
        %3783 = vmatprep.subr.mxu0 0.0
        %3784 = vmatpush1.xpose.msra.mxu0 0.0
        %3785 = vmatprep.subr.mxu0 0.0
        %3786 = vmatpush1.xpose.msra.mxu0 0.0
        %3787 = vmatprep.subr.mxu0 0.0
        %3788 = vmatpush1.xpose.msra.mxu0 0.0
        %3789 = vmatprep.subr.mxu0 0.0
        %3790 = vmatpush1.xpose.msra.mxu0 0.0
        %3791 = vmatprep.subr.mxu0 0.0
        %3792 = vmatpush1.xpose.msra.mxu0 0.0
        %3793 = vmatprep.subr.mxu0 0.0
        %3794 = vmatpush1.xpose.msra.mxu0 %v1352
        %3795 = vmatprep.subr.mxu0 0.0
        %3796 = vmatpush2.xpose.msra.mxu0 0.0
        %3797 = vmatprep.subr.mxu0 0.0
        %3798 = vmatpush2.xpose.msra.mxu0 0.0
        %3799 = vmatprep.subr.mxu0 0.0
        %3800 = vmatpush2.xpose.msra.mxu0 0.0
        %3801 = vmatprep.subr.mxu0 0.0
        %3802 = vmatpush2.xpose.msra.mxu0 0.0
        %3803 = vmatprep.subr.mxu0 0.0
        %3804 = vmatpush2.xpose.msra.mxu0 0.0
        %3805 = vmatprep.subr.mxu0 0.0
        %3806 = vmatpush2.xpose.msra.mxu0 0.0
        %3807 = vmatprep.subr.mxu0 0.0
        %3808 = vmatpush2.xpose.msra.mxu0 0.0
        %3809 = vmatprep.subr.mxu0 0.0
        %3810 = vmatpush2.xpose.msra.mxu0 0.0
        %3811 = vmatprep.subr.mxu0 0.0
        %3812 = vmatpush2.xpose.msra.mxu0 0.0
        %3813 = vmatprep.subr.mxu0 0.0
        %3814 = vmatpush2.xpose.msra.mxu0 0.0
        %3815 = vmatprep.subr.mxu0 0.0
        %3816 = vmatpush2.xpose.msra.mxu0 0.0
        %3817 = vmatprep.subr.mxu0 0.0
        %3818 = vmatpush2.xpose.msra.mxu0 0.0
        %3819 = vmatprep.subr.mxu0 0.0
        %3820 = vmatpush2.xpose.msra.mxu0 0.0
        %3821 = vmatprep.subr.mxu0 0.0
        %3822 = vmatpush2.xpose.msra.mxu0 0.0
        %3823 = vmatprep.subr.mxu0 0.0
        %3824 = vmatpush2.xpose.msra.mxu0 0.0
        %3825 = vmatprep.subr.mxu0 0.0
        %3826 = vmatpush2.xpose.msra.mxu0 0.0
        %3827 = vmatprep.mubr.f32.mxu0 0.0
        %3828 = vmatmul.mubr.f32.gmra.mxu0 %v3762
        %v3829 = vpop.f32.mrf.mxu0
        %v3830 = vadd.f32 0.0, %v3829
        %v3831 = vpop.f32.mrf.mxu0
        %3832 = vdwg.mxu0
        %v3833 = vmul.f32 %v3830, 0.25
        %v3834 = vsel %vm1467, %v3833, -inf
        %3835 = vmax.xlane.f32.xlu0 %v3834
        %v3836 = vpop.xlane.xlu0 %3835
        %v3837 = vsub.f32 %v3833, %v3836
        %v3838 = vmul.f32 %v3837, 1.442695
        %v3839 = vpow.pop %v3838
        %v3840 = vsel %vm1467, %v3839, 0.0
        %3841 = vadd.xlane.f32.xlu0 %v3840
        %v3842 = vpop.xlane.xlu0 %3841
        %v3843 = vrcp.pop %v3842
        %v3844 = vmul.f32 %v3839, %v3843
        %v3845 = vmul.f32 %v1392, %v1066
        %v3847 = vsel %vm1467, %v3844, 0
        %3849 = vmatprep.subr.mxu0 0.0
        %3850 = vmatpush1.msra.mxu0 0.0
        %3851 = vmatprep.subr.mxu0 0.0
        %3852 = vmatpush1.msra.mxu0 0.0
        %3853 = vmatprep.subr.mxu0 0.0
        %3854 = vmatpush1.msra.mxu0 0.0
        %3855 = vmatprep.subr.mxu0 0.0
        %3856 = vmatpush1.msra.mxu0 0.0
        %3857 = vmatprep.subr.mxu0 0.0
        %3858 = vmatpush1.msra.mxu0 0.0
        %3859 = vmatprep.subr.mxu0 0.0
        %3860 = vmatpush1.msra.mxu0 0.0
        %3861 = vmatprep.subr.mxu0 0.0
        %3862 = vmatpush1.msra.mxu0 0.0
        %3863 = vmatprep.subr.mxu0 0.0
        %3864 = vmatpush1.msra.mxu0 0.0
        %3865 = vmatprep.subr.mxu0 0.0
        %3866 = vmatpush1.msra.mxu0 0.0
        %3867 = vmatprep.subr.mxu0 0.0
        %3868 = vmatpush1.msra.mxu0 0.0
        %3869 = vmatprep.subr.mxu0 0.0
        %3870 = vmatpush1.msra.mxu0 0.0
        %3871 = vmatprep.subr.mxu0 0.0
        %3872 = vmatpush1.msra.mxu0 0.0
        %3873 = vmatprep.subr.mxu0 0.0
        %3874 = vmatpush1.msra.mxu0 0.0
        %3875 = vmatprep.subr.mxu0 0.0
        %3876 = vmatpush1.msra.mxu0 0.0
        %3877 = vmatprep.subr.mxu0 0.0
        %3878 = vmatpush1.msra.mxu0 0.0
        %3879 = vmatprep.subr.mxu0 0.0
        %3880 = vmatpush1.msra.mxu0 %v3845
        %3881 = vmatprep.subr.mxu0 0.0
        %3882 = vmatpush2.msra.mxu0 0.0
        %3883 = vmatprep.subr.mxu0 0.0
        %3884 = vmatpush2.msra.mxu0 0.0
        %3885 = vmatprep.subr.mxu0 0.0
        %3886 = vmatpush2.msra.mxu0 0.0
        %3887 = vmatprep.subr.mxu0 0.0
        %3888 = vmatpush2.msra.mxu0 0.0
        %3889 = vmatprep.subr.mxu0 0.0
        %3890 = vmatpush2.msra.mxu0 0.0
        %3891 = vmatprep.subr.mxu0 0.0
        %3892 = vmatpush2.msra.mxu0 0.0
        %3893 = vmatprep.subr.mxu0 0.0
        %3894 = vmatpush2.msra.mxu0 0.0
        %3895 = vmatprep.subr.mxu0 0.0
        %3896 = vmatpush2.msra.mxu0 0.0
        %3897 = vmatprep.subr.mxu0 0.0
        %3898 = vmatpush2.msra.mxu0 0.0
        %3899 = vmatprep.subr.mxu0 0.0
        %3900 = vmatpush2.msra.mxu0 0.0
        %3901 = vmatprep.subr.mxu0 0.0
        %3902 = vmatpush2.msra.mxu0 0.0
        %3903 = vmatprep.subr.mxu0 0.0
        %3904 = vmatpush2.msra.mxu0 0.0
        %3905 = vmatprep.subr.mxu0 0.0
        %3906 = vmatpush2.msra.mxu0 0.0
        %3907 = vmatprep.subr.mxu0 0.0
        %3908 = vmatpush2.msra.mxu0 0.0
        %3909 = vmatprep.subr.mxu0 0.0
        %3910 = vmatpush2.msra.mxu0 0.0
        %3911 = vmatprep.subr.mxu0 0.0
        %3912 = vmatpush2.msra.mxu0 0.0
        %3913 = vmatprep.mubr.f32.mxu0 0.0
        %3914 = vmatmul.mubr.f32.gmra.mxu0 %v3847
        %v3915 = vpop.f32.mrf.mxu0
        %v3916 = vadd.f32 0.0, %v3915
        %v3917 = vpop.f32.mrf.mxu0
        %3918 = vdwg.mxu0
        %v3919 = vadd.f32 %v3761, %v3916
        %v3920 = vld [vmem:[%s844] sm:$0xf]
        %v3921 = vld [vmem:[%s844 + $0x4] sm:$0xf]
        %v3922 = vld [vmem:[%s844 + $0x8] sm:$0xf]
        %v3923 = vld [vmem:[%s844 + $0xc] sm:$0xf]
        %v3924 = vld [vmem:[%s844 + $0x10] sm:$0xf]
        %v3925 = vld [vmem:[%s844 + $0x14] sm:$0xf]
        %v3926 = vld [vmem:[%s844 + $0x18] sm:$0xf]
        %v3927 = vld [vmem:[%s844 + $0x1c] sm:$0xf]
        %v3928 = vld [vmem:[%s844 + $0x20] sm:$0xf]
        %v3929 = vld [vmem:[%s844 + $0x24] sm:$0xf]
        %v3930 = vld [vmem:[%s844 + $0x28] sm:$0xf]
        %v3931 = vld [vmem:[%s844 + $0x2c] sm:$0xf]
        %v3932 = vld [vmem:[%s844 + $0x30] sm:$0xf]
        %v3933 = vld [vmem:[%s844 + $0x34] sm:$0xf]
        %v3934 = vld [vmem:[%s844 + $0x38] sm:$0xf]
        %v3935 = vld [vmem:[%s844 + $0x3c] sm:$0xf]
        %v3936 = vpack.c.bf16 %v3919, %v2657
        %v3937 = vld [vmem:[%s1011] sm:$0x1]
        %v3939 = vlaneseq
        %v3940 = vshrl.u32 %v3939, 7
        %v3941 = vsub.s32 0, %v3940
        %v3942 = vrot.slane %v3937, %v3941
        %v3960 = vunpack.c.l.b16 %v3920
        %v3961 = vunpack.c.l.b16 %v3921
        %v3962 = vunpack.c.l.b16 %v3922
        %v3963 = vunpack.c.l.b16 %v3923
        %v3964 = vunpack.c.l.b16 %v3924
        %v3965 = vunpack.c.l.b16 %v3925
        %v3966 = vunpack.c.l.b16 %v3926
        %v3967 = vunpack.c.l.b16 %v3927
        %v3968 = vunpack.c.l.b16 %v3928
        %v3969 = vunpack.c.l.b16 %v3929
        %v3970 = vunpack.c.l.b16 %v3930
        %v3971 = vunpack.c.l.b16 %v3931
        %v3972 = vunpack.c.l.b16 %v3932
        %v3973 = vunpack.c.l.b16 %v3933
        %v3974 = vunpack.c.l.b16 %v3934
        %v3975 = vunpack.c.l.b16 %v3935
        %v3976 = vpack.c.b16 %v3961, %v3960
        %v3977 = vpack.c.b16 %v3963, %v3962
        %v3978 = vpack.c.b16 %v3965, %v3964
        %v3979 = vpack.c.b16 %v3967, %v3966
        %v3980 = vpack.c.b16 %v3969, %v3968
        %v3981 = vpack.c.b16 %v3971, %v3970
        %v3982 = vpack.c.b16 %v3973, %v3972
        %v3983 = vpack.c.b16 %v3975, %v3974
        %3992 = vmatprep.subr.bf16.mxu0 0
        %3993 = vmatpush1.bf16.msra.mxu0 %v3983
        %3994 = vmatprep.subr.bf16.mxu0 0
        %3995 = vmatpush1.bf16.msra.mxu0 %v3982
        %3996 = vmatprep.subr.bf16.mxu0 0
        %3997 = vmatpush1.bf16.msra.mxu0 %v3981
        %3998 = vmatprep.subr.bf16.mxu0 0
        %3999 = vmatpush1.bf16.msra.mxu0 %v3980
        %4000 = vmatprep.subr.bf16.mxu0 0
        %4001 = vmatpush1.bf16.msra.mxu0 %v3979
        %4002 = vmatprep.subr.bf16.mxu0 0
        %4003 = vmatpush1.bf16.msra.mxu0 %v3978
        %4004 = vmatprep.subr.bf16.mxu0 0
        %4005 = vmatpush1.bf16.msra.mxu0 %v3977
        %4006 = vmatprep.subr.bf16.mxu0 0
        %4007 = vmatpush1.bf16.msra.mxu0 %v3976
        %4008 = vmatprep.subr.bf16.mxu0 0
        %4009 = vmatpush2.bf16.msra.mxu0 0
        %4010 = vmatprep.subr.bf16.mxu0 0
        %4011 = vmatpush2.bf16.msra.mxu0 0
        %4012 = vmatprep.subr.bf16.mxu0 0
        %4013 = vmatpush2.bf16.msra.mxu0 0
        %4014 = vmatprep.subr.bf16.mxu0 0
        %4015 = vmatpush2.bf16.msra.mxu0 0
        %4016 = vmatprep.subr.bf16.mxu0 0
        %4017 = vmatpush2.bf16.msra.mxu0 0
        %4018 = vmatprep.subr.bf16.mxu0 0
        %4019 = vmatpush2.bf16.msra.mxu0 0
        %4020 = vmatprep.subr.bf16.mxu0 0
        %4021 = vmatpush2.bf16.msra.mxu0 0
        %4022 = vmatprep.subr.bf16.mxu0 0
        %4023 = vmatpush2.bf16.msra.mxu0 0
        %4024 = vmatprep.mubr.bf16.mxu0 0
        %4025 = vmatmul.mubr.bf16.gmra.mxu0 %v3936
        %v4026 = vpop.f32.mrf.mxu0
        %v4027 = vadd.f32 %v3942, %v4026
        %v4028 = vpop.f32.mrf.mxu0
        %v4029 = vpop.f32.mrf.mxu0
        %v4030 = vadd.f32 %v3942, %v4029
        %v4031 = vpop.f32.mrf.mxu0
        %4032 = vdwg.mxu0
        %v4033 = vadd.f32 %v1131, %v4027
        %v4034 = vadd.f32 %v1132, %v4030
        %v4035 = vld [vmem:[%s1015] sm:$0x1]
        %v4036 = vld [vmem:[%s853] sm:$0x1]
        %4037 = vadd.xlane.f32.xlu0 %v4033
        %v4038 = vpop.xlane.xlu0 %4037
        %4039 = vadd.xlane.f32.xlu0 %v4034
        %v4040 = vpop.xlane.xlu0 %4039
        %v4041 = vrcp.pop 128.0
        %v4042 = vmul.f32 %v4038, %v4041
        %v4043 = vmul.f32 %v4040, %v4041
        %v4044 = vsub.f32 %v4033, %v4042
        %v4045 = vsub.f32 %v4034, %v4043
        %v4046 = vmul.f32 %v4044, %v4044
        %v4047 = vmul.f32 %v4045, %v4045
        %4048 = vadd.xlane.f32.xlu0 %v4046
        %v4049 = vpop.xlane.xlu0 %4048
        %4050 = vadd.xlane.f32.xlu0 %v4047
        %v4051 = vpop.xlane.xlu0 %4050
        %v4052 = vmul.f32 %v4049, %v4041
        %v4053 = vmul.f32 %v4051, %v4041
        %v4054 = vadd.f32 %v4052, 1e-05
        %v4055 = vadd.f32 %v4053, 1e-05
        %v4056 = vrsqrt.pop %v4054
        %v4057 = vrsqrt.pop %v4055
        %v4058 = vmul.f32 %v4044, %v4056
        %v4059 = vmul.f32 %v4045, %v4057
        %v4061 = vlaneseq
        %v4062 = vshrl.u32 %v4061, 7
        %v4063 = vsub.s32 0, %v4062
        %v4064 = vrot.slane %v4035, %v4063
        %v4066 = vmul.f32 %v4058, %v4064
        %v4067 = vmul.f32 %v4059, %v4064
        %v4069 = vlaneseq
        %v4070 = vshrl.u32 %v4069, 7
        %v4071 = vsub.s32 0, %v4070
        %v4072 = vrot.slane %v4036, %v4071
        %v4074 = vadd.f32 %v4066, %v4072
        %v4075 = vadd.f32 %v4067, %v4072
        %v4076 = vld [vmem:[%s862] sm:$0xff]
        %v4077 = vld [vmem:[%s862 + $0x8] sm:$0xff]
        %v4078 = vld [vmem:[%s862 + $0x10] sm:$0xff]
        %v4079 = vld [vmem:[%s862 + $0x18] sm:$0xff]
        %v4080 = vld [vmem:[%s862 + $0x20] sm:$0xff]
        %v4081 = vld [vmem:[%s862 + $0x28] sm:$0xff]
        %v4082 = vld [vmem:[%s862 + $0x30] sm:$0xff]
        %v4083 = vld [vmem:[%s862 + $0x38] sm:$0xff]
        %v4084 = vld [vmem:[%s862 + $0x40] sm:$0xff]
        %v4085 = vld [vmem:[%s862 + $0x48] sm:$0xff]
        %v4086 = vld [vmem:[%s862 + $0x50] sm:$0xff]
        %v4087 = vld [vmem:[%s862 + $0x58] sm:$0xff]
        %v4088 = vld [vmem:[%s862 + $0x60] sm:$0xff]
        %v4089 = vld [vmem:[%s862 + $0x68] sm:$0xff]
        %v4090 = vld [vmem:[%s862 + $0x70] sm:$0xff]
        %v4091 = vld [vmem:[%s862 + $0x78] sm:$0xff]
        %v4092 = vld [vmem:[%s862 + $0x80] sm:$0xff]
        %v4093 = vld [vmem:[%s862 + $0x88] sm:$0xff]
        %v4094 = vld [vmem:[%s862 + $0x90] sm:$0xff]
        %v4095 = vld [vmem:[%s862 + $0x98] sm:$0xff]
        %v4096 = vld [vmem:[%s862 + $0xa0] sm:$0xff]
        %v4097 = vld [vmem:[%s862 + $0xa8] sm:$0xff]
        %v4098 = vld [vmem:[%s862 + $0xb0] sm:$0xff]
        %v4099 = vld [vmem:[%s862 + $0xb8] sm:$0xff]
        %v4100 = vld [vmem:[%s862 + $0xc0] sm:$0xff]
        %v4101 = vld [vmem:[%s862 + $0xc8] sm:$0xff]
        %v4102 = vld [vmem:[%s862 + $0xd0] sm:$0xff]
        %v4103 = vld [vmem:[%s862 + $0xd8] sm:$0xff]
        %v4104 = vld [vmem:[%s862 + $0xe0] sm:$0xff]
        %v4105 = vld [vmem:[%s862 + $0xe8] sm:$0xff]
        %v4106 = vld [vmem:[%s862 + $0xf0] sm:$0xff]
        %v4107 = vld [vmem:[%s862 + $0xf8] sm:$0xff]
        %v4108 = vpack.c.bf16 %v4075, %v4074
        %v4109 = vld [vmem:[%s871] sm:$0xf]
        %v4111 = vlaneseq
        %v4112 = vshrl.u32 %v4111, 7
        %v4113 = vsub.s32 0, %v4112
        %v4114 = vrot.slane %v4109, %v4113
        %v4115 = vlaneseq
        %v4116 = vshrl.u32 %v4115, 7
        %v4117 = vsub.s32 1, %v4116
        %v4118 = vrot.slane %v4109, %v4117
        %v4119 = vlaneseq
        %v4120 = vshrl.u32 %v4119, 7
        %v4121 = vsub.s32 2, %v4120
        %v4122 = vrot.slane %v4109, %v4121
        %v4123 = vlaneseq
        %v4124 = vshrl.u32 %v4123, 7
        %v4125 = vsub.s32 3, %v4124
        %v4126 = vrot.slane %v4109, %v4125
        %v4163 = vunpack.c.l.b16 %v4076
        %v4164 = vunpack.c.h.b16 %v4076
        %v4165 = vunpack.c.l.b16 %v4077
        %v4166 = vunpack.c.h.b16 %v4077
        %v4167 = vunpack.c.l.b16 %v4078
        %v4168 = vunpack.c.h.b16 %v4078
        %v4169 = vunpack.c.l.b16 %v4079
        %v4170 = vunpack.c.h.b16 %v4079
        %v4171 = vunpack.c.l.b16 %v4080
        %v4172 = vunpack.c.h.b16 %v4080
        %v4173 = vunpack.c.l.b16 %v4081
        %v4174 = vunpack.c.h.b16 %v4081
        %v4175 = vunpack.c.l.b16 %v4082
        %v4176 = vunpack.c.h.b16 %v4082
        %v4177 = vunpack.c.l.b16 %v4083
        %v4178 = vunpack.c.h.b16 %v4083
        %v4179 = vunpack.c.l.b16 %v4084
        %v4180 = vunpack.c.h.b16 %v4084
        %v4181 = vunpack.c.l.b16 %v4085
        %v4182 = vunpack.c.h.b16 %v4085
        %v4183 = vunpack.c.l.b16 %v4086
        %v4184 = vunpack.c.h.b16 %v4086
        %v4185 = vunpack.c.l.b16 %v4087
        %v4186 = vunpack.c.h.b16 %v4087
        %v4187 = vunpack.c.l.b16 %v4088
        %v4188 = vunpack.c.h.b16 %v4088
        %v4189 = vunpack.c.l.b16 %v4089
        %v4190 = vunpack.c.h.b16 %v4089
        %v4191 = vunpack.c.l.b16 %v4090
        %v4192 = vunpack.c.h.b16 %v4090
        %v4193 = vunpack.c.l.b16 %v4091
        %v4194 = vunpack.c.h.b16 %v4091
        %v4195 = vunpack.c.l.b16 %v4092
        %v4196 = vunpack.c.h.b16 %v4092
        %v4197 = vunpack.c.l.b16 %v4093
        %v4198 = vunpack.c.h.b16 %v4093
        %v4199 = vunpack.c.l.b16 %v4094
        %v4200 = vunpack.c.h.b16 %v4094
        %v4201 = vunpack.c.l.b16 %v4095
        %v4202 = vunpack.c.h.b16 %v4095
        %v4203 = vunpack.c.l.b16 %v4096
        %v4204 = vunpack.c.h.b16 %v4096
        %v4205 = vunpack.c.l.b16 %v4097
        %v4206 = vunpack.c.h.b16 %v4097
        %v4207 = vunpack.c.l.b16 %v4098
        %v4208 = vunpack.c.h.b16 %v4098
        %v4209 = vunpack.c.l.b16 %v4099
        %v4210 = vunpack.c.h.b16 %v4099
        %v4211 = vunpack.c.l.b16 %v4100
        %v4212 = vunpack.c.h.b16 %v4100
        %v4213 = vunpack.c.l.b16 %v4101
        %v4214 = vunpack.c.h.b16 %v4101
        %v4215 = vunpack.c.l.b16 %v4102
        %v4216 = vunpack.c.h.b16 %v4102
        %v4217 = vunpack.c.l.b16 %v4103
        %v4218 = vunpack.c.h.b16 %v4103
        %v4219 = vunpack.c.l.b16 %v4104
        %v4220 = vunpack.c.h.b16 %v4104
        %v4221 = vunpack.c.l.b16 %v4105
        %v4222 = vunpack.c.h.b16 %v4105
        %v4223 = vunpack.c.l.b16 %v4106
        %v4224 = vunpack.c.h.b16 %v4106
        %v4225 = vunpack.c.l.b16 %v4107
        %v4226 = vunpack.c.h.b16 %v4107
        %v4227 = vpack.c.b16 %v4167, %v4163
        %v4228 = vpack.c.b16 %v4168, %v4164
        %v4229 = vpack.c.b16 %v4169, %v4165
        %v4230 = vpack.c.b16 %v4170, %v4166
        %v4231 = vpack.c.b16 %v4175, %v4171
        %v4232 = vpack.c.b16 %v4176, %v4172
        %v4233 = vpack.c.b16 %v4177, %v4173
        %v4234 = vpack.c.b16 %v4178, %v4174
        %v4235 = vpack.c.b16 %v4183, %v4179
        %v4236 = vpack.c.b16 %v4184, %v4180
        %v4237 = vpack.c.b16 %v4185, %v4181
        %v4238 = vpack.c.b16 %v4186, %v4182
        %v4239 = vpack.c.b16 %v4191, %v4187
        %v4240 = vpack.c.b16 %v4192, %v4188
        %v4241 = vpack.c.b16 %v4193, %v4189
        %v4242 = vpack.c.b16 %v4194, %v4190
        %v4243 = vpack.c.b16 %v4199, %v4195
        %v4244 = vpack.c.b16 %v4200, %v4196
        %v4245 = vpack.c.b16 %v4201, %v4197
        %v4246 = vpack.c.b16 %v4202, %v4198
        %v4247 = vpack.c.b16 %v4207, %v4203
        %v4248 = vpack.c.b16 %v4208, %v4204
        %v4249 = vpack.c.b16 %v4209, %v4205
        %v4250 = vpack.c.b16 %v4210, %v4206
        %v4251 = vpack.c.b16 %v4215, %v4211
        %v4252 = vpack.c.b16 %v4216, %v4212
        %v4253 = vpack.c.b16 %v4217, %v4213
        %v4254 = vpack.c.b16 %v4218, %v4214
        %v4255 = vpack.c.b16 %v4223, %v4219
        %v4256 = vpack.c.b16 %v4224, %v4220
        %v4257 = vpack.c.b16 %v4225, %v4221
        %v4258 = vpack.c.b16 %v4226, %v4222
        %4291 = vmatprep.subr.bf16.mxu0 %v4256
        %4292 = vmatpush1.bf16.msra.mxu0 %v4255
        %4293 = vmatprep.subr.bf16.mxu0 %v4252
        %4294 = vmatpush1.bf16.msra.mxu0 %v4251
        %4295 = vmatprep.subr.bf16.mxu0 %v4248
        %4296 = vmatpush1.bf16.msra.mxu0 %v4247
        %4297 = vmatprep.subr.bf16.mxu0 %v4244
        %4298 = vmatpush1.bf16.msra.mxu0 %v4243
        %4299 = vmatprep.subr.bf16.mxu0 %v4240
        %4300 = vmatpush1.bf16.msra.mxu0 %v4239
        %4301 = vmatprep.subr.bf16.mxu0 %v4236
        %4302 = vmatpush1.bf16.msra.mxu0 %v4235
        %4303 = vmatprep.subr.bf16.mxu0 %v4232
        %4304 = vmatpush1.bf16.msra.mxu0 %v4231
        %4305 = vmatprep.subr.bf16.mxu0 %v4228
        %4306 = vmatpush1.bf16.msra.mxu0 %v4227
        %4307 = vmatprep.subr.bf16.mxu0 0
        %4308 = vmatpush2.bf16.msra.mxu0 0
        %4309 = vmatprep.subr.bf16.mxu0 0
        %4310 = vmatpush2.bf16.msra.mxu0 0
        %4311 = vmatprep.subr.bf16.mxu0 0
        %4312 = vmatpush2.bf16.msra.mxu0 0
        %4313 = vmatprep.subr.bf16.mxu0 0
        %4314 = vmatpush2.bf16.msra.mxu0 0
        %4315 = vmatprep.subr.bf16.mxu0 0
        %4316 = vmatpush2.bf16.msra.mxu0 0
        %4317 = vmatprep.subr.bf16.mxu0 0
        %4318 = vmatpush2.bf16.msra.mxu0 0
        %4319 = vmatprep.subr.bf16.mxu0 0
        %4320 = vmatpush2.bf16.msra.mxu0 0
        %4321 = vmatprep.subr.bf16.mxu0 0
        %4322 = vmatpush2.bf16.msra.mxu0 0
        %4323 = vmatprep.mubr.bf16.mxu0 0
        %4324 = vmatmul.mubr.bf16.gmra.mxu0 %v4108
        %v4325 = vpop.f32.mrf.mxu0
        %v4326 = vadd.f32 %v4114, %v4325
        %v4327 = vpop.f32.mrf.mxu0
        %v4328 = vadd.f32 %v4118, %v4327
        %v4329 = vpop.f32.mrf.mxu0
        %v4330 = vadd.f32 %v4114, %v4329
        %v4331 = vpop.f32.mrf.mxu0
        %v4332 = vadd.f32 %v4118, %v4331
        %4333 = vdwg.mxu0
        %4334 = vmatprep.subr.bf16.mxu0 %v4258
        %4335 = vmatpush1.bf16.msra.mxu0 %v4257
        %4336 = vmatprep.subr.bf16.mxu0 %v4254
        %4337 = vmatpush1.bf16.msra.mxu0 %v4253
        %4338 = vmatprep.subr.bf16.mxu0 %v4250
        %4339 = vmatpush1.bf16.msra.mxu0 %v4249
        %4340 = vmatprep.subr.bf16.mxu0 %v4246
        %4341 = vmatpush1.bf16.msra.mxu0 %v4245
        %4342 = vmatprep.subr.bf16.mxu0 %v4242
        %4343 = vmatpush1.bf16.msra.mxu0 %v4241
        %4344 = vmatprep.subr.bf16.mxu0 %v4238
        %4345 = vmatpush1.bf16.msra.mxu0 %v4237
        %4346 = vmatprep.subr.bf16.mxu0 %v4234
        %4347 = vmatpush1.bf16.msra.mxu0 %v4233
        %4348 = vmatprep.subr.bf16.mxu0 %v4230
        %4349 = vmatpush1.bf16.msra.mxu0 %v4229
        %4350 = vmatprep.subr.bf16.mxu0 0
        %4351 = vmatpush2.bf16.msra.mxu0 0
        %4352 = vmatprep.subr.bf16.mxu0 0
        %4353 = vmatpush2.bf16.msra.mxu0 0
        %4354 = vmatprep.subr.bf16.mxu0 0
        %4355 = vmatpush2.bf16.msra.mxu0 0
        %4356 = vmatprep.subr.bf16.mxu0 0
        %4357 = vmatpush2.bf16.msra.mxu0 0
        %4358 = vmatprep.subr.bf16.mxu0 0
        %4359 = vmatpush2.bf16.msra.mxu0 0
        %4360 = vmatprep.subr.bf16.mxu0 0
        %4361 = vmatpush2.bf16.msra.mxu0 0
        %4362 = vmatprep.subr.bf16.mxu0 0
        %4363 = vmatpush2.bf16.msra.mxu0 0
        %4364 = vmatprep.subr.bf16.mxu0 0
        %4365 = vmatpush2.bf16.msra.mxu0 0
        %4366 = vmatprep.mubr.bf16.mxu0 0
        %4367 = vmatmul.mubr.bf16.gmra.mxu0 %v4108
        %v4368 = vpop.f32.mrf.mxu0
        %v4369 = vadd.f32 %v4122, %v4368
        %v4370 = vpop.f32.mrf.mxu0
        %v4371 = vadd.f32 %v4126, %v4370
        %v4372 = vpop.f32.mrf.mxu0
        %v4373 = vadd.f32 %v4122, %v4372
        %v4374 = vpop.f32.mrf.mxu0
        %v4375 = vadd.f32 %v4126, %v4374
        %4376 = vdwg.mxu0
        %v4377 = vmax.f32 %v4326, 0.0
        %v4378 = vmax.f32 %v4328, 0.0
        %v4379 = vmax.f32 %v4369, 0.0
        %v4380 = vmax.f32 %v4371, 0.0
        %v4381 = vmax.f32 %v4330, 0.0
        %v4382 = vmax.f32 %v4332, 0.0
        %v4383 = vmax.f32 %v4373, 0.0
        %v4384 = vmax.f32 %v4375, 0.0
        %v4385 = vld [vmem:[%s880] sm:$0xf]
        %v4386 = vld [vmem:[%s880 + $0x4] sm:$0xf]
        %v4387 = vld [vmem:[%s880 + $0x8] sm:$0xf]
        %v4388 = vld [vmem:[%s880 + $0xc] sm:$0xf]
        %v4389 = vld [vmem:[%s880 + $0x10] sm:$0xf]
        %v4390 = vld [vmem:[%s880 + $0x14] sm:$0xf]
        %v4391 = vld [vmem:[%s880 + $0x18] sm:$0xf]
        %v4392 = vld [vmem:[%s880 + $0x1c] sm:$0xf]
        %v4393 = vld [vmem:[%s880 + $0x20] sm:$0xf]
        %v4394 = vld [vmem:[%s880 + $0x24] sm:$0xf]
        %v4395 = vld [vmem:[%s880 + $0x28] sm:$0xf]
        %v4396 = vld [vmem:[%s880 + $0x2c] sm:$0xf]
        %v4397 = vld [vmem:[%s880 + $0x30] sm:$0xf]
        %v4398 = vld [vmem:[%s880 + $0x34] sm:$0xf]
        %v4399 = vld [vmem:[%s880 + $0x38] sm:$0xf]
        %v4400 = vld [vmem:[%s880 + $0x3c] sm:$0xf]
        %v4401 = vld [vmem:[%s880 + $0x40] sm:$0xf]
        %v4402 = vld [vmem:[%s880 + $0x44] sm:$0xf]
        %v4403 = vld [vmem:[%s880 + $0x48] sm:$0xf]
        %v4404 = vld [vmem:[%s880 + $0x4c] sm:$0xf]
        %v4405 = vld [vmem:[%s880 + $0x50] sm:$0xf]
        %v4406 = vld [vmem:[%s880 + $0x54] sm:$0xf]
        %v4407 = vld [vmem:[%s880 + $0x58] sm:$0xf]
        %v4408 = vld [vmem:[%s880 + $0x5c] sm:$0xf]
        %v4409 = vld [vmem:[%s880 + $0x60] sm:$0xf]
        %v4410 = vld [vmem:[%s880 + $0x64] sm:$0xf]
        %v4411 = vld [vmem:[%s880 + $0x68] sm:$0xf]
        %v4412 = vld [vmem:[%s880 + $0x6c] sm:$0xf]
        %v4413 = vld [vmem:[%s880 + $0x70] sm:$0xf]
        %v4414 = vld [vmem:[%s880 + $0x74] sm:$0xf]
        %v4415 = vld [vmem:[%s880 + $0x78] sm:$0xf]
        %v4416 = vld [vmem:[%s880 + $0x7c] sm:$0xf]
        %v4417 = vld [vmem:[%s880 + $0x80] sm:$0xf]
        %v4418 = vld [vmem:[%s880 + $0x84] sm:$0xf]
        %v4419 = vld [vmem:[%s880 + $0x88] sm:$0xf]
        %v4420 = vld [vmem:[%s880 + $0x8c] sm:$0xf]
        %v4421 = vld [vmem:[%s880 + $0x90] sm:$0xf]
        %v4422 = vld [vmem:[%s880 + $0x94] sm:$0xf]
        %v4423 = vld [vmem:[%s880 + $0x98] sm:$0xf]
        %v4424 = vld [vmem:[%s880 + $0x9c] sm:$0xf]
        %v4425 = vld [vmem:[%s880 + $0xa0] sm:$0xf]
        %v4426 = vld [vmem:[%s880 + $0xa4] sm:$0xf]
        %v4427 = vld [vmem:[%s880 + $0xa8] sm:$0xf]
        %v4428 = vld [vmem:[%s880 + $0xac] sm:$0xf]
        %v4429 = vld [vmem:[%s880 + $0xb0] sm:$0xf]
        %v4430 = vld [vmem:[%s880 + $0xb4] sm:$0xf]
        %v4431 = vld [vmem:[%s880 + $0xb8] sm:$0xf]
        %v4432 = vld [vmem:[%s880 + $0xbc] sm:$0xf]
        %v4433 = vld [vmem:[%s880 + $0xc0] sm:$0xf]
        %v4434 = vld [vmem:[%s880 + $0xc4] sm:$0xf]
        %v4435 = vld [vmem:[%s880 + $0xc8] sm:$0xf]
        %v4436 = vld [vmem:[%s880 + $0xcc] sm:$0xf]
        %v4437 = vld [vmem:[%s880 + $0xd0] sm:$0xf]
        %v4438 = vld [vmem:[%s880 + $0xd4] sm:$0xf]
        %v4439 = vld [vmem:[%s880 + $0xd8] sm:$0xf]
        %v4440 = vld [vmem:[%s880 + $0xdc] sm:$0xf]
        %v4441 = vld [vmem:[%s880 + $0xe0] sm:$0xf]
        %v4442 = vld [vmem:[%s880 + $0xe4] sm:$0xf]
        %v4443 = vld [vmem:[%s880 + $0xe8] sm:$0xf]
        %v4444 = vld [vmem:[%s880 + $0xec] sm:$0xf]
        %v4445 = vld [vmem:[%s880 + $0xf0] sm:$0xf]
        %v4446 = vld [vmem:[%s880 + $0xf4] sm:$0xf]
        %v4447 = vld [vmem:[%s880 + $0xf8] sm:$0xf]
        %v4448 = vld [vmem:[%s880 + $0xfc] sm:$0xf]
        %v4449 = vpack.c.bf16 %v4381, %v4377
        %v4450 = vpack.c.bf16 %v4382, %v4378
        %v4451 = vpack.c.bf16 %v4383, %v4379
        %v4452 = vpack.c.bf16 %v4384, %v4380
        %v4453 = vld [vmem:[%s1019] sm:$0x1]
        %v4455 = vlaneseq
        %v4456 = vshrl.u32 %v4455, 7
        %v4457 = vsub.s32 0, %v4456
        %v4458 = vrot.slane %v4453, %v4457
        %v4524 = vunpack.c.l.b16 %v4385
        %v4525 = vunpack.c.l.b16 %v4386
        %v4526 = vunpack.c.l.b16 %v4387
        %v4527 = vunpack.c.l.b16 %v4388
        %v4528 = vunpack.c.l.b16 %v4389
        %v4529 = vunpack.c.l.b16 %v4390
        %v4530 = vunpack.c.l.b16 %v4391
        %v4531 = vunpack.c.l.b16 %v4392
        %v4532 = vunpack.c.l.b16 %v4393
        %v4533 = vunpack.c.l.b16 %v4394
        %v4534 = vunpack.c.l.b16 %v4395
        %v4535 = vunpack.c.l.b16 %v4396
        %v4536 = vunpack.c.l.b16 %v4397
        %v4537 = vunpack.c.l.b16 %v4398
        %v4538 = vunpack.c.l.b16 %v4399
        %v4539 = vunpack.c.l.b16 %v4400
        %v4540 = vunpack.c.l.b16 %v4401
        %v4541 = vunpack.c.l.b16 %v4402
        %v4542 = vunpack.c.l.b16 %v4403
        %v4543 = vunpack.c.l.b16 %v4404
        %v4544 = vunpack.c.l.b16 %v4405
        %v4545 = vunpack.c.l.b16 %v4406
        %v4546 = vunpack.c.l.b16 %v4407
        %v4547 = vunpack.c.l.b16 %v4408
        %v4548 = vunpack.c.l.b16 %v4409
        %v4549 = vunpack.c.l.b16 %v4410
        %v4550 = vunpack.c.l.b16 %v4411
        %v4551 = vunpack.c.l.b16 %v4412
        %v4552 = vunpack.c.l.b16 %v4413
        %v4553 = vunpack.c.l.b16 %v4414
        %v4554 = vunpack.c.l.b16 %v4415
        %v4555 = vunpack.c.l.b16 %v4416
        %v4556 = vunpack.c.l.b16 %v4417
        %v4557 = vunpack.c.l.b16 %v4418
        %v4558 = vunpack.c.l.b16 %v4419
        %v4559 = vunpack.c.l.b16 %v4420
        %v4560 = vunpack.c.l.b16 %v4421
        %v4561 = vunpack.c.l.b16 %v4422
        %v4562 = vunpack.c.l.b16 %v4423
        %v4563 = vunpack.c.l.b16 %v4424
        %v4564 = vunpack.c.l.b16 %v4425
        %v4565 = vunpack.c.l.b16 %v4426
        %v4566 = vunpack.c.l.b16 %v4427
        %v4567 = vunpack.c.l.b16 %v4428
        %v4568 = vunpack.c.l.b16 %v4429
        %v4569 = vunpack.c.l.b16 %v4430
        %v4570 = vunpack.c.l.b16 %v4431
        %v4571 = vunpack.c.l.b16 %v4432
        %v4572 = vunpack.c.l.b16 %v4433
        %v4573 = vunpack.c.l.b16 %v4434
        %v4574 = vunpack.c.l.b16 %v4435
        %v4575 = vunpack.c.l.b16 %v4436
        %v4576 = vunpack.c.l.b16 %v4437
        %v4577 = vunpack.c.l.b16 %v4438
        %v4578 = vunpack.c.l.b16 %v4439
        %v4579 = vunpack.c.l.b16 %v4440
        %v4580 = vunpack.c.l.b16 %v4441
        %v4581 = vunpack.c.l.b16 %v4442
        %v4582 = vunpack.c.l.b16 %v4443
        %v4583 = vunpack.c.l.b16 %v4444
        %v4584 = vunpack.c.l.b16 %v4445
        %v4585 = vunpack.c.l.b16 %v4446
        %v4586 = vunpack.c.l.b16 %v4447
        %v4587 = vunpack.c.l.b16 %v4448
        %v4588 = vpack.c.b16 %v4525, %v4524
        %v4589 = vpack.c.b16 %v4527, %v4526
        %v4590 = vpack.c.b16 %v4529, %v4528
        %v4591 = vpack.c.b16 %v4531, %v4530
        %v4592 = vpack.c.b16 %v4533, %v4532
        %v4593 = vpack.c.b16 %v4535, %v4534
        %v4594 = vpack.c.b16 %v4537, %v4536
        %v4595 = vpack.c.b16 %v4539, %v4538
        %v4596 = vpack.c.b16 %v4541, %v4540
        %v4597 = vpack.c.b16 %v4543, %v4542
        %v4598 = vpack.c.b16 %v4545, %v4544
        %v4599 = vpack.c.b16 %v4547, %v4546
        %v4600 = vpack.c.b16 %v4549, %v4548
        %v4601 = vpack.c.b16 %v4551, %v4550
        %v4602 = vpack.c.b16 %v4553, %v4552
        %v4603 = vpack.c.b16 %v4555, %v4554
        %v4604 = vpack.c.b16 %v4557, %v4556
        %v4605 = vpack.c.b16 %v4559, %v4558
        %v4606 = vpack.c.b16 %v4561, %v4560
        %v4607 = vpack.c.b16 %v4563, %v4562
        %v4608 = vpack.c.b16 %v4565, %v4564
        %v4609 = vpack.c.b16 %v4567, %v4566
        %v4610 = vpack.c.b16 %v4569, %v4568
        %v4611 = vpack.c.b16 %v4571, %v4570
        %v4612 = vpack.c.b16 %v4573, %v4572
        %v4613 = vpack.c.b16 %v4575, %v4574
        %v4614 = vpack.c.b16 %v4577, %v4576
        %v4615 = vpack.c.b16 %v4579, %v4578
        %v4616 = vpack.c.b16 %v4581, %v4580
        %v4617 = vpack.c.b16 %v4583, %v4582
        %v4618 = vpack.c.b16 %v4585, %v4584
        %v4619 = vpack.c.b16 %v4587, %v4586
        %4652 = vmatprep.subr.bf16.mxu0 0
        %4653 = vmatpush1.bf16.msra.mxu0 %v4595
        %4654 = vmatprep.subr.bf16.mxu0 0
        %4655 = vmatpush1.bf16.msra.mxu0 %v4594
        %4656 = vmatprep.subr.bf16.mxu0 0
        %4657 = vmatpush1.bf16.msra.mxu0 %v4593
        %4658 = vmatprep.subr.bf16.mxu0 0
        %4659 = vmatpush1.bf16.msra.mxu0 %v4592
        %4660 = vmatprep.subr.bf16.mxu0 0
        %4661 = vmatpush1.bf16.msra.mxu0 %v4591
        %4662 = vmatprep.subr.bf16.mxu0 0
        %4663 = vmatpush1.bf16.msra.mxu0 %v4590
        %4664 = vmatprep.subr.bf16.mxu0 0
        %4665 = vmatpush1.bf16.msra.mxu0 %v4589
        %4666 = vmatprep.subr.bf16.mxu0 0
        %4667 = vmatpush1.bf16.msra.mxu0 %v4588
        %4668 = vmatprep.subr.bf16.mxu0 0
        %4669 = vmatpush2.bf16.msra.mxu0 %v4603
        %4670 = vmatprep.subr.bf16.mxu0 0
        %4671 = vmatpush2.bf16.msra.mxu0 %v4602
        %4672 = vmatprep.subr.bf16.mxu0 0
        %4673 = vmatpush2.bf16.msra.mxu0 %v4601
        %4674 = vmatprep.subr.bf16.mxu0 0
        %4675 = vmatpush2.bf16.msra.mxu0 %v4600
        %4676 = vmatprep.subr.bf16.mxu0 0
        %4677 = vmatpush2.bf16.msra.mxu0 %v4599
        %4678 = vmatprep.subr.bf16.mxu0 0
        %4679 = vmatpush2.bf16.msra.mxu0 %v4598
        %4680 = vmatprep.subr.bf16.mxu0 0
        %4681 = vmatpush2.bf16.msra.mxu0 %v4597
        %4682 = vmatprep.subr.bf16.mxu0 0
        %4683 = vmatpush2.bf16.msra.mxu0 %v4596
        %4684 = vmatprep.mubr.bf16.mxu0 %v4450
        %4685 = vmatmul.mubr.bf16.gmra.mxu0 %v4449
        %v4686 = vpop.f32.mrf.mxu0
        %v4687 = vadd.f32 %v4458, %v4686
        %v4688 = vpop.f32.mrf.mxu0
        %v4689 = vpop.f32.mrf.mxu0
        %v4690 = vadd.f32 %v4458, %v4689
        %v4691 = vpop.f32.mrf.mxu0
        %4692 = vdwg.mxu0
        %4693 = vmatprep.subr.bf16.mxu0 0
        %4694 = vmatpush1.bf16.msra.mxu0 %v4611
        %4695 = vmatprep.subr.bf16.mxu0 0
        %4696 = vmatpush1.bf16.msra.mxu0 %v4610
        %4697 = vmatprep.subr.bf16.mxu0 0
        %4698 = vmatpush1.bf16.msra.mxu0 %v4609
        %4699 = vmatprep.subr.bf16.mxu0 0
        %4700 = vmatpush1.bf16.msra.mxu0 %v4608
        %4701 = vmatprep.subr.bf16.mxu0 0
        %4702 = vmatpush1.bf16.msra.mxu0 %v4607
        %4703 = vmatprep.subr.bf16.mxu0 0
        %4704 = vmatpush1.bf16.msra.mxu0 %v4606
        %4705 = vmatprep.subr.bf16.mxu0 0
        %4706 = vmatpush1.bf16.msra.mxu0 %v4605
        %4707 = vmatprep.subr.bf16.mxu0 0
        %4708 = vmatpush1.bf16.msra.mxu0 %v4604
        %4709 = vmatprep.subr.bf16.mxu0 0
        %4710 = vmatpush2.bf16.msra.mxu0 %v4619
        %4711 = vmatprep.subr.bf16.mxu0 0
        %4712 = vmatpush2.bf16.msra.mxu0 %v4618
        %4713 = vmatprep.subr.bf16.mxu0 0
        %4714 = vmatpush2.bf16.msra.mxu0 %v4617
        %4715 = vmatprep.subr.bf16.mxu0 0
        %4716 = vmatpush2.bf16.msra.mxu0 %v4616
        %4717 = vmatprep.subr.bf16.mxu0 0
        %4718 = vmatpush2.bf16.msra.mxu0 %v4615
        %4719 = vmatprep.subr.bf16.mxu0 0
        %4720 = vmatpush2.bf16.msra.mxu0 %v4614
        %4721 = vmatprep.subr.bf16.mxu0 0
        %4722 = vmatpush2.bf16.msra.mxu0 %v4613
        %4723 = vmatprep.subr.bf16.mxu0 0
        %4724 = vmatpush2.bf16.msra.mxu0 %v4612
        %4725 = vmatprep.mubr.bf16.mxu0 %v4452
        %4726 = vmatmul.mubr.bf16.gmra.mxu0 %v4451
        %v4727 = vpop.f32.mrf.mxu0
        %v4728 = vadd.f32 %v4687, %v4727
        %v4729 = vpop.f32.mrf.mxu0
        %v4730 = vpop.f32.mrf.mxu0
        %v4731 = vadd.f32 %v4690, %v4730
        %v4732 = vpop.f32.mrf.mxu0
        %4733 = vdwg.mxu0
        %v4734 = vadd.f32 %v4074, %v4728
        %v4735 = vadd.f32 %v4075, %v4731
        %v4736 = vld [vmem:[%s1023] sm:$0x1]
        %v4737 = vld [vmem:[%s889] sm:$0x1]
        %4738 = vadd.xlane.f32.xlu0 %v4734
        %v4739 = vpop.xlane.xlu0 %4738
        %4740 = vadd.xlane.f32.xlu0 %v4735
        %v4741 = vpop.xlane.xlu0 %4740
        %v4742 = vmul.f32 %v4739, %v4041
        %v4743 = vmul.f32 %v4741, %v4041
        %v4744 = vsub.f32 %v4734, %v4742
        %v4745 = vsub.f32 %v4735, %v4743
        %v4746 = vmul.f32 %v4744, %v4744
        %v4747 = vmul.f32 %v4745, %v4745
        %4748 = vadd.xlane.f32.xlu0 %v4746
        %v4749 = vpop.xlane.xlu0 %4748
        %4750 = vadd.xlane.f32.xlu0 %v4747
        %v4751 = vpop.xlane.xlu0 %4750
        %v4752 = vmul.f32 %v4749, %v4041
        %v4753 = vmul.f32 %v4751, %v4041
        %v4754 = vadd.f32 %v4752, 1e-05
        %v4755 = vadd.f32 %v4753, 1e-05
        %v4756 = vrsqrt.pop %v4754
        %v4757 = vrsqrt.pop %v4755
        %v4758 = vmul.f32 %v4744, %v4756
        %v4759 = vmul.f32 %v4745, %v4757
        %v4761 = vlaneseq
        %v4762 = vshrl.u32 %v4761, 7
        %v4763 = vsub.s32 0, %v4762
        %v4764 = vrot.slane %v4736, %v4763
        %v4766 = vmul.f32 %v4758, %v4764
        %v4767 = vmul.f32 %v4759, %v4764
        %v4769 = vlaneseq
        %v4770 = vshrl.u32 %v4769, 7
        %v4771 = vsub.s32 0, %v4770
        %v4772 = vrot.slane %v4737, %v4771
        %v4774 = vadd.f32 %v4766, %v4772
        %v4775 = vadd.f32 %v4767, %v4772
        %s4776 = scalar_lea.vmem %s826, 192 [#allocation10]
        %v4777 = vld [vmem:[%s4776] sm:$0xff]
        %v4778 = vld [vmem:[%s4776 + $0x8] sm:$0xf]
        %v4779 = vld [vmem:[%s4776 + $0xc] sm:$0xff]
        %v4780 = vld [vmem:[%s4776 + $0x14] sm:$0xf]
        %v4781 = vld [vmem:[%s4776 + $0x18] sm:$0xff]
        %v4782 = vld [vmem:[%s4776 + $0x20] sm:$0xf]
        %v4783 = vld [vmem:[%s4776 + $0x24] sm:$0xff]
        %v4784 = vld [vmem:[%s4776 + $0x2c] sm:$0xf]
        %v4785 = vld [vmem:[%s4776 + $0x30] sm:$0xff]
        %v4786 = vld [vmem:[%s4776 + $0x38] sm:$0xf]
        %v4787 = vld [vmem:[%s4776 + $0x3c] sm:$0xff]
        %v4788 = vld [vmem:[%s4776 + $0x44] sm:$0xf]
        %v4789 = vld [vmem:[%s4776 + $0x48] sm:$0xff]
        %v4790 = vld [vmem:[%s4776 + $0x50] sm:$0xf]
        %v4791 = vld [vmem:[%s4776 + $0x54] sm:$0xff]
        %v4792 = vld [vmem:[%s4776 + $0x5c] sm:$0xf]
        %v4793 = vld [vmem:[%s4776 + $0x60] sm:$0xff]
        %v4794 = vld [vmem:[%s4776 + $0x68] sm:$0xf]
        %v4795 = vld [vmem:[%s4776 + $0x6c] sm:$0xff]
        %v4796 = vld [vmem:[%s4776 + $0x74] sm:$0xf]
        %v4797 = vld [vmem:[%s4776 + $0x78] sm:$0xff]
        %v4798 = vld [vmem:[%s4776 + $0x80] sm:$0xf]
        %v4799 = vld [vmem:[%s4776 + $0x84] sm:$0xff]
        %v4800 = vld [vmem:[%s4776 + $0x8c] sm:$0xf]
        %v4801 = vld [vmem:[%s4776 + $0x90] sm:$0xff]
        %v4802 = vld [vmem:[%s4776 + $0x98] sm:$0xf]
        %v4803 = vld [vmem:[%s4776 + $0x9c] sm:$0xff]
        %v4804 = vld [vmem:[%s4776 + $0xa4] sm:$0xf]
        %v4805 = vld [vmem:[%s4776 + $0xa8] sm:$0xff]
        %v4806 = vld [vmem:[%s4776 + $0xb0] sm:$0xf]
        %v4807 = vld [vmem:[%s4776 + $0xb4] sm:$0xff]
        %v4808 = vld [vmem:[%s4776 + $0xbc] sm:$0xf]
        %v4809 = vpack.c.bf16 %v4775, %v4774
        %s4810 = scalar_lea.vmem %s835, 3 [#allocation11]
        %v4811 = vld [vmem:[%s4810] sm:$0x7]
        %v4813 = vlaneseq
        %v4814 = vshrl.u32 %v4813, 7
        %v4815 = vsub.s32 0, %v4814
        %v4816 = vrot.slane %v4811, %v4815
        %v4817 = vlaneseq
        %v4818 = vshrl.u32 %v4817, 7
        %v4819 = vsub.s32 1, %v4818
        %v4820 = vrot.slane %v4811, %v4819
        %v4821 = vlaneseq
        %v4822 = vshrl.u32 %v4821, 7
        %v4823 = vsub.s32 2, %v4822
        %v4824 = vrot.slane %v4811, %v4823
        %v4860 = vunpack.c.l.b16 %v4777
        %v4861 = vunpack.c.h.b16 %v4777
        %v4862 = vunpack.c.l.b16 %v4778
        %v4863 = vunpack.c.l.b16 %v4779
        %v4864 = vunpack.c.h.b16 %v4779
        %v4865 = vunpack.c.l.b16 %v4780
        %v4866 = vunpack.c.l.b16 %v4781
        %v4867 = vunpack.c.h.b16 %v4781
        %v4868 = vunpack.c.l.b16 %v4782
        %v4869 = vunpack.c.l.b16 %v4783
        %v4870 = vunpack.c.h.b16 %v4783
        %v4871 = vunpack.c.l.b16 %v4784
        %v4872 = vunpack.c.l.b16 %v4785
        %v4873 = vunpack.c.h.b16 %v4785
        %v4874 = vunpack.c.l.b16 %v4786
        %v4875 = vunpack.c.l.b16 %v4787
        %v4876 = vunpack.c.h.b16 %v4787
        %v4877 = vunpack.c.l.b16 %v4788
        %v4878 = vunpack.c.l.b16 %v4789
        %v4879 = vunpack.c.h.b16 %v4789
        %v4880 = vunpack.c.l.b16 %v4790
        %v4881 = vunpack.c.l.b16 %v4791
        %v4882 = vunpack.c.h.b16 %v4791
        %v4883 = vunpack.c.l.b16 %v4792
        %v4884 = vunpack.c.l.b16 %v4793
        %v4885 = vunpack.c.h.b16 %v4793
        %v4886 = vunpack.c.l.b16 %v4794
        %v4887 = vunpack.c.l.b16 %v4795
        %v4888 = vunpack.c.h.b16 %v4795
        %v4889 = vunpack.c.l.b16 %v4796
        %v4890 = vunpack.c.l.b16 %v4797
        %v4891 = vunpack.c.h.b16 %v4797
        %v4892 = vunpack.c.l.b16 %v4798
        %v4893 = vunpack.c.l.b16 %v4799
        %v4894 = vunpack.c.h.b16 %v4799
        %v4895 = vunpack.c.l.b16 %v4800
        %v4896 = vunpack.c.l.b16 %v4801
        %v4897 = vunpack.c.h.b16 %v4801
        %v4898 = vunpack.c.l.b16 %v4802
        %v4899 = vunpack.c.l.b16 %v4803
        %v4900 = vunpack.c.h.b16 %v4803
        %v4901 = vunpack.c.l.b16 %v4804
        %v4902 = vunpack.c.l.b16 %v4805
        %v4903 = vunpack.c.h.b16 %v4805
        %v4904 = vunpack.c.l.b16 %v4806
        %v4905 = vunpack.c.l.b16 %v4807
        %v4906 = vunpack.c.h.b16 %v4807
        %v4907 = vunpack.c.l.b16 %v4808
        %v4908 = vpack.c.b16 %v4863, %v4860
        %v4909 = vpack.c.b16 %v4864, %v4861
        %v4910 = vpack.c.b16 %v4865, %v4862
        %v4911 = vpack.c.b16 %v4869, %v4866
        %v4912 = vpack.c.b16 %v4870, %v4867
        %v4913 = vpack.c.b16 %v4871, %v4868
        %v4914 = vpack.c.b16 %v4875, %v4872
        %v4915 = vpack.c.b16 %v4876, %v4873
        %v4916 = vpack.c.b16 %v4877, %v4874
        %v4917 = vpack.c.b16 %v4881, %v4878
        %v4918 = vpack.c.b16 %v4882, %v4879
        %v4919 = vpack.c.b16 %v4883, %v4880
        %v4920 = vpack.c.b16 %v4887, %v4884
        %v4921 = vpack.c.b16 %v4888, %v4885
        %v4922 = vpack.c.b16 %v4889, %v4886
        %v4923 = vpack.c.b16 %v4893, %v4890
        %v4924 = vpack.c.b16 %v4894, %v4891
        %v4925 = vpack.c.b16 %v4895, %v4892
        %v4926 = vpack.c.b16 %v4899, %v4896
        %v4927 = vpack.c.b16 %v4900, %v4897
        %v4928 = vpack.c.b16 %v4901, %v4898
        %v4929 = vpack.c.b16 %v4905, %v4902
        %v4930 = vpack.c.b16 %v4906, %v4903
        %v4931 = vpack.c.b16 %v4907, %v4904
        %4956 = vmatprep.subr.bf16.mxu0 %v4930
        %4957 = vmatpush1.bf16.msra.mxu0 %v4929
        %4958 = vmatprep.subr.bf16.mxu0 %v4927
        %4959 = vmatpush1.bf16.msra.mxu0 %v4926
        %4960 = vmatprep.subr.bf16.mxu0 %v4924
        %4961 = vmatpush1.bf16.msra.mxu0 %v4923
        %4962 = vmatprep.subr.bf16.mxu0 %v4921
        %4963 = vmatpush1.bf16.msra.mxu0 %v4920
        %4964 = vmatprep.subr.bf16.mxu0 %v4918
        %4965 = vmatpush1.bf16.msra.mxu0 %v4917
        %4966 = vmatprep.subr.bf16.mxu0 %v4915
        %4967 = vmatpush1.bf16.msra.mxu0 %v4914
        %4968 = vmatprep.subr.bf16.mxu0 %v4912
        %4969 = vmatpush1.bf16.msra.mxu0 %v4911
        %4970 = vmatprep.subr.bf16.mxu0 %v4909
        %4971 = vmatpush1.bf16.msra.mxu0 %v4908
        %4972 = vmatprep.subr.bf16.mxu0 0
        %4973 = vmatpush2.bf16.msra.mxu0 0
        %4974 = vmatprep.subr.bf16.mxu0 0
        %4975 = vmatpush2.bf16.msra.mxu0 0
        %4976 = vmatprep.subr.bf16.mxu0 0
        %4977 = vmatpush2.bf16.msra.mxu0 0
        %4978 = vmatprep.subr.bf16.mxu0 0
        %4979 = vmatpush2.bf16.msra.mxu0 0
        %4980 = vmatprep.subr.bf16.mxu0 0
        %4981 = vmatpush2.bf16.msra.mxu0 0
        %4982 = vmatprep.subr.bf16.mxu0 0
        %4983 = vmatpush2.bf16.msra.mxu0 0
        %4984 = vmatprep.subr.bf16.mxu0 0
        %4985 = vmatpush2.bf16.msra.mxu0 0
        %4986 = vmatprep.subr.bf16.mxu0 0
        %4987 = vmatpush2.bf16.msra.mxu0 0
        %4988 = vmatprep.mubr.bf16.mxu0 0
        %4989 = vmatmul.mubr.bf16.gmra.mxu0 %v4809
        %v4990 = vpop.f32.mrf.mxu0
        %v4991 = vadd.f32 %v4816, %v4990
        %v4992 = vpop.f32.mrf.mxu0
        %v4993 = vadd.f32 %v4820, %v4992
        %v4994 = vpop.f32.mrf.mxu0
        %v4995 = vadd.f32 %v4816, %v4994
        %v4996 = vpop.f32.mrf.mxu0
        %v4997 = vadd.f32 %v4820, %v4996
        %4998 = vdwg.mxu0
        %4999 = vmatprep.subr.bf16.mxu0 0
        %5000 = vmatpush1.bf16.msra.mxu0 %v4931
        %5001 = vmatprep.subr.bf16.mxu0 0
        %5002 = vmatpush1.bf16.msra.mxu0 %v4928
        %5003 = vmatprep.subr.bf16.mxu0 0
        %5004 = vmatpush1.bf16.msra.mxu0 %v4925
        %5005 = vmatprep.subr.bf16.mxu0 0
        %5006 = vmatpush1.bf16.msra.mxu0 %v4922
        %5007 = vmatprep.subr.bf16.mxu0 0
        %5008 = vmatpush1.bf16.msra.mxu0 %v4919
        %5009 = vmatprep.subr.bf16.mxu0 0
        %5010 = vmatpush1.bf16.msra.mxu0 %v4916
        %5011 = vmatprep.subr.bf16.mxu0 0
        %5012 = vmatpush1.bf16.msra.mxu0 %v4913
        %5013 = vmatprep.subr.bf16.mxu0 0
        %5014 = vmatpush1.bf16.msra.mxu0 %v4910
        %5015 = vmatprep.subr.bf16.mxu0 0
        %5016 = vmatpush2.bf16.msra.mxu0 0
        %5017 = vmatprep.subr.bf16.mxu0 0
        %5018 = vmatpush2.bf16.msra.mxu0 0
        %5019 = vmatprep.subr.bf16.mxu0 0
        %5020 = vmatpush2.bf16.msra.mxu0 0
        %5021 = vmatprep.subr.bf16.mxu0 0
        %5022 = vmatpush2.bf16.msra.mxu0 0
        %5023 = vmatprep.subr.bf16.mxu0 0
        %5024 = vmatpush2.bf16.msra.mxu0 0
        %5025 = vmatprep.subr.bf16.mxu0 0
        %5026 = vmatpush2.bf16.msra.mxu0 0
        %5027 = vmatprep.subr.bf16.mxu0 0
        %5028 = vmatpush2.bf16.msra.mxu0 0
        %5029 = vmatprep.subr.bf16.mxu0 0
        %5030 = vmatpush2.bf16.msra.mxu0 0
        %5031 = vmatprep.mubr.bf16.mxu0 0
        %5032 = vmatmul.mubr.bf16.gmra.mxu0 %v4809
        %v5033 = vpop.f32.mrf.mxu0
        %v5034 = vadd.f32 %v4824, %v5033
        %v5035 = vpop.f32.mrf.mxu0
        %v5036 = vpop.f32.mrf.mxu0
        %v5037 = vadd.f32 %v4824, %v5036
        %v5038 = vpop.f32.mrf.mxu0
        %5039 = vdwg.mxu0
        %v5040 = vmul.f32 %v4991, %v1031
        %5041 = vmatprep.subr.mxu0 0.0
        %5042 = vmatpush1.xpose.msra.mxu0 0.0
        %5043 = vmatprep.subr.mxu0 0.0
        %5044 = vmatpush1.xpose.msra.mxu0 0.0
        %5045 = vmatprep.subr.mxu0 0.0
        %5046 = vmatpush1.xpose.msra.mxu0 0.0
        %5047 = vmatprep.subr.mxu0 0.0
        %5048 = vmatpush1.xpose.msra.mxu0 0.0
        %5049 = vmatprep.subr.mxu0 0.0
        %5050 = vmatpush1.xpose.msra.mxu0 0.0
        %5051 = vmatprep.subr.mxu0 0.0
        %5052 = vmatpush1.xpose.msra.mxu0 0.0
        %5053 = vmatprep.subr.mxu0 0.0
        %5054 = vmatpush1.xpose.msra.mxu0 0.0
        %5055 = vmatprep.subr.mxu0 0.0
        %5056 = vmatpush1.xpose.msra.mxu0 0.0
        %5057 = vmatprep.subr.mxu0 0.0
        %5058 = vmatpush1.xpose.msra.mxu0 0.0
        %5059 = vmatprep.subr.mxu0 0.0
        %5060 = vmatpush1.xpose.msra.mxu0 0.0
        %5061 = vmatprep.subr.mxu0 0.0
        %5062 = vmatpush1.xpose.msra.mxu0 0.0
        %5063 = vmatprep.subr.mxu0 0.0
        %5064 = vmatpush1.xpose.msra.mxu0 0.0
        %5065 = vmatprep.subr.mxu0 0.0
        %5066 = vmatpush1.xpose.msra.mxu0 0.0
        %5067 = vmatprep.subr.mxu0 0.0
        %5068 = vmatpush1.xpose.msra.mxu0 0.0
        %5069 = vmatprep.subr.mxu0 0.0
        %5070 = vmatpush1.xpose.msra.mxu0 0.0
        %5071 = vmatprep.subr.mxu0 0.0
        %5072 = vmatpush1.xpose.msra.mxu0 %v4993
        %5073 = vmatprep.subr.mxu0 0.0
        %5074 = vmatpush2.xpose.msra.mxu0 0.0
        %5075 = vmatprep.subr.mxu0 0.0
        %5076 = vmatpush2.xpose.msra.mxu0 0.0
        %5077 = vmatprep.subr.mxu0 0.0
        %5078 = vmatpush2.xpose.msra.mxu0 0.0
        %5079 = vmatprep.subr.mxu0 0.0
        %5080 = vmatpush2.xpose.msra.mxu0 0.0
        %5081 = vmatprep.subr.mxu0 0.0
        %5082 = vmatpush2.xpose.msra.mxu0 0.0
        %5083 = vmatprep.subr.mxu0 0.0
        %5084 = vmatpush2.xpose.msra.mxu0 0.0
        %5085 = vmatprep.subr.mxu0 0.0
        %5086 = vmatpush2.xpose.msra.mxu0 0.0
        %5087 = vmatprep.subr.mxu0 0.0
        %5088 = vmatpush2.xpose.msra.mxu0 0.0
        %5089 = vmatprep.subr.mxu0 0.0
        %5090 = vmatpush2.xpose.msra.mxu0 0.0
        %5091 = vmatprep.subr.mxu0 0.0
        %5092 = vmatpush2.xpose.msra.mxu0 0.0
        %5093 = vmatprep.subr.mxu0 0.0
        %5094 = vmatpush2.xpose.msra.mxu0 0.0
        %5095 = vmatprep.subr.mxu0 0.0
        %5096 = vmatpush2.xpose.msra.mxu0 0.0
        %5097 = vmatprep.subr.mxu0 0.0
        %5098 = vmatpush2.xpose.msra.mxu0 0.0
        %5099 = vmatprep.subr.mxu0 0.0
        %5100 = vmatpush2.xpose.msra.mxu0 0.0
        %5101 = vmatprep.subr.mxu0 0.0
        %5102 = vmatpush2.xpose.msra.mxu0 0.0
        %5103 = vmatprep.subr.mxu0 0.0
        %5104 = vmatpush2.xpose.msra.mxu0 0.0
        %5105 = vmatprep.mubr.f32.mxu0 0.0
        %5106 = vmatmul.mubr.f32.gmra.mxu0 %v5040
        %v5107 = vpop.f32.mrf.mxu0
        %v5108 = vadd.f32 0.0, %v5107
        %v5109 = vpop.f32.mrf.mxu0
        %5110 = vdwg.mxu0
        %v5111 = vmul.f32 %v5108, 0.25
        %v5112 = vsel %vm1467, %v5111, -inf
        %5113 = vmax.xlane.f32.xlu0 %v5112
        %v5114 = vpop.xlane.xlu0 %5113
        %v5115 = vsub.f32 %v5111, %v5114
        %v5116 = vmul.f32 %v5115, 1.442695
        %v5117 = vpow.pop %v5116
        %v5118 = vsel %vm1467, %v5117, 0.0
        %5119 = vadd.xlane.f32.xlu0 %v5118
        %v5120 = vpop.xlane.xlu0 %5119
        %v5121 = vrcp.pop %v5120
        %v5122 = vmul.f32 %v5117, %v5121
        %v5123 = vmul.f32 %v5034, %v1031
        %v5124 = vmul.f32 %v4991, %v1036
        %5125 = vmatprep.subr.mxu0 0.0
        %5126 = vmatpush1.xpose.msra.mxu0 0.0
        %5127 = vmatprep.subr.mxu0 0.0
        %5128 = vmatpush1.xpose.msra.mxu0 0.0
        %5129 = vmatprep.subr.mxu0 0.0
        %5130 = vmatpush1.xpose.msra.mxu0 0.0
        %5131 = vmatprep.subr.mxu0 0.0
        %5132 = vmatpush1.xpose.msra.mxu0 0.0
        %5133 = vmatprep.subr.mxu0 0.0
        %5134 = vmatpush1.xpose.msra.mxu0 0.0
        %5135 = vmatprep.subr.mxu0 0.0
        %5136 = vmatpush1.xpose.msra.mxu0 0.0
        %5137 = vmatprep.subr.mxu0 0.0
        %5138 = vmatpush1.xpose.msra.mxu0 0.0
        %5139 = vmatprep.subr.mxu0 0.0
        %5140 = vmatpush1.xpose.msra.mxu0 0.0
        %5141 = vmatprep.subr.mxu0 0.0
        %5142 = vmatpush1.xpose.msra.mxu0 0.0
        %5143 = vmatprep.subr.mxu0 0.0
        %5144 = vmatpush1.xpose.msra.mxu0 0.0
        %5145 = vmatprep.subr.mxu0 0.0
        %5146 = vmatpush1.xpose.msra.mxu0 0.0
        %5147 = vmatprep.subr.mxu0 0.0
        %5148 = vmatpush1.xpose.msra.mxu0 0.0
        %5149 = vmatprep.subr.mxu0 0.0
        %5150 = vmatpush1.xpose.msra.mxu0 0.0
        %5151 = vmatprep.subr.mxu0 0.0
        %5152 = vmatpush1.xpose.msra.mxu0 0.0
        %5153 = vmatprep.subr.mxu0 0.0
        %5154 = vmatpush1.xpose.msra.mxu0 0.0
        %5155 = vmatprep.subr.mxu0 0.0
        %5156 = vmatpush1.xpose.msra.mxu0 %v4993
        %5157 = vmatprep.subr.mxu0 0.0
        %5158 = vmatpush2.xpose.msra.mxu0 0.0
        %5159 = vmatprep.subr.mxu0 0.0
        %5160 = vmatpush2.xpose.msra.mxu0 0.0
        %5161 = vmatprep.subr.mxu0 0.0
        %5162 = vmatpush2.xpose.msra.mxu0 0.0
        %5163 = vmatprep.subr.mxu0 0.0
        %5164 = vmatpush2.xpose.msra.mxu0 0.0
        %5165 = vmatprep.subr.mxu0 0.0
        %5166 = vmatpush2.xpose.msra.mxu0 0.0
        %5167 = vmatprep.subr.mxu0 0.0
        %5168 = vmatpush2.xpose.msra.mxu0 0.0
        %5169 = vmatprep.subr.mxu0 0.0
        %5170 = vmatpush2.xpose.msra.mxu0 0.0
        %5171 = vmatprep.subr.mxu0 0.0
        %5172 = vmatpush2.xpose.msra.mxu0 0.0
        %5173 = vmatprep.subr.mxu0 0.0
        %5174 = vmatpush2.xpose.msra.mxu0 0.0
        %5175 = vmatprep.subr.mxu0 0.0
        %5176 = vmatpush2.xpose.msra.mxu0 0.0
        %5177 = vmatprep.subr.mxu0 0.0
        %5178 = vmatpush2.xpose.msra.mxu0 0.0
        %5179 = vmatprep.subr.mxu0 0.0
        %5180 = vmatpush2.xpose.msra.mxu0 0.0
        %5181 = vmatprep.subr.mxu0 0.0
        %5182 = vmatpush2.xpose.msra.mxu0 0.0
        %5183 = vmatprep.subr.mxu0 0.0
        %5184 = vmatpush2.xpose.msra.mxu0 0.0
        %5185 = vmatprep.subr.mxu0 0.0
        %5186 = vmatpush2.xpose.msra.mxu0 0.0
        %5187 = vmatprep.subr.mxu0 0.0
        %5188 = vmatpush2.xpose.msra.mxu0 0.0
        %5189 = vmatprep.mubr.f32.mxu0 0.0
        %5190 = vmatmul.mubr.f32.gmra.mxu0 %v5124
        %v5191 = vpop.f32.mrf.mxu0
        %v5192 = vadd.f32 0.0, %v5191
        %v5193 = vpop.f32.mrf.mxu0
        %5194 = vdwg.mxu0
        %v5195 = vmul.f32 %v5192, 0.25
        %v5196 = vsel %vm1467, %v5195, -inf
        %5197 = vmax.xlane.f32.xlu0 %v5196
        %v5198 = vpop.xlane.xlu0 %5197
        %v5199 = vsub.f32 %v5195, %v5198
        %v5200 = vmul.f32 %v5199, 1.442695
        %v5201 = vpow.pop %v5200
        %v5202 = vsel %vm1467, %v5201, 0.0
        %5203 = vadd.xlane.f32.xlu0 %v5202
        %v5204 = vpop.xlane.xlu0 %5203
        %v5205 = vrcp.pop %v5204
        %v5206 = vmul.f32 %v5201, %v5205
        %v5207 = vmul.f32 %v5034, %v1036
        %v5209 = vsel %vm1467, %v5206, 0
        %5211 = vmatprep.subr.mxu0 0.0
        %5212 = vmatpush1.msra.mxu0 0.0
        %5213 = vmatprep.subr.mxu0 0.0
        %5214 = vmatpush1.msra.mxu0 0.0
        %5215 = vmatprep.subr.mxu0 0.0
        %5216 = vmatpush1.msra.mxu0 0.0
        %5217 = vmatprep.subr.mxu0 0.0
        %5218 = vmatpush1.msra.mxu0 0.0
        %5219 = vmatprep.subr.mxu0 0.0
        %5220 = vmatpush1.msra.mxu0 0.0
        %5221 = vmatprep.subr.mxu0 0.0
        %5222 = vmatpush1.msra.mxu0 0.0
        %5223 = vmatprep.subr.mxu0 0.0
        %5224 = vmatpush1.msra.mxu0 0.0
        %5225 = vmatprep.subr.mxu0 0.0
        %5226 = vmatpush1.msra.mxu0 0.0
        %5227 = vmatprep.subr.mxu0 0.0
        %5228 = vmatpush1.msra.mxu0 0.0
        %5229 = vmatprep.subr.mxu0 0.0
        %5230 = vmatpush1.msra.mxu0 0.0
        %5231 = vmatprep.subr.mxu0 0.0
        %5232 = vmatpush1.msra.mxu0 0.0
        %5233 = vmatprep.subr.mxu0 0.0
        %5234 = vmatpush1.msra.mxu0 0.0
        %5235 = vmatprep.subr.mxu0 0.0
        %5236 = vmatpush1.msra.mxu0 0.0
        %5237 = vmatprep.subr.mxu0 0.0
        %5238 = vmatpush1.msra.mxu0 0.0
        %5239 = vmatprep.subr.mxu0 0.0
        %5240 = vmatpush1.msra.mxu0 0.0
        %5241 = vmatprep.subr.mxu0 0.0
        %5242 = vmatpush1.msra.mxu0 %v5207
        %5243 = vmatprep.subr.mxu0 0.0
        %5244 = vmatpush2.msra.mxu0 0.0
        %5245 = vmatprep.subr.mxu0 0.0
        %5246 = vmatpush2.msra.mxu0 0.0
        %5247 = vmatprep.subr.mxu0 0.0
        %5248 = vmatpush2.msra.mxu0 0.0
        %5249 = vmatprep.subr.mxu0 0.0
        %5250 = vmatpush2.msra.mxu0 0.0
        %5251 = vmatprep.subr.mxu0 0.0
        %5252 = vmatpush2.msra.mxu0 0.0
        %5253 = vmatprep.subr.mxu0 0.0
        %5254 = vmatpush2.msra.mxu0 0.0
        %5255 = vmatprep.subr.mxu0 0.0
        %5256 = vmatpush2.msra.mxu0 0.0
        %5257 = vmatprep.subr.mxu0 0.0
        %5258 = vmatpush2.msra.mxu0 0.0
        %5259 = vmatprep.subr.mxu0 0.0
        %5260 = vmatpush2.msra.mxu0 0.0
        %5261 = vmatprep.subr.mxu0 0.0
        %5262 = vmatpush2.msra.mxu0 0.0
        %5263 = vmatprep.subr.mxu0 0.0
        %5264 = vmatpush2.msra.mxu0 0.0
        %5265 = vmatprep.subr.mxu0 0.0
        %5266 = vmatpush2.msra.mxu0 0.0
        %5267 = vmatprep.subr.mxu0 0.0
        %5268 = vmatpush2.msra.mxu0 0.0
        %5269 = vmatprep.subr.mxu0 0.0
        %5270 = vmatpush2.msra.mxu0 0.0
        %5271 = vmatprep.subr.mxu0 0.0
        %5272 = vmatpush2.msra.mxu0 0.0
        %5273 = vmatprep.subr.mxu0 0.0
        %5274 = vmatpush2.msra.mxu0 0.0
        %5275 = vmatprep.mubr.f32.mxu0 0.0
        %5276 = vmatmul.mubr.f32.gmra.mxu0 %v5209
        %v5277 = vpop.f32.mrf.mxu0
        %v5278 = vadd.f32 0.0, %v5277
        %v5279 = vpop.f32.mrf.mxu0
        %5280 = vdwg.mxu0
        %v5282 = vsel %vm1467, %v5122, 0
        %5284 = vmatprep.subr.mxu0 0.0
        %5285 = vmatpush1.msra.mxu0 0.0
        %5286 = vmatprep.subr.mxu0 0.0
        %5287 = vmatpush1.msra.mxu0 0.0
        %5288 = vmatprep.subr.mxu0 0.0
        %5289 = vmatpush1.msra.mxu0 0.0
        %5290 = vmatprep.subr.mxu0 0.0
        %5291 = vmatpush1.msra.mxu0 0.0
        %5292 = vmatprep.subr.mxu0 0.0
        %5293 = vmatpush1.msra.mxu0 0.0
        %5294 = vmatprep.subr.mxu0 0.0
        %5295 = vmatpush1.msra.mxu0 0.0
        %5296 = vmatprep.subr.mxu0 0.0
        %5297 = vmatpush1.msra.mxu0 0.0
        %5298 = vmatprep.subr.mxu0 0.0
        %5299 = vmatpush1.msra.mxu0 0.0
        %5300 = vmatprep.subr.mxu0 0.0
        %5301 = vmatpush1.msra.mxu0 0.0
        %5302 = vmatprep.subr.mxu0 0.0
        %5303 = vmatpush1.msra.mxu0 0.0
        %5304 = vmatprep.subr.mxu0 0.0
        %5305 = vmatpush1.msra.mxu0 0.0
        %5306 = vmatprep.subr.mxu0 0.0
        %5307 = vmatpush1.msra.mxu0 0.0
        %5308 = vmatprep.subr.mxu0 0.0
        %5309 = vmatpush1.msra.mxu0 0.0
        %5310 = vmatprep.subr.mxu0 0.0
        %5311 = vmatpush1.msra.mxu0 0.0
        %5312 = vmatprep.subr.mxu0 0.0
        %5313 = vmatpush1.msra.mxu0 0.0
        %5314 = vmatprep.subr.mxu0 0.0
        %5315 = vmatpush1.msra.mxu0 %v5123
        %5316 = vmatprep.subr.mxu0 0.0
        %5317 = vmatpush2.msra.mxu0 0.0
        %5318 = vmatprep.subr.mxu0 0.0
        %5319 = vmatpush2.msra.mxu0 0.0
        %5320 = vmatprep.subr.mxu0 0.0
        %5321 = vmatpush2.msra.mxu0 0.0
        %5322 = vmatprep.subr.mxu0 0.0
        %5323 = vmatpush2.msra.mxu0 0.0
        %5324 = vmatprep.subr.mxu0 0.0
        %5325 = vmatpush2.msra.mxu0 0.0
        %5326 = vmatprep.subr.mxu0 0.0
        %5327 = vmatpush2.msra.mxu0 0.0
        %5328 = vmatprep.subr.mxu0 0.0
        %5329 = vmatpush2.msra.mxu0 0.0
        %5330 = vmatprep.subr.mxu0 0.0
        %5331 = vmatpush2.msra.mxu0 0.0
        %5332 = vmatprep.subr.mxu0 0.0
        %5333 = vmatpush2.msra.mxu0 0.0
        %5334 = vmatprep.subr.mxu0 0.0
        %5335 = vmatpush2.msra.mxu0 0.0
        %5336 = vmatprep.subr.mxu0 0.0
        %5337 = vmatpush2.msra.mxu0 0.0
        %5338 = vmatprep.subr.mxu0 0.0
        %5339 = vmatpush2.msra.mxu0 0.0
        %5340 = vmatprep.subr.mxu0 0.0
        %5341 = vmatpush2.msra.mxu0 0.0
        %5342 = vmatprep.subr.mxu0 0.0
        %5343 = vmatpush2.msra.mxu0 0.0
        %5344 = vmatprep.subr.mxu0 0.0
        %5345 = vmatpush2.msra.mxu0 0.0
        %5346 = vmatprep.subr.mxu0 0.0
        %5347 = vmatpush2.msra.mxu0 0.0
        %5348 = vmatprep.mubr.f32.mxu0 0.0
        %5349 = vmatmul.mubr.f32.gmra.mxu0 %v5282
        %v5350 = vpop.f32.mrf.mxu0
        %v5351 = vadd.f32 %v5278, %v5350
        %v5352 = vpop.f32.mrf.mxu0
        %5353 = vdwg.mxu0
        %v5354 = vmul.f32 %v4991, %v1041
        %5355 = vmatprep.subr.mxu0 0.0
        %5356 = vmatpush1.xpose.msra.mxu0 0.0
        %5357 = vmatprep.subr.mxu0 0.0
        %5358 = vmatpush1.xpose.msra.mxu0 0.0
        %5359 = vmatprep.subr.mxu0 0.0
        %5360 = vmatpush1.xpose.msra.mxu0 0.0
        %5361 = vmatprep.subr.mxu0 0.0
        %5362 = vmatpush1.xpose.msra.mxu0 0.0
        %5363 = vmatprep.subr.mxu0 0.0
        %5364 = vmatpush1.xpose.msra.mxu0 0.0
        %5365 = vmatprep.subr.mxu0 0.0
        %5366 = vmatpush1.xpose.msra.mxu0 0.0
        %5367 = vmatprep.subr.mxu0 0.0
        %5368 = vmatpush1.xpose.msra.mxu0 0.0
        %5369 = vmatprep.subr.mxu0 0.0
        %5370 = vmatpush1.xpose.msra.mxu0 0.0
        %5371 = vmatprep.subr.mxu0 0.0
        %5372 = vmatpush1.xpose.msra.mxu0 0.0
        %5373 = vmatprep.subr.mxu0 0.0
        %5374 = vmatpush1.xpose.msra.mxu0 0.0
        %5375 = vmatprep.subr.mxu0 0.0
        %5376 = vmatpush1.xpose.msra.mxu0 0.0
        %5377 = vmatprep.subr.mxu0 0.0
        %5378 = vmatpush1.xpose.msra.mxu0 0.0
        %5379 = vmatprep.subr.mxu0 0.0
        %5380 = vmatpush1.xpose.msra.mxu0 0.0
        %5381 = vmatprep.subr.mxu0 0.0
        %5382 = vmatpush1.xpose.msra.mxu0 0.0
        %5383 = vmatprep.subr.mxu0 0.0
        %5384 = vmatpush1.xpose.msra.mxu0 0.0
        %5385 = vmatprep.subr.mxu0 0.0
        %5386 = vmatpush1.xpose.msra.mxu0 %v4993
        %5387 = vmatprep.subr.mxu0 0.0
        %5388 = vmatpush2.xpose.msra.mxu0 0.0
        %5389 = vmatprep.subr.mxu0 0.0
        %5390 = vmatpush2.xpose.msra.mxu0 0.0
        %5391 = vmatprep.subr.mxu0 0.0
        %5392 = vmatpush2.xpose.msra.mxu0 0.0
        %5393 = vmatprep.subr.mxu0 0.0
        %5394 = vmatpush2.xpose.msra.mxu0 0.0
        %5395 = vmatprep.subr.mxu0 0.0
        %5396 = vmatpush2.xpose.msra.mxu0 0.0
        %5397 = vmatprep.subr.mxu0 0.0
        %5398 = vmatpush2.xpose.msra.mxu0 0.0
        %5399 = vmatprep.subr.mxu0 0.0
        %5400 = vmatpush2.xpose.msra.mxu0 0.0
        %5401 = vmatprep.subr.mxu0 0.0
        %5402 = vmatpush2.xpose.msra.mxu0 0.0
        %5403 = vmatprep.subr.mxu0 0.0
        %5404 = vmatpush2.xpose.msra.mxu0 0.0
        %5405 = vmatprep.subr.mxu0 0.0
        %5406 = vmatpush2.xpose.msra.mxu0 0.0
        %5407 = vmatprep.subr.mxu0 0.0
        %5408 = vmatpush2.xpose.msra.mxu0 0.0
        %5409 = vmatprep.subr.mxu0 0.0
        %5410 = vmatpush2.xpose.msra.mxu0 0.0
        %5411 = vmatprep.subr.mxu0 0.0
        %5412 = vmatpush2.xpose.msra.mxu0 0.0
        %5413 = vmatprep.subr.mxu0 0.0
        %5414 = vmatpush2.xpose.msra.mxu0 0.0
        %5415 = vmatprep.subr.mxu0 0.0
        %5416 = vmatpush2.xpose.msra.mxu0 0.0
        %5417 = vmatprep.subr.mxu0 0.0
        %5418 = vmatpush2.xpose.msra.mxu0 0.0
        %5419 = vmatprep.mubr.f32.mxu0 0.0
        %5420 = vmatmul.mubr.f32.gmra.mxu0 %v5354
        %v5421 = vpop.f32.mrf.mxu0
        %v5422 = vadd.f32 0.0, %v5421
        %v5423 = vpop.f32.mrf.mxu0
        %5424 = vdwg.mxu0
        %v5425 = vmul.f32 %v5422, 0.25
        %v5426 = vsel %vm1467, %v5425, -inf
        %5427 = vmax.xlane.f32.xlu0 %v5426
        %v5428 = vpop.xlane.xlu0 %5427
        %v5429 = vsub.f32 %v5425, %v5428
        %v5430 = vmul.f32 %v5429, 1.442695
        %v5431 = vpow.pop %v5430
        %v5432 = vsel %vm1467, %v5431, 0.0
        %5433 = vadd.xlane.f32.xlu0 %v5432
        %v5434 = vpop.xlane.xlu0 %5433
        %v5435 = vrcp.pop %v5434
        %v5436 = vmul.f32 %v5431, %v5435
        %v5437 = vmul.f32 %v5034, %v1041
        %v5439 = vsel %vm1467, %v5436, 0
        %5441 = vmatprep.subr.mxu0 0.0
        %5442 = vmatpush1.msra.mxu0 0.0
        %5443 = vmatprep.subr.mxu0 0.0
        %5444 = vmatpush1.msra.mxu0 0.0
        %5445 = vmatprep.subr.mxu0 0.0
        %5446 = vmatpush1.msra.mxu0 0.0
        %5447 = vmatprep.subr.mxu0 0.0
        %5448 = vmatpush1.msra.mxu0 0.0
        %5449 = vmatprep.subr.mxu0 0.0
        %5450 = vmatpush1.msra.mxu0 0.0
        %5451 = vmatprep.subr.mxu0 0.0
        %5452 = vmatpush1.msra.mxu0 0.0
        %5453 = vmatprep.subr.mxu0 0.0
        %5454 = vmatpush1.msra.mxu0 0.0
        %5455 = vmatprep.subr.mxu0 0.0
        %5456 = vmatpush1.msra.mxu0 0.0
        %5457 = vmatprep.subr.mxu0 0.0
        %5458 = vmatpush1.msra.mxu0 0.0
        %5459 = vmatprep.subr.mxu0 0.0
        %5460 = vmatpush1.msra.mxu0 0.0
        %5461 = vmatprep.subr.mxu0 0.0
        %5462 = vmatpush1.msra.mxu0 0.0
        %5463 = vmatprep.subr.mxu0 0.0
        %5464 = vmatpush1.msra.mxu0 0.0
        %5465 = vmatprep.subr.mxu0 0.0
        %5466 = vmatpush1.msra.mxu0 0.0
        %5467 = vmatprep.subr.mxu0 0.0
        %5468 = vmatpush1.msra.mxu0 0.0
        %5469 = vmatprep.subr.mxu0 0.0
        %5470 = vmatpush1.msra.mxu0 0.0
        %5471 = vmatprep.subr.mxu0 0.0
        %5472 = vmatpush1.msra.mxu0 %v5437
        %5473 = vmatprep.subr.mxu0 0.0
        %5474 = vmatpush2.msra.mxu0 0.0
        %5475 = vmatprep.subr.mxu0 0.0
        %5476 = vmatpush2.msra.mxu0 0.0
        %5477 = vmatprep.subr.mxu0 0.0
        %5478 = vmatpush2.msra.mxu0 0.0
        %5479 = vmatprep.subr.mxu0 0.0
        %5480 = vmatpush2.msra.mxu0 0.0
        %5481 = vmatprep.subr.mxu0 0.0
        %5482 = vmatpush2.msra.mxu0 0.0
        %5483 = vmatprep.subr.mxu0 0.0
        %5484 = vmatpush2.msra.mxu0 0.0
        %5485 = vmatprep.subr.mxu0 0.0
        %5486 = vmatpush2.msra.mxu0 0.0
        %5487 = vmatprep.subr.mxu0 0.0
        %5488 = vmatpush2.msra.mxu0 0.0
        %5489 = vmatprep.subr.mxu0 0.0
        %5490 = vmatpush2.msra.mxu0 0.0
        %5491 = vmatprep.subr.mxu0 0.0
        %5492 = vmatpush2.msra.mxu0 0.0
        %5493 = vmatprep.subr.mxu0 0.0
        %5494 = vmatpush2.msra.mxu0 0.0
        %5495 = vmatprep.subr.mxu0 0.0
        %5496 = vmatpush2.msra.mxu0 0.0
        %5497 = vmatprep.subr.mxu0 0.0
        %5498 = vmatpush2.msra.mxu0 0.0
        %5499 = vmatprep.subr.mxu0 0.0
        %5500 = vmatpush2.msra.mxu0 0.0
        %5501 = vmatprep.subr.mxu0 0.0
        %5502 = vmatpush2.msra.mxu0 0.0
        %5503 = vmatprep.subr.mxu0 0.0
        %5504 = vmatpush2.msra.mxu0 0.0
        %5505 = vmatprep.mubr.f32.mxu0 0.0
        %5506 = vmatmul.mubr.f32.gmra.mxu0 %v5439
        %v5507 = vpop.f32.mrf.mxu0
        %v5508 = vadd.f32 0.0, %v5507
        %v5509 = vpop.f32.mrf.mxu0
        %5510 = vdwg.mxu0
        %v5511 = vadd.f32 %v5351, %v5508
        %v5512 = vmul.f32 %v4991, %v1046
        %5513 = vmatprep.subr.mxu0 0.0
        %5514 = vmatpush1.xpose.msra.mxu0 0.0
        %5515 = vmatprep.subr.mxu0 0.0
        %5516 = vmatpush1.xpose.msra.mxu0 0.0
        %5517 = vmatprep.subr.mxu0 0.0
        %5518 = vmatpush1.xpose.msra.mxu0 0.0
        %5519 = vmatprep.subr.mxu0 0.0
        %5520 = vmatpush1.xpose.msra.mxu0 0.0
        %5521 = vmatprep.subr.mxu0 0.0
        %5522 = vmatpush1.xpose.msra.mxu0 0.0
        %5523 = vmatprep.subr.mxu0 0.0
        %5524 = vmatpush1.xpose.msra.mxu0 0.0
        %5525 = vmatprep.subr.mxu0 0.0
        %5526 = vmatpush1.xpose.msra.mxu0 0.0
        %5527 = vmatprep.subr.mxu0 0.0
        %5528 = vmatpush1.xpose.msra.mxu0 0.0
        %5529 = vmatprep.subr.mxu0 0.0
        %5530 = vmatpush1.xpose.msra.mxu0 0.0
        %5531 = vmatprep.subr.mxu0 0.0
        %5532 = vmatpush1.xpose.msra.mxu0 0.0
        %5533 = vmatprep.subr.mxu0 0.0
        %5534 = vmatpush1.xpose.msra.mxu0 0.0
        %5535 = vmatprep.subr.mxu0 0.0
        %5536 = vmatpush1.xpose.msra.mxu0 0.0
        %5537 = vmatprep.subr.mxu0 0.0
        %5538 = vmatpush1.xpose.msra.mxu0 0.0
        %5539 = vmatprep.subr.mxu0 0.0
        %5540 = vmatpush1.xpose.msra.mxu0 0.0
        %5541 = vmatprep.subr.mxu0 0.0
        %5542 = vmatpush1.xpose.msra.mxu0 0.0
        %5543 = vmatprep.subr.mxu0 0.0
        %5544 = vmatpush1.xpose.msra.mxu0 %v4993
        %5545 = vmatprep.subr.mxu0 0.0
        %5546 = vmatpush2.xpose.msra.mxu0 0.0
        %5547 = vmatprep.subr.mxu0 0.0
        %5548 = vmatpush2.xpose.msra.mxu0 0.0
        %5549 = vmatprep.subr.mxu0 0.0
        %5550 = vmatpush2.xpose.msra.mxu0 0.0
        %5551 = vmatprep.subr.mxu0 0.0
        %5552 = vmatpush2.xpose.msra.mxu0 0.0
        %5553 = vmatprep.subr.mxu0 0.0
        %5554 = vmatpush2.xpose.msra.mxu0 0.0
        %5555 = vmatprep.subr.mxu0 0.0
        %5556 = vmatpush2.xpose.msra.mxu0 0.0
        %5557 = vmatprep.subr.mxu0 0.0
        %5558 = vmatpush2.xpose.msra.mxu0 0.0
        %5559 = vmatprep.subr.mxu0 0.0
        %5560 = vmatpush2.xpose.msra.mxu0 0.0
        %5561 = vmatprep.subr.mxu0 0.0
        %5562 = vmatpush2.xpose.msra.mxu0 0.0
        %5563 = vmatprep.subr.mxu0 0.0
        %5564 = vmatpush2.xpose.msra.mxu0 0.0
        %5565 = vmatprep.subr.mxu0 0.0
        %5566 = vmatpush2.xpose.msra.mxu0 0.0
        %5567 = vmatprep.subr.mxu0 0.0
        %5568 = vmatpush2.xpose.msra.mxu0 0.0
        %5569 = vmatprep.subr.mxu0 0.0
        %5570 = vmatpush2.xpose.msra.mxu0 0.0
        %5571 = vmatprep.subr.mxu0 0.0
        %5572 = vmatpush2.xpose.msra.mxu0 0.0
        %5573 = vmatprep.subr.mxu0 0.0
        %5574 = vmatpush2.xpose.msra.mxu0 0.0
        %5575 = vmatprep.subr.mxu0 0.0
        %5576 = vmatpush2.xpose.msra.mxu0 0.0
        %5577 = vmatprep.mubr.f32.mxu0 0.0
        %5578 = vmatmul.mubr.f32.gmra.mxu0 %v5512
        %v5579 = vpop.f32.mrf.mxu0
        %v5580 = vadd.f32 0.0, %v5579
        %v5581 = vpop.f32.mrf.mxu0
        %5582 = vdwg.mxu0
        %v5583 = vmul.f32 %v5580, 0.25
        %v5584 = vsel %vm1467, %v5583, -inf
        %5585 = vmax.xlane.f32.xlu0 %v5584
        %v5586 = vpop.xlane.xlu0 %5585
        %v5587 = vsub.f32 %v5583, %v5586
        %v5588 = vmul.f32 %v5587, 1.442695
        %v5589 = vpow.pop %v5588
        %v5590 = vsel %vm1467, %v5589, 0.0
        %5591 = vadd.xlane.f32.xlu0 %v5590
        %v5592 = vpop.xlane.xlu0 %5591
        %v5593 = vrcp.pop %v5592
        %v5594 = vmul.f32 %v5589, %v5593
        %v5595 = vmul.f32 %v5034, %v1046
        %v5597 = vsel %vm1467, %v5594, 0
        %5599 = vmatprep.subr.mxu0 0.0
        %5600 = vmatpush1.msra.mxu0 0.0
        %5601 = vmatprep.subr.mxu0 0.0
        %5602 = vmatpush1.msra.mxu0 0.0
        %5603 = vmatprep.subr.mxu0 0.0
        %5604 = vmatpush1.msra.mxu0 0.0
        %5605 = vmatprep.subr.mxu0 0.0
        %5606 = vmatpush1.msra.mxu0 0.0
        %5607 = vmatprep.subr.mxu0 0.0
        %5608 = vmatpush1.msra.mxu0 0.0
        %5609 = vmatprep.subr.mxu0 0.0
        %5610 = vmatpush1.msra.mxu0 0.0
        %5611 = vmatprep.subr.mxu0 0.0
        %5612 = vmatpush1.msra.mxu0 0.0
        %5613 = vmatprep.subr.mxu0 0.0
        %5614 = vmatpush1.msra.mxu0 0.0
        %5615 = vmatprep.subr.mxu0 0.0
        %5616 = vmatpush1.msra.mxu0 0.0
        %5617 = vmatprep.subr.mxu0 0.0
        %5618 = vmatpush1.msra.mxu0 0.0
        %5619 = vmatprep.subr.mxu0 0.0
        %5620 = vmatpush1.msra.mxu0 0.0
        %5621 = vmatprep.subr.mxu0 0.0
        %5622 = vmatpush1.msra.mxu0 0.0
        %5623 = vmatprep.subr.mxu0 0.0
        %5624 = vmatpush1.msra.mxu0 0.0
        %5625 = vmatprep.subr.mxu0 0.0
        %5626 = vmatpush1.msra.mxu0 0.0
        %5627 = vmatprep.subr.mxu0 0.0
        %5628 = vmatpush1.msra.mxu0 0.0
        %5629 = vmatprep.subr.mxu0 0.0
        %5630 = vmatpush1.msra.mxu0 %v5595
        %5631 = vmatprep.subr.mxu0 0.0
        %5632 = vmatpush2.msra.mxu0 0.0
        %5633 = vmatprep.subr.mxu0 0.0
        %5634 = vmatpush2.msra.mxu0 0.0
        %5635 = vmatprep.subr.mxu0 0.0
        %5636 = vmatpush2.msra.mxu0 0.0
        %5637 = vmatprep.subr.mxu0 0.0
        %5638 = vmatpush2.msra.mxu0 0.0
        %5639 = vmatprep.subr.mxu0 0.0
        %5640 = vmatpush2.msra.mxu0 0.0
        %5641 = vmatprep.subr.mxu0 0.0
        %5642 = vmatpush2.msra.mxu0 0.0
        %5643 = vmatprep.subr.mxu0 0.0
        %5644 = vmatpush2.msra.mxu0 0.0
        %5645 = vmatprep.subr.mxu0 0.0
        %5646 = vmatpush2.msra.mxu0 0.0
        %5647 = vmatprep.subr.mxu0 0.0
        %5648 = vmatpush2.msra.mxu0 0.0
        %5649 = vmatprep.subr.mxu0 0.0
        %5650 = vmatpush2.msra.mxu0 0.0
        %5651 = vmatprep.subr.mxu0 0.0
        %5652 = vmatpush2.msra.mxu0 0.0
        %5653 = vmatprep.subr.mxu0 0.0
        %5654 = vmatpush2.msra.mxu0 0.0
        %5655 = vmatprep.subr.mxu0 0.0
        %5656 = vmatpush2.msra.mxu0 0.0
        %5657 = vmatprep.subr.mxu0 0.0
        %5658 = vmatpush2.msra.mxu0 0.0
        %5659 = vmatprep.subr.mxu0 0.0
        %5660 = vmatpush2.msra.mxu0 0.0
        %5661 = vmatprep.subr.mxu0 0.0
        %5662 = vmatpush2.msra.mxu0 0.0
        %5663 = vmatprep.mubr.f32.mxu0 0.0
        %5664 = vmatmul.mubr.f32.gmra.mxu0 %v5597
        %v5665 = vpop.f32.mrf.mxu0
        %v5666 = vadd.f32 0.0, %v5665
        %v5667 = vpop.f32.mrf.mxu0
        %5668 = vdwg.mxu0
        %v5669 = vadd.f32 %v5511, %v5666
        %v5670 = vmul.f32 %v4991, %v1051
        %5671 = vmatprep.subr.mxu0 0.0
        %5672 = vmatpush1.xpose.msra.mxu0 0.0
        %5673 = vmatprep.subr.mxu0 0.0
        %5674 = vmatpush1.xpose.msra.mxu0 0.0
        %5675 = vmatprep.subr.mxu0 0.0
        %5676 = vmatpush1.xpose.msra.mxu0 0.0
        %5677 = vmatprep.subr.mxu0 0.0
        %5678 = vmatpush1.xpose.msra.mxu0 0.0
        %5679 = vmatprep.subr.mxu0 0.0
        %5680 = vmatpush1.xpose.msra.mxu0 0.0
        %5681 = vmatprep.subr.mxu0 0.0
        %5682 = vmatpush1.xpose.msra.mxu0 0.0
        %5683 = vmatprep.subr.mxu0 0.0
        %5684 = vmatpush1.xpose.msra.mxu0 0.0
        %5685 = vmatprep.subr.mxu0 0.0
        %5686 = vmatpush1.xpose.msra.mxu0 0.0
        %5687 = vmatprep.subr.mxu0 0.0
        %5688 = vmatpush1.xpose.msra.mxu0 0.0
        %5689 = vmatprep.subr.mxu0 0.0
        %5690 = vmatpush1.xpose.msra.mxu0 0.0
        %5691 = vmatprep.subr.mxu0 0.0
        %5692 = vmatpush1.xpose.msra.mxu0 0.0
        %5693 = vmatprep.subr.mxu0 0.0
        %5694 = vmatpush1.xpose.msra.mxu0 0.0
        %5695 = vmatprep.subr.mxu0 0.0
        %5696 = vmatpush1.xpose.msra.mxu0 0.0
        %5697 = vmatprep.subr.mxu0 0.0
        %5698 = vmatpush1.xpose.msra.mxu0 0.0
        %5699 = vmatprep.subr.mxu0 0.0
        %5700 = vmatpush1.xpose.msra.mxu0 0.0
        %5701 = vmatprep.subr.mxu0 0.0
        %5702 = vmatpush1.xpose.msra.mxu0 %v4993
        %5703 = vmatprep.subr.mxu0 0.0
        %5704 = vmatpush2.xpose.msra.mxu0 0.0
        %5705 = vmatprep.subr.mxu0 0.0
        %5706 = vmatpush2.xpose.msra.mxu0 0.0
        %5707 = vmatprep.subr.mxu0 0.0
        %5708 = vmatpush2.xpose.msra.mxu0 0.0
        %5709 = vmatprep.subr.mxu0 0.0
        %5710 = vmatpush2.xpose.msra.mxu0 0.0
        %5711 = vmatprep.subr.mxu0 0.0
        %5712 = vmatpush2.xpose.msra.mxu0 0.0
        %5713 = vmatprep.subr.mxu0 0.0
        %5714 = vmatpush2.xpose.msra.mxu0 0.0
        %5715 = vmatprep.subr.mxu0 0.0
        %5716 = vmatpush2.xpose.msra.mxu0 0.0
        %5717 = vmatprep.subr.mxu0 0.0
        %5718 = vmatpush2.xpose.msra.mxu0 0.0
        %5719 = vmatprep.subr.mxu0 0.0
        %5720 = vmatpush2.xpose.msra.mxu0 0.0
        %5721 = vmatprep.subr.mxu0 0.0
        %5722 = vmatpush2.xpose.msra.mxu0 0.0
        %5723 = vmatprep.subr.mxu0 0.0
        %5724 = vmatpush2.xpose.msra.mxu0 0.0
        %5725 = vmatprep.subr.mxu0 0.0
        %5726 = vmatpush2.xpose.msra.mxu0 0.0
        %5727 = vmatprep.subr.mxu0 0.0
        %5728 = vmatpush2.xpose.msra.mxu0 0.0
        %5729 = vmatprep.subr.mxu0 0.0
        %5730 = vmatpush2.xpose.msra.mxu0 0.0
        %5731 = vmatprep.subr.mxu0 0.0
        %5732 = vmatpush2.xpose.msra.mxu0 0.0
        %5733 = vmatprep.subr.mxu0 0.0
        %5734 = vmatpush2.xpose.msra.mxu0 0.0
        %5735 = vmatprep.mubr.f32.mxu0 0.0
        %5736 = vmatmul.mubr.f32.gmra.mxu0 %v5670
        %v5737 = vpop.f32.mrf.mxu0
        %v5738 = vadd.f32 0.0, %v5737
        %v5739 = vpop.f32.mrf.mxu0
        %5740 = vdwg.mxu0
        %v5741 = vmul.f32 %v5738, 0.25
        %v5742 = vsel %vm1467, %v5741, -inf
        %5743 = vmax.xlane.f32.xlu0 %v5742
        %v5744 = vpop.xlane.xlu0 %5743
        %v5745 = vsub.f32 %v5741, %v5744
        %v5746 = vmul.f32 %v5745, 1.442695
        %v5747 = vpow.pop %v5746
        %v5748 = vsel %vm1467, %v5747, 0.0
        %5749 = vadd.xlane.f32.xlu0 %v5748
        %v5750 = vpop.xlane.xlu0 %5749
        %v5751 = vrcp.pop %v5750
        %v5752 = vmul.f32 %v5747, %v5751
        %v5753 = vmul.f32 %v5034, %v1051
        %v5755 = vsel %vm1467, %v5752, 0
        %5757 = vmatprep.subr.mxu0 0.0
        %5758 = vmatpush1.msra.mxu0 0.0
        %5759 = vmatprep.subr.mxu0 0.0
        %5760 = vmatpush1.msra.mxu0 0.0
        %5761 = vmatprep.subr.mxu0 0.0
        %5762 = vmatpush1.msra.mxu0 0.0
        %5763 = vmatprep.subr.mxu0 0.0
        %5764 = vmatpush1.msra.mxu0 0.0
        %5765 = vmatprep.subr.mxu0 0.0
        %5766 = vmatpush1.msra.mxu0 0.0
        %5767 = vmatprep.subr.mxu0 0.0
        %5768 = vmatpush1.msra.mxu0 0.0
        %5769 = vmatprep.subr.mxu0 0.0
        %5770 = vmatpush1.msra.mxu0 0.0
        %5771 = vmatprep.subr.mxu0 0.0
        %5772 = vmatpush1.msra.mxu0 0.0
        %5773 = vmatprep.subr.mxu0 0.0
        %5774 = vmatpush1.msra.mxu0 0.0
        %5775 = vmatprep.subr.mxu0 0.0
        %5776 = vmatpush1.msra.mxu0 0.0
        %5777 = vmatprep.subr.mxu0 0.0
        %5778 = vmatpush1.msra.mxu0 0.0
        %5779 = vmatprep.subr.mxu0 0.0
        %5780 = vmatpush1.msra.mxu0 0.0
        %5781 = vmatprep.subr.mxu0 0.0
        %5782 = vmatpush1.msra.mxu0 0.0
        %5783 = vmatprep.subr.mxu0 0.0
        %5784 = vmatpush1.msra.mxu0 0.0
        %5785 = vmatprep.subr.mxu0 0.0
        %5786 = vmatpush1.msra.mxu0 0.0
        %5787 = vmatprep.subr.mxu0 0.0
        %5788 = vmatpush1.msra.mxu0 %v5753
        %5789 = vmatprep.subr.mxu0 0.0
        %5790 = vmatpush2.msra.mxu0 0.0
        %5791 = vmatprep.subr.mxu0 0.0
        %5792 = vmatpush2.msra.mxu0 0.0
        %5793 = vmatprep.subr.mxu0 0.0
        %5794 = vmatpush2.msra.mxu0 0.0
        %5795 = vmatprep.subr.mxu0 0.0
        %5796 = vmatpush2.msra.mxu0 0.0
        %5797 = vmatprep.subr.mxu0 0.0
        %5798 = vmatpush2.msra.mxu0 0.0
        %5799 = vmatprep.subr.mxu0 0.0
        %5800 = vmatpush2.msra.mxu0 0.0
        %5801 = vmatprep.subr.mxu0 0.0
        %5802 = vmatpush2.msra.mxu0 0.0
        %5803 = vmatprep.subr.mxu0 0.0
        %5804 = vmatpush2.msra.mxu0 0.0
        %5805 = vmatprep.subr.mxu0 0.0
        %5806 = vmatpush2.msra.mxu0 0.0
        %5807 = vmatprep.subr.mxu0 0.0
        %5808 = vmatpush2.msra.mxu0 0.0
        %5809 = vmatprep.subr.mxu0 0.0
        %5810 = vmatpush2.msra.mxu0 0.0
        %5811 = vmatprep.subr.mxu0 0.0
        %5812 = vmatpush2.msra.mxu0 0.0
        %5813 = vmatprep.subr.mxu0 0.0
        %5814 = vmatpush2.msra.mxu0 0.0
        %5815 = vmatprep.subr.mxu0 0.0
        %5816 = vmatpush2.msra.mxu0 0.0
        %5817 = vmatprep.subr.mxu0 0.0
        %5818 = vmatpush2.msra.mxu0 0.0
        %5819 = vmatprep.subr.mxu0 0.0
        %5820 = vmatpush2.msra.mxu0 0.0
        %5821 = vmatprep.mubr.f32.mxu0 0.0
        %5822 = vmatmul.mubr.f32.gmra.mxu0 %v5755
        %v5823 = vpop.f32.mrf.mxu0
        %v5824 = vadd.f32 0.0, %v5823
        %v5825 = vpop.f32.mrf.mxu0
        %5826 = vdwg.mxu0
        %v5827 = vadd.f32 %v5669, %v5824
        %v5828 = vmul.f32 %v4991, %v1056
        %5829 = vmatprep.subr.mxu0 0.0
        %5830 = vmatpush1.xpose.msra.mxu0 0.0
        %5831 = vmatprep.subr.mxu0 0.0
        %5832 = vmatpush1.xpose.msra.mxu0 0.0
        %5833 = vmatprep.subr.mxu0 0.0
        %5834 = vmatpush1.xpose.msra.mxu0 0.0
        %5835 = vmatprep.subr.mxu0 0.0
        %5836 = vmatpush1.xpose.msra.mxu0 0.0
        %5837 = vmatprep.subr.mxu0 0.0
        %5838 = vmatpush1.xpose.msra.mxu0 0.0
        %5839 = vmatprep.subr.mxu0 0.0
        %5840 = vmatpush1.xpose.msra.mxu0 0.0
        %5841 = vmatprep.subr.mxu0 0.0
        %5842 = vmatpush1.xpose.msra.mxu0 0.0
        %5843 = vmatprep.subr.mxu0 0.0
        %5844 = vmatpush1.xpose.msra.mxu0 0.0
        %5845 = vmatprep.subr.mxu0 0.0
        %5846 = vmatpush1.xpose.msra.mxu0 0.0
        %5847 = vmatprep.subr.mxu0 0.0
        %5848 = vmatpush1.xpose.msra.mxu0 0.0
        %5849 = vmatprep.subr.mxu0 0.0
        %5850 = vmatpush1.xpose.msra.mxu0 0.0
        %5851 = vmatprep.subr.mxu0 0.0
        %5852 = vmatpush1.xpose.msra.mxu0 0.0
        %5853 = vmatprep.subr.mxu0 0.0
        %5854 = vmatpush1.xpose.msra.mxu0 0.0
        %5855 = vmatprep.subr.mxu0 0.0
        %5856 = vmatpush1.xpose.msra.mxu0 0.0
        %5857 = vmatprep.subr.mxu0 0.0
        %5858 = vmatpush1.xpose.msra.mxu0 0.0
        %5859 = vmatprep.subr.mxu0 0.0
        %5860 = vmatpush1.xpose.msra.mxu0 %v4993
        %5861 = vmatprep.subr.mxu0 0.0
        %5862 = vmatpush2.xpose.msra.mxu0 0.0
        %5863 = vmatprep.subr.mxu0 0.0
        %5864 = vmatpush2.xpose.msra.mxu0 0.0
        %5865 = vmatprep.subr.mxu0 0.0
        %5866 = vmatpush2.xpose.msra.mxu0 0.0
        %5867 = vmatprep.subr.mxu0 0.0
        %5868 = vmatpush2.xpose.msra.mxu0 0.0
        %5869 = vmatprep.subr.mxu0 0.0
        %5870 = vmatpush2.xpose.msra.mxu0 0.0
        %5871 = vmatprep.subr.mxu0 0.0
        %5872 = vmatpush2.xpose.msra.mxu0 0.0
        %5873 = vmatprep.subr.mxu0 0.0
        %5874 = vmatpush2.xpose.msra.mxu0 0.0
        %5875 = vmatprep.subr.mxu0 0.0
        %5876 = vmatpush2.xpose.msra.mxu0 0.0
        %5877 = vmatprep.subr.mxu0 0.0
        %5878 = vmatpush2.xpose.msra.mxu0 0.0
        %5879 = vmatprep.subr.mxu0 0.0
        %5880 = vmatpush2.xpose.msra.mxu0 0.0
        %5881 = vmatprep.subr.mxu0 0.0
        %5882 = vmatpush2.xpose.msra.mxu0 0.0
        %5883 = vmatprep.subr.mxu0 0.0
        %5884 = vmatpush2.xpose.msra.mxu0 0.0
        %5885 = vmatprep.subr.mxu0 0.0
        %5886 = vmatpush2.xpose.msra.mxu0 0.0
        %5887 = vmatprep.subr.mxu0 0.0
        %5888 = vmatpush2.xpose.msra.mxu0 0.0
        %5889 = vmatprep.subr.mxu0 0.0
        %5890 = vmatpush2.xpose.msra.mxu0 0.0
        %5891 = vmatprep.subr.mxu0 0.0
        %5892 = vmatpush2.xpose.msra.mxu0 0.0
        %5893 = vmatprep.mubr.f32.mxu0 0.0
        %5894 = vmatmul.mubr.f32.gmra.mxu0 %v5828
        %v5895 = vpop.f32.mrf.mxu0
        %v5896 = vadd.f32 0.0, %v5895
        %v5897 = vpop.f32.mrf.mxu0
        %5898 = vdwg.mxu0
        %v5899 = vmul.f32 %v5896, 0.25
        %v5900 = vsel %vm1467, %v5899, -inf
        %5901 = vmax.xlane.f32.xlu0 %v5900
        %v5902 = vpop.xlane.xlu0 %5901
        %v5903 = vsub.f32 %v5899, %v5902
        %v5904 = vmul.f32 %v5903, 1.442695
        %v5905 = vpow.pop %v5904
        %v5906 = vsel %vm1467, %v5905, 0.0
        %5907 = vadd.xlane.f32.xlu0 %v5906
        %v5908 = vpop.xlane.xlu0 %5907
        %v5909 = vrcp.pop %v5908
        %v5910 = vmul.f32 %v5905, %v5909
        %v5911 = vmul.f32 %v5034, %v1056
        %v5913 = vsel %vm1467, %v5910, 0
        %5915 = vmatprep.subr.mxu0 0.0
        %5916 = vmatpush1.msra.mxu0 0.0
        %5917 = vmatprep.subr.mxu0 0.0
        %5918 = vmatpush1.msra.mxu0 0.0
        %5919 = vmatprep.subr.mxu0 0.0
        %5920 = vmatpush1.msra.mxu0 0.0
        %5921 = vmatprep.subr.mxu0 0.0
        %5922 = vmatpush1.msra.mxu0 0.0
        %5923 = vmatprep.subr.mxu0 0.0
        %5924 = vmatpush1.msra.mxu0 0.0
        %5925 = vmatprep.subr.mxu0 0.0
        %5926 = vmatpush1.msra.mxu0 0.0
        %5927 = vmatprep.subr.mxu0 0.0
        %5928 = vmatpush1.msra.mxu0 0.0
        %5929 = vmatprep.subr.mxu0 0.0
        %5930 = vmatpush1.msra.mxu0 0.0
        %5931 = vmatprep.subr.mxu0 0.0
        %5932 = vmatpush1.msra.mxu0 0.0
        %5933 = vmatprep.subr.mxu0 0.0
        %5934 = vmatpush1.msra.mxu0 0.0
        %5935 = vmatprep.subr.mxu0 0.0
        %5936 = vmatpush1.msra.mxu0 0.0
        %5937 = vmatprep.subr.mxu0 0.0
        %5938 = vmatpush1.msra.mxu0 0.0
        %5939 = vmatprep.subr.mxu0 0.0
        %5940 = vmatpush1.msra.mxu0 0.0
        %5941 = vmatprep.subr.mxu0 0.0
        %5942 = vmatpush1.msra.mxu0 0.0
        %5943 = vmatprep.subr.mxu0 0.0
        %5944 = vmatpush1.msra.mxu0 0.0
        %5945 = vmatprep.subr.mxu0 0.0
        %5946 = vmatpush1.msra.mxu0 %v5911
        %5947 = vmatprep.subr.mxu0 0.0
        %5948 = vmatpush2.msra.mxu0 0.0
        %5949 = vmatprep.subr.mxu0 0.0
        %5950 = vmatpush2.msra.mxu0 0.0
        %5951 = vmatprep.subr.mxu0 0.0
        %5952 = vmatpush2.msra.mxu0 0.0
        %5953 = vmatprep.subr.mxu0 0.0
        %5954 = vmatpush2.msra.mxu0 0.0
        %5955 = vmatprep.subr.mxu0 0.0
        %5956 = vmatpush2.msra.mxu0 0.0
        %5957 = vmatprep.subr.mxu0 0.0
        %5958 = vmatpush2.msra.mxu0 0.0
        %5959 = vmatprep.subr.mxu0 0.0
        %5960 = vmatpush2.msra.mxu0 0.0
        %5961 = vmatprep.subr.mxu0 0.0
        %5962 = vmatpush2.msra.mxu0 0.0
        %5963 = vmatprep.subr.mxu0 0.0
        %5964 = vmatpush2.msra.mxu0 0.0
        %5965 = vmatprep.subr.mxu0 0.0
        %5966 = vmatpush2.msra.mxu0 0.0
        %5967 = vmatprep.subr.mxu0 0.0
        %5968 = vmatpush2.msra.mxu0 0.0
        %5969 = vmatprep.subr.mxu0 0.0
        %5970 = vmatpush2.msra.mxu0 0.0
        %5971 = vmatprep.subr.mxu0 0.0
        %5972 = vmatpush2.msra.mxu0 0.0
        %5973 = vmatprep.subr.mxu0 0.0
        %5974 = vmatpush2.msra.mxu0 0.0
        %5975 = vmatprep.subr.mxu0 0.0
        %5976 = vmatpush2.msra.mxu0 0.0
        %5977 = vmatprep.subr.mxu0 0.0
        %5978 = vmatpush2.msra.mxu0 0.0
        %5979 = vmatprep.mubr.f32.mxu0 0.0
        %5980 = vmatmul.mubr.f32.gmra.mxu0 %v5913
        %v5981 = vpop.f32.mrf.mxu0
        %v5982 = vadd.f32 0.0, %v5981
        %v5983 = vpop.f32.mrf.mxu0
        %5984 = vdwg.mxu0
        %v5985 = vadd.f32 %v5827, %v5982
        %v5986 = vmul.f32 %v4991, %v1061
        %5987 = vmatprep.subr.mxu0 0.0
        %5988 = vmatpush1.xpose.msra.mxu0 0.0
        %5989 = vmatprep.subr.mxu0 0.0
        %5990 = vmatpush1.xpose.msra.mxu0 0.0
        %5991 = vmatprep.subr.mxu0 0.0
        %5992 = vmatpush1.xpose.msra.mxu0 0.0
        %5993 = vmatprep.subr.mxu0 0.0
        %5994 = vmatpush1.xpose.msra.mxu0 0.0
        %5995 = vmatprep.subr.mxu0 0.0
        %5996 = vmatpush1.xpose.msra.mxu0 0.0
        %5997 = vmatprep.subr.mxu0 0.0
        %5998 = vmatpush1.xpose.msra.mxu0 0.0
        %5999 = vmatprep.subr.mxu0 0.0
        %6000 = vmatpush1.xpose.msra.mxu0 0.0
        %6001 = vmatprep.subr.mxu0 0.0
        %6002 = vmatpush1.xpose.msra.mxu0 0.0
        %6003 = vmatprep.subr.mxu0 0.0
        %6004 = vmatpush1.xpose.msra.mxu0 0.0
        %6005 = vmatprep.subr.mxu0 0.0
        %6006 = vmatpush1.xpose.msra.mxu0 0.0
        %6007 = vmatprep.subr.mxu0 0.0
        %6008 = vmatpush1.xpose.msra.mxu0 0.0
        %6009 = vmatprep.subr.mxu0 0.0
        %6010 = vmatpush1.xpose.msra.mxu0 0.0
        %6011 = vmatprep.subr.mxu0 0.0
        %6012 = vmatpush1.xpose.msra.mxu0 0.0
        %6013 = vmatprep.subr.mxu0 0.0
        %6014 = vmatpush1.xpose.msra.mxu0 0.0
        %6015 = vmatprep.subr.mxu0 0.0
        %6016 = vmatpush1.xpose.msra.mxu0 0.0
        %6017 = vmatprep.subr.mxu0 0.0
        %6018 = vmatpush1.xpose.msra.mxu0 %v4993
        %6019 = vmatprep.subr.mxu0 0.0
        %6020 = vmatpush2.xpose.msra.mxu0 0.0
        %6021 = vmatprep.subr.mxu0 0.0
        %6022 = vmatpush2.xpose.msra.mxu0 0.0
        %6023 = vmatprep.subr.mxu0 0.0
        %6024 = vmatpush2.xpose.msra.mxu0 0.0
        %6025 = vmatprep.subr.mxu0 0.0
        %6026 = vmatpush2.xpose.msra.mxu0 0.0
        %6027 = vmatprep.subr.mxu0 0.0
        %6028 = vmatpush2.xpose.msra.mxu0 0.0
        %6029 = vmatprep.subr.mxu0 0.0
        %6030 = vmatpush2.xpose.msra.mxu0 0.0
        %6031 = vmatprep.subr.mxu0 0.0
        %6032 = vmatpush2.xpose.msra.mxu0 0.0
        %6033 = vmatprep.subr.mxu0 0.0
        %6034 = vmatpush2.xpose.msra.mxu0 0.0
        %6035 = vmatprep.subr.mxu0 0.0
        %6036 = vmatpush2.xpose.msra.mxu0 0.0
        %6037 = vmatprep.subr.mxu0 0.0
        %6038 = vmatpush2.xpose.msra.mxu0 0.0
        %6039 = vmatprep.subr.mxu0 0.0
        %6040 = vmatpush2.xpose.msra.mxu0 0.0
        %6041 = vmatprep.subr.mxu0 0.0
        %6042 = vmatpush2.xpose.msra.mxu0 0.0
        %6043 = vmatprep.subr.mxu0 0.0
        %6044 = vmatpush2.xpose.msra.mxu0 0.0
        %6045 = vmatprep.subr.mxu0 0.0
        %6046 = vmatpush2.xpose.msra.mxu0 0.0
        %6047 = vmatprep.subr.mxu0 0.0
        %6048 = vmatpush2.xpose.msra.mxu0 0.0
        %6049 = vmatprep.subr.mxu0 0.0
        %6050 = vmatpush2.xpose.msra.mxu0 0.0
        %6051 = vmatprep.mubr.f32.mxu0 0.0
        %6052 = vmatmul.mubr.f32.gmra.mxu0 %v5986
        %v6053 = vpop.f32.mrf.mxu0
        %v6054 = vadd.f32 0.0, %v6053
        %v6055 = vpop.f32.mrf.mxu0
        %6056 = vdwg.mxu0
        %v6057 = vmul.f32 %v6054, 0.25
        %v6058 = vsel %vm1467, %v6057, -inf
        %6059 = vmax.xlane.f32.xlu0 %v6058
        %v6060 = vpop.xlane.xlu0 %6059
        %v6061 = vsub.f32 %v6057, %v6060
        %v6062 = vmul.f32 %v6061, 1.442695
        %v6063 = vpow.pop %v6062
        %v6064 = vsel %vm1467, %v6063, 0.0
        %6065 = vadd.xlane.f32.xlu0 %v6064
        %v6066 = vpop.xlane.xlu0 %6065
        %v6067 = vrcp.pop %v6066
        %v6068 = vmul.f32 %v6063, %v6067
        %v6069 = vmul.f32 %v5034, %v1061
        %v6071 = vsel %vm1467, %v6068, 0
        %6073 = vmatprep.subr.mxu0 0.0
        %6074 = vmatpush1.msra.mxu0 0.0
        %6075 = vmatprep.subr.mxu0 0.0
        %6076 = vmatpush1.msra.mxu0 0.0
        %6077 = vmatprep.subr.mxu0 0.0
        %6078 = vmatpush1.msra.mxu0 0.0
        %6079 = vmatprep.subr.mxu0 0.0
        %6080 = vmatpush1.msra.mxu0 0.0
        %6081 = vmatprep.subr.mxu0 0.0
        %6082 = vmatpush1.msra.mxu0 0.0
        %6083 = vmatprep.subr.mxu0 0.0
        %6084 = vmatpush1.msra.mxu0 0.0
        %6085 = vmatprep.subr.mxu0 0.0
        %6086 = vmatpush1.msra.mxu0 0.0
        %6087 = vmatprep.subr.mxu0 0.0
        %6088 = vmatpush1.msra.mxu0 0.0
        %6089 = vmatprep.subr.mxu0 0.0
        %6090 = vmatpush1.msra.mxu0 0.0
        %6091 = vmatprep.subr.mxu0 0.0
        %6092 = vmatpush1.msra.mxu0 0.0
        %6093 = vmatprep.subr.mxu0 0.0
        %6094 = vmatpush1.msra.mxu0 0.0
        %6095 = vmatprep.subr.mxu0 0.0
        %6096 = vmatpush1.msra.mxu0 0.0
        %6097 = vmatprep.subr.mxu0 0.0
        %6098 = vmatpush1.msra.mxu0 0.0
        %6099 = vmatprep.subr.mxu0 0.0
        %6100 = vmatpush1.msra.mxu0 0.0
        %6101 = vmatprep.subr.mxu0 0.0
        %6102 = vmatpush1.msra.mxu0 0.0
        %6103 = vmatprep.subr.mxu0 0.0
        %6104 = vmatpush1.msra.mxu0 %v6069
        %6105 = vmatprep.subr.mxu0 0.0
        %6106 = vmatpush2.msra.mxu0 0.0
        %6107 = vmatprep.subr.mxu0 0.0
        %6108 = vmatpush2.msra.mxu0 0.0
        %6109 = vmatprep.subr.mxu0 0.0
        %6110 = vmatpush2.msra.mxu0 0.0
        %6111 = vmatprep.subr.mxu0 0.0
        %6112 = vmatpush2.msra.mxu0 0.0
        %6113 = vmatprep.subr.mxu0 0.0
        %6114 = vmatpush2.msra.mxu0 0.0
        %6115 = vmatprep.subr.mxu0 0.0
        %6116 = vmatpush2.msra.mxu0 0.0
        %6117 = vmatprep.subr.mxu0 0.0
        %6118 = vmatpush2.msra.mxu0 0.0
        %6119 = vmatprep.subr.mxu0 0.0
        %6120 = vmatpush2.msra.mxu0 0.0
        %6121 = vmatprep.subr.mxu0 0.0
        %6122 = vmatpush2.msra.mxu0 0.0
        %6123 = vmatprep.subr.mxu0 0.0
        %6124 = vmatpush2.msra.mxu0 0.0
        %6125 = vmatprep.subr.mxu0 0.0
        %6126 = vmatpush2.msra.mxu0 0.0
        %6127 = vmatprep.subr.mxu0 0.0
        %6128 = vmatpush2.msra.mxu0 0.0
        %6129 = vmatprep.subr.mxu0 0.0
        %6130 = vmatpush2.msra.mxu0 0.0
        %6131 = vmatprep.subr.mxu0 0.0
        %6132 = vmatpush2.msra.mxu0 0.0
        %6133 = vmatprep.subr.mxu0 0.0
        %6134 = vmatpush2.msra.mxu0 0.0
        %6135 = vmatprep.subr.mxu0 0.0
        %6136 = vmatpush2.msra.mxu0 0.0
        %6137 = vmatprep.mubr.f32.mxu0 0.0
        %6138 = vmatmul.mubr.f32.gmra.mxu0 %v6071
        %v6139 = vpop.f32.mrf.mxu0
        %v6140 = vadd.f32 0.0, %v6139
        %v6141 = vpop.f32.mrf.mxu0
        %6142 = vdwg.mxu0
        %v6143 = vadd.f32 %v5985, %v6140
        %v6144 = vmul.f32 %v4991, %v1066
        %6145 = vmatprep.subr.mxu0 0.0
        %6146 = vmatpush1.xpose.msra.mxu0 0.0
        %6147 = vmatprep.subr.mxu0 0.0
        %6148 = vmatpush1.xpose.msra.mxu0 0.0
        %6149 = vmatprep.subr.mxu0 0.0
        %6150 = vmatpush1.xpose.msra.mxu0 0.0
        %6151 = vmatprep.subr.mxu0 0.0
        %6152 = vmatpush1.xpose.msra.mxu0 0.0
        %6153 = vmatprep.subr.mxu0 0.0
        %6154 = vmatpush1.xpose.msra.mxu0 0.0
        %6155 = vmatprep.subr.mxu0 0.0
        %6156 = vmatpush1.xpose.msra.mxu0 0.0
        %6157 = vmatprep.subr.mxu0 0.0
        %6158 = vmatpush1.xpose.msra.mxu0 0.0
        %6159 = vmatprep.subr.mxu0 0.0
        %6160 = vmatpush1.xpose.msra.mxu0 0.0
        %6161 = vmatprep.subr.mxu0 0.0
        %6162 = vmatpush1.xpose.msra.mxu0 0.0
        %6163 = vmatprep.subr.mxu0 0.0
        %6164 = vmatpush1.xpose.msra.mxu0 0.0
        %6165 = vmatprep.subr.mxu0 0.0
        %6166 = vmatpush1.xpose.msra.mxu0 0.0
        %6167 = vmatprep.subr.mxu0 0.0
        %6168 = vmatpush1.xpose.msra.mxu0 0.0
        %6169 = vmatprep.subr.mxu0 0.0
        %6170 = vmatpush1.xpose.msra.mxu0 0.0
        %6171 = vmatprep.subr.mxu0 0.0
        %6172 = vmatpush1.xpose.msra.mxu0 0.0
        %6173 = vmatprep.subr.mxu0 0.0
        %6174 = vmatpush1.xpose.msra.mxu0 0.0
        %6175 = vmatprep.subr.mxu0 0.0
        %6176 = vmatpush1.xpose.msra.mxu0 %v4993
        %6177 = vmatprep.subr.mxu0 0.0
        %6178 = vmatpush2.xpose.msra.mxu0 0.0
        %6179 = vmatprep.subr.mxu0 0.0
        %6180 = vmatpush2.xpose.msra.mxu0 0.0
        %6181 = vmatprep.subr.mxu0 0.0
        %6182 = vmatpush2.xpose.msra.mxu0 0.0
        %6183 = vmatprep.subr.mxu0 0.0
        %6184 = vmatpush2.xpose.msra.mxu0 0.0
        %6185 = vmatprep.subr.mxu0 0.0
        %6186 = vmatpush2.xpose.msra.mxu0 0.0
        %6187 = vmatprep.subr.mxu0 0.0
        %6188 = vmatpush2.xpose.msra.mxu0 0.0
        %6189 = vmatprep.subr.mxu0 0.0
        %6190 = vmatpush2.xpose.msra.mxu0 0.0
        %6191 = vmatprep.subr.mxu0 0.0
        %6192 = vmatpush2.xpose.msra.mxu0 0.0
        %6193 = vmatprep.subr.mxu0 0.0
        %6194 = vmatpush2.xpose.msra.mxu0 0.0
        %6195 = vmatprep.subr.mxu0 0.0
        %6196 = vmatpush2.xpose.msra.mxu0 0.0
        %6197 = vmatprep.subr.mxu0 0.0
        %6198 = vmatpush2.xpose.msra.mxu0 0.0
        %6199 = vmatprep.subr.mxu0 0.0
        %6200 = vmatpush2.xpose.msra.mxu0 0.0
        %6201 = vmatprep.subr.mxu0 0.0
        %6202 = vmatpush2.xpose.msra.mxu0 0.0
        %6203 = vmatprep.subr.mxu0 0.0
        %6204 = vmatpush2.xpose.msra.mxu0 0.0
        %6205 = vmatprep.subr.mxu0 0.0
        %6206 = vmatpush2.xpose.msra.mxu0 0.0
        %6207 = vmatprep.subr.mxu0 0.0
        %6208 = vmatpush2.xpose.msra.mxu0 0.0
        %6209 = vmatprep.mubr.f32.mxu0 0.0
        %6210 = vmatmul.mubr.f32.gmra.mxu0 %v6144
        %v6211 = vpop.f32.mrf.mxu0
        %v6212 = vadd.f32 0.0, %v6211
        %v6213 = vpop.f32.mrf.mxu0
        %6214 = vdwg.mxu0
        %v6215 = vmul.f32 %v6212, 0.25
        %v6216 = vsel %vm1467, %v6215, -inf
        %6217 = vmax.xlane.f32.xlu0 %v6216
        %v6218 = vpop.xlane.xlu0 %6217
        %v6219 = vsub.f32 %v6215, %v6218
        %v6220 = vmul.f32 %v6219, 1.442695
        %v6221 = vpow.pop %v6220
        %v6222 = vsel %vm1467, %v6221, 0.0
        %6223 = vadd.xlane.f32.xlu0 %v6222
        %v6224 = vpop.xlane.xlu0 %6223
        %v6225 = vrcp.pop %v6224
        %v6226 = vmul.f32 %v6221, %v6225
        %v6227 = vmul.f32 %v5034, %v1066
        %v6229 = vsel %vm1467, %v6226, 0
        %6231 = vmatprep.subr.mxu0 0.0
        %6232 = vmatpush1.msra.mxu0 0.0
        %6233 = vmatprep.subr.mxu0 0.0
        %6234 = vmatpush1.msra.mxu0 0.0
        %6235 = vmatprep.subr.mxu0 0.0
        %6236 = vmatpush1.msra.mxu0 0.0
        %6237 = vmatprep.subr.mxu0 0.0
        %6238 = vmatpush1.msra.mxu0 0.0
        %6239 = vmatprep.subr.mxu0 0.0
        %6240 = vmatpush1.msra.mxu0 0.0
        %6241 = vmatprep.subr.mxu0 0.0
        %6242 = vmatpush1.msra.mxu0 0.0
        %6243 = vmatprep.subr.mxu0 0.0
        %6244 = vmatpush1.msra.mxu0 0.0
        %6245 = vmatprep.subr.mxu0 0.0
        %6246 = vmatpush1.msra.mxu0 0.0
        %6247 = vmatprep.subr.mxu0 0.0
        %6248 = vmatpush1.msra.mxu0 0.0
        %6249 = vmatprep.subr.mxu0 0.0
        %6250 = vmatpush1.msra.mxu0 0.0
        %6251 = vmatprep.subr.mxu0 0.0
        %6252 = vmatpush1.msra.mxu0 0.0
        %6253 = vmatprep.subr.mxu0 0.0
        %6254 = vmatpush1.msra.mxu0 0.0
        %6255 = vmatprep.subr.mxu0 0.0
        %6256 = vmatpush1.msra.mxu0 0.0
        %6257 = vmatprep.subr.mxu0 0.0
        %6258 = vmatpush1.msra.mxu0 0.0
        %6259 = vmatprep.subr.mxu0 0.0
        %6260 = vmatpush1.msra.mxu0 0.0
        %6261 = vmatprep.subr.mxu0 0.0
        %6262 = vmatpush1.msra.mxu0 %v6227
        %6263 = vmatprep.subr.mxu0 0.0
        %6264 = vmatpush2.msra.mxu0 0.0
        %6265 = vmatprep.subr.mxu0 0.0
        %6266 = vmatpush2.msra.mxu0 0.0
        %6267 = vmatprep.subr.mxu0 0.0
        %6268 = vmatpush2.msra.mxu0 0.0
        %6269 = vmatprep.subr.mxu0 0.0
        %6270 = vmatpush2.msra.mxu0 0.0
        %6271 = vmatprep.subr.mxu0 0.0
        %6272 = vmatpush2.msra.mxu0 0.0
        %6273 = vmatprep.subr.mxu0 0.0
        %6274 = vmatpush2.msra.mxu0 0.0
        %6275 = vmatprep.subr.mxu0 0.0
        %6276 = vmatpush2.msra.mxu0 0.0
        %6277 = vmatprep.subr.mxu0 0.0
        %6278 = vmatpush2.msra.mxu0 0.0
        %6279 = vmatprep.subr.mxu0 0.0
        %6280 = vmatpush2.msra.mxu0 0.0
        %6281 = vmatprep.subr.mxu0 0.0
        %6282 = vmatpush2.msra.mxu0 0.0
        %6283 = vmatprep.subr.mxu0 0.0
        %6284 = vmatpush2.msra.mxu0 0.0
        %6285 = vmatprep.subr.mxu0 0.0
        %6286 = vmatpush2.msra.mxu0 0.0
        %6287 = vmatprep.subr.mxu0 0.0
        %6288 = vmatpush2.msra.mxu0 0.0
        %6289 = vmatprep.subr.mxu0 0.0
        %6290 = vmatpush2.msra.mxu0 0.0
        %6291 = vmatprep.subr.mxu0 0.0
        %6292 = vmatpush2.msra.mxu0 0.0
        %6293 = vmatprep.subr.mxu0 0.0
        %6294 = vmatpush2.msra.mxu0 0.0
        %6295 = vmatprep.mubr.f32.mxu0 0.0
        %6296 = vmatmul.mubr.f32.gmra.mxu0 %v6229
        %v6297 = vpop.f32.mrf.mxu0
        %v6298 = vadd.f32 0.0, %v6297
        %v6299 = vpop.f32.mrf.mxu0
        %6300 = vdwg.mxu0
        %v6301 = vadd.f32 %v6143, %v6298
        %v6302 = vmul.f32 %v4995, %v1031
        %6303 = vmatprep.subr.mxu0 0.0
        %6304 = vmatpush1.xpose.msra.mxu0 0.0
        %6305 = vmatprep.subr.mxu0 0.0
        %6306 = vmatpush1.xpose.msra.mxu0 0.0
        %6307 = vmatprep.subr.mxu0 0.0
        %6308 = vmatpush1.xpose.msra.mxu0 0.0
        %6309 = vmatprep.subr.mxu0 0.0
        %6310 = vmatpush1.xpose.msra.mxu0 0.0
        %6311 = vmatprep.subr.mxu0 0.0
        %6312 = vmatpush1.xpose.msra.mxu0 0.0
        %6313 = vmatprep.subr.mxu0 0.0
        %6314 = vmatpush1.xpose.msra.mxu0 0.0
        %6315 = vmatprep.subr.mxu0 0.0
        %6316 = vmatpush1.xpose.msra.mxu0 0.0
        %6317 = vmatprep.subr.mxu0 0.0
        %6318 = vmatpush1.xpose.msra.mxu0 0.0
        %6319 = vmatprep.subr.mxu0 0.0
        %6320 = vmatpush1.xpose.msra.mxu0 0.0
        %6321 = vmatprep.subr.mxu0 0.0
        %6322 = vmatpush1.xpose.msra.mxu0 0.0
        %6323 = vmatprep.subr.mxu0 0.0
        %6324 = vmatpush1.xpose.msra.mxu0 0.0
        %6325 = vmatprep.subr.mxu0 0.0
        %6326 = vmatpush1.xpose.msra.mxu0 0.0
        %6327 = vmatprep.subr.mxu0 0.0
        %6328 = vmatpush1.xpose.msra.mxu0 0.0
        %6329 = vmatprep.subr.mxu0 0.0
        %6330 = vmatpush1.xpose.msra.mxu0 0.0
        %6331 = vmatprep.subr.mxu0 0.0
        %6332 = vmatpush1.xpose.msra.mxu0 0.0
        %6333 = vmatprep.subr.mxu0 0.0
        %6334 = vmatpush1.xpose.msra.mxu0 %v4997
        %6335 = vmatprep.subr.mxu0 0.0
        %6336 = vmatpush2.xpose.msra.mxu0 0.0
        %6337 = vmatprep.subr.mxu0 0.0
        %6338 = vmatpush2.xpose.msra.mxu0 0.0
        %6339 = vmatprep.subr.mxu0 0.0
        %6340 = vmatpush2.xpose.msra.mxu0 0.0
        %6341 = vmatprep.subr.mxu0 0.0
        %6342 = vmatpush2.xpose.msra.mxu0 0.0
        %6343 = vmatprep.subr.mxu0 0.0
        %6344 = vmatpush2.xpose.msra.mxu0 0.0
        %6345 = vmatprep.subr.mxu0 0.0
        %6346 = vmatpush2.xpose.msra.mxu0 0.0
        %6347 = vmatprep.subr.mxu0 0.0
        %6348 = vmatpush2.xpose.msra.mxu0 0.0
        %6349 = vmatprep.subr.mxu0 0.0
        %6350 = vmatpush2.xpose.msra.mxu0 0.0
        %6351 = vmatprep.subr.mxu0 0.0
        %6352 = vmatpush2.xpose.msra.mxu0 0.0
        %6353 = vmatprep.subr.mxu0 0.0
        %6354 = vmatpush2.xpose.msra.mxu0 0.0
        %6355 = vmatprep.subr.mxu0 0.0
        %6356 = vmatpush2.xpose.msra.mxu0 0.0
        %6357 = vmatprep.subr.mxu0 0.0
        %6358 = vmatpush2.xpose.msra.mxu0 0.0
        %6359 = vmatprep.subr.mxu0 0.0
        %6360 = vmatpush2.xpose.msra.mxu0 0.0
        %6361 = vmatprep.subr.mxu0 0.0
        %6362 = vmatpush2.xpose.msra.mxu0 0.0
        %6363 = vmatprep.subr.mxu0 0.0
        %6364 = vmatpush2.xpose.msra.mxu0 0.0
        %6365 = vmatprep.subr.mxu0 0.0
        %6366 = vmatpush2.xpose.msra.mxu0 0.0
        %6367 = vmatprep.mubr.f32.mxu0 0.0
        %6368 = vmatmul.mubr.f32.gmra.mxu0 %v6302
        %v6369 = vpop.f32.mrf.mxu0
        %v6370 = vadd.f32 0.0, %v6369
        %v6371 = vpop.f32.mrf.mxu0
        %6372 = vdwg.mxu0
        %v6373 = vmul.f32 %v6370, 0.25
        %v6374 = vsel %vm1467, %v6373, -inf
        %6375 = vmax.xlane.f32.xlu0 %v6374
        %v6376 = vpop.xlane.xlu0 %6375
        %v6377 = vsub.f32 %v6373, %v6376
        %v6378 = vmul.f32 %v6377, 1.442695
        %v6379 = vpow.pop %v6378
        %v6380 = vsel %vm1467, %v6379, 0.0
        %6381 = vadd.xlane.f32.xlu0 %v6380
        %v6382 = vpop.xlane.xlu0 %6381
        %v6383 = vrcp.pop %v6382
        %v6384 = vmul.f32 %v6379, %v6383
        %v6385 = vmul.f32 %v5037, %v1031
        %v6386 = vmul.f32 %v4995, %v1036
        %6387 = vmatprep.subr.mxu0 0.0
        %6388 = vmatpush1.xpose.msra.mxu0 0.0
        %6389 = vmatprep.subr.mxu0 0.0
        %6390 = vmatpush1.xpose.msra.mxu0 0.0
        %6391 = vmatprep.subr.mxu0 0.0
        %6392 = vmatpush1.xpose.msra.mxu0 0.0
        %6393 = vmatprep.subr.mxu0 0.0
        %6394 = vmatpush1.xpose.msra.mxu0 0.0
        %6395 = vmatprep.subr.mxu0 0.0
        %6396 = vmatpush1.xpose.msra.mxu0 0.0
        %6397 = vmatprep.subr.mxu0 0.0
        %6398 = vmatpush1.xpose.msra.mxu0 0.0
        %6399 = vmatprep.subr.mxu0 0.0
        %6400 = vmatpush1.xpose.msra.mxu0 0.0
        %6401 = vmatprep.subr.mxu0 0.0
        %6402 = vmatpush1.xpose.msra.mxu0 0.0
        %6403 = vmatprep.subr.mxu0 0.0
        %6404 = vmatpush1.xpose.msra.mxu0 0.0
        %6405 = vmatprep.subr.mxu0 0.0
        %6406 = vmatpush1.xpose.msra.mxu0 0.0
        %6407 = vmatprep.subr.mxu0 0.0
        %6408 = vmatpush1.xpose.msra.mxu0 0.0
        %6409 = vmatprep.subr.mxu0 0.0
        %6410 = vmatpush1.xpose.msra.mxu0 0.0
        %6411 = vmatprep.subr.mxu0 0.0
        %6412 = vmatpush1.xpose.msra.mxu0 0.0
        %6413 = vmatprep.subr.mxu0 0.0
        %6414 = vmatpush1.xpose.msra.mxu0 0.0
        %6415 = vmatprep.subr.mxu0 0.0
        %6416 = vmatpush1.xpose.msra.mxu0 0.0
        %6417 = vmatprep.subr.mxu0 0.0
        %6418 = vmatpush1.xpose.msra.mxu0 %v4997
        %6419 = vmatprep.subr.mxu0 0.0
        %6420 = vmatpush2.xpose.msra.mxu0 0.0
        %6421 = vmatprep.subr.mxu0 0.0
        %6422 = vmatpush2.xpose.msra.mxu0 0.0
        %6423 = vmatprep.subr.mxu0 0.0
        %6424 = vmatpush2.xpose.msra.mxu0 0.0
        %6425 = vmatprep.subr.mxu0 0.0
        %6426 = vmatpush2.xpose.msra.mxu0 0.0
        %6427 = vmatprep.subr.mxu0 0.0
        %6428 = vmatpush2.xpose.msra.mxu0 0.0
        %6429 = vmatprep.subr.mxu0 0.0
        %6430 = vmatpush2.xpose.msra.mxu0 0.0
        %6431 = vmatprep.subr.mxu0 0.0
        %6432 = vmatpush2.xpose.msra.mxu0 0.0
        %6433 = vmatprep.subr.mxu0 0.0
        %6434 = vmatpush2.xpose.msra.mxu0 0.0
        %6435 = vmatprep.subr.mxu0 0.0
        %6436 = vmatpush2.xpose.msra.mxu0 0.0
        %6437 = vmatprep.subr.mxu0 0.0
        %6438 = vmatpush2.xpose.msra.mxu0 0.0
        %6439 = vmatprep.subr.mxu0 0.0
        %6440 = vmatpush2.xpose.msra.mxu0 0.0
        %6441 = vmatprep.subr.mxu0 0.0
        %6442 = vmatpush2.xpose.msra.mxu0 0.0
        %6443 = vmatprep.subr.mxu0 0.0
        %6444 = vmatpush2.xpose.msra.mxu0 0.0
        %6445 = vmatprep.subr.mxu0 0.0
        %6446 = vmatpush2.xpose.msra.mxu0 0.0
        %6447 = vmatprep.subr.mxu0 0.0
        %6448 = vmatpush2.xpose.msra.mxu0 0.0
        %6449 = vmatprep.subr.mxu0 0.0
        %6450 = vmatpush2.xpose.msra.mxu0 0.0
        %6451 = vmatprep.mubr.f32.mxu0 0.0
        %6452 = vmatmul.mubr.f32.gmra.mxu0 %v6386
        %v6453 = vpop.f32.mrf.mxu0
        %v6454 = vadd.f32 0.0, %v6453
        %v6455 = vpop.f32.mrf.mxu0
        %6456 = vdwg.mxu0
        %v6457 = vmul.f32 %v6454, 0.25
        %v6458 = vsel %vm1467, %v6457, -inf
        %6459 = vmax.xlane.f32.xlu0 %v6458
        %v6460 = vpop.xlane.xlu0 %6459
        %v6461 = vsub.f32 %v6457, %v6460
        %v6462 = vmul.f32 %v6461, 1.442695
        %v6463 = vpow.pop %v6462
        %v6464 = vsel %vm1467, %v6463, 0.0
        %6465 = vadd.xlane.f32.xlu0 %v6464
        %v6466 = vpop.xlane.xlu0 %6465
        %v6467 = vrcp.pop %v6466
        %v6468 = vmul.f32 %v6463, %v6467
        %v6469 = vmul.f32 %v5037, %v1036
        %v6471 = vsel %vm1467, %v6468, 0
        %6473 = vmatprep.subr.mxu0 0.0
        %6474 = vmatpush1.msra.mxu0 0.0
        %6475 = vmatprep.subr.mxu0 0.0
        %6476 = vmatpush1.msra.mxu0 0.0
        %6477 = vmatprep.subr.mxu0 0.0
        %6478 = vmatpush1.msra.mxu0 0.0
        %6479 = vmatprep.subr.mxu0 0.0
        %6480 = vmatpush1.msra.mxu0 0.0
        %6481 = vmatprep.subr.mxu0 0.0
        %6482 = vmatpush1.msra.mxu0 0.0
        %6483 = vmatprep.subr.mxu0 0.0
        %6484 = vmatpush1.msra.mxu0 0.0
        %6485 = vmatprep.subr.mxu0 0.0
        %6486 = vmatpush1.msra.mxu0 0.0
        %6487 = vmatprep.subr.mxu0 0.0
        %6488 = vmatpush1.msra.mxu0 0.0
        %6489 = vmatprep.subr.mxu0 0.0
        %6490 = vmatpush1.msra.mxu0 0.0
        %6491 = vmatprep.subr.mxu0 0.0
        %6492 = vmatpush1.msra.mxu0 0.0
        %6493 = vmatprep.subr.mxu0 0.0
        %6494 = vmatpush1.msra.mxu0 0.0
        %6495 = vmatprep.subr.mxu0 0.0
        %6496 = vmatpush1.msra.mxu0 0.0
        %6497 = vmatprep.subr.mxu0 0.0
        %6498 = vmatpush1.msra.mxu0 0.0
        %6499 = vmatprep.subr.mxu0 0.0
        %6500 = vmatpush1.msra.mxu0 0.0
        %6501 = vmatprep.subr.mxu0 0.0
        %6502 = vmatpush1.msra.mxu0 0.0
        %6503 = vmatprep.subr.mxu0 0.0
        %6504 = vmatpush1.msra.mxu0 %v6469
        %6505 = vmatprep.subr.mxu0 0.0
        %6506 = vmatpush2.msra.mxu0 0.0
        %6507 = vmatprep.subr.mxu0 0.0
        %6508 = vmatpush2.msra.mxu0 0.0
        %6509 = vmatprep.subr.mxu0 0.0
        %6510 = vmatpush2.msra.mxu0 0.0
        %6511 = vmatprep.subr.mxu0 0.0
        %6512 = vmatpush2.msra.mxu0 0.0
        %6513 = vmatprep.subr.mxu0 0.0
        %6514 = vmatpush2.msra.mxu0 0.0
        %6515 = vmatprep.subr.mxu0 0.0
        %6516 = vmatpush2.msra.mxu0 0.0
        %6517 = vmatprep.subr.mxu0 0.0
        %6518 = vmatpush2.msra.mxu0 0.0
        %6519 = vmatprep.subr.mxu0 0.0
        %6520 = vmatpush2.msra.mxu0 0.0
        %6521 = vmatprep.subr.mxu0 0.0
        %6522 = vmatpush2.msra.mxu0 0.0
        %6523 = vmatprep.subr.mxu0 0.0
        %6524 = vmatpush2.msra.mxu0 0.0
        %6525 = vmatprep.subr.mxu0 0.0
        %6526 = vmatpush2.msra.mxu0 0.0
        %6527 = vmatprep.subr.mxu0 0.0
        %6528 = vmatpush2.msra.mxu0 0.0
        %6529 = vmatprep.subr.mxu0 0.0
        %6530 = vmatpush2.msra.mxu0 0.0
        %6531 = vmatprep.subr.mxu0 0.0
        %6532 = vmatpush2.msra.mxu0 0.0
        %6533 = vmatprep.subr.mxu0 0.0
        %6534 = vmatpush2.msra.mxu0 0.0
        %6535 = vmatprep.subr.mxu0 0.0
        %6536 = vmatpush2.msra.mxu0 0.0
        %6537 = vmatprep.mubr.f32.mxu0 0.0
        %6538 = vmatmul.mubr.f32.gmra.mxu0 %v6471
        %v6539 = vpop.f32.mrf.mxu0
        %v6540 = vadd.f32 0.0, %v6539
        %v6541 = vpop.f32.mrf.mxu0
        %6542 = vdwg.mxu0
        %v6544 = vsel %vm1467, %v6384, 0
        %6546 = vmatprep.subr.mxu0 0.0
        %6547 = vmatpush1.msra.mxu0 0.0
        %6548 = vmatprep.subr.mxu0 0.0
        %6549 = vmatpush1.msra.mxu0 0.0
        %6550 = vmatprep.subr.mxu0 0.0
        %6551 = vmatpush1.msra.mxu0 0.0
        %6552 = vmatprep.subr.mxu0 0.0
        %6553 = vmatpush1.msra.mxu0 0.0
        %6554 = vmatprep.subr.mxu0 0.0
        %6555 = vmatpush1.msra.mxu0 0.0
        %6556 = vmatprep.subr.mxu0 0.0
        %6557 = vmatpush1.msra.mxu0 0.0
        %6558 = vmatprep.subr.mxu0 0.0
        %6559 = vmatpush1.msra.mxu0 0.0
        %6560 = vmatprep.subr.mxu0 0.0
        %6561 = vmatpush1.msra.mxu0 0.0
        %6562 = vmatprep.subr.mxu0 0.0
        %6563 = vmatpush1.msra.mxu0 0.0
        %6564 = vmatprep.subr.mxu0 0.0
        %6565 = vmatpush1.msra.mxu0 0.0
        %6566 = vmatprep.subr.mxu0 0.0
        %6567 = vmatpush1.msra.mxu0 0.0
        %6568 = vmatprep.subr.mxu0 0.0
        %6569 = vmatpush1.msra.mxu0 0.0
        %6570 = vmatprep.subr.mxu0 0.0
        %6571 = vmatpush1.msra.mxu0 0.0
        %6572 = vmatprep.subr.mxu0 0.0
        %6573 = vmatpush1.msra.mxu0 0.0
        %6574 = vmatprep.subr.mxu0 0.0
        %6575 = vmatpush1.msra.mxu0 0.0
        %6576 = vmatprep.subr.mxu0 0.0
        %6577 = vmatpush1.msra.mxu0 %v6385
        %6578 = vmatprep.subr.mxu0 0.0
        %6579 = vmatpush2.msra.mxu0 0.0
        %6580 = vmatprep.subr.mxu0 0.0
        %6581 = vmatpush2.msra.mxu0 0.0
        %6582 = vmatprep.subr.mxu0 0.0
        %6583 = vmatpush2.msra.mxu0 0.0
        %6584 = vmatprep.subr.mxu0 0.0
        %6585 = vmatpush2.msra.mxu0 0.0
        %6586 = vmatprep.subr.mxu0 0.0
        %6587 = vmatpush2.msra.mxu0 0.0
        %6588 = vmatprep.subr.mxu0 0.0
        %6589 = vmatpush2.msra.mxu0 0.0
        %6590 = vmatprep.subr.mxu0 0.0
        %6591 = vmatpush2.msra.mxu0 0.0
        %6592 = vmatprep.subr.mxu0 0.0
        %6593 = vmatpush2.msra.mxu0 0.0
        %6594 = vmatprep.subr.mxu0 0.0
        %6595 = vmatpush2.msra.mxu0 0.0
        %6596 = vmatprep.subr.mxu0 0.0
        %6597 = vmatpush2.msra.mxu0 0.0
        %6598 = vmatprep.subr.mxu0 0.0
        %6599 = vmatpush2.msra.mxu0 0.0
        %6600 = vmatprep.subr.mxu0 0.0
        %6601 = vmatpush2.msra.mxu0 0.0
        %6602 = vmatprep.subr.mxu0 0.0
        %6603 = vmatpush2.msra.mxu0 0.0
        %6604 = vmatprep.subr.mxu0 0.0
        %6605 = vmatpush2.msra.mxu0 0.0
        %6606 = vmatprep.subr.mxu0 0.0
        %6607 = vmatpush2.msra.mxu0 0.0
        %6608 = vmatprep.subr.mxu0 0.0
        %6609 = vmatpush2.msra.mxu0 0.0
        %6610 = vmatprep.mubr.f32.mxu0 0.0
        %6611 = vmatmul.mubr.f32.gmra.mxu0 %v6544
        %v6612 = vpop.f32.mrf.mxu0
        %v6613 = vadd.f32 %v6540, %v6612
        %v6614 = vpop.f32.mrf.mxu0
        %6615 = vdwg.mxu0
        %v6616 = vmul.f32 %v4995, %v1041
        %6617 = vmatprep.subr.mxu0 0.0
        %6618 = vmatpush1.xpose.msra.mxu0 0.0
        %6619 = vmatprep.subr.mxu0 0.0
        %6620 = vmatpush1.xpose.msra.mxu0 0.0
        %6621 = vmatprep.subr.mxu0 0.0
        %6622 = vmatpush1.xpose.msra.mxu0 0.0
        %6623 = vmatprep.subr.mxu0 0.0
        %6624 = vmatpush1.xpose.msra.mxu0 0.0
        %6625 = vmatprep.subr.mxu0 0.0
        %6626 = vmatpush1.xpose.msra.mxu0 0.0
        %6627 = vmatprep.subr.mxu0 0.0
        %6628 = vmatpush1.xpose.msra.mxu0 0.0
        %6629 = vmatprep.subr.mxu0 0.0
        %6630 = vmatpush1.xpose.msra.mxu0 0.0
        %6631 = vmatprep.subr.mxu0 0.0
        %6632 = vmatpush1.xpose.msra.mxu0 0.0
        %6633 = vmatprep.subr.mxu0 0.0
        %6634 = vmatpush1.xpose.msra.mxu0 0.0
        %6635 = vmatprep.subr.mxu0 0.0
        %6636 = vmatpush1.xpose.msra.mxu0 0.0
        %6637 = vmatprep.subr.mxu0 0.0
        %6638 = vmatpush1.xpose.msra.mxu0 0.0
        %6639 = vmatprep.subr.mxu0 0.0
        %6640 = vmatpush1.xpose.msra.mxu0 0.0
        %6641 = vmatprep.subr.mxu0 0.0
        %6642 = vmatpush1.xpose.msra.mxu0 0.0
        %6643 = vmatprep.subr.mxu0 0.0
        %6644 = vmatpush1.xpose.msra.mxu0 0.0
        %6645 = vmatprep.subr.mxu0 0.0
        %6646 = vmatpush1.xpose.msra.mxu0 0.0
        %6647 = vmatprep.subr.mxu0 0.0
        %6648 = vmatpush1.xpose.msra.mxu0 %v4997
        %6649 = vmatprep.subr.mxu0 0.0
        %6650 = vmatpush2.xpose.msra.mxu0 0.0
        %6651 = vmatprep.subr.mxu0 0.0
        %6652 = vmatpush2.xpose.msra.mxu0 0.0
        %6653 = vmatprep.subr.mxu0 0.0
        %6654 = vmatpush2.xpose.msra.mxu0 0.0
        %6655 = vmatprep.subr.mxu0 0.0
        %6656 = vmatpush2.xpose.msra.mxu0 0.0
        %6657 = vmatprep.subr.mxu0 0.0
        %6658 = vmatpush2.xpose.msra.mxu0 0.0
        %6659 = vmatprep.subr.mxu0 0.0
        %6660 = vmatpush2.xpose.msra.mxu0 0.0
        %6661 = vmatprep.subr.mxu0 0.0
        %6662 = vmatpush2.xpose.msra.mxu0 0.0
        %6663 = vmatprep.subr.mxu0 0.0
        %6664 = vmatpush2.xpose.msra.mxu0 0.0
        %6665 = vmatprep.subr.mxu0 0.0
        %6666 = vmatpush2.xpose.msra.mxu0 0.0
        %6667 = vmatprep.subr.mxu0 0.0
        %6668 = vmatpush2.xpose.msra.mxu0 0.0
        %6669 = vmatprep.subr.mxu0 0.0
        %6670 = vmatpush2.xpose.msra.mxu0 0.0
        %6671 = vmatprep.subr.mxu0 0.0
        %6672 = vmatpush2.xpose.msra.mxu0 0.0
        %6673 = vmatprep.subr.mxu0 0.0
        %6674 = vmatpush2.xpose.msra.mxu0 0.0
        %6675 = vmatprep.subr.mxu0 0.0
        %6676 = vmatpush2.xpose.msra.mxu0 0.0
        %6677 = vmatprep.subr.mxu0 0.0
        %6678 = vmatpush2.xpose.msra.mxu0 0.0
        %6679 = vmatprep.subr.mxu0 0.0
        %6680 = vmatpush2.xpose.msra.mxu0 0.0
        %6681 = vmatprep.mubr.f32.mxu0 0.0
        %6682 = vmatmul.mubr.f32.gmra.mxu0 %v6616
        %v6683 = vpop.f32.mrf.mxu0
        %v6684 = vadd.f32 0.0, %v6683
        %v6685 = vpop.f32.mrf.mxu0
        %6686 = vdwg.mxu0
        %v6687 = vmul.f32 %v6684, 0.25
        %v6688 = vsel %vm1467, %v6687, -inf
        %6689 = vmax.xlane.f32.xlu0 %v6688
        %v6690 = vpop.xlane.xlu0 %6689
        %v6691 = vsub.f32 %v6687, %v6690
        %v6692 = vmul.f32 %v6691, 1.442695
        %v6693 = vpow.pop %v6692
        %v6694 = vsel %vm1467, %v6693, 0.0
        %6695 = vadd.xlane.f32.xlu0 %v6694
        %v6696 = vpop.xlane.xlu0 %6695
        %v6697 = vrcp.pop %v6696
        %v6698 = vmul.f32 %v6693, %v6697
        %v6699 = vmul.f32 %v5037, %v1041
        %v6701 = vsel %vm1467, %v6698, 0
        %6703 = vmatprep.subr.mxu0 0.0
        %6704 = vmatpush1.msra.mxu0 0.0
        %6705 = vmatprep.subr.mxu0 0.0
        %6706 = vmatpush1.msra.mxu0 0.0
        %6707 = vmatprep.subr.mxu0 0.0
        %6708 = vmatpush1.msra.mxu0 0.0
        %6709 = vmatprep.subr.mxu0 0.0
        %6710 = vmatpush1.msra.mxu0 0.0
        %6711 = vmatprep.subr.mxu0 0.0
        %6712 = vmatpush1.msra.mxu0 0.0
        %6713 = vmatprep.subr.mxu0 0.0
        %6714 = vmatpush1.msra.mxu0 0.0
        %6715 = vmatprep.subr.mxu0 0.0
        %6716 = vmatpush1.msra.mxu0 0.0
        %6717 = vmatprep.subr.mxu0 0.0
        %6718 = vmatpush1.msra.mxu0 0.0
        %6719 = vmatprep.subr.mxu0 0.0
        %6720 = vmatpush1.msra.mxu0 0.0
        %6721 = vmatprep.subr.mxu0 0.0
        %6722 = vmatpush1.msra.mxu0 0.0
        %6723 = vmatprep.subr.mxu0 0.0
        %6724 = vmatpush1.msra.mxu0 0.0
        %6725 = vmatprep.subr.mxu0 0.0
        %6726 = vmatpush1.msra.mxu0 0.0
        %6727 = vmatprep.subr.mxu0 0.0
        %6728 = vmatpush1.msra.mxu0 0.0
        %6729 = vmatprep.subr.mxu0 0.0
        %6730 = vmatpush1.msra.mxu0 0.0
        %6731 = vmatprep.subr.mxu0 0.0
        %6732 = vmatpush1.msra.mxu0 0.0
        %6733 = vmatprep.subr.mxu0 0.0
        %6734 = vmatpush1.msra.mxu0 %v6699
        %6735 = vmatprep.subr.mxu0 0.0
        %6736 = vmatpush2.msra.mxu0 0.0
        %6737 = vmatprep.subr.mxu0 0.0
        %6738 = vmatpush2.msra.mxu0 0.0
        %6739 = vmatprep.subr.mxu0 0.0
        %6740 = vmatpush2.msra.mxu0 0.0
        %6741 = vmatprep.subr.mxu0 0.0
        %6742 = vmatpush2.msra.mxu0 0.0
        %6743 = vmatprep.subr.mxu0 0.0
        %6744 = vmatpush2.msra.mxu0 0.0
        %6745 = vmatprep.subr.mxu0 0.0
        %6746 = vmatpush2.msra.mxu0 0.0
        %6747 = vmatprep.subr.mxu0 0.0
        %6748 = vmatpush2.msra.mxu0 0.0
        %6749 = vmatprep.subr.mxu0 0.0
        %6750 = vmatpush2.msra.mxu0 0.0
        %6751 = vmatprep.subr.mxu0 0.0
        %6752 = vmatpush2.msra.mxu0 0.0
        %6753 = vmatprep.subr.mxu0 0.0
        %6754 = vmatpush2.msra.mxu0 0.0
        %6755 = vmatprep.subr.mxu0 0.0
        %6756 = vmatpush2.msra.mxu0 0.0
        %6757 = vmatprep.subr.mxu0 0.0
        %6758 = vmatpush2.msra.mxu0 0.0
        %6759 = vmatprep.subr.mxu0 0.0
        %6760 = vmatpush2.msra.mxu0 0.0
        %6761 = vmatprep.subr.mxu0 0.0
        %6762 = vmatpush2.msra.mxu0 0.0
        %6763 = vmatprep.subr.mxu0 0.0
        %6764 = vmatpush2.msra.mxu0 0.0
        %6765 = vmatprep.subr.mxu0 0.0
        %6766 = vmatpush2.msra.mxu0 0.0
        %6767 = vmatprep.mubr.f32.mxu0 0.0
        %6768 = vmatmul.mubr.f32.gmra.mxu0 %v6701
        %v6769 = vpop.f32.mrf.mxu0
        %v6770 = vadd.f32 0.0, %v6769
        %v6771 = vpop.f32.mrf.mxu0
        %6772 = vdwg.mxu0
        %v6773 = vadd.f32 %v6613, %v6770
        %v6774 = vmul.f32 %v4995, %v1046
        %6775 = vmatprep.subr.mxu0 0.0
        %6776 = vmatpush1.xpose.msra.mxu0 0.0
        %6777 = vmatprep.subr.mxu0 0.0
        %6778 = vmatpush1.xpose.msra.mxu0 0.0
        %6779 = vmatprep.subr.mxu0 0.0
        %6780 = vmatpush1.xpose.msra.mxu0 0.0
        %6781 = vmatprep.subr.mxu0 0.0
        %6782 = vmatpush1.xpose.msra.mxu0 0.0
        %6783 = vmatprep.subr.mxu0 0.0
        %6784 = vmatpush1.xpose.msra.mxu0 0.0
        %6785 = vmatprep.subr.mxu0 0.0
        %6786 = vmatpush1.xpose.msra.mxu0 0.0
        %6787 = vmatprep.subr.mxu0 0.0
        %6788 = vmatpush1.xpose.msra.mxu0 0.0
        %6789 = vmatprep.subr.mxu0 0.0
        %6790 = vmatpush1.xpose.msra.mxu0 0.0
        %6791 = vmatprep.subr.mxu0 0.0
        %6792 = vmatpush1.xpose.msra.mxu0 0.0
        %6793 = vmatprep.subr.mxu0 0.0
        %6794 = vmatpush1.xpose.msra.mxu0 0.0
        %6795 = vmatprep.subr.mxu0 0.0
        %6796 = vmatpush1.xpose.msra.mxu0 0.0
        %6797 = vmatprep.subr.mxu0 0.0
        %6798 = vmatpush1.xpose.msra.mxu0 0.0
        %6799 = vmatprep.subr.mxu0 0.0
        %6800 = vmatpush1.xpose.msra.mxu0 0.0
        %6801 = vmatprep.subr.mxu0 0.0
        %6802 = vmatpush1.xpose.msra.mxu0 0.0
        %6803 = vmatprep.subr.mxu0 0.0
        %6804 = vmatpush1.xpose.msra.mxu0 0.0
        %6805 = vmatprep.subr.mxu0 0.0
        %6806 = vmatpush1.xpose.msra.mxu0 %v4997
        %6807 = vmatprep.subr.mxu0 0.0
        %6808 = vmatpush2.xpose.msra.mxu0 0.0
        %6809 = vmatprep.subr.mxu0 0.0
        %6810 = vmatpush2.xpose.msra.mxu0 0.0
        %6811 = vmatprep.subr.mxu0 0.0
        %6812 = vmatpush2.xpose.msra.mxu0 0.0
        %6813 = vmatprep.subr.mxu0 0.0
        %6814 = vmatpush2.xpose.msra.mxu0 0.0
        %6815 = vmatprep.subr.mxu0 0.0
        %6816 = vmatpush2.xpose.msra.mxu0 0.0
        %6817 = vmatprep.subr.mxu0 0.0
        %6818 = vmatpush2.xpose.msra.mxu0 0.0
        %6819 = vmatprep.subr.mxu0 0.0
        %6820 = vmatpush2.xpose.msra.mxu0 0.0
        %6821 = vmatprep.subr.mxu0 0.0
        %6822 = vmatpush2.xpose.msra.mxu0 0.0
        %6823 = vmatprep.subr.mxu0 0.0
        %6824 = vmatpush2.xpose.msra.mxu0 0.0
        %6825 = vmatprep.subr.mxu0 0.0
        %6826 = vmatpush2.xpose.msra.mxu0 0.0
        %6827 = vmatprep.subr.mxu0 0.0
        %6828 = vmatpush2.xpose.msra.mxu0 0.0
        %6829 = vmatprep.subr.mxu0 0.0
        %6830 = vmatpush2.xpose.msra.mxu0 0.0
        %6831 = vmatprep.subr.mxu0 0.0
        %6832 = vmatpush2.xpose.msra.mxu0 0.0
        %6833 = vmatprep.subr.mxu0 0.0
        %6834 = vmatpush2.xpose.msra.mxu0 0.0
        %6835 = vmatprep.subr.mxu0 0.0
        %6836 = vmatpush2.xpose.msra.mxu0 0.0
        %6837 = vmatprep.subr.mxu0 0.0
        %6838 = vmatpush2.xpose.msra.mxu0 0.0
        %6839 = vmatprep.mubr.f32.mxu0 0.0
        %6840 = vmatmul.mubr.f32.gmra.mxu0 %v6774
        %v6841 = vpop.f32.mrf.mxu0
        %v6842 = vadd.f32 0.0, %v6841
        %v6843 = vpop.f32.mrf.mxu0
        %6844 = vdwg.mxu0
        %v6845 = vmul.f32 %v6842, 0.25
        %v6846 = vsel %vm1467, %v6845, -inf
        %6847 = vmax.xlane.f32.xlu0 %v6846
        %v6848 = vpop.xlane.xlu0 %6847
        %v6849 = vsub.f32 %v6845, %v6848
        %v6850 = vmul.f32 %v6849, 1.442695
        %v6851 = vpow.pop %v6850
        %v6852 = vsel %vm1467, %v6851, 0.0
        %6853 = vadd.xlane.f32.xlu0 %v6852
        %v6854 = vpop.xlane.xlu0 %6853
        %v6855 = vrcp.pop %v6854
        %v6856 = vmul.f32 %v6851, %v6855
        %v6857 = vmul.f32 %v5037, %v1046
        %v6859 = vsel %vm1467, %v6856, 0
        %6861 = vmatprep.subr.mxu0 0.0
        %6862 = vmatpush1.msra.mxu0 0.0
        %6863 = vmatprep.subr.mxu0 0.0
        %6864 = vmatpush1.msra.mxu0 0.0
        %6865 = vmatprep.subr.mxu0 0.0
        %6866 = vmatpush1.msra.mxu0 0.0
        %6867 = vmatprep.subr.mxu0 0.0
        %6868 = vmatpush1.msra.mxu0 0.0
        %6869 = vmatprep.subr.mxu0 0.0
        %6870 = vmatpush1.msra.mxu0 0.0
        %6871 = vmatprep.subr.mxu0 0.0
        %6872 = vmatpush1.msra.mxu0 0.0
        %6873 = vmatprep.subr.mxu0 0.0
        %6874 = vmatpush1.msra.mxu0 0.0
        %6875 = vmatprep.subr.mxu0 0.0
        %6876 = vmatpush1.msra.mxu0 0.0
        %6877 = vmatprep.subr.mxu0 0.0
        %6878 = vmatpush1.msra.mxu0 0.0
        %6879 = vmatprep.subr.mxu0 0.0
        %6880 = vmatpush1.msra.mxu0 0.0
        %6881 = vmatprep.subr.mxu0 0.0
        %6882 = vmatpush1.msra.mxu0 0.0
        %6883 = vmatprep.subr.mxu0 0.0
        %6884 = vmatpush1.msra.mxu0 0.0
        %6885 = vmatprep.subr.mxu0 0.0
        %6886 = vmatpush1.msra.mxu0 0.0
        %6887 = vmatprep.subr.mxu0 0.0
        %6888 = vmatpush1.msra.mxu0 0.0
        %6889 = vmatprep.subr.mxu0 0.0
        %6890 = vmatpush1.msra.mxu0 0.0
        %6891 = vmatprep.subr.mxu0 0.0
        %6892 = vmatpush1.msra.mxu0 %v6857
        %6893 = vmatprep.subr.mxu0 0.0
        %6894 = vmatpush2.msra.mxu0 0.0
        %6895 = vmatprep.subr.mxu0 0.0
        %6896 = vmatpush2.msra.mxu0 0.0
        %6897 = vmatprep.subr.mxu0 0.0
        %6898 = vmatpush2.msra.mxu0 0.0
        %6899 = vmatprep.subr.mxu0 0.0
        %6900 = vmatpush2.msra.mxu0 0.0
        %6901 = vmatprep.subr.mxu0 0.0
        %6902 = vmatpush2.msra.mxu0 0.0
        %6903 = vmatprep.subr.mxu0 0.0
        %6904 = vmatpush2.msra.mxu0 0.0
        %6905 = vmatprep.subr.mxu0 0.0
        %6906 = vmatpush2.msra.mxu0 0.0
        %6907 = vmatprep.subr.mxu0 0.0
        %6908 = vmatpush2.msra.mxu0 0.0
        %6909 = vmatprep.subr.mxu0 0.0
        %6910 = vmatpush2.msra.mxu0 0.0
        %6911 = vmatprep.subr.mxu0 0.0
        %6912 = vmatpush2.msra.mxu0 0.0
        %6913 = vmatprep.subr.mxu0 0.0
        %6914 = vmatpush2.msra.mxu0 0.0
        %6915 = vmatprep.subr.mxu0 0.0
        %6916 = vmatpush2.msra.mxu0 0.0
        %6917 = vmatprep.subr.mxu0 0.0
        %6918 = vmatpush2.msra.mxu0 0.0
        %6919 = vmatprep.subr.mxu0 0.0
        %6920 = vmatpush2.msra.mxu0 0.0
        %6921 = vmatprep.subr.mxu0 0.0
        %6922 = vmatpush2.msra.mxu0 0.0
        %6923 = vmatprep.subr.mxu0 0.0
        %6924 = vmatpush2.msra.mxu0 0.0
        %6925 = vmatprep.mubr.f32.mxu0 0.0
        %6926 = vmatmul.mubr.f32.gmra.mxu0 %v6859
        %v6927 = vpop.f32.mrf.mxu0
        %v6928 = vadd.f32 0.0, %v6927
        %v6929 = vpop.f32.mrf.mxu0
        %6930 = vdwg.mxu0
        %v6931 = vadd.f32 %v6773, %v6928
        %v6932 = vmul.f32 %v4995, %v1051
        %6933 = vmatprep.subr.mxu0 0.0
        %6934 = vmatpush1.xpose.msra.mxu0 0.0
        %6935 = vmatprep.subr.mxu0 0.0
        %6936 = vmatpush1.xpose.msra.mxu0 0.0
        %6937 = vmatprep.subr.mxu0 0.0
        %6938 = vmatpush1.xpose.msra.mxu0 0.0
        %6939 = vmatprep.subr.mxu0 0.0
        %6940 = vmatpush1.xpose.msra.mxu0 0.0
        %6941 = vmatprep.subr.mxu0 0.0
        %6942 = vmatpush1.xpose.msra.mxu0 0.0
        %6943 = vmatprep.subr.mxu0 0.0
        %6944 = vmatpush1.xpose.msra.mxu0 0.0
        %6945 = vmatprep.subr.mxu0 0.0
        %6946 = vmatpush1.xpose.msra.mxu0 0.0
        %6947 = vmatprep.subr.mxu0 0.0
        %6948 = vmatpush1.xpose.msra.mxu0 0.0
        %6949 = vmatprep.subr.mxu0 0.0
        %6950 = vmatpush1.xpose.msra.mxu0 0.0
        %6951 = vmatprep.subr.mxu0 0.0
        %6952 = vmatpush1.xpose.msra.mxu0 0.0
        %6953 = vmatprep.subr.mxu0 0.0
        %6954 = vmatpush1.xpose.msra.mxu0 0.0
        %6955 = vmatprep.subr.mxu0 0.0
        %6956 = vmatpush1.xpose.msra.mxu0 0.0
        %6957 = vmatprep.subr.mxu0 0.0
        %6958 = vmatpush1.xpose.msra.mxu0 0.0
        %6959 = vmatprep.subr.mxu0 0.0
        %6960 = vmatpush1.xpose.msra.mxu0 0.0
        %6961 = vmatprep.subr.mxu0 0.0
        %6962 = vmatpush1.xpose.msra.mxu0 0.0
        %6963 = vmatprep.subr.mxu0 0.0
        %6964 = vmatpush1.xpose.msra.mxu0 %v4997
        %6965 = vmatprep.subr.mxu0 0.0
        %6966 = vmatpush2.xpose.msra.mxu0 0.0
        %6967 = vmatprep.subr.mxu0 0.0
        %6968 = vmatpush2.xpose.msra.mxu0 0.0
        %6969 = vmatprep.subr.mxu0 0.0
        %6970 = vmatpush2.xpose.msra.mxu0 0.0
        %6971 = vmatprep.subr.mxu0 0.0
        %6972 = vmatpush2.xpose.msra.mxu0 0.0
        %6973 = vmatprep.subr.mxu0 0.0
        %6974 = vmatpush2.xpose.msra.mxu0 0.0
        %6975 = vmatprep.subr.mxu0 0.0
        %6976 = vmatpush2.xpose.msra.mxu0 0.0
        %6977 = vmatprep.subr.mxu0 0.0
        %6978 = vmatpush2.xpose.msra.mxu0 0.0
        %6979 = vmatprep.subr.mxu0 0.0
        %6980 = vmatpush2.xpose.msra.mxu0 0.0
        %6981 = vmatprep.subr.mxu0 0.0
        %6982 = vmatpush2.xpose.msra.mxu0 0.0
        %6983 = vmatprep.subr.mxu0 0.0
        %6984 = vmatpush2.xpose.msra.mxu0 0.0
        %6985 = vmatprep.subr.mxu0 0.0
        %6986 = vmatpush2.xpose.msra.mxu0 0.0
        %6987 = vmatprep.subr.mxu0 0.0
        %6988 = vmatpush2.xpose.msra.mxu0 0.0
        %6989 = vmatprep.subr.mxu0 0.0
        %6990 = vmatpush2.xpose.msra.mxu0 0.0
        %6991 = vmatprep.subr.mxu0 0.0
        %6992 = vmatpush2.xpose.msra.mxu0 0.0
        %6993 = vmatprep.subr.mxu0 0.0
        %6994 = vmatpush2.xpose.msra.mxu0 0.0
        %6995 = vmatprep.subr.mxu0 0.0
        %6996 = vmatpush2.xpose.msra.mxu0 0.0
        %6997 = vmatprep.mubr.f32.mxu0 0.0
        %6998 = vmatmul.mubr.f32.gmra.mxu0 %v6932
        %v6999 = vpop.f32.mrf.mxu0
        %v7000 = vadd.f32 0.0, %v6999
        %v7001 = vpop.f32.mrf.mxu0
        %7002 = vdwg.mxu0
        %v7003 = vmul.f32 %v7000, 0.25
        %v7004 = vsel %vm1467, %v7003, -inf
        %7005 = vmax.xlane.f32.xlu0 %v7004
        %v7006 = vpop.xlane.xlu0 %7005
        %v7007 = vsub.f32 %v7003, %v7006
        %v7008 = vmul.f32 %v7007, 1.442695
        %v7009 = vpow.pop %v7008
        %v7010 = vsel %vm1467, %v7009, 0.0
        %7011 = vadd.xlane.f32.xlu0 %v7010
        %v7012 = vpop.xlane.xlu0 %7011
        %v7013 = vrcp.pop %v7012
        %v7014 = vmul.f32 %v7009, %v7013
        %v7015 = vmul.f32 %v5037, %v1051
        %v7017 = vsel %vm1467, %v7014, 0
        %7019 = vmatprep.subr.mxu0 0.0
        %7020 = vmatpush1.msra.mxu0 0.0
        %7021 = vmatprep.subr.mxu0 0.0
        %7022 = vmatpush1.msra.mxu0 0.0
        %7023 = vmatprep.subr.mxu0 0.0
        %7024 = vmatpush1.msra.mxu0 0.0
        %7025 = vmatprep.subr.mxu0 0.0
        %7026 = vmatpush1.msra.mxu0 0.0
        %7027 = vmatprep.subr.mxu0 0.0
        %7028 = vmatpush1.msra.mxu0 0.0
        %7029 = vmatprep.subr.mxu0 0.0
        %7030 = vmatpush1.msra.mxu0 0.0
        %7031 = vmatprep.subr.mxu0 0.0
        %7032 = vmatpush1.msra.mxu0 0.0
        %7033 = vmatprep.subr.mxu0 0.0
        %7034 = vmatpush1.msra.mxu0 0.0
        %7035 = vmatprep.subr.mxu0 0.0
        %7036 = vmatpush1.msra.mxu0 0.0
        %7037 = vmatprep.subr.mxu0 0.0
        %7038 = vmatpush1.msra.mxu0 0.0
        %7039 = vmatprep.subr.mxu0 0.0
        %7040 = vmatpush1.msra.mxu0 0.0
        %7041 = vmatprep.subr.mxu0 0.0
        %7042 = vmatpush1.msra.mxu0 0.0
        %7043 = vmatprep.subr.mxu0 0.0
        %7044 = vmatpush1.msra.mxu0 0.0
        %7045 = vmatprep.subr.mxu0 0.0
        %7046 = vmatpush1.msra.mxu0 0.0
        %7047 = vmatprep.subr.mxu0 0.0
        %7048 = vmatpush1.msra.mxu0 0.0
        %7049 = vmatprep.subr.mxu0 0.0
        %7050 = vmatpush1.msra.mxu0 %v7015
        %7051 = vmatprep.subr.mxu0 0.0
        %7052 = vmatpush2.msra.mxu0 0.0
        %7053 = vmatprep.subr.mxu0 0.0
        %7054 = vmatpush2.msra.mxu0 0.0
        %7055 = vmatprep.subr.mxu0 0.0
        %7056 = vmatpush2.msra.mxu0 0.0
        %7057 = vmatprep.subr.mxu0 0.0
        %7058 = vmatpush2.msra.mxu0 0.0
        %7059 = vmatprep.subr.mxu0 0.0
        %7060 = vmatpush2.msra.mxu0 0.0
        %7061 = vmatprep.subr.mxu0 0.0
        %7062 = vmatpush2.msra.mxu0 0.0
        %7063 = vmatprep.subr.mxu0 0.0
        %7064 = vmatpush2.msra.mxu0 0.0
        %7065 = vmatprep.subr.mxu0 0.0
        %7066 = vmatpush2.msra.mxu0 0.0
        %7067 = vmatprep.subr.mxu0 0.0
        %7068 = vmatpush2.msra.mxu0 0.0
        %7069 = vmatprep.subr.mxu0 0.0
        %7070 = vmatpush2.msra.mxu0 0.0
        %7071 = vmatprep.subr.mxu0 0.0
        %7072 = vmatpush2.msra.mxu0 0.0
        %7073 = vmatprep.subr.mxu0 0.0
        %7074 = vmatpush2.msra.mxu0 0.0
        %7075 = vmatprep.subr.mxu0 0.0
        %7076 = vmatpush2.msra.mxu0 0.0
        %7077 = vmatprep.subr.mxu0 0.0
        %7078 = vmatpush2.msra.mxu0 0.0
        %7079 = vmatprep.subr.mxu0 0.0
        %7080 = vmatpush2.msra.mxu0 0.0
        %7081 = vmatprep.subr.mxu0 0.0
        %7082 = vmatpush2.msra.mxu0 0.0
        %7083 = vmatprep.mubr.f32.mxu0 0.0
        %7084 = vmatmul.mubr.f32.gmra.mxu0 %v7017
        %v7085 = vpop.f32.mrf.mxu0
        %v7086 = vadd.f32 0.0, %v7085
        %v7087 = vpop.f32.mrf.mxu0
        %7088 = vdwg.mxu0
        %v7089 = vadd.f32 %v6931, %v7086
        %v7090 = vmul.f32 %v4995, %v1056
        %7091 = vmatprep.subr.mxu0 0.0
        %7092 = vmatpush1.xpose.msra.mxu0 0.0
        %7093 = vmatprep.subr.mxu0 0.0
        %7094 = vmatpush1.xpose.msra.mxu0 0.0
        %7095 = vmatprep.subr.mxu0 0.0
        %7096 = vmatpush1.xpose.msra.mxu0 0.0
        %7097 = vmatprep.subr.mxu0 0.0
        %7098 = vmatpush1.xpose.msra.mxu0 0.0
        %7099 = vmatprep.subr.mxu0 0.0
        %7100 = vmatpush1.xpose.msra.mxu0 0.0
        %7101 = vmatprep.subr.mxu0 0.0
        %7102 = vmatpush1.xpose.msra.mxu0 0.0
        %7103 = vmatprep.subr.mxu0 0.0
        %7104 = vmatpush1.xpose.msra.mxu0 0.0
        %7105 = vmatprep.subr.mxu0 0.0
        %7106 = vmatpush1.xpose.msra.mxu0 0.0
        %7107 = vmatprep.subr.mxu0 0.0
        %7108 = vmatpush1.xpose.msra.mxu0 0.0
        %7109 = vmatprep.subr.mxu0 0.0
        %7110 = vmatpush1.xpose.msra.mxu0 0.0
        %7111 = vmatprep.subr.mxu0 0.0
        %7112 = vmatpush1.xpose.msra.mxu0 0.0
        %7113 = vmatprep.subr.mxu0 0.0
        %7114 = vmatpush1.xpose.msra.mxu0 0.0
        %7115 = vmatprep.subr.mxu0 0.0
        %7116 = vmatpush1.xpose.msra.mxu0 0.0
        %7117 = vmatprep.subr.mxu0 0.0
        %7118 = vmatpush1.xpose.msra.mxu0 0.0
        %7119 = vmatprep.subr.mxu0 0.0
        %7120 = vmatpush1.xpose.msra.mxu0 0.0
        %7121 = vmatprep.subr.mxu0 0.0
        %7122 = vmatpush1.xpose.msra.mxu0 %v4997
        %7123 = vmatprep.subr.mxu0 0.0
        %7124 = vmatpush2.xpose.msra.mxu0 0.0
        %7125 = vmatprep.subr.mxu0 0.0
        %7126 = vmatpush2.xpose.msra.mxu0 0.0
        %7127 = vmatprep.subr.mxu0 0.0
        %7128 = vmatpush2.xpose.msra.mxu0 0.0
        %7129 = vmatprep.subr.mxu0 0.0
        %7130 = vmatpush2.xpose.msra.mxu0 0.0
        %7131 = vmatprep.subr.mxu0 0.0
        %7132 = vmatpush2.xpose.msra.mxu0 0.0
        %7133 = vmatprep.subr.mxu0 0.0
        %7134 = vmatpush2.xpose.msra.mxu0 0.0
        %7135 = vmatprep.subr.mxu0 0.0
        %7136 = vmatpush2.xpose.msra.mxu0 0.0
        %7137 = vmatprep.subr.mxu0 0.0
        %7138 = vmatpush2.xpose.msra.mxu0 0.0
        %7139 = vmatprep.subr.mxu0 0.0
        %7140 = vmatpush2.xpose.msra.mxu0 0.0
        %7141 = vmatprep.subr.mxu0 0.0
        %7142 = vmatpush2.xpose.msra.mxu0 0.0
        %7143 = vmatprep.subr.mxu0 0.0
        %7144 = vmatpush2.xpose.msra.mxu0 0.0
        %7145 = vmatprep.subr.mxu0 0.0
        %7146 = vmatpush2.xpose.msra.mxu0 0.0
        %7147 = vmatprep.subr.mxu0 0.0
        %7148 = vmatpush2.xpose.msra.mxu0 0.0
        %7149 = vmatprep.subr.mxu0 0.0
        %7150 = vmatpush2.xpose.msra.mxu0 0.0
        %7151 = vmatprep.subr.mxu0 0.0
        %7152 = vmatpush2.xpose.msra.mxu0 0.0
        %7153 = vmatprep.subr.mxu0 0.0
        %7154 = vmatpush2.xpose.msra.mxu0 0.0
        %7155 = vmatprep.mubr.f32.mxu0 0.0
        %7156 = vmatmul.mubr.f32.gmra.mxu0 %v7090
        %v7157 = vpop.f32.mrf.mxu0
        %v7158 = vadd.f32 0.0, %v7157
        %v7159 = vpop.f32.mrf.mxu0
        %7160 = vdwg.mxu0
        %v7161 = vmul.f32 %v7158, 0.25
        %v7162 = vsel %vm1467, %v7161, -inf
        %7163 = vmax.xlane.f32.xlu0 %v7162
        %v7164 = vpop.xlane.xlu0 %7163
        %v7165 = vsub.f32 %v7161, %v7164
        %v7166 = vmul.f32 %v7165, 1.442695
        %v7167 = vpow.pop %v7166
        %v7168 = vsel %vm1467, %v7167, 0.0
        %7169 = vadd.xlane.f32.xlu0 %v7168
        %v7170 = vpop.xlane.xlu0 %7169
        %v7171 = vrcp.pop %v7170
        %v7172 = vmul.f32 %v7167, %v7171
        %v7173 = vmul.f32 %v5037, %v1056
        %v7175 = vsel %vm1467, %v7172, 0
        %7177 = vmatprep.subr.mxu0 0.0
        %7178 = vmatpush1.msra.mxu0 0.0
        %7179 = vmatprep.subr.mxu0 0.0
        %7180 = vmatpush1.msra.mxu0 0.0
        %7181 = vmatprep.subr.mxu0 0.0
        %7182 = vmatpush1.msra.mxu0 0.0
        %7183 = vmatprep.subr.mxu0 0.0
        %7184 = vmatpush1.msra.mxu0 0.0
        %7185 = vmatprep.subr.mxu0 0.0
        %7186 = vmatpush1.msra.mxu0 0.0
        %7187 = vmatprep.subr.mxu0 0.0
        %7188 = vmatpush1.msra.mxu0 0.0
        %7189 = vmatprep.subr.mxu0 0.0
        %7190 = vmatpush1.msra.mxu0 0.0
        %7191 = vmatprep.subr.mxu0 0.0
        %7192 = vmatpush1.msra.mxu0 0.0
        %7193 = vmatprep.subr.mxu0 0.0
        %7194 = vmatpush1.msra.mxu0 0.0
        %7195 = vmatprep.subr.mxu0 0.0
        %7196 = vmatpush1.msra.mxu0 0.0
        %7197 = vmatprep.subr.mxu0 0.0
        %7198 = vmatpush1.msra.mxu0 0.0
        %7199 = vmatprep.subr.mxu0 0.0
        %7200 = vmatpush1.msra.mxu0 0.0
        %7201 = vmatprep.subr.mxu0 0.0
        %7202 = vmatpush1.msra.mxu0 0.0
        %7203 = vmatprep.subr.mxu0 0.0
        %7204 = vmatpush1.msra.mxu0 0.0
        %7205 = vmatprep.subr.mxu0 0.0
        %7206 = vmatpush1.msra.mxu0 0.0
        %7207 = vmatprep.subr.mxu0 0.0
        %7208 = vmatpush1.msra.mxu0 %v7173
        %7209 = vmatprep.subr.mxu0 0.0
        %7210 = vmatpush2.msra.mxu0 0.0
        %7211 = vmatprep.subr.mxu0 0.0
        %7212 = vmatpush2.msra.mxu0 0.0
        %7213 = vmatprep.subr.mxu0 0.0
        %7214 = vmatpush2.msra.mxu0 0.0
        %7215 = vmatprep.subr.mxu0 0.0
        %7216 = vmatpush2.msra.mxu0 0.0
        %7217 = vmatprep.subr.mxu0 0.0
        %7218 = vmatpush2.msra.mxu0 0.0
        %7219 = vmatprep.subr.mxu0 0.0
        %7220 = vmatpush2.msra.mxu0 0.0
        %7221 = vmatprep.subr.mxu0 0.0
        %7222 = vmatpush2.msra.mxu0 0.0
        %7223 = vmatprep.subr.mxu0 0.0
        %7224 = vmatpush2.msra.mxu0 0.0
        %7225 = vmatprep.subr.mxu0 0.0
        %7226 = vmatpush2.msra.mxu0 0.0
        %7227 = vmatprep.subr.mxu0 0.0
        %7228 = vmatpush2.msra.mxu0 0.0
        %7229 = vmatprep.subr.mxu0 0.0
        %7230 = vmatpush2.msra.mxu0 0.0
        %7231 = vmatprep.subr.mxu0 0.0
        %7232 = vmatpush2.msra.mxu0 0.0
        %7233 = vmatprep.subr.mxu0 0.0
        %7234 = vmatpush2.msra.mxu0 0.0
        %7235 = vmatprep.subr.mxu0 0.0
        %7236 = vmatpush2.msra.mxu0 0.0
        %7237 = vmatprep.subr.mxu0 0.0
        %7238 = vmatpush2.msra.mxu0 0.0
        %7239 = vmatprep.subr.mxu0 0.0
        %7240 = vmatpush2.msra.mxu0 0.0
        %7241 = vmatprep.mubr.f32.mxu0 0.0
        %7242 = vmatmul.mubr.f32.gmra.mxu0 %v7175
        %v7243 = vpop.f32.mrf.mxu0
        %v7244 = vadd.f32 0.0, %v7243
        %v7245 = vpop.f32.mrf.mxu0
        %7246 = vdwg.mxu0
        %v7247 = vadd.f32 %v7089, %v7244
        %v7248 = vmul.f32 %v4995, %v1061
        %7249 = vmatprep.subr.mxu0 0.0
        %7250 = vmatpush1.xpose.msra.mxu0 0.0
        %7251 = vmatprep.subr.mxu0 0.0
        %7252 = vmatpush1.xpose.msra.mxu0 0.0
        %7253 = vmatprep.subr.mxu0 0.0
        %7254 = vmatpush1.xpose.msra.mxu0 0.0
        %7255 = vmatprep.subr.mxu0 0.0
        %7256 = vmatpush1.xpose.msra.mxu0 0.0
        %7257 = vmatprep.subr.mxu0 0.0
        %7258 = vmatpush1.xpose.msra.mxu0 0.0
        %7259 = vmatprep.subr.mxu0 0.0
        %7260 = vmatpush1.xpose.msra.mxu0 0.0
        %7261 = vmatprep.subr.mxu0 0.0
        %7262 = vmatpush1.xpose.msra.mxu0 0.0
        %7263 = vmatprep.subr.mxu0 0.0
        %7264 = vmatpush1.xpose.msra.mxu0 0.0
        %7265 = vmatprep.subr.mxu0 0.0
        %7266 = vmatpush1.xpose.msra.mxu0 0.0
        %7267 = vmatprep.subr.mxu0 0.0
        %7268 = vmatpush1.xpose.msra.mxu0 0.0
        %7269 = vmatprep.subr.mxu0 0.0
        %7270 = vmatpush1.xpose.msra.mxu0 0.0
        %7271 = vmatprep.subr.mxu0 0.0
        %7272 = vmatpush1.xpose.msra.mxu0 0.0
        %7273 = vmatprep.subr.mxu0 0.0
        %7274 = vmatpush1.xpose.msra.mxu0 0.0
        %7275 = vmatprep.subr.mxu0 0.0
        %7276 = vmatpush1.xpose.msra.mxu0 0.0
        %7277 = vmatprep.subr.mxu0 0.0
        %7278 = vmatpush1.xpose.msra.mxu0 0.0
        %7279 = vmatprep.subr.mxu0 0.0
        %7280 = vmatpush1.xpose.msra.mxu0 %v4997
        %7281 = vmatprep.subr.mxu0 0.0
        %7282 = vmatpush2.xpose.msra.mxu0 0.0
        %7283 = vmatprep.subr.mxu0 0.0
        %7284 = vmatpush2.xpose.msra.mxu0 0.0
        %7285 = vmatprep.subr.mxu0 0.0
        %7286 = vmatpush2.xpose.msra.mxu0 0.0
        %7287 = vmatprep.subr.mxu0 0.0
        %7288 = vmatpush2.xpose.msra.mxu0 0.0
        %7289 = vmatprep.subr.mxu0 0.0
        %7290 = vmatpush2.xpose.msra.mxu0 0.0
        %7291 = vmatprep.subr.mxu0 0.0
        %7292 = vmatpush2.xpose.msra.mxu0 0.0
        %7293 = vmatprep.subr.mxu0 0.0
        %7294 = vmatpush2.xpose.msra.mxu0 0.0
        %7295 = vmatprep.subr.mxu0 0.0
        %7296 = vmatpush2.xpose.msra.mxu0 0.0
        %7297 = vmatprep.subr.mxu0 0.0
        %7298 = vmatpush2.xpose.msra.mxu0 0.0
        %7299 = vmatprep.subr.mxu0 0.0
        %7300 = vmatpush2.xpose.msra.mxu0 0.0
        %7301 = vmatprep.subr.mxu0 0.0
        %7302 = vmatpush2.xpose.msra.mxu0 0.0
        %7303 = vmatprep.subr.mxu0 0.0
        %7304 = vmatpush2.xpose.msra.mxu0 0.0
        %7305 = vmatprep.subr.mxu0 0.0
        %7306 = vmatpush2.xpose.msra.mxu0 0.0
        %7307 = vmatprep.subr.mxu0 0.0
        %7308 = vmatpush2.xpose.msra.mxu0 0.0
        %7309 = vmatprep.subr.mxu0 0.0
        %7310 = vmatpush2.xpose.msra.mxu0 0.0
        %7311 = vmatprep.subr.mxu0 0.0
        %7312 = vmatpush2.xpose.msra.mxu0 0.0
        %7313 = vmatprep.mubr.f32.mxu0 0.0
        %7314 = vmatmul.mubr.f32.gmra.mxu0 %v7248
        %v7315 = vpop.f32.mrf.mxu0
        %v7316 = vadd.f32 0.0, %v7315
        %v7317 = vpop.f32.mrf.mxu0
        %7318 = vdwg.mxu0
        %v7319 = vmul.f32 %v7316, 0.25
        %v7320 = vsel %vm1467, %v7319, -inf
        %7321 = vmax.xlane.f32.xlu0 %v7320
        %v7322 = vpop.xlane.xlu0 %7321
        %v7323 = vsub.f32 %v7319, %v7322
        %v7324 = vmul.f32 %v7323, 1.442695
        %v7325 = vpow.pop %v7324
        %v7326 = vsel %vm1467, %v7325, 0.0
        %7327 = vadd.xlane.f32.xlu0 %v7326
        %v7328 = vpop.xlane.xlu0 %7327
        %v7329 = vrcp.pop %v7328
        %v7330 = vmul.f32 %v7325, %v7329
        %v7331 = vmul.f32 %v5037, %v1061
        %v7333 = vsel %vm1467, %v7330, 0
        %7335 = vmatprep.subr.mxu0 0.0
        %7336 = vmatpush1.msra.mxu0 0.0
        %7337 = vmatprep.subr.mxu0 0.0
        %7338 = vmatpush1.msra.mxu0 0.0
        %7339 = vmatprep.subr.mxu0 0.0
        %7340 = vmatpush1.msra.mxu0 0.0
        %7341 = vmatprep.subr.mxu0 0.0
        %7342 = vmatpush1.msra.mxu0 0.0
        %7343 = vmatprep.subr.mxu0 0.0
        %7344 = vmatpush1.msra.mxu0 0.0
        %7345 = vmatprep.subr.mxu0 0.0
        %7346 = vmatpush1.msra.mxu0 0.0
        %7347 = vmatprep.subr.mxu0 0.0
        %7348 = vmatpush1.msra.mxu0 0.0
        %7349 = vmatprep.subr.mxu0 0.0
        %7350 = vmatpush1.msra.mxu0 0.0
        %7351 = vmatprep.subr.mxu0 0.0
        %7352 = vmatpush1.msra.mxu0 0.0
        %7353 = vmatprep.subr.mxu0 0.0
        %7354 = vmatpush1.msra.mxu0 0.0
        %7355 = vmatprep.subr.mxu0 0.0
        %7356 = vmatpush1.msra.mxu0 0.0
        %7357 = vmatprep.subr.mxu0 0.0
        %7358 = vmatpush1.msra.mxu0 0.0
        %7359 = vmatprep.subr.mxu0 0.0
        %7360 = vmatpush1.msra.mxu0 0.0
        %7361 = vmatprep.subr.mxu0 0.0
        %7362 = vmatpush1.msra.mxu0 0.0
        %7363 = vmatprep.subr.mxu0 0.0
        %7364 = vmatpush1.msra.mxu0 0.0
        %7365 = vmatprep.subr.mxu0 0.0
        %7366 = vmatpush1.msra.mxu0 %v7331
        %7367 = vmatprep.subr.mxu0 0.0
        %7368 = vmatpush2.msra.mxu0 0.0
        %7369 = vmatprep.subr.mxu0 0.0
        %7370 = vmatpush2.msra.mxu0 0.0
        %7371 = vmatprep.subr.mxu0 0.0
        %7372 = vmatpush2.msra.mxu0 0.0
        %7373 = vmatprep.subr.mxu0 0.0
        %7374 = vmatpush2.msra.mxu0 0.0
        %7375 = vmatprep.subr.mxu0 0.0
        %7376 = vmatpush2.msra.mxu0 0.0
        %7377 = vmatprep.subr.mxu0 0.0
        %7378 = vmatpush2.msra.mxu0 0.0
        %7379 = vmatprep.subr.mxu0 0.0
        %7380 = vmatpush2.msra.mxu0 0.0
        %7381 = vmatprep.subr.mxu0 0.0
        %7382 = vmatpush2.msra.mxu0 0.0
        %7383 = vmatprep.subr.mxu0 0.0
        %7384 = vmatpush2.msra.mxu0 0.0
        %7385 = vmatprep.subr.mxu0 0.0
        %7386 = vmatpush2.msra.mxu0 0.0
        %7387 = vmatprep.subr.mxu0 0.0
        %7388 = vmatpush2.msra.mxu0 0.0
        %7389 = vmatprep.subr.mxu0 0.0
        %7390 = vmatpush2.msra.mxu0 0.0
        %7391 = vmatprep.subr.mxu0 0.0
        %7392 = vmatpush2.msra.mxu0 0.0
        %7393 = vmatprep.subr.mxu0 0.0
        %7394 = vmatpush2.msra.mxu0 0.0
        %7395 = vmatprep.subr.mxu0 0.0
        %7396 = vmatpush2.msra.mxu0 0.0
        %7397 = vmatprep.subr.mxu0 0.0
        %7398 = vmatpush2.msra.mxu0 0.0
        %7399 = vmatprep.mubr.f32.mxu0 0.0
        %7400 = vmatmul.mubr.f32.gmra.mxu0 %v7333
        %v7401 = vpop.f32.mrf.mxu0
        %v7402 = vadd.f32 0.0, %v7401
        %v7403 = vpop.f32.mrf.mxu0
        %7404 = vdwg.mxu0
        %v7405 = vadd.f32 %v7247, %v7402
        %v7406 = vmul.f32 %v4995, %v1066
        %7407 = vmatprep.subr.mxu0 0.0
        %7408 = vmatpush1.xpose.msra.mxu0 0.0
        %7409 = vmatprep.subr.mxu0 0.0
        %7410 = vmatpush1.xpose.msra.mxu0 0.0
        %7411 = vmatprep.subr.mxu0 0.0
        %7412 = vmatpush1.xpose.msra.mxu0 0.0
        %7413 = vmatprep.subr.mxu0 0.0
        %7414 = vmatpush1.xpose.msra.mxu0 0.0
        %7415 = vmatprep.subr.mxu0 0.0
        %7416 = vmatpush1.xpose.msra.mxu0 0.0
        %7417 = vmatprep.subr.mxu0 0.0
        %7418 = vmatpush1.xpose.msra.mxu0 0.0
        %7419 = vmatprep.subr.mxu0 0.0
        %7420 = vmatpush1.xpose.msra.mxu0 0.0
        %7421 = vmatprep.subr.mxu0 0.0
        %7422 = vmatpush1.xpose.msra.mxu0 0.0
        %7423 = vmatprep.subr.mxu0 0.0
        %7424 = vmatpush1.xpose.msra.mxu0 0.0
        %7425 = vmatprep.subr.mxu0 0.0
        %7426 = vmatpush1.xpose.msra.mxu0 0.0
        %7427 = vmatprep.subr.mxu0 0.0
        %7428 = vmatpush1.xpose.msra.mxu0 0.0
        %7429 = vmatprep.subr.mxu0 0.0
        %7430 = vmatpush1.xpose.msra.mxu0 0.0
        %7431 = vmatprep.subr.mxu0 0.0
        %7432 = vmatpush1.xpose.msra.mxu0 0.0
        %7433 = vmatprep.subr.mxu0 0.0
        %7434 = vmatpush1.xpose.msra.mxu0 0.0
        %7435 = vmatprep.subr.mxu0 0.0
        %7436 = vmatpush1.xpose.msra.mxu0 0.0
        %7437 = vmatprep.subr.mxu0 0.0
        %7438 = vmatpush1.xpose.msra.mxu0 %v4997
        %7439 = vmatprep.subr.mxu0 0.0
        %7440 = vmatpush2.xpose.msra.mxu0 0.0
        %7441 = vmatprep.subr.mxu0 0.0
        %7442 = vmatpush2.xpose.msra.mxu0 0.0
        %7443 = vmatprep.subr.mxu0 0.0
        %7444 = vmatpush2.xpose.msra.mxu0 0.0
        %7445 = vmatprep.subr.mxu0 0.0
        %7446 = vmatpush2.xpose.msra.mxu0 0.0
        %7447 = vmatprep.subr.mxu0 0.0
        %7448 = vmatpush2.xpose.msra.mxu0 0.0
        %7449 = vmatprep.subr.mxu0 0.0
        %7450 = vmatpush2.xpose.msra.mxu0 0.0
        %7451 = vmatprep.subr.mxu0 0.0
        %7452 = vmatpush2.xpose.msra.mxu0 0.0
        %7453 = vmatprep.subr.mxu0 0.0
        %7454 = vmatpush2.xpose.msra.mxu0 0.0
        %7455 = vmatprep.subr.mxu0 0.0
        %7456 = vmatpush2.xpose.msra.mxu0 0.0
        %7457 = vmatprep.subr.mxu0 0.0
        %7458 = vmatpush2.xpose.msra.mxu0 0.0
        %7459 = vmatprep.subr.mxu0 0.0
        %7460 = vmatpush2.xpose.msra.mxu0 0.0
        %7461 = vmatprep.subr.mxu0 0.0
        %7462 = vmatpush2.xpose.msra.mxu0 0.0
        %7463 = vmatprep.subr.mxu0 0.0
        %7464 = vmatpush2.xpose.msra.mxu0 0.0
        %7465 = vmatprep.subr.mxu0 0.0
        %7466 = vmatpush2.xpose.msra.mxu0 0.0
        %7467 = vmatprep.subr.mxu0 0.0
        %7468 = vmatpush2.xpose.msra.mxu0 0.0
        %7469 = vmatprep.subr.mxu0 0.0
        %7470 = vmatpush2.xpose.msra.mxu0 0.0
        %7471 = vmatprep.mubr.f32.mxu0 0.0
        %7472 = vmatmul.mubr.f32.gmra.mxu0 %v7406
        %v7473 = vpop.f32.mrf.mxu0
        %v7474 = vadd.f32 0.0, %v7473
        %v7475 = vpop.f32.mrf.mxu0
        %7476 = vdwg.mxu0
        %v7477 = vmul.f32 %v7474, 0.25
        %v7478 = vsel %vm1467, %v7477, -inf
        %7479 = vmax.xlane.f32.xlu0 %v7478
        %v7480 = vpop.xlane.xlu0 %7479
        %v7481 = vsub.f32 %v7477, %v7480
        %v7482 = vmul.f32 %v7481, 1.442695
        %v7483 = vpow.pop %v7482
        %v7484 = vsel %vm1467, %v7483, 0.0
        %7485 = vadd.xlane.f32.xlu0 %v7484
        %v7486 = vpop.xlane.xlu0 %7485
        %v7487 = vrcp.pop %v7486
        %v7488 = vmul.f32 %v7483, %v7487
        %v7489 = vmul.f32 %v5037, %v1066
        %v7491 = vsel %vm1467, %v7488, 0
        %7493 = vmatprep.subr.mxu0 0.0
        %7494 = vmatpush1.msra.mxu0 0.0
        %7495 = vmatprep.subr.mxu0 0.0
        %7496 = vmatpush1.msra.mxu0 0.0
        %7497 = vmatprep.subr.mxu0 0.0
        %7498 = vmatpush1.msra.mxu0 0.0
        %7499 = vmatprep.subr.mxu0 0.0
        %7500 = vmatpush1.msra.mxu0 0.0
        %7501 = vmatprep.subr.mxu0 0.0
        %7502 = vmatpush1.msra.mxu0 0.0
        %7503 = vmatprep.subr.mxu0 0.0
        %7504 = vmatpush1.msra.mxu0 0.0
        %7505 = vmatprep.subr.mxu0 0.0
        %7506 = vmatpush1.msra.mxu0 0.0
        %7507 = vmatprep.subr.mxu0 0.0
        %7508 = vmatpush1.msra.mxu0 0.0
        %7509 = vmatprep.subr.mxu0 0.0
        %7510 = vmatpush1.msra.mxu0 0.0
        %7511 = vmatprep.subr.mxu0 0.0
        %7512 = vmatpush1.msra.mxu0 0.0
        %7513 = vmatprep.subr.mxu0 0.0
        %7514 = vmatpush1.msra.mxu0 0.0
        %7515 = vmatprep.subr.mxu0 0.0
        %7516 = vmatpush1.msra.mxu0 0.0
        %7517 = vmatprep.subr.mxu0 0.0
        %7518 = vmatpush1.msra.mxu0 0.0
        %7519 = vmatprep.subr.mxu0 0.0
        %7520 = vmatpush1.msra.mxu0 0.0
        %7521 = vmatprep.subr.mxu0 0.0
        %7522 = vmatpush1.msra.mxu0 0.0
        %7523 = vmatprep.subr.mxu0 0.0
        %7524 = vmatpush1.msra.mxu0 %v7489
        %7525 = vmatprep.subr.mxu0 0.0
        %7526 = vmatpush2.msra.mxu0 0.0
        %7527 = vmatprep.subr.mxu0 0.0
        %7528 = vmatpush2.msra.mxu0 0.0
        %7529 = vmatprep.subr.mxu0 0.0
        %7530 = vmatpush2.msra.mxu0 0.0
        %7531 = vmatprep.subr.mxu0 0.0
        %7532 = vmatpush2.msra.mxu0 0.0
        %7533 = vmatprep.subr.mxu0 0.0
        %7534 = vmatpush2.msra.mxu0 0.0
        %7535 = vmatprep.subr.mxu0 0.0
        %7536 = vmatpush2.msra.mxu0 0.0
        %7537 = vmatprep.subr.mxu0 0.0
        %7538 = vmatpush2.msra.mxu0 0.0
        %7539 = vmatprep.subr.mxu0 0.0
        %7540 = vmatpush2.msra.mxu0 0.0
        %7541 = vmatprep.subr.mxu0 0.0
        %7542 = vmatpush2.msra.mxu0 0.0
        %7543 = vmatprep.subr.mxu0 0.0
        %7544 = vmatpush2.msra.mxu0 0.0
        %7545 = vmatprep.subr.mxu0 0.0
        %7546 = vmatpush2.msra.mxu0 0.0
        %7547 = vmatprep.subr.mxu0 0.0
        %7548 = vmatpush2.msra.mxu0 0.0
        %7549 = vmatprep.subr.mxu0 0.0
        %7550 = vmatpush2.msra.mxu0 0.0
        %7551 = vmatprep.subr.mxu0 0.0
        %7552 = vmatpush2.msra.mxu0 0.0
        %7553 = vmatprep.subr.mxu0 0.0
        %7554 = vmatpush2.msra.mxu0 0.0
        %7555 = vmatprep.subr.mxu0 0.0
        %7556 = vmatpush2.msra.mxu0 0.0
        %7557 = vmatprep.mubr.f32.mxu0 0.0
        %7558 = vmatmul.mubr.f32.gmra.mxu0 %v7491
        %v7559 = vpop.f32.mrf.mxu0
        %v7560 = vadd.f32 0.0, %v7559
        %v7561 = vpop.f32.mrf.mxu0
        %7562 = vdwg.mxu0
        %v7563 = vadd.f32 %v7405, %v7560
        %s7564 = scalar_lea.vmem %s844, 64 [#allocation13]
        %v7565 = vld [vmem:[%s7564] sm:$0xf]
        %v7566 = vld [vmem:[%s7564 + $0x4] sm:$0xf]
        %v7567 = vld [vmem:[%s7564 + $0x8] sm:$0xf]
        %v7568 = vld [vmem:[%s7564 + $0xc] sm:$0xf]
        %v7569 = vld [vmem:[%s7564 + $0x10] sm:$0xf]
        %v7570 = vld [vmem:[%s7564 + $0x14] sm:$0xf]
        %v7571 = vld [vmem:[%s7564 + $0x18] sm:$0xf]
        %v7572 = vld [vmem:[%s7564 + $0x1c] sm:$0xf]
        %v7573 = vld [vmem:[%s7564 + $0x20] sm:$0xf]
        %v7574 = vld [vmem:[%s7564 + $0x24] sm:$0xf]
        %v7575 = vld [vmem:[%s7564 + $0x28] sm:$0xf]
        %v7576 = vld [vmem:[%s7564 + $0x2c] sm:$0xf]
        %v7577 = vld [vmem:[%s7564 + $0x30] sm:$0xf]
        %v7578 = vld [vmem:[%s7564 + $0x34] sm:$0xf]
        %v7579 = vld [vmem:[%s7564 + $0x38] sm:$0xf]
        %v7580 = vld [vmem:[%s7564 + $0x3c] sm:$0xf]
        %v7581 = vpack.c.bf16 %v7563, %v6301
        %s7582 = scalar_lea.vmem %s1011, 1
        %v7583 = vld [vmem:[%s7582] sm:$0x1]
        %v7585 = vlaneseq
        %v7586 = vshrl.u32 %v7585, 7
        %v7587 = vsub.s32 0, %v7586
        %v7588 = vrot.slane %v7583, %v7587
        %v7606 = vunpack.c.l.b16 %v7565
        %v7607 = vunpack.c.l.b16 %v7566
        %v7608 = vunpack.c.l.b16 %v7567
        %v7609 = vunpack.c.l.b16 %v7568
        %v7610 = vunpack.c.l.b16 %v7569
        %v7611 = vunpack.c.l.b16 %v7570
        %v7612 = vunpack.c.l.b16 %v7571
        %v7613 = vunpack.c.l.b16 %v7572
        %v7614 = vunpack.c.l.b16 %v7573
        %v7615 = vunpack.c.l.b16 %v7574
        %v7616 = vunpack.c.l.b16 %v7575
        %v7617 = vunpack.c.l.b16 %v7576
        %v7618 = vunpack.c.l.b16 %v7577
        %v7619 = vunpack.c.l.b16 %v7578
        %v7620 = vunpack.c.l.b16 %v7579
        %v7621 = vunpack.c.l.b16 %v7580
        %v7622 = vpack.c.b16 %v7607, %v7606
        %v7623 = vpack.c.b16 %v7609, %v7608
        %v7624 = vpack.c.b16 %v7611, %v7610
        %v7625 = vpack.c.b16 %v7613, %v7612
        %v7626 = vpack.c.b16 %v7615, %v7614
        %v7627 = vpack.c.b16 %v7617, %v7616
        %v7628 = vpack.c.b16 %v7619, %v7618
        %v7629 = vpack.c.b16 %v7621, %v7620
        %7638 = vmatprep.subr.bf16.mxu0 0
        %7639 = vmatpush1.bf16.msra.mxu0 %v7629
        %7640 = vmatprep.subr.bf16.mxu0 0
        %7641 = vmatpush1.bf16.msra.mxu0 %v7628
        %7642 = vmatprep.subr.bf16.mxu0 0
        %7643 = vmatpush1.bf16.msra.mxu0 %v7627
        %7644 = vmatprep.subr.bf16.mxu0 0
        %7645 = vmatpush1.bf16.msra.mxu0 %v7626
        %7646 = vmatprep.subr.bf16.mxu0 0
        %7647 = vmatpush1.bf16.msra.mxu0 %v7625
        %7648 = vmatprep.subr.bf16.mxu0 0
        %7649 = vmatpush1.bf16.msra.mxu0 %v7624
        %7650 = vmatprep.subr.bf16.mxu0 0
        %7651 = vmatpush1.bf16.msra.mxu0 %v7623
        %7652 = vmatprep.subr.bf16.mxu0 0
        %7653 = vmatpush1.bf16.msra.mxu0 %v7622
        %7654 = vmatprep.subr.bf16.mxu0 0
        %7655 = vmatpush2.bf16.msra.mxu0 0
        %7656 = vmatprep.subr.bf16.mxu0 0
        %7657 = vmatpush2.bf16.msra.mxu0 0
        %7658 = vmatprep.subr.bf16.mxu0 0
        %7659 = vmatpush2.bf16.msra.mxu0 0
        %7660 = vmatprep.subr.bf16.mxu0 0
        %7661 = vmatpush2.bf16.msra.mxu0 0
        %7662 = vmatprep.subr.bf16.mxu0 0
        %7663 = vmatpush2.bf16.msra.mxu0 0
        %7664 = vmatprep.subr.bf16.mxu0 0
        %7665 = vmatpush2.bf16.msra.mxu0 0
        %7666 = vmatprep.subr.bf16.mxu0 0
        %7667 = vmatpush2.bf16.msra.mxu0 0
        %7668 = vmatprep.subr.bf16.mxu0 0
        %7669 = vmatpush2.bf16.msra.mxu0 0
        %7670 = vmatprep.mubr.bf16.mxu0 0
        %7671 = vmatmul.mubr.bf16.gmra.mxu0 %v7581
        %v7672 = vpop.f32.mrf.mxu0
        %v7673 = vadd.f32 %v7588, %v7672
        %v7674 = vpop.f32.mrf.mxu0
        %v7675 = vpop.f32.mrf.mxu0
        %v7676 = vadd.f32 %v7588, %v7675
        %v7677 = vpop.f32.mrf.mxu0
        %7678 = vdwg.mxu0
        %v7679 = vadd.f32 %v4774, %v7673
        %v7680 = vadd.f32 %v4775, %v7676
        %s7681 = scalar_lea.vmem %s1015, 1
        %v7682 = vld [vmem:[%s7681] sm:$0x1]
        %s7683 = scalar_lea.vmem %s853, 1 [#allocation14]
        %v7684 = vld [vmem:[%s7683] sm:$0x1]
        %7685 = vadd.xlane.f32.xlu0 %v7679
        %v7686 = vpop.xlane.xlu0 %7685
        %7687 = vadd.xlane.f32.xlu0 %v7680
        %v7688 = vpop.xlane.xlu0 %7687
        %v7689 = vmul.f32 %v7686, %v4041
        %v7690 = vmul.f32 %v7688, %v4041
        %v7691 = vsub.f32 %v7679, %v7689
        %v7692 = vsub.f32 %v7680, %v7690
        %v7693 = vmul.f32 %v7691, %v7691
        %v7694 = vmul.f32 %v7692, %v7692
        %7695 = vadd.xlane.f32.xlu0 %v7693
        %v7696 = vpop.xlane.xlu0 %7695
        %7697 = vadd.xlane.f32.xlu0 %v7694
        %v7698 = vpop.xlane.xlu0 %7697
        %v7699 = vmul.f32 %v7696, %v4041
        %v7700 = vmul.f32 %v7698, %v4041
        %v7701 = vadd.f32 %v7699, 1e-05
        %v7702 = vadd.f32 %v7700, 1e-05
        %v7703 = vrsqrt.pop %v7701
        %v7704 = vrsqrt.pop %v7702
        %v7705 = vmul.f32 %v7691, %v7703
        %v7706 = vmul.f32 %v7692, %v7704
        %v7708 = vlaneseq
        %v7709 = vshrl.u32 %v7708, 7
        %v7710 = vsub.s32 0, %v7709
        %v7711 = vrot.slane %v7682, %v7710
        %v7713 = vmul.f32 %v7705, %v7711
        %v7714 = vmul.f32 %v7706, %v7711
        %v7716 = vlaneseq
        %v7717 = vshrl.u32 %v7716, 7
        %v7718 = vsub.s32 0, %v7717
        %v7719 = vrot.slane %v7684, %v7718
        %v7721 = vadd.f32 %v7713, %v7719
        %v7722 = vadd.f32 %v7714, %v7719
        %s7723 = scalar_lea.vmem %s862, 256 [#allocation16]
        %v7724 = vld [vmem:[%s7723] sm:$0xff]
        %v7725 = vld [vmem:[%s7723 + $0x8] sm:$0xff]
        %v7726 = vld [vmem:[%s7723 + $0x10] sm:$0xff]
        %v7727 = vld [vmem:[%s7723 + $0x18] sm:$0xff]
        %v7728 = vld [vmem:[%s7723 + $0x20] sm:$0xff]
        %v7729 = vld [vmem:[%s7723 + $0x28] sm:$0xff]
        %v7730 = vld [vmem:[%s7723 + $0x30] sm:$0xff]
        %v7731 = vld [vmem:[%s7723 + $0x38] sm:$0xff]
        %v7732 = vld [vmem:[%s7723 + $0x40] sm:$0xff]
        %v7733 = vld [vmem:[%s7723 + $0x48] sm:$0xff]
        %v7734 = vld [vmem:[%s7723 + $0x50] sm:$0xff]
        %v7735 = vld [vmem:[%s7723 + $0x58] sm:$0xff]
        %v7736 = vld [vmem:[%s7723 + $0x60] sm:$0xff]
        %v7737 = vld [vmem:[%s7723 + $0x68] sm:$0xff]
        %v7738 = vld [vmem:[%s7723 + $0x70] sm:$0xff]
        %v7739 = vld [vmem:[%s7723 + $0x78] sm:$0xff]
        %v7740 = vld [vmem:[%s7723 + $0x80] sm:$0xff]
        %v7741 = vld [vmem:[%s7723 + $0x88] sm:$0xff]
        %v7742 = vld [vmem:[%s7723 + $0x90] sm:$0xff]
        %v7743 = vld [vmem:[%s7723 + $0x98] sm:$0xff]
        %v7744 = vld [vmem:[%s7723 + $0xa0] sm:$0xff]
        %v7745 = vld [vmem:[%s7723 + $0xa8] sm:$0xff]
        %v7746 = vld [vmem:[%s7723 + $0xb0] sm:$0xff]
        %v7747 = vld [vmem:[%s7723 + $0xb8] sm:$0xff]
        %v7748 = vld [vmem:[%s7723 + $0xc0] sm:$0xff]
        %v7749 = vld [vmem:[%s7723 + $0xc8] sm:$0xff]
        %v7750 = vld [vmem:[%s7723 + $0xd0] sm:$0xff]
        %v7751 = vld [vmem:[%s7723 + $0xd8] sm:$0xff]
        %v7752 = vld [vmem:[%s7723 + $0xe0] sm:$0xff]
        %v7753 = vld [vmem:[%s7723 + $0xe8] sm:$0xff]
        %v7754 = vld [vmem:[%s7723 + $0xf0] sm:$0xff]
        %v7755 = vld [vmem:[%s7723 + $0xf8] sm:$0xff]
        %v7756 = vpack.c.bf16 %v7722, %v7721
        %s7757 = scalar_lea.vmem %s871, 4 [#allocation17]
        %v7758 = vld [vmem:[%s7757] sm:$0xf]
        %v7760 = vlaneseq
        %v7761 = vshrl.u32 %v7760, 7
        %v7762 = vsub.s32 0, %v7761
        %v7763 = vrot.slane %v7758, %v7762
        %v7764 = vlaneseq
        %v7765 = vshrl.u32 %v7764, 7
        %v7766 = vsub.s32 1, %v7765
        %v7767 = vrot.slane %v7758, %v7766
        %v7768 = vlaneseq
        %v7769 = vshrl.u32 %v7768, 7
        %v7770 = vsub.s32 2, %v7769
        %v7771 = vrot.slane %v7758, %v7770
        %v7772 = vlaneseq
        %v7773 = vshrl.u32 %v7772, 7
        %v7774 = vsub.s32 3, %v7773
        %v7775 = vrot.slane %v7758, %v7774
        %v7812 = vunpack.c.l.b16 %v7724
        %v7813 = vunpack.c.h.b16 %v7724
        %v7814 = vunpack.c.l.b16 %v7725
        %v7815 = vunpack.c.h.b16 %v7725
        %v7816 = vunpack.c.l.b16 %v7726
        %v7817 = vunpack.c.h.b16 %v7726
        %v7818 = vunpack.c.l.b16 %v7727
        %v7819 = vunpack.c.h.b16 %v7727
        %v7820 = vunpack.c.l.b16 %v7728
        %v7821 = vunpack.c.h.b16 %v7728
        %v7822 = vunpack.c.l.b16 %v7729
        %v7823 = vunpack.c.h.b16 %v7729
        %v7824 = vunpack.c.l.b16 %v7730
        %v7825 = vunpack.c.h.b16 %v7730
        %v7826 = vunpack.c.l.b16 %v7731
        %v7827 = vunpack.c.h.b16 %v7731
        %v7828 = vunpack.c.l.b16 %v7732
        %v7829 = vunpack.c.h.b16 %v7732
        %v7830 = vunpack.c.l.b16 %v7733
        %v7831 = vunpack.c.h.b16 %v7733
        %v7832 = vunpack.c.l.b16 %v7734
        %v7833 = vunpack.c.h.b16 %v7734
        %v7834 = vunpack.c.l.b16 %v7735
        %v7835 = vunpack.c.h.b16 %v7735
        %v7836 = vunpack.c.l.b16 %v7736
        %v7837 = vunpack.c.h.b16 %v7736
        %v7838 = vunpack.c.l.b16 %v7737
        %v7839 = vunpack.c.h.b16 %v7737
        %v7840 = vunpack.c.l.b16 %v7738
        %v7841 = vunpack.c.h.b16 %v7738
        %v7842 = vunpack.c.l.b16 %v7739
        %v7843 = vunpack.c.h.b16 %v7739
        %v7844 = vunpack.c.l.b16 %v7740
        %v7845 = vunpack.c.h.b16 %v7740
        %v7846 = vunpack.c.l.b16 %v7741
        %v7847 = vunpack.c.h.b16 %v7741
        %v7848 = vunpack.c.l.b16 %v7742
        %v7849 = vunpack.c.h.b16 %v7742
        %v7850 = vunpack.c.l.b16 %v7743
        %v7851 = vunpack.c.h.b16 %v7743
        %v7852 = vunpack.c.l.b16 %v7744
        %v7853 = vunpack.c.h.b16 %v7744
        %v7854 = vunpack.c.l.b16 %v7745
        %v7855 = vunpack.c.h.b16 %v7745
        %v7856 = vunpack.c.l.b16 %v7746
        %v7857 = vunpack.c.h.b16 %v7746
        %v7858 = vunpack.c.l.b16 %v7747
        %v7859 = vunpack.c.h.b16 %v7747
        %v7860 = vunpack.c.l.b16 %v7748
        %v7861 = vunpack.c.h.b16 %v7748
        %v7862 = vunpack.c.l.b16 %v7749
        %v7863 = vunpack.c.h.b16 %v7749
        %v7864 = vunpack.c.l.b16 %v7750
        %v7865 = vunpack.c.h.b16 %v7750
        %v7866 = vunpack.c.l.b16 %v7751
        %v7867 = vunpack.c.h.b16 %v7751
        %v7868 = vunpack.c.l.b16 %v7752
        %v7869 = vunpack.c.h.b16 %v7752
        %v7870 = vunpack.c.l.b16 %v7753
        %v7871 = vunpack.c.h.b16 %v7753
        %v7872 = vunpack.c.l.b16 %v7754
        %v7873 = vunpack.c.h.b16 %v7754
        %v7874 = vunpack.c.l.b16 %v7755
        %v7875 = vunpack.c.h.b16 %v7755
        %v7876 = vpack.c.b16 %v7816, %v7812
        %v7877 = vpack.c.b16 %v7817, %v7813
        %v7878 = vpack.c.b16 %v7818, %v7814
        %v7879 = vpack.c.b16 %v7819, %v7815
        %v7880 = vpack.c.b16 %v7824, %v7820
        %v7881 = vpack.c.b16 %v7825, %v7821
        %v7882 = vpack.c.b16 %v7826, %v7822
        %v7883 = vpack.c.b16 %v7827, %v7823
        %v7884 = vpack.c.b16 %v7832, %v7828
        %v7885 = vpack.c.b16 %v7833, %v7829
        %v7886 = vpack.c.b16 %v7834, %v7830
        %v7887 = vpack.c.b16 %v7835, %v7831
        %v7888 = vpack.c.b16 %v7840, %v7836
        %v7889 = vpack.c.b16 %v7841, %v7837
        %v7890 = vpack.c.b16 %v7842, %v7838
        %v7891 = vpack.c.b16 %v7843, %v7839
        %v7892 = vpack.c.b16 %v7848, %v7844
        %v7893 = vpack.c.b16 %v7849, %v7845
        %v7894 = vpack.c.b16 %v7850, %v7846
        %v7895 = vpack.c.b16 %v7851, %v7847
        %v7896 = vpack.c.b16 %v7856, %v7852
        %v7897 = vpack.c.b16 %v7857, %v7853
        %v7898 = vpack.c.b16 %v7858, %v7854
        %v7899 = vpack.c.b16 %v7859, %v7855
        %v7900 = vpack.c.b16 %v7864, %v7860
        %v7901 = vpack.c.b16 %v7865, %v7861
        %v7902 = vpack.c.b16 %v7866, %v7862
        %v7903 = vpack.c.b16 %v7867, %v7863
        %v7904 = vpack.c.b16 %v7872, %v7868
        %v7905 = vpack.c.b16 %v7873, %v7869
        %v7906 = vpack.c.b16 %v7874, %v7870
        %v7907 = vpack.c.b16 %v7875, %v7871
        %7940 = vmatprep.subr.bf16.mxu0 %v7905
        %7941 = vmatpush1.bf16.msra.mxu0 %v7904
        %7942 = vmatprep.subr.bf16.mxu0 %v7901
        %7943 = vmatpush1.bf16.msra.mxu0 %v7900
        %7944 = vmatprep.subr.bf16.mxu0 %v7897
        %7945 = vmatpush1.bf16.msra.mxu0 %v7896
        %7946 = vmatprep.subr.bf16.mxu0 %v7893
        %7947 = vmatpush1.bf16.msra.mxu0 %v7892
        %7948 = vmatprep.subr.bf16.mxu0 %v7889
        %7949 = vmatpush1.bf16.msra.mxu0 %v7888
        %7950 = vmatprep.subr.bf16.mxu0 %v7885
        %7951 = vmatpush1.bf16.msra.mxu0 %v7884
        %7952 = vmatprep.subr.bf16.mxu0 %v7881
        %7953 = vmatpush1.bf16.msra.mxu0 %v7880
        %7954 = vmatprep.subr.bf16.mxu0 %v7877
        %7955 = vmatpush1.bf16.msra.mxu0 %v7876
        %7956 = vmatprep.subr.bf16.mxu0 0
        %7957 = vmatpush2.bf16.msra.mxu0 0
        %7958 = vmatprep.subr.bf16.mxu0 0
        %7959 = vmatpush2.bf16.msra.mxu0 0
        %7960 = vmatprep.subr.bf16.mxu0 0
        %7961 = vmatpush2.bf16.msra.mxu0 0
        %7962 = vmatprep.subr.bf16.mxu0 0
        %7963 = vmatpush2.bf16.msra.mxu0 0
        %7964 = vmatprep.subr.bf16.mxu0 0
        %7965 = vmatpush2.bf16.msra.mxu0 0
        %7966 = vmatprep.subr.bf16.mxu0 0
        %7967 = vmatpush2.bf16.msra.mxu0 0
        %7968 = vmatprep.subr.bf16.mxu0 0
        %7969 = vmatpush2.bf16.msra.mxu0 0
        %7970 = vmatprep.subr.bf16.mxu0 0
        %7971 = vmatpush2.bf16.msra.mxu0 0
        %7972 = vmatprep.mubr.bf16.mxu0 0
        %7973 = vmatmul.mubr.bf16.gmra.mxu0 %v7756
        %v7974 = vpop.f32.mrf.mxu0
        %v7975 = vadd.f32 %v7763, %v7974
        %v7976 = vpop.f32.mrf.mxu0
        %v7977 = vadd.f32 %v7767, %v7976
        %v7978 = vpop.f32.mrf.mxu0
        %v7979 = vadd.f32 %v7763, %v7978
        %v7980 = vpop.f32.mrf.mxu0
        %v7981 = vadd.f32 %v7767, %v7980
        %7982 = vdwg.mxu0
        %7983 = vmatprep.subr.bf16.mxu0 %v7907
        %7984 = vmatpush1.bf16.msra.mxu0 %v7906
        %7985 = vmatprep.subr.bf16.mxu0 %v7903
        %7986 = vmatpush1.bf16.msra.mxu0 %v7902
        %7987 = vmatprep.subr.bf16.mxu0 %v7899
        %7988 = vmatpush1.bf16.msra.mxu0 %v7898
        %7989 = vmatprep.subr.bf16.mxu0 %v7895
        %7990 = vmatpush1.bf16.msra.mxu0 %v7894
        %7991 = vmatprep.subr.bf16.mxu0 %v7891
        %7992 = vmatpush1.bf16.msra.mxu0 %v7890
        %7993 = vmatprep.subr.bf16.mxu0 %v7887
        %7994 = vmatpush1.bf16.msra.mxu0 %v7886
        %7995 = vmatprep.subr.bf16.mxu0 %v7883
        %7996 = vmatpush1.bf16.msra.mxu0 %v7882
        %7997 = vmatprep.subr.bf16.mxu0 %v7879
        %7998 = vmatpush1.bf16.msra.mxu0 %v7878
        %7999 = vmatprep.subr.bf16.mxu0 0
        %8000 = vmatpush2.bf16.msra.mxu0 0
        %8001 = vmatprep.subr.bf16.mxu0 0
        %8002 = vmatpush2.bf16.msra.mxu0 0
        %8003 = vmatprep.subr.bf16.mxu0 0
        %8004 = vmatpush2.bf16.msra.mxu0 0
        %8005 = vmatprep.subr.bf16.mxu0 0
        %8006 = vmatpush2.bf16.msra.mxu0 0
        %8007 = vmatprep.subr.bf16.mxu0 0
        %8008 = vmatpush2.bf16.msra.mxu0 0
        %8009 = vmatprep.subr.bf16.mxu0 0
        %8010 = vmatpush2.bf16.msra.mxu0 0
        %8011 = vmatprep.subr.bf16.mxu0 0
        %8012 = vmatpush2.bf16.msra.mxu0 0
        %8013 = vmatprep.subr.bf16.mxu0 0
        %8014 = vmatpush2.bf16.msra.mxu0 0
        %8015 = vmatprep.mubr.bf16.mxu0 0
        %8016 = vmatmul.mubr.bf16.gmra.mxu0 %v7756
        %v8017 = vpop.f32.mrf.mxu0
        %v8018 = vadd.f32 %v7771, %v8017
        %v8019 = vpop.f32.mrf.mxu0
        %v8020 = vadd.f32 %v7775, %v8019
        %v8021 = vpop.f32.mrf.mxu0
        %v8022 = vadd.f32 %v7771, %v8021
        %v8023 = vpop.f32.mrf.mxu0
        %v8024 = vadd.f32 %v7775, %v8023
        %8025 = vdwg.mxu0
        %v8026 = vmax.f32 %v7975, 0.0
        %v8027 = vmax.f32 %v7977, 0.0
        %v8028 = vmax.f32 %v8018, 0.0
        %v8029 = vmax.f32 %v8020, 0.0
        %v8030 = vmax.f32 %v7979, 0.0
        %v8031 = vmax.f32 %v7981, 0.0
        %v8032 = vmax.f32 %v8022, 0.0
        %v8033 = vmax.f32 %v8024, 0.0
        %s8034 = scalar_lea.vmem %s880, 256 [#allocation19]
        %v8035 = vld [vmem:[%s8034] sm:$0xf]
        %v8036 = vld [vmem:[%s8034 + $0x4] sm:$0xf]
        %v8037 = vld [vmem:[%s8034 + $0x8] sm:$0xf]
        %v8038 = vld [vmem:[%s8034 + $0xc] sm:$0xf]
        %v8039 = vld [vmem:[%s8034 + $0x10] sm:$0xf]
        %v8040 = vld [vmem:[%s8034 + $0x14] sm:$0xf]
        %v8041 = vld [vmem:[%s8034 + $0x18] sm:$0xf]
        %v8042 = vld [vmem:[%s8034 + $0x1c] sm:$0xf]
        %v8043 = vld [vmem:[%s8034 + $0x20] sm:$0xf]
        %v8044 = vld [vmem:[%s8034 + $0x24] sm:$0xf]
        %v8045 = vld [vmem:[%s8034 + $0x28] sm:$0xf]
        %v8046 = vld [vmem:[%s8034 + $0x2c] sm:$0xf]
        %v8047 = vld [vmem:[%s8034 + $0x30] sm:$0xf]
        %v8048 = vld [vmem:[%s8034 + $0x34] sm:$0xf]
        %v8049 = vld [vmem:[%s8034 + $0x38] sm:$0xf]
        %v8050 = vld [vmem:[%s8034 + $0x3c] sm:$0xf]
        %v8051 = vld [vmem:[%s8034 + $0x40] sm:$0xf]
        %v8052 = vld [vmem:[%s8034 + $0x44] sm:$0xf]
        %v8053 = vld [vmem:[%s8034 + $0x48] sm:$0xf]
        %v8054 = vld [vmem:[%s8034 + $0x4c] sm:$0xf]
        %v8055 = vld [vmem:[%s8034 + $0x50] sm:$0xf]
        %v8056 = vld [vmem:[%s8034 + $0x54] sm:$0xf]
        %v8057 = vld [vmem:[%s8034 + $0x58] sm:$0xf]
        %v8058 = vld [vmem:[%s8034 + $0x5c] sm:$0xf]
        %v8059 = vld [vmem:[%s8034 + $0x60] sm:$0xf]
        %v8060 = vld [vmem:[%s8034 + $0x64] sm:$0xf]
        %v8061 = vld [vmem:[%s8034 + $0x68] sm:$0xf]
        %v8062 = vld [vmem:[%s8034 + $0x6c] sm:$0xf]
        %v8063 = vld [vmem:[%s8034 + $0x70] sm:$0xf]
        %v8064 = vld [vmem:[%s8034 + $0x74] sm:$0xf]
        %v8065 = vld [vmem:[%s8034 + $0x78] sm:$0xf]
        %v8066 = vld [vmem:[%s8034 + $0x7c] sm:$0xf]
        %v8067 = vld [vmem:[%s8034 + $0x80] sm:$0xf]
        %v8068 = vld [vmem:[%s8034 + $0x84] sm:$0xf]
        %v8069 = vld [vmem:[%s8034 + $0x88] sm:$0xf]
        %v8070 = vld [vmem:[%s8034 + $0x8c] sm:$0xf]
        %v8071 = vld [vmem:[%s8034 + $0x90] sm:$0xf]
        %v8072 = vld [vmem:[%s8034 + $0x94] sm:$0xf]
        %v8073 = vld [vmem:[%s8034 + $0x98] sm:$0xf]
        %v8074 = vld [vmem:[%s8034 + $0x9c] sm:$0xf]
        %v8075 = vld [vmem:[%s8034 + $0xa0] sm:$0xf]
        %v8076 = vld [vmem:[%s8034 + $0xa4] sm:$0xf]
        %v8077 = vld [vmem:[%s8034 + $0xa8] sm:$0xf]
        %v8078 = vld [vmem:[%s8034 + $0xac] sm:$0xf]
        %v8079 = vld [vmem:[%s8034 + $0xb0] sm:$0xf]
        %v8080 = vld [vmem:[%s8034 + $0xb4] sm:$0xf]
        %v8081 = vld [vmem:[%s8034 + $0xb8] sm:$0xf]
        %v8082 = vld [vmem:[%s8034 + $0xbc] sm:$0xf]
        %v8083 = vld [vmem:[%s8034 + $0xc0] sm:$0xf]
        %v8084 = vld [vmem:[%s8034 + $0xc4] sm:$0xf]
        %v8085 = vld [vmem:[%s8034 + $0xc8] sm:$0xf]
        %v8086 = vld [vmem:[%s8034 + $0xcc] sm:$0xf]
        %v8087 = vld [vmem:[%s8034 + $0xd0] sm:$0xf]
        %v8088 = vld [vmem:[%s8034 + $0xd4] sm:$0xf]
        %v8089 = vld [vmem:[%s8034 + $0xd8] sm:$0xf]
        %v8090 = vld [vmem:[%s8034 + $0xdc] sm:$0xf]
        %v8091 = vld [vmem:[%s8034 + $0xe0] sm:$0xf]
        %v8092 = vld [vmem:[%s8034 + $0xe4] sm:$0xf]
        %v8093 = vld [vmem:[%s8034 + $0xe8] sm:$0xf]
        %v8094 = vld [vmem:[%s8034 + $0xec] sm:$0xf]
        %v8095 = vld [vmem:[%s8034 + $0xf0] sm:$0xf]
        %v8096 = vld [vmem:[%s8034 + $0xf4] sm:$0xf]
        %v8097 = vld [vmem:[%s8034 + $0xf8] sm:$0xf]
        %v8098 = vld [vmem:[%s8034 + $0xfc] sm:$0xf]
        %v8099 = vpack.c.bf16 %v8030, %v8026
        %v8100 = vpack.c.bf16 %v8031, %v8027
        %v8101 = vpack.c.bf16 %v8032, %v8028
        %v8102 = vpack.c.bf16 %v8033, %v8029
        %s8103 = scalar_lea.vmem %s1019, 1
        %v8104 = vld [vmem:[%s8103] sm:$0x1]
        %v8106 = vlaneseq
        %v8107 = vshrl.u32 %v8106, 7
        %v8108 = vsub.s32 0, %v8107
        %v8109 = vrot.slane %v8104, %v8108
        %v8175 = vunpack.c.l.b16 %v8035
        %v8176 = vunpack.c.l.b16 %v8036
        %v8177 = vunpack.c.l.b16 %v8037
        %v8178 = vunpack.c.l.b16 %v8038
        %v8179 = vunpack.c.l.b16 %v8039
        %v8180 = vunpack.c.l.b16 %v8040
        %v8181 = vunpack.c.l.b16 %v8041
        %v8182 = vunpack.c.l.b16 %v8042
        %v8183 = vunpack.c.l.b16 %v8043
        %v8184 = vunpack.c.l.b16 %v8044
        %v8185 = vunpack.c.l.b16 %v8045
        %v8186 = vunpack.c.l.b16 %v8046
        %v8187 = vunpack.c.l.b16 %v8047
        %v8188 = vunpack.c.l.b16 %v8048
        %v8189 = vunpack.c.l.b16 %v8049
        %v8190 = vunpack.c.l.b16 %v8050
        %v8191 = vunpack.c.l.b16 %v8051
        %v8192 = vunpack.c.l.b16 %v8052
        %v8193 = vunpack.c.l.b16 %v8053
        %v8194 = vunpack.c.l.b16 %v8054
        %v8195 = vunpack.c.l.b16 %v8055
        %v8196 = vunpack.c.l.b16 %v8056
        %v8197 = vunpack.c.l.b16 %v8057
        %v8198 = vunpack.c.l.b16 %v8058
        %v8199 = vunpack.c.l.b16 %v8059
        %v8200 = vunpack.c.l.b16 %v8060
        %v8201 = vunpack.c.l.b16 %v8061
        %v8202 = vunpack.c.l.b16 %v8062
        %v8203 = vunpack.c.l.b16 %v8063
        %v8204 = vunpack.c.l.b16 %v8064
        %v8205 = vunpack.c.l.b16 %v8065
        %v8206 = vunpack.c.l.b16 %v8066
        %v8207 = vunpack.c.l.b16 %v8067
        %v8208 = vunpack.c.l.b16 %v8068
        %v8209 = vunpack.c.l.b16 %v8069
        %v8210 = vunpack.c.l.b16 %v8070
        %v8211 = vunpack.c.l.b16 %v8071
        %v8212 = vunpack.c.l.b16 %v8072
        %v8213 = vunpack.c.l.b16 %v8073
        %v8214 = vunpack.c.l.b16 %v8074
        %v8215 = vunpack.c.l.b16 %v8075
        %v8216 = vunpack.c.l.b16 %v8076
        %v8217 = vunpack.c.l.b16 %v8077
        %v8218 = vunpack.c.l.b16 %v8078
        %v8219 = vunpack.c.l.b16 %v8079
        %v8220 = vunpack.c.l.b16 %v8080
        %v8221 = vunpack.c.l.b16 %v8081
        %v8222 = vunpack.c.l.b16 %v8082
        %v8223 = vunpack.c.l.b16 %v8083
        %v8224 = vunpack.c.l.b16 %v8084
        %v8225 = vunpack.c.l.b16 %v8085
        %v8226 = vunpack.c.l.b16 %v8086
        %v8227 = vunpack.c.l.b16 %v8087
        %v8228 = vunpack.c.l.b16 %v8088
        %v8229 = vunpack.c.l.b16 %v8089
        %v8230 = vunpack.c.l.b16 %v8090
        %v8231 = vunpack.c.l.b16 %v8091
        %v8232 = vunpack.c.l.b16 %v8092
        %v8233 = vunpack.c.l.b16 %v8093
        %v8234 = vunpack.c.l.b16 %v8094
        %v8235 = vunpack.c.l.b16 %v8095
        %v8236 = vunpack.c.l.b16 %v8096
        %v8237 = vunpack.c.l.b16 %v8097
        %v8238 = vunpack.c.l.b16 %v8098
        %v8239 = vpack.c.b16 %v8176, %v8175
        %v8240 = vpack.c.b16 %v8178, %v8177
        %v8241 = vpack.c.b16 %v8180, %v8179
        %v8242 = vpack.c.b16 %v8182, %v8181
        %v8243 = vpack.c.b16 %v8184, %v8183
        %v8244 = vpack.c.b16 %v8186, %v8185
        %v8245 = vpack.c.b16 %v8188, %v8187
        %v8246 = vpack.c.b16 %v8190, %v8189
        %v8247 = vpack.c.b16 %v8192, %v8191
        %v8248 = vpack.c.b16 %v8194, %v8193
        %v8249 = vpack.c.b16 %v8196, %v8195
        %v8250 = vpack.c.b16 %v8198, %v8197
        %v8251 = vpack.c.b16 %v8200, %v8199
        %v8252 = vpack.c.b16 %v8202, %v8201
        %v8253 = vpack.c.b16 %v8204, %v8203
        %v8254 = vpack.c.b16 %v8206, %v8205
        %v8255 = vpack.c.b16 %v8208, %v8207
        %v8256 = vpack.c.b16 %v8210, %v8209
        %v8257 = vpack.c.b16 %v8212, %v8211
        %v8258 = vpack.c.b16 %v8214, %v8213
        %v8259 = vpack.c.b16 %v8216, %v8215
        %v8260 = vpack.c.b16 %v8218, %v8217
        %v8261 = vpack.c.b16 %v8220, %v8219
        %v8262 = vpack.c.b16 %v8222, %v8221
        %v8263 = vpack.c.b16 %v8224, %v8223
        %v8264 = vpack.c.b16 %v8226, %v8225
        %v8265 = vpack.c.b16 %v8228, %v8227
        %v8266 = vpack.c.b16 %v8230, %v8229
        %v8267 = vpack.c.b16 %v8232, %v8231
        %v8268 = vpack.c.b16 %v8234, %v8233
        %v8269 = vpack.c.b16 %v8236, %v8235
        %v8270 = vpack.c.b16 %v8238, %v8237
        %8303 = vmatprep.subr.bf16.mxu0 0
        %8304 = vmatpush1.bf16.msra.mxu0 %v8246
        %8305 = vmatprep.subr.bf16.mxu0 0
        %8306 = vmatpush1.bf16.msra.mxu0 %v8245
        %8307 = vmatprep.subr.bf16.mxu0 0
        %8308 = vmatpush1.bf16.msra.mxu0 %v8244
        %8309 = vmatprep.subr.bf16.mxu0 0
        %8310 = vmatpush1.bf16.msra.mxu0 %v8243
        %8311 = vmatprep.subr.bf16.mxu0 0
        %8312 = vmatpush1.bf16.msra.mxu0 %v8242
        %8313 = vmatprep.subr.bf16.mxu0 0
        %8314 = vmatpush1.bf16.msra.mxu0 %v8241
        %8315 = vmatprep.subr.bf16.mxu0 0
        %8316 = vmatpush1.bf16.msra.mxu0 %v8240
        %8317 = vmatprep.subr.bf16.mxu0 0
        %8318 = vmatpush1.bf16.msra.mxu0 %v8239
        %8319 = vmatprep.subr.bf16.mxu0 0
        %8320 = vmatpush2.bf16.msra.mxu0 %v8254
        %8321 = vmatprep.subr.bf16.mxu0 0
        %8322 = vmatpush2.bf16.msra.mxu0 %v8253
        %8323 = vmatprep.subr.bf16.mxu0 0
        %8324 = vmatpush2.bf16.msra.mxu0 %v8252
        %8325 = vmatprep.subr.bf16.mxu0 0
        %8326 = vmatpush2.bf16.msra.mxu0 %v8251
        %8327 = vmatprep.subr.bf16.mxu0 0
        %8328 = vmatpush2.bf16.msra.mxu0 %v8250
        %8329 = vmatprep.subr.bf16.mxu0 0
        %8330 = vmatpush2.bf16.msra.mxu0 %v8249
        %8331 = vmatprep.subr.bf16.mxu0 0
        %8332 = vmatpush2.bf16.msra.mxu0 %v8248
        %8333 = vmatprep.subr.bf16.mxu0 0
        %8334 = vmatpush2.bf16.msra.mxu0 %v8247
        %8335 = vmatprep.mubr.bf16.mxu0 %v8100
        %8336 = vmatmul.mubr.bf16.gmra.mxu0 %v8099
        %v8337 = vpop.f32.mrf.mxu0
        %v8338 = vadd.f32 %v8109, %v8337
        %v8339 = vpop.f32.mrf.mxu0
        %v8340 = vpop.f32.mrf.mxu0
        %v8341 = vadd.f32 %v8109, %v8340
        %v8342 = vpop.f32.mrf.mxu0
        %8343 = vdwg.mxu0
        %8344 = vmatprep.subr.bf16.mxu0 0
        %8345 = vmatpush1.bf16.msra.mxu0 %v8262
        %8346 = vmatprep.subr.bf16.mxu0 0
        %8347 = vmatpush1.bf16.msra.mxu0 %v8261
        %8348 = vmatprep.subr.bf16.mxu0 0
        %8349 = vmatpush1.bf16.msra.mxu0 %v8260
        %8350 = vmatprep.subr.bf16.mxu0 0
        %8351 = vmatpush1.bf16.msra.mxu0 %v8259
        %8352 = vmatprep.subr.bf16.mxu0 0
        %8353 = vmatpush1.bf16.msra.mxu0 %v8258
        %8354 = vmatprep.subr.bf16.mxu0 0
        %8355 = vmatpush1.bf16.msra.mxu0 %v8257
        %8356 = vmatprep.subr.bf16.mxu0 0
        %8357 = vmatpush1.bf16.msra.mxu0 %v8256
        %8358 = vmatprep.subr.bf16.mxu0 0
        %8359 = vmatpush1.bf16.msra.mxu0 %v8255
        %8360 = vmatprep.subr.bf16.mxu0 0
        %8361 = vmatpush2.bf16.msra.mxu0 %v8270
        %8362 = vmatprep.subr.bf16.mxu0 0
        %8363 = vmatpush2.bf16.msra.mxu0 %v8269
        %8364 = vmatprep.subr.bf16.mxu0 0
        %8365 = vmatpush2.bf16.msra.mxu0 %v8268
        %8366 = vmatprep.subr.bf16.mxu0 0
        %8367 = vmatpush2.bf16.msra.mxu0 %v8267
        %8368 = vmatprep.subr.bf16.mxu0 0
        %8369 = vmatpush2.bf16.msra.mxu0 %v8266
        %8370 = vmatprep.subr.bf16.mxu0 0
        %8371 = vmatpush2.bf16.msra.mxu0 %v8265
        %8372 = vmatprep.subr.bf16.mxu0 0
        %8373 = vmatpush2.bf16.msra.mxu0 %v8264
        %8374 = vmatprep.subr.bf16.mxu0 0
        %8375 = vmatpush2.bf16.msra.mxu0 %v8263
        %8376 = vmatprep.mubr.bf16.mxu0 %v8102
        %8377 = vmatmul.mubr.bf16.gmra.mxu0 %v8101
        %v8378 = vpop.f32.mrf.mxu0
        %v8379 = vadd.f32 %v8338, %v8378
        %v8380 = vpop.f32.mrf.mxu0
        %v8381 = vpop.f32.mrf.mxu0
        %v8382 = vadd.f32 %v8341, %v8381
        %v8383 = vpop.f32.mrf.mxu0
        %8384 = vdwg.mxu0
        %v8385 = vadd.f32 %v7721, %v8379
        %v8386 = vadd.f32 %v7722, %v8382
        %s8387 = scalar_lea.vmem %s1023, 1
        %v8388 = vld [vmem:[%s8387] sm:$0x1]
        %s8389 = scalar_lea.vmem %s889, 1 [#allocation20]
        %v8390 = vld [vmem:[%s8389] sm:$0x1]
        %8391 = vadd.xlane.f32.xlu0 %v8385
        %v8392 = vpop.xlane.xlu0 %8391
        %8393 = vadd.xlane.f32.xlu0 %v8386
        %v8394 = vpop.xlane.xlu0 %8393
        %v8395 = vmul.f32 %v8392, %v4041
        %v8396 = vmul.f32 %v8394, %v4041
        %v8397 = vsub.f32 %v8385, %v8395
        %v8398 = vsub.f32 %v8386, %v8396
        %v8399 = vmul.f32 %v8397, %v8397
        %v8400 = vmul.f32 %v8398, %v8398
        %8401 = vadd.xlane.f32.xlu0 %v8399
        %v8402 = vpop.xlane.xlu0 %8401
        %8403 = vadd.xlane.f32.xlu0 %v8400
        %v8404 = vpop.xlane.xlu0 %8403
        %v8405 = vmul.f32 %v8402, %v4041
        %v8406 = vmul.f32 %v8404, %v4041
        %v8407 = vadd.f32 %v8405, 1e-05
        %v8408 = vadd.f32 %v8406, 1e-05
        %v8409 = vrsqrt.pop %v8407
        %v8410 = vrsqrt.pop %v8408
        %v8411 = vmul.f32 %v8397, %v8409
        %v8412 = vmul.f32 %v8398, %v8410
        %v8414 = vlaneseq
        %v8415 = vshrl.u32 %v8414, 7
        %v8416 = vsub.s32 0, %v8415
        %v8417 = vrot.slane %v8388, %v8416
        %v8419 = vmul.f32 %v8411, %v8417
        %v8420 = vmul.f32 %v8412, %v8417
        %v8422 = vlaneseq
        %v8423 = vshrl.u32 %v8422, 7
        %v8424 = vsub.s32 0, %v8423
        %v8425 = vrot.slane %v8390, %v8424
        %v8427 = vadd.f32 %v8419, %v8425
        %v8428 = vadd.f32 %v8420, %v8425
        %v8430 = vrot.slane %v8427, 7
        %v8433 = vrot.slane %v8428, 6
        %vm8435 = vcmask 1040384
        %v8436 = vsel %vm8435, %v8430, %v8433
        %8437 = vst [vmem:[%s1007] sm:$0x3] %v8436
        %s8438 = sand.u32 %s475, 1
        %s8439 = scalar_lea.sflag [#allocation4], %s8438
        %s8440 = sand.u32 %s475, 1
        %s8441 = smul.addr %s8440, 2
        %s8442 = scalar_lea.vmem [#allocation22], %s8441
        // Predicated region
        $region133: #{tpu_custom_call.1} parent=83 // pred_check
          %p8443 = pneg %p485
        $region134: #{tpu_custom_call.1} parent=83 // pred_check_branch
          %8445 = sbr.rel (%p8443) target = $region136
        $region135: #{tpu_custom_call.1} parent=83 // pred_region
          %s8447 = ssub.s32 32, 32
          %8448 = vsyncadd %s8439, %s8447
          %s8449 = smul.addr %s51, 32
          %s8450 = scalar_lea.hbm %s16, %s8449
          %s8452 = sshll.u32 %s8442, 4
          %s8453 = int_to_ptr.vmem [resolvable:$true] %s8452
          %8455 = dma.vmem_to_hbm [thread:$0]  %s8453, 32, %s8450, %s8439
        $region136: #{tpu_custom_call.1} parent=83 // pred_fallthru
          _
      $region84: #{tpu_custom_call.1} parent=5 // pred_fallthru
        _
      %p8456 = scmp.le.s32.totalorder 2, %s46
      // Predicated region
      $region137: #{tpu_custom_call.1} parent=5 // pred_check
        %p8457 = pneg %p8456
      $region138: #{tpu_custom_call.1} parent=5 // pred_check_branch
        %8459 = sbr.rel (%p8457) target = $region140
      $region139: #{tpu_custom_call.1} parent=5 // pred_region
        %s8460 = ssub.s32 %s46, 2
        // Predicated region
        $region141: #{tpu_custom_call.1} parent=139 // pred_check
          %p8461 = pneg %p491
        $region142: #{tpu_custom_call.1} parent=139 // pred_check_branch
          %8463 = sbr.rel (%p8461) target = $region144
        $region143: #{tpu_custom_call.1} parent=139 // pred_region
          %s8464 = sand.u32 %s476, 1
          %s8465 = scalar_lea.sflag [#allocation4], %s8464
          %s8466 = sand.u32 %s476, 1
          %s8467 = smul.addr %s8466, 2
          %s8468 = scalar_lea.vmem [#allocation22], %s8467
          %8469 = dma.done %s8465, 32
        $region144: #{tpu_custom_call.1} parent=139 // pred_fallthru
          _
      $region140: #{tpu_custom_call.1} parent=5 // pred_fallthru
        _
    $region6: #{tpu_custom_call.1} parent=1 // loop_footer
      %s50 = sadd.s32 1, %s46
    $region7: #{tpu_custom_call.1} parent=1 // loop_footer_branch
      %45 = sbr.rel target = $region3
    $region8: #{tpu_custom_call.1} parent=1 // loop_exit
      _
    %8470 = vsyncpa [#allocation3], 1
    %s8471 = scalar_lea.sflag [#allocation3], 1
    %8472 = vsyncpa %s8471, 1
    %8473 = vsyncpa [#allocation6], 1
    %s8474 = scalar_lea.sflag [#allocation6], 1
    %8475 = vsyncpa %s8474, 1
    %8476 = vsyncpa [#allocation9], 1
    %s8477 = scalar_lea.sflag [#allocation9], 1
    %8478 = vsyncpa %s8477, 1
    %8479 = vsyncpa [#allocation12], 1
    %s8480 = scalar_lea.sflag [#allocation12], 1
    %8481 = vsyncpa %s8480, 1
    %8482 = vsyncpa [#allocation15], 1
    %s8483 = scalar_lea.sflag [#allocation15], 1
    %8484 = vsyncpa %s8483, 1
    %8485 = vsyncpa [#allocation18], 1
    %s8486 = scalar_lea.sflag [#allocation18], 1
    %8487 = vsyncpa %s8486, 1
    %8488 = vsyncpa [#allocation21], 1
    %s8489 = scalar_lea.sflag [#allocation21], 1
    %8490 = vsyncpa %s8489, 1
    %8491 = vsyncpa [#allocation4], 1
    %s8492 = scalar_lea.sflag [#allocation4], 1
    %8493 = vsyncpa %s8492, 1

</llo_original>
